<compile_context>
chip_gen: v7x
topology: tpu7x:2x2x1
jax: 0.10.0
libtpu: 0.0.40
codegen_flags: <defaults>
</compile_context>

<pallas_src>
import functools

import jax
import jax.numpy as jnp
from jax.experimental import pallas as pl
from jax.experimental.pallas import tpu as pltpu

_VMEM_LIMIT = 40 * 1024 * 1024      # explicit scoped-VMEM budget (fits v7x 64 MiB)
_GFE_TWO_STRIDES = (2, 1, 1)        # STGC(64,128,2), STGC(128,128,1), STGC(128,128,1)


def _round_up(x, m):
    return (x + m - 1) // m * m


def bn_fold(bn, eps=1e-5):
    scale = bn["gamma"] / jnp.sqrt(bn["var"] + eps)
    shift = bn["beta"] - bn["mean"] * scale
    return scale, shift


# ----------------------------------------------------------------------------
# One-time parameter preparation (weight folding, BN folding, layout, casts)
# ----------------------------------------------------------------------------
def prepare_stgc(p, A, eps=1e-5):
    """Fold adjacency / BN / biases into kernel-ready tensors."""
    K, V, _ = A.shape
    KC, Cin = p["w_gcn"].shape
    Cout = KC // K
    kt = p["w_t"].shape[-1]

    # --- GCN: folded weight + BN1(+bias) epilogue -----------------------------
    wg = p["w_gcn"].reshape(K, Cout, Cin)                        # wg[k,co,ci]
    # Wfold[(v,ci),(w,co)] = sum_k A[k,v,w] * wg[k,co,ci]
    w_fold = jnp.einsum('kvw,koi->viwo', A, wg).reshape(V * Cin, V * Cout)
    s1, t1 = bn_fold(p["bn1"], eps)
    beff = jnp.einsum('kvw,kc->wc', A, p["b_gcn"].reshape(K, Cout))  # bias thru A
    scale1 = jnp.tile(s1, V).reshape(1, V * Cout)
    shift1 = (t1[None, :] + s1[None, :] * beff).reshape(1, V * Cout)

    # --- TCN: (kt*C, Cout) weight + BN2(+bias) epilogue -----------------------
    s2, t2 = bn_fold(p["bn2"], eps)
    wt = jnp.transpose(p["w_t"], (2, 1, 0)).reshape(kt * Cout, Cout)

    prep = dict(
        w_fold=w_fold.astype(jnp.bfloat16),
        s1=scale1.astype(jnp.float32),
        sh1=shift1.astype(jnp.float32),
        wt=wt.astype(jnp.bfloat16),
        s2=s2.reshape(1, Cout).astype(jnp.float32),
        sh2=(t2 + s2 * p["b_t"]).reshape(1, Cout).astype(jnp.float32),
    )
    if "w_res" in p:                              # strided 1x1 conv residual
        sr, tr = bn_fold(p["bn_res"], eps)
        prep["wr"] = p["w_res"].T.astype(jnp.bfloat16)           # (Cin, Cout)
        prep["sr"] = sr.reshape(1, Cout).astype(jnp.float32)
        prep["shr"] = (tr + sr * p["b_res"]).reshape(1, Cout).astype(jnp.float32)
    return prep


def prepare_gfe_two(params, A):
    A = A.astype(jnp.float32)
    return [prepare_stgc(p, A) for p in params]


# ----------------------------------------------------------------------------
# Kernel 1: fused graph conv (folded weight GEMM -> BN1 -> ReLU)
# ----------------------------------------------------------------------------
def _gcn_kernel(x_ref, w_ref, sc_ref, sh_ref, o_ref):
    acc = jnp.dot(x_ref[...], w_ref[...], preferred_element_type=jnp.float32)
    y = acc * sc_ref[...] + sh_ref[...]                 # BN1 (+ folded conv bias)
    o_ref[...] = jnp.maximum(y, 0.0).astype(o_ref.dtype)


def _pick_col_block(vcin, vcout, max_block_bytes=4 * 2**20):
    """Largest multiple-of-128 divisor of vcout keeping weight block <= ~4 MiB."""
    if vcin * vcout * 2 <= 8 * 2**20 or vcout % 128 != 0:
        return vcout
    best = 128
    c = 256
    while c < vcout and c * vcin * 2 <= max_block_bytes:
        if vcout % c == 0:
            best = c
        c += 128
    return best


def gcn_forward(x, prep):
    """x: (N, T, V, Cin) bf16 -> (N, T, V, Cout) bf16."""
    N, T, V, Cin = x.shape
    VCin, VCout = prep["w_fold"].shape
    Cout = VCout // V
    NT = N * T

    if NT <= 8:
        TB = NT
    else:
        TB = min(512, _round_up(pl.cdiv(NT, 2), 8))     # >=2 blocks for megacore
    CB = _pick_col_block(VCin, VCout)
    grid = (pl.cdiv(NT, TB), pl.cdiv(VCout, CB))

    out = pl.pallas_call(
        _gcn_kernel,
        out_shape=jax.ShapeDtypeStruct((NT, VCout), jnp.bfloat16),
        grid=grid,
        in_specs=[
            pl.BlockSpec((TB, VCin), lambda i, j: (i, 0)),
            pl.BlockSpec((VCin, CB), lambda i, j: (0, j)),
            pl.BlockSpec((1, CB), lambda i, j: (0, j)),
            pl.BlockSpec((1, CB), lambda i, j: (0, j)),
        ],
        out_specs=pl.BlockSpec((TB, CB), lambda i, j: (i, j)),
        compiler_params=pltpu.CompilerParams(
            dimension_semantics=("parallel", "parallel"),
            vmem_limit_bytes=_VMEM_LIMIT),
    )(x.reshape(NT, V * Cin).astype(jnp.bfloat16),
      prep["w_fold"], prep["s1"], prep["sh1"])
    return out.reshape(N, T, V, Cout)


# ----------------------------------------------------------------------------
# Kernel 2: fused 9x1 temporal conv (in-kernel im2col GEMM) + BN2 + residual + ReLU
# ----------------------------------------------------------------------------
def _tcn_kernel(*refs, stride, TT, V, C, kt, has_res, conv_res):
    if has_res and conv_res:
        (y_ref, x_ref, wt_ref, s2_ref, sh2_ref,
         wr_ref, sr_ref, shr_ref, o_ref, col_ref) = refs
    elif has_res:
        y_ref, x_ref, wt_ref, s2_ref, sh2_ref, o_ref, col_ref = refs
    else:
        y_ref, wt_ref, s2_ref, sh2_ref, o_ref, col_ref = refs
        x_ref = None

    t0 = pl.program_id(1) * TT
    rows = TT * V

    # im2col: the kt taps are contiguous row-windows of the (pre-padded,
    # parity-split) input; concat them on the lane dim into one GEMM operand.
    for tau in range(kt):                                # static unroll
        src = (t0 + tau // stride) * V
        col_ref[:, tau * C:(tau + 1) * C] = \
            y_ref[0, tau % stride, pl.ds(src, rows), :]

    out = jnp.dot(col_ref[...], wt_ref[...], preferred_element_type=jnp.float32)
    out = out * s2_ref[...] + sh2_ref[...]               # BN2 (+ folded conv bias)

    if has_res:
        if conv_res:                                     # 1x1 conv + BN_res (x pre-strided)
            r = jnp.dot(x_ref[0], wr_ref[...], preferred_element_type=jnp.float32)
            r = r * sr_ref[...] + shr_ref[...]
        else:                                            # identity residual
            r = x_ref[0].astype(jnp.float32)
        out = out + r

    out = jnp.maximum(out, 0.0)                          # dropout == identity (eval)
    o_ref[0] = out.astype(o_ref.dtype)


def tcn_forward(y, x_res, prep, *, stride, has_res, conv_res, out_dtype):
    """y: (N, T, V, C) GCN output (bf16); x_res: STGC block input or None.
    Returns (N, T_out, V, C)."""
    N, T, V, C = y.shape
    Cout = C
    kt = prep["wt"].shape[0] // Cout
    half = (kt - 1) // 2
    T_out = (T - 1) // stride + 1
    assert stride in (1, 2)

    # output tile: ~1000-2000 (frame,joint) rows per grid step, multiple of 8
    if T_out * V <= 2048:
        TT = T_out
    else:
        TT = max(8, (1024 // V) // 8 * 8)
    n_tb = pl.cdiv(T_out, TT)

    # zero-pad T and split frames by stride-parity in the wrapper (one cheap XLA
    # copy, only for the stride-2 layer) so every tap is a contiguous row slice.
    GA = n_tb * TT + (kt - 1) // stride          # groups, incl. tail-block slack
    frames = GA * stride
    right = frames - T - half
    y_pad = jnp.pad(y, ((0, 0), (half, right), (0, 0), (0, 0)))
    y_grp = jnp.transpose(y_pad.reshape(N, GA, stride, V, C),
                          (0, 2, 1, 3, 4)).reshape(N, stride, GA * V, C)

    inputs = [y_grp]
    in_specs = [pl.BlockSpec((1, stride, GA * V, C), lambda n, t: (n, 0, 0, 0))]

    Cin = C
    if has_res:
        Cin = x_res.shape[-1]
        if stride > 1:
            x_res = x_res[:, ::stride]           # pre-strided residual (wrapper)
        x_flat = x_res.reshape(N, T_out * V, Cin).astype(jnp.bfloat16)
        inputs.append(x_flat)
        in_specs.append(pl.BlockSpec((1, TT * V, Cin), lambda n, t: (n, t, 0)))

    inputs += [prep["wt"], prep["s2"], prep["sh2"]]
    in_specs += [
        pl.BlockSpec((kt * C, Cout), lambda n, t: (0, 0)),
        pl.BlockSpec((1, Cout), lambda n, t: (0, 0)),
        pl.BlockSpec((1, Cout), lambda n, t: (0, 0)),
    ]
    if has_res and conv_res:
        inputs += [prep["wr"], prep["sr"], prep["shr"]]
        in_specs += [
            pl.BlockSpec((Cin, Cout), lambda n, t: (0, 0)),
            pl.BlockSpec((1, Cout), lambda n, t: (0, 0)),
            pl.BlockSpec((1, Cout), lambda n, t: (0, 0)),
        ]

    kernel = functools.partial(
        _tcn_kernel, stride=stride, TT=TT, V=V, C=C, kt=kt,
        has_res=has_res, conv_res=conv_res)

    out = pl.pallas_call(
        kernel,
        out_shape=jax.ShapeDtypeStruct((N, T_out * V, Cout), out_dtype),
        grid=(N, n_tb),
        in_specs=in_specs,
        out_specs=pl.BlockSpec((1, TT * V, Cout), lambda n, t: (n, t, 0)),
        scratch_shapes=[pltpu.VMEM((TT * V, kt * C), jnp.bfloat16)],
        compiler_params=pltpu.CompilerParams(
            dimension_semantics=("parallel", "arbitrary"),
            vmem_limit_bytes=_VMEM_LIMIT),
    )(*inputs)
    return out.reshape(N, T_out, V, Cout)


# ----------------------------------------------------------------------------
# STGC block + GFE_two forward
# ----------------------------------------------------------------------------
def stgc_forward(x, prep, *, stride, residual=True, out_dtype=jnp.bfloat16):
    """x: (N, T, V, Cin) channels-last bf16 -> (N, T_out, V, Cout)."""
    y = gcn_forward(x, prep)                            # graph conv + BN1 + ReLU
    has_res = residual
    conv_res = residual and ("wr" in prep)
    return tcn_forward(y, x if has_res else None, prep, stride=stride,
                       has_res=has_res, conv_res=conv_res, out_dtype=out_dtype)


def gfe_two_apply(x_nchw, preps, residual=True):
    """GFE_two.forward with pre-folded params: x (N, 64, T, V) NCHW,
    returns (N, 128, ceil(T/2), V)."""
    x = jnp.transpose(x_nchw, (0, 2, 3, 1)).astype(jnp.bfloat16)   # NCHW -> NTVC
    n_layers = len(preps)
    for li, (prep, s) in enumerate(zip(preps, _GFE_TWO_STRIDES)):
        last = li == n_layers - 1
        x = stgc_forward(x, prep, stride=s, residual=residual,
                         out_dtype=jnp.float32 if last else jnp.bfloat16)
    return jnp.transpose(x, (0, 3, 1, 2))                          # back to NCHW


def gfe_two_forward(x_nchw, A, params, residual=True):
    return gfe_two_apply(x_nchw, prepare_gfe_two(params, A), residual=residual)


# ----------------------------------------------------------------------------
# Deterministic parameter init (PyTorch Conv2d weight layouts, eval-mode BN)
# ----------------------------------------------------------------------------
def init_bn(key, C):
    k1, k2, k3, k4 = jax.random.split(key, 4)
    return dict(
        gamma=1.0 + 0.1 * jax.random.normal(k1, (C,), jnp.float32),
        beta=0.1 * jax.random.normal(k2, (C,), jnp.float32),
        mean=0.05 * jax.random.normal(k3, (C,), jnp.float32),
        var=1.0 + 0.1 * jax.random.uniform(k4, (C,), jnp.float32),
    )


def init_stgc(key, Cin, Cout, K, stride, kt=9):
    """Weights stored in PyTorch Conv2d layouts (out_ch leading):
       w_gcn (K*Cout, Cin)    ~ Conv2d(Cin, K*Cout, 1)
       w_t   (Cout, Cout, kt) ~ Conv2d(Cout, Cout, (kt,1))
       w_res (Cout, Cin)      ~ Conv2d(Cin, Cout, 1, stride)"""
    ks = jax.random.split(key, 9)
    p = dict(
        w_gcn=jax.random.normal(ks[0], (K * Cout, Cin), jnp.float32)
              / jnp.sqrt(float(Cin)),
        b_gcn=0.01 * jax.random.normal(ks[1], (K * Cout,), jnp.float32),
        w_t=jax.random.normal(ks[2], (Cout, Cout, kt), jnp.float32)
            / jnp.sqrt(float(kt * Cout)),
        b_t=0.01 * jax.random.normal(ks[3], (Cout,), jnp.float32),
        bn1=init_bn(ks[4], Cout),
        bn2=init_bn(ks[5], Cout),
    )
    if Cin != Cout or stride != 1:
        p["w_res"] = (jax.random.normal(ks[6], (Cout, Cin), jnp.float32)
                      / jnp.sqrt(float(Cin)))
        p["b_res"] = 0.01 * jax.random.normal(ks[7], (Cout,), jnp.float32)
        p["bn_res"] = init_bn(ks[8], Cout)
    return p


if __name__ == "__main__":
    key = jax.random.PRNGKey(0)
    kx, ka, kp = jax.random.split(key, 3)

    # Small shapes consistent with GFE_two: 64 input channels, K adjacency
    # kernels, V joints, T frames.
    N, Cin, T, V, K = 2, 64, 16, 8, 3

    x = jax.random.normal(kx, (N, Cin, T, V), jnp.float32)          # NCHW
    A = jax.nn.softmax(jax.random.normal(ka, (K, V, V), jnp.float32), axis=-1)

    layer_cfg = [(64, 128, 2), (128, 128, 1), (128, 128, 1)]
    keys = jax.random.split(kp, len(layer_cfg))
    params = [init_stgc(k, ci, co, K, s)
              for k, (ci, co, s) in zip(keys, layer_cfg)]

    # one-time parameter folding (hoisted out of the per-call forward)
    preps = prepare_gfe_two(params, A)

    fwd = jax.jit(functools.partial(gfe_two_apply, residual=True))
    out = jax.block_until_ready(fwd(x, preps))
    assert out.shape == (N, 128, T // 2, V), out.shape
    assert bool(jnp.all(jnp.isfinite(out)))
    print("KERNEL_OK")
</pallas_src>

<mosaic_0001>
module attributes {stable_mosaic.version = 11 : i64} {
  func.func @_gcn_kernel(%arg0: i32, %arg1: i32, %arg2: memref<16x512xbf16, #tpu.memory_space<vmem>>, %arg3: memref<512x1024xbf16, #tpu.memory_space<vmem>>, %arg4: memref<1x1024xf32, #tpu.memory_space<vmem>>, %arg5: memref<1x1024xf32, #tpu.memory_space<vmem>>, %arg6: memref<16x1024xbf16, #tpu.memory_space<vmem>>) attributes {dimension_semantics = [#tpu.dimension_semantics<parallel>, #tpu.dimension_semantics<parallel>], iteration_bounds = array<i64: 2, 1>, scalar_prefetch = 0 : i64, scratch_operands = 0 : i64, tpu.core_type = #tpu.core_type<tc>, window_params = [{transform_indices = @transform_0, window_bounds = array<i64: 16, 512>}, {transform_indices = @transform_1, window_bounds = array<i64: 512, 1024>}, {transform_indices = @transform_2, window_bounds = array<i64: 1, 1024>}, {transform_indices = @transform_3, window_bounds = array<i64: 1, 1024>}, {transform_indices = @transform_4, window_bounds = array<i64: 16, 1024>}]} {
    %c0 = arith.constant 0 : index
    %c0_0 = arith.constant 0 : index
    %0 = vector.load %arg2[%c0, %c0_0] : memref<16x512xbf16, #tpu.memory_space<vmem>>, vector<16x512xbf16>
    %c0_1 = arith.constant 0 : index
    %c0_2 = arith.constant 0 : index
    %1 = vector.load %arg3[%c0_1, %c0_2] : memref<512x1024xbf16, #tpu.memory_space<vmem>>, vector<512x1024xbf16>
    %cst = arith.constant dense<0.000000e+00> : vector<16x1024xf32>
    %2 = tpu.matmul %0, %1, %cst {dimension_numbers = #tpu.dot_dimension_numbers<[1], [0], [0], [1], [0, 0, 1, 1], [], []>} : vector<16x512xbf16>, vector<512x1024xbf16>, vector<16x1024xf32> -> vector<16x1024xf32>
    %c0_3 = arith.constant 0 : index
    %c0_4 = arith.constant 0 : index
    %3 = vector.load %arg4[%c0_3, %c0_4] : memref<1x1024xf32, #tpu.memory_space<vmem>>, vector<1x1024xf32>
    %4 = vector.broadcast %3 : vector<1x1024xf32> to vector<16x1024xf32>
    %5 = arith.mulf %2, %4 : vector<16x1024xf32>
    %c0_5 = arith.constant 0 : index
    %c0_6 = arith.constant 0 : index
    %6 = vector.load %arg5[%c0_5, %c0_6] : memref<1x1024xf32, #tpu.memory_space<vmem>>, vector<1x1024xf32>
    %7 = vector.broadcast %6 : vector<1x1024xf32> to vector<16x1024xf32>
    %8 = arith.addf %5, %7 : vector<16x1024xf32>
    %cst_7 = arith.constant 0.000000e+00 : f32
    %9 = vector.broadcast %cst_7 : f32 to vector<16x1024xf32>
    %10 = arith.maximumf %8, %9 : vector<16x1024xf32>
    %11 = arith.truncf %10 : vector<16x1024xf32> to vector<16x1024xbf16>
    %c0_8 = arith.constant 0 : index
    %c0_9 = arith.constant 0 : index
    %12 = vector.load %arg6[%c0_8, %c0_9] : memref<16x1024xbf16, #tpu.memory_space<vmem>>, vector<16x1024xbf16>
    tpu.vector_store %arg6[%c0_8, %c0_9], %11 {strides = array<i32>} : memref<16x1024xbf16, #tpu.memory_space<vmem>>, vector<16x1024xbf16>,
    return
  }
  func.func @transform_0(%arg0: i32, %arg1: i32) -> (i32, i32) {
    %c0_i32 = arith.constant 0 : i32
    %c0_i32_0 = arith.constant 0 : i32
    return %arg0, %c0_i32 : i32, i32
  }
  func.func @transform_1(%arg0: i32, %arg1: i32) -> (i32, i32) {
    %c0_i32 = arith.constant 0 : i32
    %c0_i32_0 = arith.constant 0 : i32
    return %c0_i32, %arg1 : i32, i32
  }
  func.func @transform_2(%arg0: i32, %arg1: i32) -> (i32, i32) {
    %c0_i32 = arith.constant 0 : i32
    %c0_i32_0 = arith.constant 0 : i32
    return %c0_i32, %arg1 : i32, i32
  }
  func.func @transform_3(%arg0: i32, %arg1: i32) -> (i32, i32) {
    %c0_i32 = arith.constant 0 : i32
    %c0_i32_0 = arith.constant 0 : i32
    return %c0_i32, %arg1 : i32, i32
  }
  func.func @transform_4(%arg0: i32, %arg1: i32) -> (i32, i32) {
    %c0_i32 = arith.constant 0 : i32
    return %arg0, %arg1 : i32, i32
  }
}

module attributes {stable_mosaic.version = 11 : i64} {
  func.func @_tcn_kernel(%arg0: i32, %arg1: i32, %arg2: memref<1x2x96x128xbf16, #tpu.memory_space<vmem>>, %arg3: memref<1x64x64xbf16, #tpu.memory_space<vmem>>, %arg4: memref<1152x128xbf16, #tpu.memory_space<vmem>>, %arg5: memref<1x128xf32, #tpu.memory_space<vmem>>, %arg6: memref<1x128xf32, #tpu.memory_space<vmem>>, %arg7: memref<64x128xbf16, #tpu.memory_space<vmem>>, %arg8: memref<1x128xf32, #tpu.memory_space<vmem>>, %arg9: memref<1x128xf32, #tpu.memory_space<vmem>>, %arg10: memref<1x64x128xbf16, #tpu.memory_space<vmem>>, %arg11: memref<64x1152xbf16, #tpu.memory_space<vmem>>) attributes {dimension_semantics = [#tpu.dimension_semantics<parallel>, #tpu.dimension_semantics<arbitrary>], iteration_bounds = array<i64: 2, 1>, scalar_prefetch = 0 : i64, scratch_operands = 1 : i64, tpu.core_type = #tpu.core_type<tc>, window_params = [{transform_indices = @transform_0, window_bounds = array<i64: 1, 2, 96, 128>}, {transform_indices = @transform_1, window_bounds = array<i64: 1, 64, 64>}, {pipeline_mode = #tpu.pipeline_mode<synchronous>, transform_indices = @transform_2, window_bounds = array<i64: 1152, 128>}, {pipeline_mode = #tpu.pipeline_mode<synchronous>, transform_indices = @transform_3, window_bounds = array<i64: 1, 128>}, {pipeline_mode = #tpu.pipeline_mode<synchronous>, transform_indices = @transform_4, window_bounds = array<i64: 1, 128>}, {pipeline_mode = #tpu.pipeline_mode<synchronous>, transform_indices = @transform_5, window_bounds = array<i64: 64, 128>}, {pipeline_mode = #tpu.pipeline_mode<synchronous>, transform_indices = @transform_6, window_bounds = array<i64: 1, 128>}, {pipeline_mode = #tpu.pipeline_mode<synchronous>, transform_indices = @transform_7, window_bounds = array<i64: 1, 128>}, {transform_indices = @transform_8, window_bounds = array<i64: 1, 64, 128>}]} {
    %c8_i32 = arith.constant 8 : i32
    %0 = arith.muli %arg1, %c8_i32 : i32
    %c0_i32 = arith.constant 0 : i32
    %1 = arith.addi %0, %c0_i32 : i32
    %c8_i32_0 = arith.constant 8 : i32
    %2 = arith.muli %1, %c8_i32_0 : i32
    %c0 = arith.constant 0 : index
    %c0_1 = arith.constant 0 : index
    %3 = arith.index_cast %2 : i32 to index
    %c0_2 = arith.constant 0 : index
    %4 = vector.load %arg2[%c0, %c0_1, %3, %c0_2] : memref<1x2x96x128xbf16, #tpu.memory_space<vmem>>, vector<1x1x64x128xbf16>
    %5 = vector.shape_cast %4 : vector<1x1x64x128xbf16> to vector<64x128xbf16>
    %c0_3 = arith.constant 0 : index
    %c0_4 = arith.constant 0 : index
    %6 = vector.load %arg11[%c0_3, %c0_4] : memref<64x1152xbf16, #tpu.memory_space<vmem>>, vector<64x128xbf16>
    tpu.vector_store %arg11[%c0_3, %c0_4], %5 {strides = array<i32>} : memref<64x1152xbf16, #tpu.memory_space<vmem>>, vector<64x128xbf16>,
    %c0_i32_5 = arith.constant 0 : i32
    %7 = arith.addi %0, %c0_i32_5 : i32
    %c8_i32_6 = arith.constant 8 : i32
    %8 = arith.muli %7, %c8_i32_6 : i32
    %c0_7 = arith.constant 0 : index
    %c1 = arith.constant 1 : index
    %9 = arith.index_cast %8 : i32 to index
    %c0_8 = arith.constant 0 : index
    %10 = vector.load %arg2[%c0_7, %c1, %9, %c0_8] : memref<1x2x96x128xbf16, #tpu.memory_space<vmem>>, vector<1x1x64x128xbf16>
    %11 = vector.shape_cast %10 : vector<1x1x64x128xbf16> to vector<64x128xbf16>
    %c0_9 = arith.constant 0 : index
    %c128 = arith.constant 128 : index
    %12 = vector.load %arg11[%c0_9, %c128] : memref<64x1152xbf16, #tpu.memory_space<vmem>>, vector<64x128xbf16>
    tpu.vector_store %arg11[%c0_9, %c128], %11 {strides = array<i32>} : memref<64x1152xbf16, #tpu.memory_space<vmem>>, vector<64x128xbf16>,
    %c1_i32 = arith.constant 1 : i32
    %13 = arith.addi %0, %c1_i32 : i32
    %c8_i32_10 = arith.constant 8 : i32
    %14 = arith.muli %13, %c8_i32_10 : i32
    %c0_11 = arith.constant 0 : index
    %c0_12 = arith.constant 0 : index
    %15 = arith.index_cast %14 : i32 to index
    %c0_13 = arith.constant 0 : index
    %16 = vector.load %arg2[%c0_11, %c0_12, %15, %c0_13] : memref<1x2x96x128xbf16, #tpu.memory_space<vmem>>, vector<1x1x64x128xbf16>
    %17 = vector.shape_cast %16 : vector<1x1x64x128xbf16> to vector<64x128xbf16>
    %c0_14 = arith.constant 0 : index
    %c256 = arith.constant 256 : index
    %18 = vector.load %arg11[%c0_14, %c256] : memref<64x1152xbf16, #tpu.memory_space<vmem>>, vector<64x128xbf16>
    tpu.vector_store %arg11[%c0_14, %c256], %17 {strides = array<i32>} : memref<64x1152xbf16, #tpu.memory_space<vmem>>, vector<64x128xbf16>,
    %c1_i32_15 = arith.constant 1 : i32
    %19 = arith.addi %0, %c1_i32_15 : i32
    %c8_i32_16 = arith.constant 8 : i32
    %20 = arith.muli %19, %c8_i32_16 : i32
    %c0_17 = arith.constant 0 : index
    %c1_18 = arith.constant 1 : index
    %21 = arith.index_cast %20 : i32 to index
    %c0_19 = arith.constant 0 : index
    %22 = vector.load %arg2[%c0_17, %c1_18, %21, %c0_19] : memref<1x2x96x128xbf16, #tpu.memory_space<vmem>>, vector<1x1x64x128xbf16>
    %23 = vector.shape_cast %22 : vector<1x1x64x128xbf16> to vector<64x128xbf16>
    %c0_20 = arith.constant 0 : index
    %c384 = arith.constant 384 : index
    %24 = vector.load %arg11[%c0_20, %c384] : memref<64x1152xbf16, #tpu.memory_space<vmem>>, vector<64x128xbf16>
    tpu.vector_store %arg11[%c0_20, %c384], %23 {strides = array<i32>} : memref<64x1152xbf16, #tpu.memory_space<vmem>>, vector<64x128xbf16>,
    %c2_i32 = arith.constant 2 : i32
    %25 = arith.addi %0, %c2_i32 : i32
    %c8_i32_21 = arith.constant 8 : i32
    %26 = arith.muli %25, %c8_i32_21 : i32
    %c0_22 = arith.constant 0 : index
    %c0_23 = arith.constant 0 : index
    %27 = arith.index_cast %26 : i32 to index
    %c0_24 = arith.constant 0 : index
    %28 = vector.load %arg2[%c0_22, %c0_23, %27, %c0_24] : memref<1x2x96x128xbf16, #tpu.memory_space<vmem>>, vector<1x1x64x128xbf16>
    %29 = vector.shape_cast %28 : vector<1x1x64x128xbf16> to vector<64x128xbf16>
    %c0_25 = arith.constant 0 : index
    %c512 = arith.constant 512 : index
    %30 = vector.load %arg11[%c0_25, %c512] : memref<64x1152xbf16, #tpu.memory_space<vmem>>, vector<64x128xbf16>
    tpu.vector_store %arg11[%c0_25, %c512], %29 {strides = array<i32>} : memref<64x1152xbf16, #tpu.memory_space<vmem>>, vector<64x128xbf16>,
    %c2_i32_26 = arith.constant 2 : i32
    %31 = arith.addi %0, %c2_i32_26 : i32
    %c8_i32_27 = arith.constant 8 : i32
    %32 = arith.muli %31, %c8_i32_27 : i32
    %c0_28 = arith.constant 0 : index
    %c1_29 = arith.constant 1 : index
    %33 = arith.index_cast %32 : i32 to index
    %c0_30 = arith.constant 0 : index
    %34 = vector.load %arg2[%c0_28, %c1_29, %33, %c0_30] : memref<1x2x96x128xbf16, #tpu.memory_space<vmem>>, vector<1x1x64x128xbf16>
    %35 = vector.shape_cast %34 : vector<1x1x64x128xbf16> to vector<64x128xbf16>
    %c0_31 = arith.constant 0 : index
    %c640 = arith.constant 640 : index
    %36 = vector.load %arg11[%c0_31, %c640] : memref<64x1152xbf16, #tpu.memory_space<vmem>>, vector<64x128xbf16>
    tpu.vector_store %arg11[%c0_31, %c640], %35 {strides = array<i32>} : memref<64x1152xbf16, #tpu.memory_space<vmem>>, vector<64x128xbf16>,
    %c3_i32 = arith.constant 3 : i32
    %37 = arith.addi %0, %c3_i32 : i32
    %c8_i32_32 = arith.constant 8 : i32
    %38 = arith.muli %37, %c8_i32_32 : i32
    %c0_33 = arith.constant 0 : index
    %c0_34 = arith.constant 0 : index
    %39 = arith.index_cast %38 : i32 to index
    %c0_35 = arith.constant 0 : index
    %40 = vector.load %arg2[%c0_33, %c0_34, %39, %c0_35] : memref<1x2x96x128xbf16, #tpu.memory_space<vmem>>, vector<1x1x64x128xbf16>
    %41 = vector.shape_cast %40 : vector<1x1x64x128xbf16> to vector<64x128xbf16>
    %c0_36 = arith.constant 0 : index
    %c768 = arith.constant 768 : index
    %42 = vector.load %arg11[%c0_36, %c768] : memref<64x1152xbf16, #tpu.memory_space<vmem>>, vector<64x128xbf16>
    tpu.vector_store %arg11[%c0_36, %c768], %41 {strides = array<i32>} : memref<64x1152xbf16, #tpu.memory_space<vmem>>, vector<64x128xbf16>,
    %c3_i32_37 = arith.constant 3 : i32
    %43 = arith.addi %0, %c3_i32_37 : i32
    %c8_i32_38 = arith.constant 8 : i32
    %44 = arith.muli %43, %c8_i32_38 : i32
    %c0_39 = arith.constant 0 : index
    %c1_40 = arith.constant 1 : index
    %45 = arith.index_cast %44 : i32 to index
    %c0_41 = arith.constant 0 : index
    %46 = vector.load %arg2[%c0_39, %c1_40, %45, %c0_41] : memref<1x2x96x128xbf16, #tpu.memory_space<vmem>>, vector<1x1x64x128xbf16>
    %47 = vector.shape_cast %46 : vector<1x1x64x128xbf16> to vector<64x128xbf16>
    %c0_42 = arith.constant 0 : index
    %c896 = arith.constant 896 : index
    %48 = vector.load %arg11[%c0_42, %c896] : memref<64x1152xbf16, #tpu.memory_space<vmem>>, vector<64x128xbf16>
    tpu.vector_store %arg11[%c0_42, %c896], %47 {strides = array<i32>} : memref<64x1152xbf16, #tpu.memory_space<vmem>>, vector<64x128xbf16>,
    %c4_i32 = arith.constant 4 : i32
    %49 = arith.addi %0, %c4_i32 : i32
    %c8_i32_43 = arith.constant 8 : i32
    %50 = arith.muli %49, %c8_i32_43 : i32
    %c0_44 = arith.constant 0 : index
    %c0_45 = arith.constant 0 : index
    %51 = arith.index_cast %50 : i32 to index
    %c0_46 = arith.constant 0 : index
    %52 = vector.load %arg2[%c0_44, %c0_45, %51, %c0_46] : memref<1x2x96x128xbf16, #tpu.memory_space<vmem>>, vector<1x1x64x128xbf16>
    %53 = vector.shape_cast %52 : vector<1x1x64x128xbf16> to vector<64x128xbf16>
    %c0_47 = arith.constant 0 : index
    %c1024 = arith.constant 1024 : index
    %54 = vector.load %arg11[%c0_47, %c1024] : memref<64x1152xbf16, #tpu.memory_space<vmem>>, vector<64x128xbf16>
    tpu.vector_store %arg11[%c0_47, %c1024], %53 {strides = array<i32>} : memref<64x1152xbf16, #tpu.memory_space<vmem>>, vector<64x128xbf16>,
    %c0_48 = arith.constant 0 : index
    %c0_49 = arith.constant 0 : index
    %55 = vector.load %arg11[%c0_48, %c0_49] : memref<64x1152xbf16, #tpu.memory_space<vmem>>, vector<64x1152xbf16>
    %c0_50 = arith.constant 0 : index
    %c0_51 = arith.constant 0 : index
    %56 = vector.load %arg4[%c0_50, %c0_51] : memref<1152x128xbf16, #tpu.memory_space<vmem>>, vector<1152x128xbf16>
    %cst = arith.constant dense<0.000000e+00> : vector<64x128xf32>
    %57 = tpu.matmul %55, %56, %cst {dimension_numbers = #tpu.dot_dimension_numbers<[1], [0], [0], [1], [0, 0, 1, 1], [], []>} : vector<64x1152xbf16>, vector<1152x128xbf16>, vector<64x128xf32> -> vector<64x128xf32>
    %c0_52 = arith.constant 0 : index
    %c0_53 = arith.constant 0 : index
    %58 = vector.load %arg5[%c0_52, %c0_53] : memref<1x128xf32, #tpu.memory_space<vmem>>, vector<1x128xf32>
    %59 = vector.broadcast %58 : vector<1x128xf32> to vector<64x128xf32>
    %60 = arith.mulf %57, %59 : vector<64x128xf32>
    %c0_54 = arith.constant 0 : index
    %c0_55 = arith.constant 0 : index
    %61 = vector.load %arg6[%c0_54, %c0_55] : memref<1x128xf32, #tpu.memory_space<vmem>>, vector<1x128xf32>
    %62 = vector.broadcast %61 : vector<1x128xf32> to vector<64x128xf32>
    %63 = arith.addf %60, %62 : vector<64x128xf32>
    %c0_56 = arith.constant 0 : index
    %c0_57 = arith.constant 0 : index
    %c0_58 = arith.constant 0 : index
    %64 = vector.load %arg3[%c0_56, %c0_57, %c0_58] : memref<1x64x64xbf16, #tpu.memory_space<vmem>>, vector<1x64x64xbf16>
    %65 = vector.shape_cast %64 : vector<1x64x64xbf16> to vector<64x64xbf16>
    %c0_59 = arith.constant 0 : index
    %c0_60 = arith.constant 0 : index
    %66 = vector.load %arg7[%c0_59, %c0_60] : memref<64x128xbf16, #tpu.memory_space<vmem>>, vector<64x128xbf16>
    %cst_61 = arith.constant dense<0.000000e+00> : vector<64x128xf32>
    %67 = tpu.matmul %65, %66, %cst_61 {dimension_numbers = #tpu.dot_dimension_numbers<[1], [0], [0], [1], [0, 0, 1, 1], [], []>} : vector<64x64xbf16>, vector<64x128xbf16>, vector<64x128xf32> -> vector<64x128xf32>
    %c0_62 = arith.constant 0 : index
    %c0_63 = arith.constant 0 : index
    %68 = vector.load %arg8[%c0_62, %c0_63] : memref<1x128xf32, #tpu.memory_space<vmem>>, vector<1x128xf32>
    %69 = vector.broadcast %68 : vector<1x128xf32> to vector<64x128xf32>
    %70 = arith.mulf %67, %69 : vector<64x128xf32>
    %c0_64 = arith.constant 0 : index
    %c0_65 = arith.constant 0 : index
    %71 = vector.load %arg9[%c0_64, %c0_65] : memref<1x128xf32, #tpu.memory_space<vmem>>, vector<1x128xf32>
    %72 = vector.broadcast %71 : vector<1x128xf32> to vector<64x128xf32>
    %73 = arith.addf %70, %72 : vector<64x128xf32>
    %74 = arith.addf %63, %73 : vector<64x128xf32>
    %cst_66 = arith.constant 0.000000e+00 : f32
    %75 = vector.broadcast %cst_66 : f32 to vector<64x128xf32>
    %76 = arith.maximumf %74, %75 : vector<64x128xf32>
    %77 = arith.truncf %76 : vector<64x128xf32> to vector<64x128xbf16>
    %c0_67 = arith.constant 0 : index
    %c0_68 = arith.constant 0 : index
    %c0_69 = arith.constant 0 : index
    %78 = vector.load %arg10[%c0_67, %c0_68, %c0_69] : memref<1x64x128xbf16, #tpu.memory_space<vmem>>, vector<1x64x128xbf16>
    %79 = vector.shape_cast %78 : vector<1x64x128xbf16> to vector<64x128xbf16>
    %80 = vector.shape_cast %77 : vector<64x128xbf16> to vector<1x64x128xbf16>
    tpu.vector_store %arg10[%c0_67, %c0_68, %c0_69], %80 {strides = array<i32>} : memref<1x64x128xbf16, #tpu.memory_space<vmem>>, vector<1x64x128xbf16>,
    return
  }
  func.func @transform_0(%arg0: i32, %arg1: i32) -> (i32, i32, i32, i32) {
    %c0_i32 = arith.constant 0 : i32
    %c0_i32_0 = arith.constant 0 : i32
    %c0_i32_1 = arith.constant 0 : i32
    %c0_i32_2 = arith.constant 0 : i32
    return %arg0, %c0_i32, %c0_i32_0, %c0_i32_1 : i32, i32, i32, i32
  }
  func.func @transform_1(%arg0: i32, %arg1: i32) -> (i32, i32, i32) {
    %c0_i32 = arith.constant 0 : i32
    %c0_i32_0 = arith.constant 0 : i32
    return %arg0, %arg1, %c0_i32 : i32, i32, i32
  }
  func.func @transform_2(%arg0: i32, %arg1: i32) -> (i32, i32) {
    %c0_i32 = arith.constant 0 : i32
    %c0_i32_0 = arith.constant 0 : i32
    %c0_i32_1 = arith.constant 0 : i32
    return %c0_i32, %c0_i32_0 : i32, i32
  }
  func.func @transform_3(%arg0: i32, %arg1: i32) -> (i32, i32) {
    %c0_i32 = arith.constant 0 : i32
    %c0_i32_0 = arith.constant 0 : i32
    %c0_i32_1 = arith.constant 0 : i32
    return %c0_i32, %c0_i32_0 : i32, i32
  }
  func.func @transform_4(%arg0: i32, %arg1: i32) -> (i32, i32) {
    %c0_i32 = arith.constant 0 : i32
    %c0_i32_0 = arith.constant 0 : i32
    %c0_i32_1 = arith.constant 0 : i32
    return %c0_i32, %c0_i32_0 : i32, i32
  }
  func.func @transform_5(%arg0: i32, %arg1: i32) -> (i32, i32) {
    %c0_i32 = arith.constant 0 : i32
    %c0_i32_0 = arith.constant 0 : i32
    %c0_i32_1 = arith.constant 0 : i32
    return %c0_i32, %c0_i32_0 : i32, i32
  }
  func.func @transform_6(%arg0: i32, %arg1: i32) -> (i32, i32) {
    %c0_i32 = arith.constant 0 : i32
    %c0_i32_0 = arith.constant 0 : i32
    %c0_i32_1 = arith.constant 0 : i32
    return %c0_i32, %c0_i32_0 : i32, i32
  }
  func.func @transform_7(%arg0: i32, %arg1: i32) -> (i32, i32) {
    %c0_i32 = arith.constant 0 : i32
    %c0_i32_0 = arith.constant 0 : i32
    %c0_i32_1 = arith.constant 0 : i32
    return %c0_i32, %c0_i32_0 : i32, i32
  }
  func.func @transform_8(%arg0: i32, %arg1: i32) -> (i32, i32, i32) {
    %c0_i32 = arith.constant 0 : i32
    %c0_i32_0 = arith.constant 0 : i32
    return %arg0, %arg1, %c0_i32 : i32, i32, i32
  }
}

module attributes {stable_mosaic.version = 11 : i64} {
  func.func @_gcn_kernel(%arg0: i32, %arg1: i32, %arg2: memref<8x1024xbf16, #tpu.memory_space<vmem>>, %arg3: memref<1024x1024xbf16, #tpu.memory_space<vmem>>, %arg4: memref<1x1024xf32, #tpu.memory_space<vmem>>, %arg5: memref<1x1024xf32, #tpu.memory_space<vmem>>, %arg6: memref<8x1024xbf16, #tpu.memory_space<vmem>>) attributes {dimension_semantics = [#tpu.dimension_semantics<parallel>, #tpu.dimension_semantics<parallel>], iteration_bounds = array<i64: 2, 1>, scalar_prefetch = 0 : i64, scratch_operands = 0 : i64, tpu.core_type = #tpu.core_type<tc>, window_params = [{transform_indices = @transform_0, window_bounds = array<i64: 8, 1024>}, {transform_indices = @transform_1, window_bounds = array<i64: 1024, 1024>}, {transform_indices = @transform_2, window_bounds = array<i64: 1, 1024>}, {transform_indices = @transform_3, window_bounds = array<i64: 1, 1024>}, {transform_indices = @transform_4, window_bounds = array<i64: 8, 1024>}]} {
    %c0 = arith.constant 0 : index
    %c0_0 = arith.constant 0 : index
    %0 = vector.load %arg2[%c0, %c0_0] : memref<8x1024xbf16, #tpu.memory_space<vmem>>, vector<8x1024xbf16>
    %c0_1 = arith.constant 0 : index
    %c0_2 = arith.constant 0 : index
    %1 = vector.load %arg3[%c0_1, %c0_2] : memref<1024x1024xbf16, #tpu.memory_space<vmem>>, vector<1024x1024xbf16>
    %cst = arith.constant dense<0.000000e+00> : vector<8x1024xf32>
    %2 = tpu.matmul %0, %1, %cst {dimension_numbers = #tpu.dot_dimension_numbers<[1], [0], [0], [1], [0, 0, 1, 1], [], []>} : vector<8x1024xbf16>, vector<1024x1024xbf16>, vector<8x1024xf32> -> vector<8x1024xf32>
    %c0_3 = arith.constant 0 : index
    %c0_4 = arith.constant 0 : index
    %3 = vector.load %arg4[%c0_3, %c0_4] : memref<1x1024xf32, #tpu.memory_space<vmem>>, vector<1x1024xf32>
    %4 = vector.broadcast %3 : vector<1x1024xf32> to vector<8x1024xf32>
    %5 = arith.mulf %2, %4 : vector<8x1024xf32>
    %c0_5 = arith.constant 0 : index
    %c0_6 = arith.constant 0 : index
    %6 = vector.load %arg5[%c0_5, %c0_6] : memref<1x1024xf32, #tpu.memory_space<vmem>>, vector<1x1024xf32>
    %7 = vector.broadcast %6 : vector<1x1024xf32> to vector<8x1024xf32>
    %8 = arith.addf %5, %7 : vector<8x1024xf32>
    %cst_7 = arith.constant 0.000000e+00 : f32
    %9 = vector.broadcast %cst_7 : f32 to vector<8x1024xf32>
    %10 = arith.maximumf %8, %9 : vector<8x1024xf32>
    %11 = arith.truncf %10 : vector<8x1024xf32> to vector<8x1024xbf16>
    %c0_8 = arith.constant 0 : index
    %c0_9 = arith.constant 0 : index
    %12 = vector.load %arg6[%c0_8, %c0_9] : memref<8x1024xbf16, #tpu.memory_space<vmem>>, vector<8x1024xbf16>
    tpu.vector_store %arg6[%c0_8, %c0_9], %11 {strides = array<i32>} : memref<8x1024xbf16, #tpu.memory_space<vmem>>, vector<8x1024xbf16>,
    return
  }
  func.func @transform_0(%arg0: i32, %arg1: i32) -> (i32, i32) {
    %c0_i32 = arith.constant 0 : i32
    %c0_i32_0 = arith.constant 0 : i32
    return %arg0, %c0_i32 : i32, i32
  }
  func.func @transform_1(%arg0: i32, %arg1: i32) -> (i32, i32) {
    %c0_i32 = arith.constant 0 : i32
    %c0_i32_0 = arith.constant 0 : i32
    return %c0_i32, %arg1 : i32, i32
  }
  func.func @transform_2(%arg0: i32, %arg1: i32) -> (i32, i32) {
    %c0_i32 = arith.constant 0 : i32
    %c0_i32_0 = arith.constant 0 : i32
    return %c0_i32, %arg1 : i32, i32
  }
  func.func @transform_3(%arg0: i32, %arg1: i32) -> (i32, i32) {
    %c0_i32 = arith.constant 0 : i32
    %c0_i32_0 = arith.constant 0 : i32
    return %c0_i32, %arg1 : i32, i32
  }
  func.func @transform_4(%arg0: i32, %arg1: i32) -> (i32, i32) {
    %c0_i32 = arith.constant 0 : i32
    return %arg0, %arg1 : i32, i32
  }
}

module attributes {stable_mosaic.version = 11 : i64} {
  func.func @_tcn_kernel(%arg0: i32, %arg1: i32, %arg2: memref<1x1x128x128xbf16, #tpu.memory_space<vmem>>, %arg3: memref<1x64x128xbf16, #tpu.memory_space<vmem>>, %arg4: memref<1152x128xbf16, #tpu.memory_space<vmem>>, %arg5: memref<1x128xf32, #tpu.memory_space<vmem>>, %arg6: memref<1x128xf32, #tpu.memory_space<vmem>>, %arg7: memref<1x64x128xbf16, #tpu.memory_space<vmem>>, %arg8: memref<64x1152xbf16, #tpu.memory_space<vmem>>) attributes {dimension_semantics = [#tpu.dimension_semantics<parallel>, #tpu.dimension_semantics<arbitrary>], iteration_bounds = array<i64: 2, 1>, scalar_prefetch = 0 : i64, scratch_operands = 1 : i64, tpu.core_type = #tpu.core_type<tc>, window_params = [{transform_indices = @transform_0, window_bounds = array<i64: 1, 1, 128, 128>}, {transform_indices = @transform_1, window_bounds = array<i64: 1, 64, 128>}, {pipeline_mode = #tpu.pipeline_mode<synchronous>, transform_indices = @transform_2, window_bounds = array<i64: 1152, 128>}, {pipeline_mode = #tpu.pipeline_mode<synchronous>, transform_indices = @transform_3, window_bounds = array<i64: 1, 128>}, {pipeline_mode = #tpu.pipeline_mode<synchronous>, transform_indices = @transform_4, window_bounds = array<i64: 1, 128>}, {transform_indices = @transform_5, window_bounds = array<i64: 1, 64, 128>}]} {
    %c8_i32 = arith.constant 8 : i32
    %0 = arith.muli %arg1, %c8_i32 : i32
    %c0_i32 = arith.constant 0 : i32
    %1 = arith.addi %0, %c0_i32 : i32
    %c8_i32_0 = arith.constant 8 : i32
    %2 = arith.muli %1, %c8_i32_0 : i32
    %c0 = arith.constant 0 : index
    %c0_1 = arith.constant 0 : index
    %3 = arith.index_cast %2 : i32 to index
    %c0_2 = arith.constant 0 : index
    %4 = vector.load %arg2[%c0, %c0_1, %3, %c0_2] : memref<1x1x128x128xbf16, #tpu.memory_space<vmem>>, vector<1x1x64x128xbf16>
    %5 = vector.shape_cast %4 : vector<1x1x64x128xbf16> to vector<64x128xbf16>
    %c0_3 = arith.constant 0 : index
    %c0_4 = arith.constant 0 : index
    %6 = vector.load %arg8[%c0_3, %c0_4] : memref<64x1152xbf16, #tpu.memory_space<vmem>>, vector<64x128xbf16>
    tpu.vector_store %arg8[%c0_3, %c0_4], %5 {strides = array<i32>} : memref<64x1152xbf16, #tpu.memory_space<vmem>>, vector<64x128xbf16>,
    %c1_i32 = arith.constant 1 : i32
    %7 = arith.addi %0, %c1_i32 : i32
    %c8_i32_5 = arith.constant 8 : i32
    %8 = arith.muli %7, %c8_i32_5 : i32
    %c0_6 = arith.constant 0 : index
    %c0_7 = arith.constant 0 : index
    %9 = arith.index_cast %8 : i32 to index
    %c0_8 = arith.constant 0 : index
    %10 = vector.load %arg2[%c0_6, %c0_7, %9, %c0_8] : memref<1x1x128x128xbf16, #tpu.memory_space<vmem>>, vector<1x1x64x128xbf16>
    %11 = vector.shape_cast %10 : vector<1x1x64x128xbf16> to vector<64x128xbf16>
    %c0_9 = arith.constant 0 : index
    %c128 = arith.constant 128 : index
    %12 = vector.load %arg8[%c0_9, %c128] : memref<64x1152xbf16, #tpu.memory_space<vmem>>, vector<64x128xbf16>
    tpu.vector_store %arg8[%c0_9, %c128], %11 {strides = array<i32>} : memref<64x1152xbf16, #tpu.memory_space<vmem>>, vector<64x128xbf16>,
    %c2_i32 = arith.constant 2 : i32
    %13 = arith.addi %0, %c2_i32 : i32
    %c8_i32_10 = arith.constant 8 : i32
    %14 = arith.muli %13, %c8_i32_10 : i32
    %c0_11 = arith.constant 0 : index
    %c0_12 = arith.constant 0 : index
    %15 = arith.index_cast %14 : i32 to index
    %c0_13 = arith.constant 0 : index
    %16 = vector.load %arg2[%c0_11, %c0_12, %15, %c0_13] : memref<1x1x128x128xbf16, #tpu.memory_space<vmem>>, vector<1x1x64x128xbf16>
    %17 = vector.shape_cast %16 : vector<1x1x64x128xbf16> to vector<64x128xbf16>
    %c0_14 = arith.constant 0 : index
    %c256 = arith.constant 256 : index
    %18 = vector.load %arg8[%c0_14, %c256] : memref<64x1152xbf16, #tpu.memory_space<vmem>>, vector<64x128xbf16>
    tpu.vector_store %arg8[%c0_14, %c256], %17 {strides = array<i32>} : memref<64x1152xbf16, #tpu.memory_space<vmem>>, vector<64x128xbf16>,
    %c3_i32 = arith.constant 3 : i32
    %19 = arith.addi %0, %c3_i32 : i32
    %c8_i32_15 = arith.constant 8 : i32
    %20 = arith.muli %19, %c8_i32_15 : i32
    %c0_16 = arith.constant 0 : index
    %c0_17 = arith.constant 0 : index
    %21 = arith.index_cast %20 : i32 to index
    %c0_18 = arith.constant 0 : index
    %22 = vector.load %arg2[%c0_16, %c0_17, %21, %c0_18] : memref<1x1x128x128xbf16, #tpu.memory_space<vmem>>, vector<1x1x64x128xbf16>
    %23 = vector.shape_cast %22 : vector<1x1x64x128xbf16> to vector<64x128xbf16>
    %c0_19 = arith.constant 0 : index
    %c384 = arith.constant 384 : index
    %24 = vector.load %arg8[%c0_19, %c384] : memref<64x1152xbf16, #tpu.memory_space<vmem>>, vector<64x128xbf16>
    tpu.vector_store %arg8[%c0_19, %c384], %23 {strides = array<i32>} : memref<64x1152xbf16, #tpu.memory_space<vmem>>, vector<64x128xbf16>,
    %c4_i32 = arith.constant 4 : i32
    %25 = arith.addi %0, %c4_i32 : i32
    %c8_i32_20 = arith.constant 8 : i32
    %26 = arith.muli %25, %c8_i32_20 : i32
    %c0_21 = arith.constant 0 : index
    %c0_22 = arith.constant 0 : index
    %27 = arith.index_cast %26 : i32 to index
    %c0_23 = arith.constant 0 : index
    %28 = vector.load %arg2[%c0_21, %c0_22, %27, %c0_23] : memref<1x1x128x128xbf16, #tpu.memory_space<vmem>>, vector<1x1x64x128xbf16>
    %29 = vector.shape_cast %28 : vector<1x1x64x128xbf16> to vector<64x128xbf16>
    %c0_24 = arith.constant 0 : index
    %c512 = arith.constant 512 : index
    %30 = vector.load %arg8[%c0_24, %c512] : memref<64x1152xbf16, #tpu.memory_space<vmem>>, vector<64x128xbf16>
    tpu.vector_store %arg8[%c0_24, %c512], %29 {strides = array<i32>} : memref<64x1152xbf16, #tpu.memory_space<vmem>>, vector<64x128xbf16>,
    %c5_i32 = arith.constant 5 : i32
    %31 = arith.addi %0, %c5_i32 : i32
    %c8_i32_25 = arith.constant 8 : i32
    %32 = arith.muli %31, %c8_i32_25 : i32
    %c0_26 = arith.constant 0 : index
    %c0_27 = arith.constant 0 : index
    %33 = arith.index_cast %32 : i32 to index
    %c0_28 = arith.constant 0 : index
    %34 = vector.load %arg2[%c0_26, %c0_27, %33, %c0_28] : memref<1x1x128x128xbf16, #tpu.memory_space<vmem>>, vector<1x1x64x128xbf16>
    %35 = vector.shape_cast %34 : vector<1x1x64x128xbf16> to vector<64x128xbf16>
    %c0_29 = arith.constant 0 : index
    %c640 = arith.constant 640 : index
    %36 = vector.load %arg8[%c0_29, %c640] : memref<64x1152xbf16, #tpu.memory_space<vmem>>, vector<64x128xbf16>
    tpu.vector_store %arg8[%c0_29, %c640], %35 {strides = array<i32>} : memref<64x1152xbf16, #tpu.memory_space<vmem>>, vector<64x128xbf16>,
    %c6_i32 = arith.constant 6 : i32
    %37 = arith.addi %0, %c6_i32 : i32
    %c8_i32_30 = arith.constant 8 : i32
    %38 = arith.muli %37, %c8_i32_30 : i32
    %c0_31 = arith.constant 0 : index
    %c0_32 = arith.constant 0 : index
    %39 = arith.index_cast %38 : i32 to index
    %c0_33 = arith.constant 0 : index
    %40 = vector.load %arg2[%c0_31, %c0_32, %39, %c0_33] : memref<1x1x128x128xbf16, #tpu.memory_space<vmem>>, vector<1x1x64x128xbf16>
    %41 = vector.shape_cast %40 : vector<1x1x64x128xbf16> to vector<64x128xbf16>
    %c0_34 = arith.constant 0 : index
    %c768 = arith.constant 768 : index
    %42 = vector.load %arg8[%c0_34, %c768] : memref<64x1152xbf16, #tpu.memory_space<vmem>>, vector<64x128xbf16>
    tpu.vector_store %arg8[%c0_34, %c768], %41 {strides = array<i32>} : memref<64x1152xbf16, #tpu.memory_space<vmem>>, vector<64x128xbf16>,
    %c7_i32 = arith.constant 7 : i32
    %43 = arith.addi %0, %c7_i32 : i32
    %c8_i32_35 = arith.constant 8 : i32
    %44 = arith.muli %43, %c8_i32_35 : i32
    %c0_36 = arith.constant 0 : index
    %c0_37 = arith.constant 0 : index
    %45 = arith.index_cast %44 : i32 to index
    %c0_38 = arith.constant 0 : index
    %46 = vector.load %arg2[%c0_36, %c0_37, %45, %c0_38] : memref<1x1x128x128xbf16, #tpu.memory_space<vmem>>, vector<1x1x64x128xbf16>
    %47 = vector.shape_cast %46 : vector<1x1x64x128xbf16> to vector<64x128xbf16>
    %c0_39 = arith.constant 0 : index
    %c896 = arith.constant 896 : index
    %48 = vector.load %arg8[%c0_39, %c896] : memref<64x1152xbf16, #tpu.memory_space<vmem>>, vector<64x128xbf16>
    tpu.vector_store %arg8[%c0_39, %c896], %47 {strides = array<i32>} : memref<64x1152xbf16, #tpu.memory_space<vmem>>, vector<64x128xbf16>,
    %c8_i32_40 = arith.constant 8 : i32
    %49 = arith.addi %0, %c8_i32_40 : i32
    %c8_i32_41 = arith.constant 8 : i32
    %50 = arith.muli %49, %c8_i32_41 : i32
    %c0_42 = arith.constant 0 : index
    %c0_43 = arith.constant 0 : index
    %51 = arith.index_cast %50 : i32 to index
    %c0_44 = arith.constant 0 : index
    %52 = vector.load %arg2[%c0_42, %c0_43, %51, %c0_44] : memref<1x1x128x128xbf16, #tpu.memory_space<vmem>>, vector<1x1x64x128xbf16>
    %53 = vector.shape_cast %52 : vector<1x1x64x128xbf16> to vector<64x128xbf16>
    %c0_45 = arith.constant 0 : index
    %c1024 = arith.constant 1024 : index
    %54 = vector.load %arg8[%c0_45, %c1024] : memref<64x1152xbf16, #tpu.memory_space<vmem>>, vector<64x128xbf16>
    tpu.vector_store %arg8[%c0_45, %c1024], %53 {strides = array<i32>} : memref<64x1152xbf16, #tpu.memory_space<vmem>>, vector<64x128xbf16>,
    %c0_46 = arith.constant 0 : index
    %c0_47 = arith.constant 0 : index
    %55 = vector.load %arg8[%c0_46, %c0_47] : memref<64x1152xbf16, #tpu.memory_space<vmem>>, vector<64x1152xbf16>
    %c0_48 = arith.constant 0 : index
    %c0_49 = arith.constant 0 : index
    %56 = vector.load %arg4[%c0_48, %c0_49] : memref<1152x128xbf16, #tpu.memory_space<vmem>>, vector<1152x128xbf16>
    %cst = arith.constant dense<0.000000e+00> : vector<64x128xf32>
    %57 = tpu.matmul %55, %56, %cst {dimension_numbers = #tpu.dot_dimension_numbers<[1], [0], [0], [1], [0, 0, 1, 1], [], []>} : vector<64x1152xbf16>, vector<1152x128xbf16>, vector<64x128xf32> -> vector<64x128xf32>
    %c0_50 = arith.constant 0 : index
    %c0_51 = arith.constant 0 : index
    %58 = vector.load %arg5[%c0_50, %c0_51] : memref<1x128xf32, #tpu.memory_space<vmem>>, vector<1x128xf32>
    %59 = vector.broadcast %58 : vector<1x128xf32> to vector<64x128xf32>
    %60 = arith.mulf %57, %59 : vector<64x128xf32>
    %c0_52 = arith.constant 0 : index
    %c0_53 = arith.constant 0 : index
    %61 = vector.load %arg6[%c0_52, %c0_53] : memref<1x128xf32, #tpu.memory_space<vmem>>, vector<1x128xf32>
    %62 = vector.broadcast %61 : vector<1x128xf32> to vector<64x128xf32>
    %63 = arith.addf %60, %62 : vector<64x128xf32>
    %c0_54 = arith.constant 0 : index
    %c0_55 = arith.constant 0 : index
    %c0_56 = arith.constant 0 : index
    %64 = vector.load %arg3[%c0_54, %c0_55, %c0_56] : memref<1x64x128xbf16, #tpu.memory_space<vmem>>, vector<1x64x128xbf16>
    %65 = vector.shape_cast %64 : vector<1x64x128xbf16> to vector<64x128xbf16>
    %66 = arith.extf %65 : vector<64x128xbf16> to vector<64x128xf32>
    %67 = arith.addf %63, %66 : vector<64x128xf32>
    %cst_57 = arith.constant 0.000000e+00 : f32
    %68 = vector.broadcast %cst_57 : f32 to vector<64x128xf32>
    %69 = arith.maximumf %67, %68 : vector<64x128xf32>
    %70 = arith.truncf %69 : vector<64x128xf32> to vector<64x128xbf16>
    %c0_58 = arith.constant 0 : index
    %c0_59 = arith.constant 0 : index
    %c0_60 = arith.constant 0 : index
    %71 = vector.load %arg7[%c0_58, %c0_59, %c0_60] : memref<1x64x128xbf16, #tpu.memory_space<vmem>>, vector<1x64x128xbf16>
    %72 = vector.shape_cast %71 : vector<1x64x128xbf16> to vector<64x128xbf16>
    %73 = vector.shape_cast %70 : vector<64x128xbf16> to vector<1x64x128xbf16>
    tpu.vector_store %arg7[%c0_58, %c0_59, %c0_60], %73 {strides = array<i32>} : memref<1x64x128xbf16, #tpu.memory_space<vmem>>, vector<1x64x128xbf16>,
    return
  }
  func.func @transform_0(%arg0: i32, %arg1: i32) -> (i32, i32, i32, i32) {
    %c0_i32 = arith.constant 0 : i32
    %c0_i32_0 = arith.constant 0 : i32
    %c0_i32_1 = arith.constant 0 : i32
    %c0_i32_2 = arith.constant 0 : i32
    return %arg0, %c0_i32, %c0_i32_0, %c0_i32_1 : i32, i32, i32, i32
  }
  func.func @transform_1(%arg0: i32, %arg1: i32) -> (i32, i32, i32) {
    %c0_i32 = arith.constant 0 : i32
    %c0_i32_0 = arith.constant 0 : i32
    return %arg0, %arg1, %c0_i32 : i32, i32, i32
  }
  func.func @transform_2(%arg0: i32, %arg1: i32) -> (i32, i32) {
    %c0_i32 = arith.constant 0 : i32
    %c0_i32_0 = arith.constant 0 : i32
    %c0_i32_1 = arith.constant 0 : i32
    return %c0_i32, %c0_i32_0 : i32, i32
  }
  func.func @transform_3(%arg0: i32, %arg1: i32) -> (i32, i32) {
    %c0_i32 = arith.constant 0 : i32
    %c0_i32_0 = arith.constant 0 : i32
    %c0_i32_1 = arith.constant 0 : i32
    return %c0_i32, %c0_i32_0 : i32, i32
  }
  func.func @transform_4(%arg0: i32, %arg1: i32) -> (i32, i32) {
    %c0_i32 = arith.constant 0 : i32
    %c0_i32_0 = arith.constant 0 : i32
    %c0_i32_1 = arith.constant 0 : i32
    return %c0_i32, %c0_i32_0 : i32, i32
  }
  func.func @transform_5(%arg0: i32, %arg1: i32) -> (i32, i32, i32) {
    %c0_i32 = arith.constant 0 : i32
    %c0_i32_0 = arith.constant 0 : i32
    return %arg0, %arg1, %c0_i32 : i32, i32, i32
  }
}

module attributes {stable_mosaic.version = 11 : i64} {
  func.func @_tcn_kernel(%arg0: i32, %arg1: i32, %arg2: memref<1x1x128x128xbf16, #tpu.memory_space<vmem>>, %arg3: memref<1x64x128xbf16, #tpu.memory_space<vmem>>, %arg4: memref<1152x128xbf16, #tpu.memory_space<vmem>>, %arg5: memref<1x128xf32, #tpu.memory_space<vmem>>, %arg6: memref<1x128xf32, #tpu.memory_space<vmem>>, %arg7: memref<1x64x128xf32, #tpu.memory_space<vmem>>, %arg8: memref<64x1152xbf16, #tpu.memory_space<vmem>>) attributes {dimension_semantics = [#tpu.dimension_semantics<parallel>, #tpu.dimension_semantics<arbitrary>], iteration_bounds = array<i64: 2, 1>, scalar_prefetch = 0 : i64, scratch_operands = 1 : i64, tpu.core_type = #tpu.core_type<tc>, window_params = [{transform_indices = @transform_0, window_bounds = array<i64: 1, 1, 128, 128>}, {transform_indices = @transform_1, window_bounds = array<i64: 1, 64, 128>}, {pipeline_mode = #tpu.pipeline_mode<synchronous>, transform_indices = @transform_2, window_bounds = array<i64: 1152, 128>}, {pipeline_mode = #tpu.pipeline_mode<synchronous>, transform_indices = @transform_3, window_bounds = array<i64: 1, 128>}, {pipeline_mode = #tpu.pipeline_mode<synchronous>, transform_indices = @transform_4, window_bounds = array<i64: 1, 128>}, {transform_indices = @transform_5, window_bounds = array<i64: 1, 64, 128>}]} {
    %c8_i32 = arith.constant 8 : i32
    %0 = arith.muli %arg1, %c8_i32 : i32
    %c0_i32 = arith.constant 0 : i32
    %1 = arith.addi %0, %c0_i32 : i32
    %c8_i32_0 = arith.constant 8 : i32
    %2 = arith.muli %1, %c8_i32_0 : i32
    %c0 = arith.constant 0 : index
    %c0_1 = arith.constant 0 : index
    %3 = arith.index_cast %2 : i32 to index
    %c0_2 = arith.constant 0 : index
    %4 = vector.load %arg2[%c0, %c0_1, %3, %c0_2] : memref<1x1x128x128xbf16, #tpu.memory_space<vmem>>, vector<1x1x64x128xbf16>
    %5 = vector.shape_cast %4 : vector<1x1x64x128xbf16> to vector<64x128xbf16>
    %c0_3 = arith.constant 0 : index
    %c0_4 = arith.constant 0 : index
    %6 = vector.load %arg8[%c0_3, %c0_4] : memref<64x1152xbf16, #tpu.memory_space<vmem>>, vector<64x128xbf16>
    tpu.vector_store %arg8[%c0_3, %c0_4], %5 {strides = array<i32>} : memref<64x1152xbf16, #tpu.memory_space<vmem>>, vector<64x128xbf16>,
    %c1_i32 = arith.constant 1 : i32
    %7 = arith.addi %0, %c1_i32 : i32
    %c8_i32_5 = arith.constant 8 : i32
    %8 = arith.muli %7, %c8_i32_5 : i32
    %c0_6 = arith.constant 0 : index
    %c0_7 = arith.constant 0 : index
    %9 = arith.index_cast %8 : i32 to index
    %c0_8 = arith.constant 0 : index
    %10 = vector.load %arg2[%c0_6, %c0_7, %9, %c0_8] : memref<1x1x128x128xbf16, #tpu.memory_space<vmem>>, vector<1x1x64x128xbf16>
    %11 = vector.shape_cast %10 : vector<1x1x64x128xbf16> to vector<64x128xbf16>
    %c0_9 = arith.constant 0 : index
    %c128 = arith.constant 128 : index
    %12 = vector.load %arg8[%c0_9, %c128] : memref<64x1152xbf16, #tpu.memory_space<vmem>>, vector<64x128xbf16>
    tpu.vector_store %arg8[%c0_9, %c128], %11 {strides = array<i32>} : memref<64x1152xbf16, #tpu.memory_space<vmem>>, vector<64x128xbf16>,
    %c2_i32 = arith.constant 2 : i32
    %13 = arith.addi %0, %c2_i32 : i32
    %c8_i32_10 = arith.constant 8 : i32
    %14 = arith.muli %13, %c8_i32_10 : i32
    %c0_11 = arith.constant 0 : index
    %c0_12 = arith.constant 0 : index
    %15 = arith.index_cast %14 : i32 to index
    %c0_13 = arith.constant 0 : index
    %16 = vector.load %arg2[%c0_11, %c0_12, %15, %c0_13] : memref<1x1x128x128xbf16, #tpu.memory_space<vmem>>, vector<1x1x64x128xbf16>
    %17 = vector.shape_cast %16 : vector<1x1x64x128xbf16> to vector<64x128xbf16>
    %c0_14 = arith.constant 0 : index
    %c256 = arith.constant 256 : index
    %18 = vector.load %arg8[%c0_14, %c256] : memref<64x1152xbf16, #tpu.memory_space<vmem>>, vector<64x128xbf16>
    tpu.vector_store %arg8[%c0_14, %c256], %17 {strides = array<i32>} : memref<64x1152xbf16, #tpu.memory_space<vmem>>, vector<64x128xbf16>,
    %c3_i32 = arith.constant 3 : i32
    %19 = arith.addi %0, %c3_i32 : i32
    %c8_i32_15 = arith.constant 8 : i32
    %20 = arith.muli %19, %c8_i32_15 : i32
    %c0_16 = arith.constant 0 : index
    %c0_17 = arith.constant 0 : index
    %21 = arith.index_cast %20 : i32 to index
    %c0_18 = arith.constant 0 : index
    %22 = vector.load %arg2[%c0_16, %c0_17, %21, %c0_18] : memref<1x1x128x128xbf16, #tpu.memory_space<vmem>>, vector<1x1x64x128xbf16>
    %23 = vector.shape_cast %22 : vector<1x1x64x128xbf16> to vector<64x128xbf16>
    %c0_19 = arith.constant 0 : index
    %c384 = arith.constant 384 : index
    %24 = vector.load %arg8[%c0_19, %c384] : memref<64x1152xbf16, #tpu.memory_space<vmem>>, vector<64x128xbf16>
    tpu.vector_store %arg8[%c0_19, %c384], %23 {strides = array<i32>} : memref<64x1152xbf16, #tpu.memory_space<vmem>>, vector<64x128xbf16>,
    %c4_i32 = arith.constant 4 : i32
    %25 = arith.addi %0, %c4_i32 : i32
    %c8_i32_20 = arith.constant 8 : i32
    %26 = arith.muli %25, %c8_i32_20 : i32
    %c0_21 = arith.constant 0 : index
    %c0_22 = arith.constant 0 : index
    %27 = arith.index_cast %26 : i32 to index
    %c0_23 = arith.constant 0 : index
    %28 = vector.load %arg2[%c0_21, %c0_22, %27, %c0_23] : memref<1x1x128x128xbf16, #tpu.memory_space<vmem>>, vector<1x1x64x128xbf16>
    %29 = vector.shape_cast %28 : vector<1x1x64x128xbf16> to vector<64x128xbf16>
    %c0_24 = arith.constant 0 : index
    %c512 = arith.constant 512 : index
    %30 = vector.load %arg8[%c0_24, %c512] : memref<64x1152xbf16, #tpu.memory_space<vmem>>, vector<64x128xbf16>
    tpu.vector_store %arg8[%c0_24, %c512], %29 {strides = array<i32>} : memref<64x1152xbf16, #tpu.memory_space<vmem>>, vector<64x128xbf16>,
    %c5_i32 = arith.constant 5 : i32
    %31 = arith.addi %0, %c5_i32 : i32
    %c8_i32_25 = arith.constant 8 : i32
    %32 = arith.muli %31, %c8_i32_25 : i32
    %c0_26 = arith.constant 0 : index
    %c0_27 = arith.constant 0 : index
    %33 = arith.index_cast %32 : i32 to index
    %c0_28 = arith.constant 0 : index
    %34 = vector.load %arg2[%c0_26, %c0_27, %33, %c0_28] : memref<1x1x128x128xbf16, #tpu.memory_space<vmem>>, vector<1x1x64x128xbf16>
    %35 = vector.shape_cast %34 : vector<1x1x64x128xbf16> to vector<64x128xbf16>
    %c0_29 = arith.constant 0 : index
    %c640 = arith.constant 640 : index
    %36 = vector.load %arg8[%c0_29, %c640] : memref<64x1152xbf16, #tpu.memory_space<vmem>>, vector<64x128xbf16>
    tpu.vector_store %arg8[%c0_29, %c640], %35 {strides = array<i32>} : memref<64x1152xbf16, #tpu.memory_space<vmem>>, vector<64x128xbf16>,
    %c6_i32 = arith.constant 6 : i32
    %37 = arith.addi %0, %c6_i32 : i32
    %c8_i32_30 = arith.constant 8 : i32
    %38 = arith.muli %37, %c8_i32_30 : i32
    %c0_31 = arith.constant 0 : index
    %c0_32 = arith.constant 0 : index
    %39 = arith.index_cast %38 : i32 to index
    %c0_33 = arith.constant 0 : index
    %40 = vector.load %arg2[%c0_31, %c0_32, %39, %c0_33] : memref<1x1x128x128xbf16, #tpu.memory_space<vmem>>, vector<1x1x64x128xbf16>
    %41 = vector.shape_cast %40 : vector<1x1x64x128xbf16> to vector<64x128xbf16>
    %c0_34 = arith.constant 0 : index
    %c768 = arith.constant 768 : index
    %42 = vector.load %arg8[%c0_34, %c768] : memref<64x1152xbf16, #tpu.memory_space<vmem>>, vector<64x128xbf16>
    tpu.vector_store %arg8[%c0_34, %c768], %41 {strides = array<i32>} : memref<64x1152xbf16, #tpu.memory_space<vmem>>, vector<64x128xbf16>,
    %c7_i32 = arith.constant 7 : i32
    %43 = arith.addi %0, %c7_i32 : i32
    %c8_i32_35 = arith.constant 8 : i32
    %44 = arith.muli %43, %c8_i32_35 : i32
    %c0_36 = arith.constant 0 : index
    %c0_37 = arith.constant 0 : index
    %45 = arith.index_cast %44 : i32 to index
    %c0_38 = arith.constant 0 : index
    %46 = vector.load %arg2[%c0_36, %c0_37, %45, %c0_38] : memref<1x1x128x128xbf16, #tpu.memory_space<vmem>>, vector<1x1x64x128xbf16>
    %47 = vector.shape_cast %46 : vector<1x1x64x128xbf16> to vector<64x128xbf16>
    %c0_39 = arith.constant 0 : index
    %c896 = arith.constant 896 : index
    %48 = vector.load %arg8[%c0_39, %c896] : memref<64x1152xbf16, #tpu.memory_space<vmem>>, vector<64x128xbf16>
    tpu.vector_store %arg8[%c0_39, %c896], %47 {strides = array<i32>} : memref<64x1152xbf16, #tpu.memory_space<vmem>>, vector<64x128xbf16>,
    %c8_i32_40 = arith.constant 8 : i32
    %49 = arith.addi %0, %c8_i32_40 : i32
    %c8_i32_41 = arith.constant 8 : i32
    %50 = arith.muli %49, %c8_i32_41 : i32
    %c0_42 = arith.constant 0 : index
    %c0_43 = arith.constant 0 : index
    %51 = arith.index_cast %50 : i32 to index
    %c0_44 = arith.constant 0 : index
    %52 = vector.load %arg2[%c0_42, %c0_43, %51, %c0_44] : memref<1x1x128x128xbf16, #tpu.memory_space<vmem>>, vector<1x1x64x128xbf16>
    %53 = vector.shape_cast %52 : vector<1x1x64x128xbf16> to vector<64x128xbf16>
    %c0_45 = arith.constant 0 : index
    %c1024 = arith.constant 1024 : index
    %54 = vector.load %arg8[%c0_45, %c1024] : memref<64x1152xbf16, #tpu.memory_space<vmem>>, vector<64x128xbf16>
    tpu.vector_store %arg8[%c0_45, %c1024], %53 {strides = array<i32>} : memref<64x1152xbf16, #tpu.memory_space<vmem>>, vector<64x128xbf16>,
    %c0_46 = arith.constant 0 : index
    %c0_47 = arith.constant 0 : index
    %55 = vector.load %arg8[%c0_46, %c0_47] : memref<64x1152xbf16, #tpu.memory_space<vmem>>, vector<64x1152xbf16>
    %c0_48 = arith.constant 0 : index
    %c0_49 = arith.constant 0 : index
    %56 = vector.load %arg4[%c0_48, %c0_49] : memref<1152x128xbf16, #tpu.memory_space<vmem>>, vector<1152x128xbf16>
    %cst = arith.constant dense<0.000000e+00> : vector<64x128xf32>
    %57 = tpu.matmul %55, %56, %cst {dimension_numbers = #tpu.dot_dimension_numbers<[1], [0], [0], [1], [0, 0, 1, 1], [], []>} : vector<64x1152xbf16>, vector<1152x128xbf16>, vector<64x128xf32> -> vector<64x128xf32>
    %c0_50 = arith.constant 0 : index
    %c0_51 = arith.constant 0 : index
    %58 = vector.load %arg5[%c0_50, %c0_51] : memref<1x128xf32, #tpu.memory_space<vmem>>, vector<1x128xf32>
    %59 = vector.broadcast %58 : vector<1x128xf32> to vector<64x128xf32>
    %60 = arith.mulf %57, %59 : vector<64x128xf32>
    %c0_52 = arith.constant 0 : index
    %c0_53 = arith.constant 0 : index
    %61 = vector.load %arg6[%c0_52, %c0_53] : memref<1x128xf32, #tpu.memory_space<vmem>>, vector<1x128xf32>
    %62 = vector.broadcast %61 : vector<1x128xf32> to vector<64x128xf32>
    %63 = arith.addf %60, %62 : vector<64x128xf32>
    %c0_54 = arith.constant 0 : index
    %c0_55 = arith.constant 0 : index
    %c0_56 = arith.constant 0 : index
    %64 = vector.load %arg3[%c0_54, %c0_55, %c0_56] : memref<1x64x128xbf16, #tpu.memory_space<vmem>>, vector<1x64x128xbf16>
    %65 = vector.shape_cast %64 : vector<1x64x128xbf16> to vector<64x128xbf16>
    %66 = arith.extf %65 : vector<64x128xbf16> to vector<64x128xf32>
    %67 = arith.addf %63, %66 : vector<64x128xf32>
    %cst_57 = arith.constant 0.000000e+00 : f32
    %68 = vector.broadcast %cst_57 : f32 to vector<64x128xf32>
    %69 = arith.maximumf %67, %68 : vector<64x128xf32>
    %c0_58 = arith.constant 0 : index
    %c0_59 = arith.constant 0 : index
    %c0_60 = arith.constant 0 : index
    %70 = vector.load %arg7[%c0_58, %c0_59, %c0_60] : memref<1x64x128xf32, #tpu.memory_space<vmem>>, vector<1x64x128xf32>
    %71 = vector.shape_cast %70 : vector<1x64x128xf32> to vector<64x128xf32>
    %72 = vector.shape_cast %69 : vector<64x128xf32> to vector<1x64x128xf32>
    tpu.vector_store %arg7[%c0_58, %c0_59, %c0_60], %72 {strides = array<i32>} : memref<1x64x128xf32, #tpu.memory_space<vmem>>, vector<1x64x128xf32>,
    return
  }
  func.func @transform_0(%arg0: i32, %arg1: i32) -> (i32, i32, i32, i32) {
    %c0_i32 = arith.constant 0 : i32
    %c0_i32_0 = arith.constant 0 : i32
    %c0_i32_1 = arith.constant 0 : i32
    %c0_i32_2 = arith.constant 0 : i32
    return %arg0, %c0_i32, %c0_i32_0, %c0_i32_1 : i32, i32, i32, i32
  }
  func.func @transform_1(%arg0: i32, %arg1: i32) -> (i32, i32, i32) {
    %c0_i32 = arith.constant 0 : i32
    %c0_i32_0 = arith.constant 0 : i32
    return %arg0, %arg1, %c0_i32 : i32, i32, i32
  }
  func.func @transform_2(%arg0: i32, %arg1: i32) -> (i32, i32) {
    %c0_i32 = arith.constant 0 : i32
    %c0_i32_0 = arith.constant 0 : i32
    %c0_i32_1 = arith.constant 0 : i32
    return %c0_i32, %c0_i32_0 : i32, i32
  }
  func.func @transform_3(%arg0: i32, %arg1: i32) -> (i32, i32) {
    %c0_i32 = arith.constant 0 : i32
    %c0_i32_0 = arith.constant 0 : i32
    %c0_i32_1 = arith.constant 0 : i32
    return %c0_i32, %c0_i32_0 : i32, i32
  }
  func.func @transform_4(%arg0: i32, %arg1: i32) -> (i32, i32) {
    %c0_i32 = arith.constant 0 : i32
    %c0_i32_0 = arith.constant 0 : i32
    %c0_i32_1 = arith.constant 0 : i32
    return %c0_i32, %c0_i32_0 : i32, i32
  }
  func.func @transform_5(%arg0: i32, %arg1: i32) -> (i32, i32, i32) {
    %c0_i32 = arith.constant 0 : i32
    %c0_i32_0 = arith.constant 0 : i32
    return %arg0, %arg1, %c0_i32 : i32, i32, i32
  }
}

</mosaic_0001>

<llo_original>
// kernel: gfe_two_apply.6
$region0: #{gfe_two_apply.6}
  #allocation0 [shape = 'u32[]', space=smem, size = 0x4, offset = 0x4, fixed_abs, tag = 'smem constant byte address 0x4 - core index']
  #allocation1 [shape = 'u32[144,128]{1,0:T(1,128)}', space=vmem, size = 0x12000, scoped, tag = 'internal scratch']
  %s0 = inlined_call_operand.vmem [shape: bf16[32,512], index: 0, kind: input, shape index: {}]
  %s1 = inlined_call_operand.hbm [shape: bf16[512,1024], index: 1, kind: input, shape index: {}]
  %s2 = inlined_call_operand.hbm [shape: f32[1,1024], index: 2, kind: input, shape index: {}]
  %s3 = inlined_call_operand.hbm [shape: f32[1,1024], index: 3, kind: input, shape index: {}]
  %s4 = inlined_call_operand.vmem [shape: bf16[32,1024], index: 4, kind: output, shape index: {}]
  %s5 = sld [smem:[#allocation0]]
  $region61: #{gfe_two_apply.6} parent=0
    _
  %s7 = ssub.s32 1, %s5
  %s8 = scalar_select 0, %s7, %s5
  $region1: #{gfe_two_apply.6} parent=0
    #allocation2 [shape = 'u8[1048576]{0}', space=vmem, size = 0x100000, scoped, tag = 'input window, operand 1, single buffered']
    #allocation3 [shape = 's32[2]{0}', space=sflag, size = 0x8, scoped, tag = 'scoped memory for gfe_two_apply.6']
    #allocation4 [shape = 'u8[4096]{0}', space=vmem, size = 0x1000, scoped, tag = 'input window, operand 2, single buffered']
    #allocation5 [shape = 's32[1]{0}', space=sflag, size = 0x4, scoped, tag = 'scoped memory for gfe_two_apply.6']
    #allocation6 [shape = 'u8[4096]{0}', space=vmem, size = 0x1000, scoped, tag = 'input window, operand 3, single buffered']
    %9 = vsyncpa [#allocation3], 0
    %10 = vsyncpa [#allocation5], 0
    loop: start=0, step=1, limit=4
    $region2: #{gfe_two_apply.6} parent=1 // loop_pre_header
      _
    $region3: #{gfe_two_apply.6} parent=1 // loop_header
      %s12 = sphi 0, %s16
      %p13 = scmp.ge.s32.totalorder %s12, 4
      %s19 = sphi 0, %s31
      %s20 = sphi 0, %s27
      %s21 = sphi 0, %s19
      %s22 = sphi 0, %s20
      %s23 = sphi 0, %s21
      %s24 = sphi 0, %s22
      %s34 = sphi 0, %s36
      %s37 = sphi 0, %s34
      %s38 = sphi 0, %s37
      %s54 = sphi 0, %s38
      %s60 = sphi 0, %s62
      %s63 = sphi 0, %s60
      %s64 = sphi 0, %s63
      %s80 = sphi 0, %s64
      %s86 = sphi 0, %s88
      %s89 = sphi 0, %s86
      %s90 = sphi 0, %s89
      %s106 = sphi 0, %s90
      %s112 = sphi 0, %s114
      %s115 = sphi 0, %s112
      %s116 = sphi 0, %s115
      %s132 = sphi 0, %s116
      %s140 = sphi 0, %s142
      %s143 = sphi 0, %s140
      %s144 = sphi 0, %s143
      %s160 = sphi 0, %s144
    $region4: #{gfe_two_apply.6} parent=1 // loop_header_branch
      %15 = sbr.rel (%p13) target = $region8
    $region5: #{gfe_two_apply.6} parent=1 // loop_body
      %s17 = ssub.s32 %s12, 1
      %s18 = ssub.s32 %s12, 2
      %s25 = sadd.s32 1, %s20
      %p26 = scmp.ge.s32.totalorder %s25, 1
      %s27 = scalar_select %p26, 0, %s25
      %s28 = sadd.s32 1, %s19
      %s29 = scalar_select %p26, %s28, %s19
      %p30 = scmp.ge.s32.totalorder %s29, 2
      %s31 = scalar_select %p30, 0, %s29
      %s32 = ssub.s32 %s19, %s31
      %p33 = scmp.eq.s32.totalorder %s32, 0
      %s35 = sadd.s32 %s34, 1
      %s36 = scalar_select %p33, %s34, %s35
      %p39 = pneg %p33
      %p40 = scmp.eq.s32.totalorder %s12, 1
      %p41 = por %p39, %p40
      %p42 = scmp.ne.s32.totalorder %s34, %s37
      %p43 = scmp.eq.s32.totalorder %s12, 0
      %p44 = por %p42, %p43
      %p45 = scmp.ne.s32.totalorder %s34, %s37
      %p46 = scmp.eq.s32.totalorder %s17, 1
      %p47 = por %p45, %p46
      %p48 = scmp.ne.s32.totalorder %s37, %s38
      %p49 = scmp.eq.s32.totalorder %s17, 0
      %p50 = por %p48, %p49
      %p51 = scmp.ne.s32.totalorder %s37, %s38
      %p52 = scmp.eq.s32.totalorder %s18, 1
      %p53 = por %p51, %p52
      %p55 = scmp.ne.s32.totalorder %s38, %s54
      %p56 = scmp.eq.s32.totalorder %s18, 0
      %p57 = por %p55, %p56
      %s58 = ssub.s32 %s20, %s27
      %p59 = scmp.eq.s32.totalorder %s58, 0
      %s61 = sadd.s32 %s60, 1
      %s62 = scalar_select %p59, %s60, %s61
      %p65 = pneg %p59
      %p66 = scmp.eq.s32.totalorder %s12, 1
      %p67 = por %p65, %p66
      %p68 = scmp.ne.s32.totalorder %s60, %s63
      %p69 = scmp.eq.s32.totalorder %s12, 0
      %p70 = por %p68, %p69
      %p71 = scmp.ne.s32.totalorder %s60, %s63
      %p72 = scmp.eq.s32.totalorder %s17, 1
      %p73 = por %p71, %p72
      %p74 = scmp.ne.s32.totalorder %s63, %s64
      %p75 = scmp.eq.s32.totalorder %s17, 0
      %p76 = por %p74, %p75
      %p77 = scmp.ne.s32.totalorder %s63, %s64
      %p78 = scmp.eq.s32.totalorder %s18, 1
      %p79 = por %p77, %p78
      %p81 = scmp.ne.s32.totalorder %s64, %s80
      %p82 = scmp.eq.s32.totalorder %s18, 0
      %p83 = por %p81, %p82
      %s84 = ssub.s32 %s20, %s27
      %p85 = scmp.eq.s32.totalorder %s84, 0
      %s87 = sadd.s32 %s86, 1
      %s88 = scalar_select %p85, %s86, %s87
      %p91 = pneg %p85
      %p92 = scmp.eq.s32.totalorder %s12, 1
      %p93 = por %p91, %p92
      %p94 = scmp.ne.s32.totalorder %s86, %s89
      %p95 = scmp.eq.s32.totalorder %s12, 0
      %p96 = por %p94, %p95
      %p97 = scmp.ne.s32.totalorder %s86, %s89
      %p98 = scmp.eq.s32.totalorder %s17, 1
      %p99 = por %p97, %p98
      %p100 = scmp.ne.s32.totalorder %s89, %s90
      %p101 = scmp.eq.s32.totalorder %s17, 0
      %p102 = por %p100, %p101
      %p103 = scmp.ne.s32.totalorder %s89, %s90
      %p104 = scmp.eq.s32.totalorder %s18, 1
      %p105 = por %p103, %p104
      %p107 = scmp.ne.s32.totalorder %s90, %s106
      %p108 = scmp.eq.s32.totalorder %s18, 0
      %p109 = por %p107, %p108
      %s110 = ssub.s32 %s20, %s27
      %p111 = scmp.eq.s32.totalorder %s110, 0
      %s113 = sadd.s32 %s112, 1
      %s114 = scalar_select %p111, %s112, %s113
      %p117 = pneg %p111
      %p118 = scmp.eq.s32.totalorder %s12, 1
      %p119 = por %p117, %p118
      %p120 = scmp.ne.s32.totalorder %s112, %s115
      %p121 = scmp.eq.s32.totalorder %s12, 0
      %p122 = por %p120, %p121
      %p123 = scmp.ne.s32.totalorder %s112, %s115
      %p124 = scmp.eq.s32.totalorder %s17, 1
      %p125 = por %p123, %p124
      %p126 = scmp.ne.s32.totalorder %s115, %s116
      %p127 = scmp.eq.s32.totalorder %s17, 0
      %p128 = por %p126, %p127
      %p129 = scmp.ne.s32.totalorder %s115, %s116
      %p130 = scmp.eq.s32.totalorder %s18, 1
      %p131 = por %p129, %p130
      %p133 = scmp.ne.s32.totalorder %s116, %s132
      %p134 = scmp.eq.s32.totalorder %s18, 0
      %p135 = por %p133, %p134
      %s136 = ssub.s32 %s19, %s31
      %s137 = ssub.s32 %s20, %s27
      %s138 = sor.u32 %s136, %s137
      %p139 = scmp.eq.s32.totalorder %s138, 0
      %s141 = sadd.s32 %s140, 1
      %s142 = scalar_select %p139, %s140, %s141
      %p145 = pneg %p139
      %p146 = scmp.eq.s32.totalorder %s12, 1
      %p147 = por %p145, %p146
      %p148 = scmp.ne.s32.totalorder %s140, %s143
      %p149 = scmp.eq.s32.totalorder %s12, 0
      %p150 = por %p148, %p149
      %p151 = scmp.ne.s32.totalorder %s140, %s143
      %p152 = scmp.eq.s32.totalorder %s17, 1
      %p153 = por %p151, %p152
      %p154 = scmp.ne.s32.totalorder %s143, %s144
      %p155 = scmp.eq.s32.totalorder %s17, 0
      %p156 = por %p154, %p155
      %p157 = scmp.ne.s32.totalorder %s143, %s144
      %p158 = scmp.eq.s32.totalorder %s18, 1
      %p159 = por %p157, %p158
      %p161 = scmp.ne.s32.totalorder %s144, %s160
      %p162 = scmp.eq.s32.totalorder %s18, 0
      %p163 = por %p161, %p162
      %p164 = scmp.le.s32.totalorder 1, %s12
      %p165 = scmp.lt.s32.totalorder %s12, 3
      %p166 = pnand %p164, %p165
      %p167 = pneg %p166
      // Predicated region
      $region9: #{gfe_two_apply.6} parent=5 // pred_check
        _
      $region10: #{gfe_two_apply.6} parent=5 // pred_check_branch
        %169 = sbr.rel (%p166) target = $region12
      $region11: #{gfe_two_apply.6} parent=5 // pred_region
        %s170 = ssub.s32 %s12, 1
        // Predicated region
        $region13: #{gfe_two_apply.6} parent=11 // pred_check
          %p171 = pneg %p76
        $region14: #{gfe_two_apply.6} parent=11 // pred_check_branch
          %173 = sbr.rel (%p171) target = $region16
        $region15: #{gfe_two_apply.6} parent=11 // pred_region
          %s174 = smul.u32 8, %s22
          %s176 = ssub.s32 32768, 32768
          %177 = vsyncadd [#allocation3], %s176
          %s178 = smul.addr %s174, 64
          %s179 = scalar_lea.hbm %s1, %s178
          %s180 = sshll.u32 [#allocation2], 4
          %s181 = int_to_ptr.vmem [resolvable:$true] %s180
          %186 = dma.hbm_to_vmem [thread:$0]  %s179, 32768, %s181, [#allocation3], 512, 512, 32
        $region16: #{gfe_two_apply.6} parent=11 // pred_fallthru
          _
        // Predicated region
        $region17: #{gfe_two_apply.6} parent=11 // pred_check
          %p187 = pneg %p102
        $region18: #{gfe_two_apply.6} parent=11 // pred_check_branch
          %189 = sbr.rel (%p187) target = $region20
        $region19: #{gfe_two_apply.6} parent=11 // pred_region
          %s190 = smul.u32 8, %s22
          %s192 = ssub.s32 128, 128
          %193 = vsyncadd [#allocation5], %s192
          %s194 = smul.addr %s190, 16
          %s195 = scalar_lea.hbm %s2, %s194
          %s197 = sshll.u32 [#allocation4], 4
          %s198 = int_to_ptr.vmem [resolvable:$true] %s197
          %200 = dma.hbm_to_vmem [thread:$0]  %s195, 128, %s198, [#allocation5]
        $region20: #{gfe_two_apply.6} parent=11 // pred_fallthru
          _
        // Predicated region
        $region21: #{gfe_two_apply.6} parent=11 // pred_check
          %p201 = pneg %p128
        $region22: #{gfe_two_apply.6} parent=11 // pred_check_branch
          %203 = sbr.rel (%p201) target = $region24
        $region23: #{gfe_two_apply.6} parent=11 // pred_region
          %s204 = smul.u32 8, %s22
          %s206 = ssub.s32 128, 128
          %207 = vsyncadd [#allocation5], %s206
          %s208 = smul.addr %s204, 16
          %s209 = scalar_lea.hbm %s3, %s208
          %s211 = sshll.u32 [#allocation6], 4
          %s212 = int_to_ptr.vmem [resolvable:$true] %s211
          %214 = dma.hbm_to_vmem [thread:$0]  %s209, 128, %s212, [#allocation5]
        $region24: #{gfe_two_apply.6} parent=11 // pred_fallthru
          _
      $region12: #{gfe_two_apply.6} parent=5 // pred_fallthru
        _
      %p215 = scmp.lt.s32.totalorder %s12, 2
      // Predicated region
      $region25: #{gfe_two_apply.6} parent=5 // pred_check
        %p216 = pneg %p215
      $region26: #{gfe_two_apply.6} parent=5 // pred_check_branch
        %218 = sbr.rel (%p216) target = $region28
      $region27: #{gfe_two_apply.6} parent=5 // pred_region
        // Predicated region
        $region29: #{gfe_two_apply.6} parent=27 // pred_check
          %p219 = pneg %p44
        $region30: #{gfe_two_apply.6} parent=27 // pred_check_branch
          %221 = sbr.rel (%p219) target = $region32
        $region31: #{gfe_two_apply.6} parent=27 // pred_region
          %s222 = smul.u32 2, %s19
          %p223 = scmp.lt.s32.totalorder %s222, 3
          %s224 = scalar_select %p223, %s222, 3
          %s225 = smul.addr %s224, 4
          %s226 = smul.addr %s225, 4
          %s227 = scalar_lea.vmem %s0, %s226
          %s228 = smul.u32 2, %s19
        $region32: #{gfe_two_apply.6} parent=27 // pred_fallthru
          _
      $region28: #{gfe_two_apply.6} parent=5 // pred_fallthru
        _
      %p229 = scmp.le.s32.totalorder 1, %s12
      %p230 = scmp.lt.s32.totalorder %s12, 3
      %p231 = pnand %p229, %p230
      %p232 = pneg %p231
      // Predicated region
      $region33: #{gfe_two_apply.6} parent=5 // pred_check
        _
      $region34: #{gfe_two_apply.6} parent=5 // pred_check_branch
        %234 = sbr.rel (%p231) target = $region36
      $region35: #{gfe_two_apply.6} parent=5 // pred_region
        %s235 = ssub.s32 %s12, 1
        // Predicated region
        $region37: #{gfe_two_apply.6} parent=35 // pred_check
          %p236 = pneg %p76
        $region38: #{gfe_two_apply.6} parent=35 // pred_check_branch
          %238 = sbr.rel (%p236) target = $region40
        $region39: #{gfe_two_apply.6} parent=35 // pred_region
          %239 = dma.done [#allocation3], 32768
        $region40: #{gfe_two_apply.6} parent=35 // pred_fallthru
          _
        // Predicated region
        $region41: #{gfe_two_apply.6} parent=35 // pred_check
          %p240 = pneg %p102
        $region42: #{gfe_two_apply.6} parent=35 // pred_check_branch
          %242 = sbr.rel (%p240) target = $region44
        $region43: #{gfe_two_apply.6} parent=35 // pred_region
          %243 = dma.done [#allocation5], 128
        $region44: #{gfe_two_apply.6} parent=35 // pred_fallthru
          _
        // Predicated region
        $region45: #{gfe_two_apply.6} parent=35 // pred_check
          %p244 = pneg %p128
        $region46: #{gfe_two_apply.6} parent=35 // pred_check_branch
          %246 = sbr.rel (%p244) target = $region48
        $region47: #{gfe_two_apply.6} parent=35 // pred_region
          %247 = dma.done [#allocation5], 128
        $region48: #{gfe_two_apply.6} parent=35 // pred_fallthru
          _
        %s248 = smul.u32 2, %s21
        %p249 = scmp.lt.s32.totalorder %s248, 3
        %s250 = scalar_select %p249, %s248, 3
        %s251 = smul.addr %s250, 4
        %s252 = smul.addr %s251, 4
        %s253 = scalar_lea.vmem %s0, %s252
        %p254 = pneg %p50
        %p255 = pneg %p47
        %p256 = pneg %p76
        %p257 = pneg %p73
        %p258 = pneg %p102
        %p259 = pneg %p99
        %p260 = pneg %p128
        %p261 = pneg %p125
        %p262 = pneg %p156
        %p263 = pneg %p153
        %s264 = smul.u32 2, %s21
        %s265 = smul.u32 8, %s22
        %p266 = scmp.lt.s32.totalorder %s264, 3
        %s267 = scalar_select %p266, %s264, 3
        %p268 = scmp.lt.s32.totalorder %s265, 7
        %s269 = scalar_select %p268, %s265, 7
        %s270 = smul.addr %s267, 8
        %s271 = sadd.s32 %s269, %s270
        %s272 = smul.addr %s271, 4
        %s273 = scalar_lea.vmem %s4, %s272
        %s274 = smul.u32 2, %s21
        %p275 = scmp.lt.s32.totalorder %s274, 3
        %s276 = scalar_select %p275, %s274, 3
        %s277 = smul.addr %s276, 4
        %s278 = smul.addr %s277, 4
        %s279 = scalar_lea.vmem %s0, %s278
        %s280 = smul.u32 2, %s21
        %s281 = smul.u32 8, %s22
        %s282 = smul.u32 8, %s22
        %s283 = smul.u32 8, %s22
        %s284 = smul.u32 2, %s21
        %s285 = smul.u32 8, %s22
        %p286 = scmp.lt.s32.totalorder %s284, 3
        %s287 = scalar_select %p286, %s284, 3
        %p288 = scmp.lt.s32.totalorder %s285, 7
        %s289 = scalar_select %p288, %s285, 7
        %s290 = smul.addr %s287, 8
        %s291 = sadd.s32 %s289, %s290
        %s292 = smul.addr %s291, 4
        %s293 = scalar_lea.vmem %s4, %s292
        %s294 = smul.u32 2, %s21
        %s295 = smul.u32 8, %s22
        %v296 = vld [vmem:[%s279] sm:$0xff]
        %v297 = vld [vmem:[%s279 + $0x8] sm:$0xff]
        %v298 = vld [vmem:[%s279 + $0x10] sm:$0xff]
        %v299 = vld [vmem:[%s279 + $0x18] sm:$0xff]
        %v300 = vld [vmem:[#allocation2] sm:$0xff]
        %v301 = vld [vmem:[#allocation2 + $0x8] sm:$0xff]
        %v302 = vld [vmem:[#allocation2 + $0x10] sm:$0xff]
        %v303 = vld [vmem:[#allocation2 + $0x18] sm:$0xff]
        %v304 = vld [vmem:[#allocation2 + $0x20] sm:$0xff]
        %v305 = vld [vmem:[#allocation2 + $0x28] sm:$0xff]
        %v306 = vld [vmem:[#allocation2 + $0x30] sm:$0xff]
        %v307 = vld [vmem:[#allocation2 + $0x38] sm:$0xff]
        %v308 = vld [vmem:[#allocation2 + $0x40] sm:$0xff]
        %v309 = vld [vmem:[#allocation2 + $0x48] sm:$0xff]
        %v310 = vld [vmem:[#allocation2 + $0x50] sm:$0xff]
        %v311 = vld [vmem:[#allocation2 + $0x58] sm:$0xff]
        %v312 = vld [vmem:[#allocation2 + $0x60] sm:$0xff]
        %v313 = vld [vmem:[#allocation2 + $0x68] sm:$0xff]
        %v314 = vld [vmem:[#allocation2 + $0x70] sm:$0xff]
        %v315 = vld [vmem:[#allocation2 + $0x78] sm:$0xff]
        %v316 = vld [vmem:[#allocation2 + $0x80] sm:$0xff]
        %v317 = vld [vmem:[#allocation2 + $0x88] sm:$0xff]
        %v318 = vld [vmem:[#allocation2 + $0x90] sm:$0xff]
        %v319 = vld [vmem:[#allocation2 + $0x98] sm:$0xff]
        %v320 = vld [vmem:[#allocation2 + $0xa0] sm:$0xff]
        %v321 = vld [vmem:[#allocation2 + $0xa8] sm:$0xff]
        %v322 = vld [vmem:[#allocation2 + $0xb0] sm:$0xff]
        %v323 = vld [vmem:[#allocation2 + $0xb8] sm:$0xff]
        %v324 = vld [vmem:[#allocation2 + $0xc0] sm:$0xff]
        %v325 = vld [vmem:[#allocation2 + $0xc8] sm:$0xff]
        %v326 = vld [vmem:[#allocation2 + $0xd0] sm:$0xff]
        %v327 = vld [vmem:[#allocation2 + $0xd8] sm:$0xff]
        %v328 = vld [vmem:[#allocation2 + $0xe0] sm:$0xff]
        %v329 = vld [vmem:[#allocation2 + $0xe8] sm:$0xff]
        %v330 = vld [vmem:[#allocation2 + $0xf0] sm:$0xff]
        %v331 = vld [vmem:[#allocation2 + $0xf8] sm:$0xff]
        %v332 = vld [vmem:[#allocation2 + $0x100] sm:$0xff]
        %v333 = vld [vmem:[#allocation2 + $0x108] sm:$0xff]
        %v334 = vld [vmem:[#allocation2 + $0x110] sm:$0xff]
        %v335 = vld [vmem:[#allocation2 + $0x118] sm:$0xff]
        %v336 = vld [vmem:[#allocation2 + $0x120] sm:$0xff]
        %v337 = vld [vmem:[#allocation2 + $0x128] sm:$0xff]
        %v338 = vld [vmem:[#allocation2 + $0x130] sm:$0xff]
        %v339 = vld [vmem:[#allocation2 + $0x138] sm:$0xff]
        %v340 = vld [vmem:[#allocation2 + $0x140] sm:$0xff]
        %v341 = vld [vmem:[#allocation2 + $0x148] sm:$0xff]
        %v342 = vld [vmem:[#allocation2 + $0x150] sm:$0xff]
        %v343 = vld [vmem:[#allocation2 + $0x158] sm:$0xff]
        %v344 = vld [vmem:[#allocation2 + $0x160] sm:$0xff]
        %v345 = vld [vmem:[#allocation2 + $0x168] sm:$0xff]
        %v346 = vld [vmem:[#allocation2 + $0x170] sm:$0xff]
        %v347 = vld [vmem:[#allocation2 + $0x178] sm:$0xff]
        %v348 = vld [vmem:[#allocation2 + $0x180] sm:$0xff]
        %v349 = vld [vmem:[#allocation2 + $0x188] sm:$0xff]
        %v350 = vld [vmem:[#allocation2 + $0x190] sm:$0xff]
        %v351 = vld [vmem:[#allocation2 + $0x198] sm:$0xff]
        %v352 = vld [vmem:[#allocation2 + $0x1a0] sm:$0xff]
        %v353 = vld [vmem:[#allocation2 + $0x1a8] sm:$0xff]
        %v354 = vld [vmem:[#allocation2 + $0x1b0] sm:$0xff]
        %v355 = vld [vmem:[#allocation2 + $0x1b8] sm:$0xff]
        %v356 = vld [vmem:[#allocation2 + $0x1c0] sm:$0xff]
        %v357 = vld [vmem:[#allocation2 + $0x1c8] sm:$0xff]
        %v358 = vld [vmem:[#allocation2 + $0x1d0] sm:$0xff]
        %v359 = vld [vmem:[#allocation2 + $0x1d8] sm:$0xff]
        %v360 = vld [vmem:[#allocation2 + $0x1e0] sm:$0xff]
        %v361 = vld [vmem:[#allocation2 + $0x1e8] sm:$0xff]
        %v362 = vld [vmem:[#allocation2 + $0x1f0] sm:$0xff]
        %v363 = vld [vmem:[#allocation2 + $0x1f8] sm:$0xff]
        %v364 = vld [vmem:[#allocation2 + $0x200] sm:$0xff]
        %v365 = vld [vmem:[#allocation2 + $0x208] sm:$0xff]
        %v366 = vld [vmem:[#allocation2 + $0x210] sm:$0xff]
        %v367 = vld [vmem:[#allocation2 + $0x218] sm:$0xff]
        %v368 = vld [vmem:[#allocation2 + $0x220] sm:$0xff]
        %v369 = vld [vmem:[#allocation2 + $0x228] sm:$0xff]
        %v370 = vld [vmem:[#allocation2 + $0x230] sm:$0xff]
        %v371 = vld [vmem:[#allocation2 + $0x238] sm:$0xff]
        %v372 = vld [vmem:[#allocation2 + $0x240] sm:$0xff]
        %v373 = vld [vmem:[#allocation2 + $0x248] sm:$0xff]
        %v374 = vld [vmem:[#allocation2 + $0x250] sm:$0xff]
        %v375 = vld [vmem:[#allocation2 + $0x258] sm:$0xff]
        %v376 = vld [vmem:[#allocation2 + $0x260] sm:$0xff]
        %v377 = vld [vmem:[#allocation2 + $0x268] sm:$0xff]
        %v378 = vld [vmem:[#allocation2 + $0x270] sm:$0xff]
        %v379 = vld [vmem:[#allocation2 + $0x278] sm:$0xff]
        %v380 = vld [vmem:[#allocation2 + $0x280] sm:$0xff]
        %v381 = vld [vmem:[#allocation2 + $0x288] sm:$0xff]
        %v382 = vld [vmem:[#allocation2 + $0x290] sm:$0xff]
        %v383 = vld [vmem:[#allocation2 + $0x298] sm:$0xff]
        %v384 = vld [vmem:[#allocation2 + $0x2a0] sm:$0xff]
        %v385 = vld [vmem:[#allocation2 + $0x2a8] sm:$0xff]
        %v386 = vld [vmem:[#allocation2 + $0x2b0] sm:$0xff]
        %v387 = vld [vmem:[#allocation2 + $0x2b8] sm:$0xff]
        %v388 = vld [vmem:[#allocation2 + $0x2c0] sm:$0xff]
        %v389 = vld [vmem:[#allocation2 + $0x2c8] sm:$0xff]
        %v390 = vld [vmem:[#allocation2 + $0x2d0] sm:$0xff]
        %v391 = vld [vmem:[#allocation2 + $0x2d8] sm:$0xff]
        %v392 = vld [vmem:[#allocation2 + $0x2e0] sm:$0xff]
        %v393 = vld [vmem:[#allocation2 + $0x2e8] sm:$0xff]
        %v394 = vld [vmem:[#allocation2 + $0x2f0] sm:$0xff]
        %v395 = vld [vmem:[#allocation2 + $0x2f8] sm:$0xff]
        %v396 = vld [vmem:[#allocation2 + $0x300] sm:$0xff]
        %v397 = vld [vmem:[#allocation2 + $0x308] sm:$0xff]
        %v398 = vld [vmem:[#allocation2 + $0x310] sm:$0xff]
        %v399 = vld [vmem:[#allocation2 + $0x318] sm:$0xff]
        %v400 = vld [vmem:[#allocation2 + $0x320] sm:$0xff]
        %v401 = vld [vmem:[#allocation2 + $0x328] sm:$0xff]
        %v402 = vld [vmem:[#allocation2 + $0x330] sm:$0xff]
        %v403 = vld [vmem:[#allocation2 + $0x338] sm:$0xff]
        %v404 = vld [vmem:[#allocation2 + $0x340] sm:$0xff]
        %v405 = vld [vmem:[#allocation2 + $0x348] sm:$0xff]
        %v406 = vld [vmem:[#allocation2 + $0x350] sm:$0xff]
        %v407 = vld [vmem:[#allocation2 + $0x358] sm:$0xff]
        %v408 = vld [vmem:[#allocation2 + $0x360] sm:$0xff]
        %v409 = vld [vmem:[#allocation2 + $0x368] sm:$0xff]
        %v410 = vld [vmem:[#allocation2 + $0x370] sm:$0xff]
        %v411 = vld [vmem:[#allocation2 + $0x378] sm:$0xff]
        %v412 = vld [vmem:[#allocation2 + $0x380] sm:$0xff]
        %v413 = vld [vmem:[#allocation2 + $0x388] sm:$0xff]
        %v414 = vld [vmem:[#allocation2 + $0x390] sm:$0xff]
        %v415 = vld [vmem:[#allocation2 + $0x398] sm:$0xff]
        %v416 = vld [vmem:[#allocation2 + $0x3a0] sm:$0xff]
        %v417 = vld [vmem:[#allocation2 + $0x3a8] sm:$0xff]
        %v418 = vld [vmem:[#allocation2 + $0x3b0] sm:$0xff]
        %v419 = vld [vmem:[#allocation2 + $0x3b8] sm:$0xff]
        %v420 = vld [vmem:[#allocation2 + $0x3c0] sm:$0xff]
        %v421 = vld [vmem:[#allocation2 + $0x3c8] sm:$0xff]
        %v422 = vld [vmem:[#allocation2 + $0x3d0] sm:$0xff]
        %v423 = vld [vmem:[#allocation2 + $0x3d8] sm:$0xff]
        %v424 = vld [vmem:[#allocation2 + $0x3e0] sm:$0xff]
        %v425 = vld [vmem:[#allocation2 + $0x3e8] sm:$0xff]
        %v426 = vld [vmem:[#allocation2 + $0x3f0] sm:$0xff]
        %v427 = vld [vmem:[#allocation2 + $0x3f8] sm:$0xff]
        %v428 = vld [vmem:[#allocation2 + $0x400] sm:$0xff]
        %v429 = vld [vmem:[#allocation2 + $0x408] sm:$0xff]
        %v430 = vld [vmem:[#allocation2 + $0x410] sm:$0xff]
        %v431 = vld [vmem:[#allocation2 + $0x418] sm:$0xff]
        %v432 = vld [vmem:[#allocation2 + $0x420] sm:$0xff]
        %v433 = vld [vmem:[#allocation2 + $0x428] sm:$0xff]
        %v434 = vld [vmem:[#allocation2 + $0x430] sm:$0xff]
        %v435 = vld [vmem:[#allocation2 + $0x438] sm:$0xff]
        %v436 = vld [vmem:[#allocation2 + $0x440] sm:$0xff]
        %v437 = vld [vmem:[#allocation2 + $0x448] sm:$0xff]
        %v438 = vld [vmem:[#allocation2 + $0x450] sm:$0xff]
        %v439 = vld [vmem:[#allocation2 + $0x458] sm:$0xff]
        %v440 = vld [vmem:[#allocation2 + $0x460] sm:$0xff]
        %v441 = vld [vmem:[#allocation2 + $0x468] sm:$0xff]
        %v442 = vld [vmem:[#allocation2 + $0x470] sm:$0xff]
        %v443 = vld [vmem:[#allocation2 + $0x478] sm:$0xff]
        %v444 = vld [vmem:[#allocation2 + $0x480] sm:$0xff]
        %v445 = vld [vmem:[#allocation2 + $0x488] sm:$0xff]
        %v446 = vld [vmem:[#allocation2 + $0x490] sm:$0xff]
        %v447 = vld [vmem:[#allocation2 + $0x498] sm:$0xff]
        %v448 = vld [vmem:[#allocation2 + $0x4a0] sm:$0xff]
        %v449 = vld [vmem:[#allocation2 + $0x4a8] sm:$0xff]
        %v450 = vld [vmem:[#allocation2 + $0x4b0] sm:$0xff]
        %v451 = vld [vmem:[#allocation2 + $0x4b8] sm:$0xff]
        %v452 = vld [vmem:[#allocation2 + $0x4c0] sm:$0xff]
        %v453 = vld [vmem:[#allocation2 + $0x4c8] sm:$0xff]
        %v454 = vld [vmem:[#allocation2 + $0x4d0] sm:$0xff]
        %v455 = vld [vmem:[#allocation2 + $0x4d8] sm:$0xff]
        %v456 = vld [vmem:[#allocation2 + $0x4e0] sm:$0xff]
        %v457 = vld [vmem:[#allocation2 + $0x4e8] sm:$0xff]
        %v458 = vld [vmem:[#allocation2 + $0x4f0] sm:$0xff]
        %v459 = vld [vmem:[#allocation2 + $0x4f8] sm:$0xff]
        %v460 = vld [vmem:[#allocation2 + $0x500] sm:$0xff]
        %v461 = vld [vmem:[#allocation2 + $0x508] sm:$0xff]
        %v462 = vld [vmem:[#allocation2 + $0x510] sm:$0xff]
        %v463 = vld [vmem:[#allocation2 + $0x518] sm:$0xff]
        %v464 = vld [vmem:[#allocation2 + $0x520] sm:$0xff]
        %v465 = vld [vmem:[#allocation2 + $0x528] sm:$0xff]
        %v466 = vld [vmem:[#allocation2 + $0x530] sm:$0xff]
        %v467 = vld [vmem:[#allocation2 + $0x538] sm:$0xff]
        %v468 = vld [vmem:[#allocation2 + $0x540] sm:$0xff]
        %v469 = vld [vmem:[#allocation2 + $0x548] sm:$0xff]
        %v470 = vld [vmem:[#allocation2 + $0x550] sm:$0xff]
        %v471 = vld [vmem:[#allocation2 + $0x558] sm:$0xff]
        %v472 = vld [vmem:[#allocation2 + $0x560] sm:$0xff]
        %v473 = vld [vmem:[#allocation2 + $0x568] sm:$0xff]
        %v474 = vld [vmem:[#allocation2 + $0x570] sm:$0xff]
        %v475 = vld [vmem:[#allocation2 + $0x578] sm:$0xff]
        %v476 = vld [vmem:[#allocation2 + $0x580] sm:$0xff]
        %v477 = vld [vmem:[#allocation2 + $0x588] sm:$0xff]
        %v478 = vld [vmem:[#allocation2 + $0x590] sm:$0xff]
        %v479 = vld [vmem:[#allocation2 + $0x598] sm:$0xff]
        %v480 = vld [vmem:[#allocation2 + $0x5a0] sm:$0xff]
        %v481 = vld [vmem:[#allocation2 + $0x5a8] sm:$0xff]
        %v482 = vld [vmem:[#allocation2 + $0x5b0] sm:$0xff]
        %v483 = vld [vmem:[#allocation2 + $0x5b8] sm:$0xff]
        %v484 = vld [vmem:[#allocation2 + $0x5c0] sm:$0xff]
        %v485 = vld [vmem:[#allocation2 + $0x5c8] sm:$0xff]
        %v486 = vld [vmem:[#allocation2 + $0x5d0] sm:$0xff]
        %v487 = vld [vmem:[#allocation2 + $0x5d8] sm:$0xff]
        %v488 = vld [vmem:[#allocation2 + $0x5e0] sm:$0xff]
        %v489 = vld [vmem:[#allocation2 + $0x5e8] sm:$0xff]
        %v490 = vld [vmem:[#allocation2 + $0x5f0] sm:$0xff]
        %v491 = vld [vmem:[#allocation2 + $0x5f8] sm:$0xff]
        %v492 = vld [vmem:[#allocation2 + $0x600] sm:$0xff]
        %v493 = vld [vmem:[#allocation2 + $0x608] sm:$0xff]
        %v494 = vld [vmem:[#allocation2 + $0x610] sm:$0xff]
        %v495 = vld [vmem:[#allocation2 + $0x618] sm:$0xff]
        %v496 = vld [vmem:[#allocation2 + $0x620] sm:$0xff]
        %v497 = vld [vmem:[#allocation2 + $0x628] sm:$0xff]
        %v498 = vld [vmem:[#allocation2 + $0x630] sm:$0xff]
        %v499 = vld [vmem:[#allocation2 + $0x638] sm:$0xff]
        %v500 = vld [vmem:[#allocation2 + $0x640] sm:$0xff]
        %v501 = vld [vmem:[#allocation2 + $0x648] sm:$0xff]
        %v502 = vld [vmem:[#allocation2 + $0x650] sm:$0xff]
        %v503 = vld [vmem:[#allocation2 + $0x658] sm:$0xff]
        %v504 = vld [vmem:[#allocation2 + $0x660] sm:$0xff]
        %v505 = vld [vmem:[#allocation2 + $0x668] sm:$0xff]
        %v506 = vld [vmem:[#allocation2 + $0x670] sm:$0xff]
        %v507 = vld [vmem:[#allocation2 + $0x678] sm:$0xff]
        %v508 = vld [vmem:[#allocation2 + $0x680] sm:$0xff]
        %v509 = vld [vmem:[#allocation2 + $0x688] sm:$0xff]
        %v510 = vld [vmem:[#allocation2 + $0x690] sm:$0xff]
        %v511 = vld [vmem:[#allocation2 + $0x698] sm:$0xff]
        %v512 = vld [vmem:[#allocation2 + $0x6a0] sm:$0xff]
        %v513 = vld [vmem:[#allocation2 + $0x6a8] sm:$0xff]
        %v514 = vld [vmem:[#allocation2 + $0x6b0] sm:$0xff]
        %v515 = vld [vmem:[#allocation2 + $0x6b8] sm:$0xff]
        %v516 = vld [vmem:[#allocation2 + $0x6c0] sm:$0xff]
        %v517 = vld [vmem:[#allocation2 + $0x6c8] sm:$0xff]
        %v518 = vld [vmem:[#allocation2 + $0x6d0] sm:$0xff]
        %v519 = vld [vmem:[#allocation2 + $0x6d8] sm:$0xff]
        %v520 = vld [vmem:[#allocation2 + $0x6e0] sm:$0xff]
        %v521 = vld [vmem:[#allocation2 + $0x6e8] sm:$0xff]
        %v522 = vld [vmem:[#allocation2 + $0x6f0] sm:$0xff]
        %v523 = vld [vmem:[#allocation2 + $0x6f8] sm:$0xff]
        %v524 = vld [vmem:[#allocation2 + $0x700] sm:$0xff]
        %v525 = vld [vmem:[#allocation2 + $0x708] sm:$0xff]
        %v526 = vld [vmem:[#allocation2 + $0x710] sm:$0xff]
        %v527 = vld [vmem:[#allocation2 + $0x718] sm:$0xff]
        %v528 = vld [vmem:[#allocation2 + $0x720] sm:$0xff]
        %v529 = vld [vmem:[#allocation2 + $0x728] sm:$0xff]
        %v530 = vld [vmem:[#allocation2 + $0x730] sm:$0xff]
        %v531 = vld [vmem:[#allocation2 + $0x738] sm:$0xff]
        %v532 = vld [vmem:[#allocation2 + $0x740] sm:$0xff]
        %v533 = vld [vmem:[#allocation2 + $0x748] sm:$0xff]
        %v534 = vld [vmem:[#allocation2 + $0x750] sm:$0xff]
        %v535 = vld [vmem:[#allocation2 + $0x758] sm:$0xff]
        %v536 = vld [vmem:[#allocation2 + $0x760] sm:$0xff]
        %v537 = vld [vmem:[#allocation2 + $0x768] sm:$0xff]
        %v538 = vld [vmem:[#allocation2 + $0x770] sm:$0xff]
        %v539 = vld [vmem:[#allocation2 + $0x778] sm:$0xff]
        %v540 = vld [vmem:[#allocation2 + $0x780] sm:$0xff]
        %v541 = vld [vmem:[#allocation2 + $0x788] sm:$0xff]
        %v542 = vld [vmem:[#allocation2 + $0x790] sm:$0xff]
        %v543 = vld [vmem:[#allocation2 + $0x798] sm:$0xff]
        %v544 = vld [vmem:[#allocation2 + $0x7a0] sm:$0xff]
        %v545 = vld [vmem:[#allocation2 + $0x7a8] sm:$0xff]
        %v546 = vld [vmem:[#allocation2 + $0x7b0] sm:$0xff]
        %v547 = vld [vmem:[#allocation2 + $0x7b8] sm:$0xff]
        %v548 = vld [vmem:[#allocation2 + $0x7c0] sm:$0xff]
        %v549 = vld [vmem:[#allocation2 + $0x7c8] sm:$0xff]
        %v550 = vld [vmem:[#allocation2 + $0x7d0] sm:$0xff]
        %v551 = vld [vmem:[#allocation2 + $0x7d8] sm:$0xff]
        %v552 = vld [vmem:[#allocation2 + $0x7e0] sm:$0xff]
        %v553 = vld [vmem:[#allocation2 + $0x7e8] sm:$0xff]
        %v554 = vld [vmem:[#allocation2 + $0x7f0] sm:$0xff]
        %v555 = vld [vmem:[#allocation2 + $0x7f8] sm:$0xff]
        %v560 = vunpack.c.l.b16 %v296
        %v561 = vunpack.c.h.b16 %v296
        %v562 = vunpack.c.l.b16 %v297
        %v563 = vunpack.c.h.b16 %v297
        %v564 = vunpack.c.l.b16 %v298
        %v565 = vunpack.c.h.b16 %v298
        %v566 = vunpack.c.l.b16 %v299
        %v567 = vunpack.c.h.b16 %v299
        %v568 = vpack.c.b16 %v564, %v560
        %v569 = vpack.c.b16 %v565, %v561
        %v570 = vpack.c.b16 %v566, %v562
        %v571 = vpack.c.b16 %v567, %v563
        %v832 = vunpack.c.l.b16 %v300
        %v833 = vunpack.c.h.b16 %v300
        %v834 = vunpack.c.l.b16 %v301
        %v835 = vunpack.c.h.b16 %v301
        %v836 = vunpack.c.l.b16 %v302
        %v837 = vunpack.c.h.b16 %v302
        %v838 = vunpack.c.l.b16 %v303
        %v839 = vunpack.c.h.b16 %v303
        %v840 = vunpack.c.l.b16 %v304
        %v841 = vunpack.c.h.b16 %v304
        %v842 = vunpack.c.l.b16 %v305
        %v843 = vunpack.c.h.b16 %v305
        %v844 = vunpack.c.l.b16 %v306
        %v845 = vunpack.c.h.b16 %v306
        %v846 = vunpack.c.l.b16 %v307
        %v847 = vunpack.c.h.b16 %v307
        %v848 = vunpack.c.l.b16 %v308
        %v849 = vunpack.c.h.b16 %v308
        %v850 = vunpack.c.l.b16 %v309
        %v851 = vunpack.c.h.b16 %v309
        %v852 = vunpack.c.l.b16 %v310
        %v853 = vunpack.c.h.b16 %v310
        %v854 = vunpack.c.l.b16 %v311
        %v855 = vunpack.c.h.b16 %v311
        %v856 = vunpack.c.l.b16 %v312
        %v857 = vunpack.c.h.b16 %v312
        %v858 = vunpack.c.l.b16 %v313
        %v859 = vunpack.c.h.b16 %v313
        %v860 = vunpack.c.l.b16 %v314
        %v861 = vunpack.c.h.b16 %v314
        %v862 = vunpack.c.l.b16 %v315
        %v863 = vunpack.c.h.b16 %v315
        %v864 = vunpack.c.l.b16 %v316
        %v865 = vunpack.c.h.b16 %v316
        %v866 = vunpack.c.l.b16 %v317
        %v867 = vunpack.c.h.b16 %v317
        %v868 = vunpack.c.l.b16 %v318
        %v869 = vunpack.c.h.b16 %v318
        %v870 = vunpack.c.l.b16 %v319
        %v871 = vunpack.c.h.b16 %v319
        %v872 = vunpack.c.l.b16 %v320
        %v873 = vunpack.c.h.b16 %v320
        %v874 = vunpack.c.l.b16 %v321
        %v875 = vunpack.c.h.b16 %v321
        %v876 = vunpack.c.l.b16 %v322
        %v877 = vunpack.c.h.b16 %v322
        %v878 = vunpack.c.l.b16 %v323
        %v879 = vunpack.c.h.b16 %v323
        %v880 = vunpack.c.l.b16 %v324
        %v881 = vunpack.c.h.b16 %v324
        %v882 = vunpack.c.l.b16 %v325
        %v883 = vunpack.c.h.b16 %v325
        %v884 = vunpack.c.l.b16 %v326
        %v885 = vunpack.c.h.b16 %v326
        %v886 = vunpack.c.l.b16 %v327
        %v887 = vunpack.c.h.b16 %v327
        %v888 = vunpack.c.l.b16 %v328
        %v889 = vunpack.c.h.b16 %v328
        %v890 = vunpack.c.l.b16 %v329
        %v891 = vunpack.c.h.b16 %v329
        %v892 = vunpack.c.l.b16 %v330
        %v893 = vunpack.c.h.b16 %v330
        %v894 = vunpack.c.l.b16 %v331
        %v895 = vunpack.c.h.b16 %v331
        %v896 = vunpack.c.l.b16 %v332
        %v897 = vunpack.c.h.b16 %v332
        %v898 = vunpack.c.l.b16 %v333
        %v899 = vunpack.c.h.b16 %v333
        %v900 = vunpack.c.l.b16 %v334
        %v901 = vunpack.c.h.b16 %v334
        %v902 = vunpack.c.l.b16 %v335
        %v903 = vunpack.c.h.b16 %v335
        %v904 = vunpack.c.l.b16 %v336
        %v905 = vunpack.c.h.b16 %v336
        %v906 = vunpack.c.l.b16 %v337
        %v907 = vunpack.c.h.b16 %v337
        %v908 = vunpack.c.l.b16 %v338
        %v909 = vunpack.c.h.b16 %v338
        %v910 = vunpack.c.l.b16 %v339
        %v911 = vunpack.c.h.b16 %v339
        %v912 = vunpack.c.l.b16 %v340
        %v913 = vunpack.c.h.b16 %v340
        %v914 = vunpack.c.l.b16 %v341
        %v915 = vunpack.c.h.b16 %v341
        %v916 = vunpack.c.l.b16 %v342
        %v917 = vunpack.c.h.b16 %v342
        %v918 = vunpack.c.l.b16 %v343
        %v919 = vunpack.c.h.b16 %v343
        %v920 = vunpack.c.l.b16 %v344
        %v921 = vunpack.c.h.b16 %v344
        %v922 = vunpack.c.l.b16 %v345
        %v923 = vunpack.c.h.b16 %v345
        %v924 = vunpack.c.l.b16 %v346
        %v925 = vunpack.c.h.b16 %v346
        %v926 = vunpack.c.l.b16 %v347
        %v927 = vunpack.c.h.b16 %v347
        %v928 = vunpack.c.l.b16 %v348
        %v929 = vunpack.c.h.b16 %v348
        %v930 = vunpack.c.l.b16 %v349
        %v931 = vunpack.c.h.b16 %v349
        %v932 = vunpack.c.l.b16 %v350
        %v933 = vunpack.c.h.b16 %v350
        %v934 = vunpack.c.l.b16 %v351
        %v935 = vunpack.c.h.b16 %v351
        %v936 = vunpack.c.l.b16 %v352
        %v937 = vunpack.c.h.b16 %v352
        %v938 = vunpack.c.l.b16 %v353
        %v939 = vunpack.c.h.b16 %v353
        %v940 = vunpack.c.l.b16 %v354
        %v941 = vunpack.c.h.b16 %v354
        %v942 = vunpack.c.l.b16 %v355
        %v943 = vunpack.c.h.b16 %v355
        %v944 = vunpack.c.l.b16 %v356
        %v945 = vunpack.c.h.b16 %v356
        %v946 = vunpack.c.l.b16 %v357
        %v947 = vunpack.c.h.b16 %v357
        %v948 = vunpack.c.l.b16 %v358
        %v949 = vunpack.c.h.b16 %v358
        %v950 = vunpack.c.l.b16 %v359
        %v951 = vunpack.c.h.b16 %v359
        %v952 = vunpack.c.l.b16 %v360
        %v953 = vunpack.c.h.b16 %v360
        %v954 = vunpack.c.l.b16 %v361
        %v955 = vunpack.c.h.b16 %v361
        %v956 = vunpack.c.l.b16 %v362
        %v957 = vunpack.c.h.b16 %v362
        %v958 = vunpack.c.l.b16 %v363
        %v959 = vunpack.c.h.b16 %v363
        %v960 = vunpack.c.l.b16 %v364
        %v961 = vunpack.c.h.b16 %v364
        %v962 = vunpack.c.l.b16 %v365
        %v963 = vunpack.c.h.b16 %v365
        %v964 = vunpack.c.l.b16 %v366
        %v965 = vunpack.c.h.b16 %v366
        %v966 = vunpack.c.l.b16 %v367
        %v967 = vunpack.c.h.b16 %v367
        %v968 = vunpack.c.l.b16 %v368
        %v969 = vunpack.c.h.b16 %v368
        %v970 = vunpack.c.l.b16 %v369
        %v971 = vunpack.c.h.b16 %v369
        %v972 = vunpack.c.l.b16 %v370
        %v973 = vunpack.c.h.b16 %v370
        %v974 = vunpack.c.l.b16 %v371
        %v975 = vunpack.c.h.b16 %v371
        %v976 = vunpack.c.l.b16 %v372
        %v977 = vunpack.c.h.b16 %v372
        %v978 = vunpack.c.l.b16 %v373
        %v979 = vunpack.c.h.b16 %v373
        %v980 = vunpack.c.l.b16 %v374
        %v981 = vunpack.c.h.b16 %v374
        %v982 = vunpack.c.l.b16 %v375
        %v983 = vunpack.c.h.b16 %v375
        %v984 = vunpack.c.l.b16 %v376
        %v985 = vunpack.c.h.b16 %v376
        %v986 = vunpack.c.l.b16 %v377
        %v987 = vunpack.c.h.b16 %v377
        %v988 = vunpack.c.l.b16 %v378
        %v989 = vunpack.c.h.b16 %v378
        %v990 = vunpack.c.l.b16 %v379
        %v991 = vunpack.c.h.b16 %v379
        %v992 = vunpack.c.l.b16 %v380
        %v993 = vunpack.c.h.b16 %v380
        %v994 = vunpack.c.l.b16 %v381
        %v995 = vunpack.c.h.b16 %v381
        %v996 = vunpack.c.l.b16 %v382
        %v997 = vunpack.c.h.b16 %v382
        %v998 = vunpack.c.l.b16 %v383
        %v999 = vunpack.c.h.b16 %v383
        %v1000 = vunpack.c.l.b16 %v384
        %v1001 = vunpack.c.h.b16 %v384
        %v1002 = vunpack.c.l.b16 %v385
        %v1003 = vunpack.c.h.b16 %v385
        %v1004 = vunpack.c.l.b16 %v386
        %v1005 = vunpack.c.h.b16 %v386
        %v1006 = vunpack.c.l.b16 %v387
        %v1007 = vunpack.c.h.b16 %v387
        %v1008 = vunpack.c.l.b16 %v388
        %v1009 = vunpack.c.h.b16 %v388
        %v1010 = vunpack.c.l.b16 %v389
        %v1011 = vunpack.c.h.b16 %v389
        %v1012 = vunpack.c.l.b16 %v390
        %v1013 = vunpack.c.h.b16 %v390
        %v1014 = vunpack.c.l.b16 %v391
        %v1015 = vunpack.c.h.b16 %v391
        %v1016 = vunpack.c.l.b16 %v392
        %v1017 = vunpack.c.h.b16 %v392
        %v1018 = vunpack.c.l.b16 %v393
        %v1019 = vunpack.c.h.b16 %v393
        %v1020 = vunpack.c.l.b16 %v394
        %v1021 = vunpack.c.h.b16 %v394
        %v1022 = vunpack.c.l.b16 %v395
        %v1023 = vunpack.c.h.b16 %v395
        %v1024 = vunpack.c.l.b16 %v396
        %v1025 = vunpack.c.h.b16 %v396
        %v1026 = vunpack.c.l.b16 %v397
        %v1027 = vunpack.c.h.b16 %v397
        %v1028 = vunpack.c.l.b16 %v398
        %v1029 = vunpack.c.h.b16 %v398
        %v1030 = vunpack.c.l.b16 %v399
        %v1031 = vunpack.c.h.b16 %v399
        %v1032 = vunpack.c.l.b16 %v400
        %v1033 = vunpack.c.h.b16 %v400
        %v1034 = vunpack.c.l.b16 %v401
        %v1035 = vunpack.c.h.b16 %v401
        %v1036 = vunpack.c.l.b16 %v402
        %v1037 = vunpack.c.h.b16 %v402
        %v1038 = vunpack.c.l.b16 %v403
        %v1039 = vunpack.c.h.b16 %v403
        %v1040 = vunpack.c.l.b16 %v404
        %v1041 = vunpack.c.h.b16 %v404
        %v1042 = vunpack.c.l.b16 %v405
        %v1043 = vunpack.c.h.b16 %v405
        %v1044 = vunpack.c.l.b16 %v406
        %v1045 = vunpack.c.h.b16 %v406
        %v1046 = vunpack.c.l.b16 %v407
        %v1047 = vunpack.c.h.b16 %v407
        %v1048 = vunpack.c.l.b16 %v408
        %v1049 = vunpack.c.h.b16 %v408
        %v1050 = vunpack.c.l.b16 %v409
        %v1051 = vunpack.c.h.b16 %v409
        %v1052 = vunpack.c.l.b16 %v410
        %v1053 = vunpack.c.h.b16 %v410
        %v1054 = vunpack.c.l.b16 %v411
        %v1055 = vunpack.c.h.b16 %v411
        %v1056 = vunpack.c.l.b16 %v412
        %v1057 = vunpack.c.h.b16 %v412
        %v1058 = vunpack.c.l.b16 %v413
        %v1059 = vunpack.c.h.b16 %v413
        %v1060 = vunpack.c.l.b16 %v414
        %v1061 = vunpack.c.h.b16 %v414
        %v1062 = vunpack.c.l.b16 %v415
        %v1063 = vunpack.c.h.b16 %v415
        %v1064 = vunpack.c.l.b16 %v416
        %v1065 = vunpack.c.h.b16 %v416
        %v1066 = vunpack.c.l.b16 %v417
        %v1067 = vunpack.c.h.b16 %v417
        %v1068 = vunpack.c.l.b16 %v418
        %v1069 = vunpack.c.h.b16 %v418
        %v1070 = vunpack.c.l.b16 %v419
        %v1071 = vunpack.c.h.b16 %v419
        %v1072 = vunpack.c.l.b16 %v420
        %v1073 = vunpack.c.h.b16 %v420
        %v1074 = vunpack.c.l.b16 %v421
        %v1075 = vunpack.c.h.b16 %v421
        %v1076 = vunpack.c.l.b16 %v422
        %v1077 = vunpack.c.h.b16 %v422
        %v1078 = vunpack.c.l.b16 %v423
        %v1079 = vunpack.c.h.b16 %v423
        %v1080 = vunpack.c.l.b16 %v424
        %v1081 = vunpack.c.h.b16 %v424
        %v1082 = vunpack.c.l.b16 %v425
        %v1083 = vunpack.c.h.b16 %v425
        %v1084 = vunpack.c.l.b16 %v426
        %v1085 = vunpack.c.h.b16 %v426
        %v1086 = vunpack.c.l.b16 %v427
        %v1087 = vunpack.c.h.b16 %v427
        %v1088 = vunpack.c.l.b16 %v428
        %v1089 = vunpack.c.h.b16 %v428
        %v1090 = vunpack.c.l.b16 %v429
        %v1091 = vunpack.c.h.b16 %v429
        %v1092 = vunpack.c.l.b16 %v430
        %v1093 = vunpack.c.h.b16 %v430
        %v1094 = vunpack.c.l.b16 %v431
        %v1095 = vunpack.c.h.b16 %v431
        %v1096 = vunpack.c.l.b16 %v432
        %v1097 = vunpack.c.h.b16 %v432
        %v1098 = vunpack.c.l.b16 %v433
        %v1099 = vunpack.c.h.b16 %v433
        %v1100 = vunpack.c.l.b16 %v434
        %v1101 = vunpack.c.h.b16 %v434
        %v1102 = vunpack.c.l.b16 %v435
        %v1103 = vunpack.c.h.b16 %v435
        %v1104 = vunpack.c.l.b16 %v436
        %v1105 = vunpack.c.h.b16 %v436
        %v1106 = vunpack.c.l.b16 %v437
        %v1107 = vunpack.c.h.b16 %v437
        %v1108 = vunpack.c.l.b16 %v438
        %v1109 = vunpack.c.h.b16 %v438
        %v1110 = vunpack.c.l.b16 %v439
        %v1111 = vunpack.c.h.b16 %v439
        %v1112 = vunpack.c.l.b16 %v440
        %v1113 = vunpack.c.h.b16 %v440
        %v1114 = vunpack.c.l.b16 %v441
        %v1115 = vunpack.c.h.b16 %v441
        %v1116 = vunpack.c.l.b16 %v442
        %v1117 = vunpack.c.h.b16 %v442
        %v1118 = vunpack.c.l.b16 %v443
        %v1119 = vunpack.c.h.b16 %v443
        %v1120 = vunpack.c.l.b16 %v444
        %v1121 = vunpack.c.h.b16 %v444
        %v1122 = vunpack.c.l.b16 %v445
        %v1123 = vunpack.c.h.b16 %v445
        %v1124 = vunpack.c.l.b16 %v446
        %v1125 = vunpack.c.h.b16 %v446
        %v1126 = vunpack.c.l.b16 %v447
        %v1127 = vunpack.c.h.b16 %v447
        %v1128 = vunpack.c.l.b16 %v448
        %v1129 = vunpack.c.h.b16 %v448
        %v1130 = vunpack.c.l.b16 %v449
        %v1131 = vunpack.c.h.b16 %v449
        %v1132 = vunpack.c.l.b16 %v450
        %v1133 = vunpack.c.h.b16 %v450
        %v1134 = vunpack.c.l.b16 %v451
        %v1135 = vunpack.c.h.b16 %v451
        %v1136 = vunpack.c.l.b16 %v452
        %v1137 = vunpack.c.h.b16 %v452
        %v1138 = vunpack.c.l.b16 %v453
        %v1139 = vunpack.c.h.b16 %v453
        %v1140 = vunpack.c.l.b16 %v454
        %v1141 = vunpack.c.h.b16 %v454
        %v1142 = vunpack.c.l.b16 %v455
        %v1143 = vunpack.c.h.b16 %v455
        %v1144 = vunpack.c.l.b16 %v456
        %v1145 = vunpack.c.h.b16 %v456
        %v1146 = vunpack.c.l.b16 %v457
        %v1147 = vunpack.c.h.b16 %v457
        %v1148 = vunpack.c.l.b16 %v458
        %v1149 = vunpack.c.h.b16 %v458
        %v1150 = vunpack.c.l.b16 %v459
        %v1151 = vunpack.c.h.b16 %v459
        %v1152 = vunpack.c.l.b16 %v460
        %v1153 = vunpack.c.h.b16 %v460
        %v1154 = vunpack.c.l.b16 %v461
        %v1155 = vunpack.c.h.b16 %v461
        %v1156 = vunpack.c.l.b16 %v462
        %v1157 = vunpack.c.h.b16 %v462
        %v1158 = vunpack.c.l.b16 %v463
        %v1159 = vunpack.c.h.b16 %v463
        %v1160 = vunpack.c.l.b16 %v464
        %v1161 = vunpack.c.h.b16 %v464
        %v1162 = vunpack.c.l.b16 %v465
        %v1163 = vunpack.c.h.b16 %v465
        %v1164 = vunpack.c.l.b16 %v466
        %v1165 = vunpack.c.h.b16 %v466
        %v1166 = vunpack.c.l.b16 %v467
        %v1167 = vunpack.c.h.b16 %v467
        %v1168 = vunpack.c.l.b16 %v468
        %v1169 = vunpack.c.h.b16 %v468
        %v1170 = vunpack.c.l.b16 %v469
        %v1171 = vunpack.c.h.b16 %v469
        %v1172 = vunpack.c.l.b16 %v470
        %v1173 = vunpack.c.h.b16 %v470
        %v1174 = vunpack.c.l.b16 %v471
        %v1175 = vunpack.c.h.b16 %v471
        %v1176 = vunpack.c.l.b16 %v472
        %v1177 = vunpack.c.h.b16 %v472
        %v1178 = vunpack.c.l.b16 %v473
        %v1179 = vunpack.c.h.b16 %v473
        %v1180 = vunpack.c.l.b16 %v474
        %v1181 = vunpack.c.h.b16 %v474
        %v1182 = vunpack.c.l.b16 %v475
        %v1183 = vunpack.c.h.b16 %v475
        %v1184 = vunpack.c.l.b16 %v476
        %v1185 = vunpack.c.h.b16 %v476
        %v1186 = vunpack.c.l.b16 %v477
        %v1187 = vunpack.c.h.b16 %v477
        %v1188 = vunpack.c.l.b16 %v478
        %v1189 = vunpack.c.h.b16 %v478
        %v1190 = vunpack.c.l.b16 %v479
        %v1191 = vunpack.c.h.b16 %v479
        %v1192 = vunpack.c.l.b16 %v480
        %v1193 = vunpack.c.h.b16 %v480
        %v1194 = vunpack.c.l.b16 %v481
        %v1195 = vunpack.c.h.b16 %v481
        %v1196 = vunpack.c.l.b16 %v482
        %v1197 = vunpack.c.h.b16 %v482
        %v1198 = vunpack.c.l.b16 %v483
        %v1199 = vunpack.c.h.b16 %v483
        %v1200 = vunpack.c.l.b16 %v484
        %v1201 = vunpack.c.h.b16 %v484
        %v1202 = vunpack.c.l.b16 %v485
        %v1203 = vunpack.c.h.b16 %v485
        %v1204 = vunpack.c.l.b16 %v486
        %v1205 = vunpack.c.h.b16 %v486
        %v1206 = vunpack.c.l.b16 %v487
        %v1207 = vunpack.c.h.b16 %v487
        %v1208 = vunpack.c.l.b16 %v488
        %v1209 = vunpack.c.h.b16 %v488
        %v1210 = vunpack.c.l.b16 %v489
        %v1211 = vunpack.c.h.b16 %v489
        %v1212 = vunpack.c.l.b16 %v490
        %v1213 = vunpack.c.h.b16 %v490
        %v1214 = vunpack.c.l.b16 %v491
        %v1215 = vunpack.c.h.b16 %v491
        %v1216 = vunpack.c.l.b16 %v492
        %v1217 = vunpack.c.h.b16 %v492
        %v1218 = vunpack.c.l.b16 %v493
        %v1219 = vunpack.c.h.b16 %v493
        %v1220 = vunpack.c.l.b16 %v494
        %v1221 = vunpack.c.h.b16 %v494
        %v1222 = vunpack.c.l.b16 %v495
        %v1223 = vunpack.c.h.b16 %v495
        %v1224 = vunpack.c.l.b16 %v496
        %v1225 = vunpack.c.h.b16 %v496
        %v1226 = vunpack.c.l.b16 %v497
        %v1227 = vunpack.c.h.b16 %v497
        %v1228 = vunpack.c.l.b16 %v498
        %v1229 = vunpack.c.h.b16 %v498
        %v1230 = vunpack.c.l.b16 %v499
        %v1231 = vunpack.c.h.b16 %v499
        %v1232 = vunpack.c.l.b16 %v500
        %v1233 = vunpack.c.h.b16 %v500
        %v1234 = vunpack.c.l.b16 %v501
        %v1235 = vunpack.c.h.b16 %v501
        %v1236 = vunpack.c.l.b16 %v502
        %v1237 = vunpack.c.h.b16 %v502
        %v1238 = vunpack.c.l.b16 %v503
        %v1239 = vunpack.c.h.b16 %v503
        %v1240 = vunpack.c.l.b16 %v504
        %v1241 = vunpack.c.h.b16 %v504
        %v1242 = vunpack.c.l.b16 %v505
        %v1243 = vunpack.c.h.b16 %v505
        %v1244 = vunpack.c.l.b16 %v506
        %v1245 = vunpack.c.h.b16 %v506
        %v1246 = vunpack.c.l.b16 %v507
        %v1247 = vunpack.c.h.b16 %v507
        %v1248 = vunpack.c.l.b16 %v508
        %v1249 = vunpack.c.h.b16 %v508
        %v1250 = vunpack.c.l.b16 %v509
        %v1251 = vunpack.c.h.b16 %v509
        %v1252 = vunpack.c.l.b16 %v510
        %v1253 = vunpack.c.h.b16 %v510
        %v1254 = vunpack.c.l.b16 %v511
        %v1255 = vunpack.c.h.b16 %v511
        %v1256 = vunpack.c.l.b16 %v512
        %v1257 = vunpack.c.h.b16 %v512
        %v1258 = vunpack.c.l.b16 %v513
        %v1259 = vunpack.c.h.b16 %v513
        %v1260 = vunpack.c.l.b16 %v514
        %v1261 = vunpack.c.h.b16 %v514
        %v1262 = vunpack.c.l.b16 %v515
        %v1263 = vunpack.c.h.b16 %v515
        %v1264 = vunpack.c.l.b16 %v516
        %v1265 = vunpack.c.h.b16 %v516
        %v1266 = vunpack.c.l.b16 %v517
        %v1267 = vunpack.c.h.b16 %v517
        %v1268 = vunpack.c.l.b16 %v518
        %v1269 = vunpack.c.h.b16 %v518
        %v1270 = vunpack.c.l.b16 %v519
        %v1271 = vunpack.c.h.b16 %v519
        %v1272 = vunpack.c.l.b16 %v520
        %v1273 = vunpack.c.h.b16 %v520
        %v1274 = vunpack.c.l.b16 %v521
        %v1275 = vunpack.c.h.b16 %v521
        %v1276 = vunpack.c.l.b16 %v522
        %v1277 = vunpack.c.h.b16 %v522
        %v1278 = vunpack.c.l.b16 %v523
        %v1279 = vunpack.c.h.b16 %v523
        %v1280 = vunpack.c.l.b16 %v524
        %v1281 = vunpack.c.h.b16 %v524
        %v1282 = vunpack.c.l.b16 %v525
        %v1283 = vunpack.c.h.b16 %v525
        %v1284 = vunpack.c.l.b16 %v526
        %v1285 = vunpack.c.h.b16 %v526
        %v1286 = vunpack.c.l.b16 %v527
        %v1287 = vunpack.c.h.b16 %v527
        %v1288 = vunpack.c.l.b16 %v528
        %v1289 = vunpack.c.h.b16 %v528
        %v1290 = vunpack.c.l.b16 %v529
        %v1291 = vunpack.c.h.b16 %v529
        %v1292 = vunpack.c.l.b16 %v530
        %v1293 = vunpack.c.h.b16 %v530
        %v1294 = vunpack.c.l.b16 %v531
        %v1295 = vunpack.c.h.b16 %v531
        %v1296 = vunpack.c.l.b16 %v532
        %v1297 = vunpack.c.h.b16 %v532
        %v1298 = vunpack.c.l.b16 %v533
        %v1299 = vunpack.c.h.b16 %v533
        %v1300 = vunpack.c.l.b16 %v534
        %v1301 = vunpack.c.h.b16 %v534
        %v1302 = vunpack.c.l.b16 %v535
        %v1303 = vunpack.c.h.b16 %v535
        %v1304 = vunpack.c.l.b16 %v536
        %v1305 = vunpack.c.h.b16 %v536
        %v1306 = vunpack.c.l.b16 %v537
        %v1307 = vunpack.c.h.b16 %v537
        %v1308 = vunpack.c.l.b16 %v538
        %v1309 = vunpack.c.h.b16 %v538
        %v1310 = vunpack.c.l.b16 %v539
        %v1311 = vunpack.c.h.b16 %v539
        %v1312 = vunpack.c.l.b16 %v540
        %v1313 = vunpack.c.h.b16 %v540
        %v1314 = vunpack.c.l.b16 %v541
        %v1315 = vunpack.c.h.b16 %v541
        %v1316 = vunpack.c.l.b16 %v542
        %v1317 = vunpack.c.h.b16 %v542
        %v1318 = vunpack.c.l.b16 %v543
        %v1319 = vunpack.c.h.b16 %v543
        %v1320 = vunpack.c.l.b16 %v544
        %v1321 = vunpack.c.h.b16 %v544
        %v1322 = vunpack.c.l.b16 %v545
        %v1323 = vunpack.c.h.b16 %v545
        %v1324 = vunpack.c.l.b16 %v546
        %v1325 = vunpack.c.h.b16 %v546
        %v1326 = vunpack.c.l.b16 %v547
        %v1327 = vunpack.c.h.b16 %v547
        %v1328 = vunpack.c.l.b16 %v548
        %v1329 = vunpack.c.h.b16 %v548
        %v1330 = vunpack.c.l.b16 %v549
        %v1331 = vunpack.c.h.b16 %v549
        %v1332 = vunpack.c.l.b16 %v550
        %v1333 = vunpack.c.h.b16 %v550
        %v1334 = vunpack.c.l.b16 %v551
        %v1335 = vunpack.c.h.b16 %v551
        %v1336 = vunpack.c.l.b16 %v552
        %v1337 = vunpack.c.h.b16 %v552
        %v1338 = vunpack.c.l.b16 %v553
        %v1339 = vunpack.c.h.b16 %v553
        %v1340 = vunpack.c.l.b16 %v554
        %v1341 = vunpack.c.h.b16 %v554
        %v1342 = vunpack.c.l.b16 %v555
        %v1343 = vunpack.c.h.b16 %v555
        %v1344 = vpack.c.b16 %v840, %v832
        %v1345 = vpack.c.b16 %v841, %v833
        %v1346 = vpack.c.b16 %v842, %v834
        %v1347 = vpack.c.b16 %v843, %v835
        %v1348 = vpack.c.b16 %v844, %v836
        %v1349 = vpack.c.b16 %v845, %v837
        %v1350 = vpack.c.b16 %v846, %v838
        %v1351 = vpack.c.b16 %v847, %v839
        %v1352 = vpack.c.b16 %v856, %v848
        %v1353 = vpack.c.b16 %v857, %v849
        %v1354 = vpack.c.b16 %v858, %v850
        %v1355 = vpack.c.b16 %v859, %v851
        %v1356 = vpack.c.b16 %v860, %v852
        %v1357 = vpack.c.b16 %v861, %v853
        %v1358 = vpack.c.b16 %v862, %v854
        %v1359 = vpack.c.b16 %v863, %v855
        %v1360 = vpack.c.b16 %v872, %v864
        %v1361 = vpack.c.b16 %v873, %v865
        %v1362 = vpack.c.b16 %v874, %v866
        %v1363 = vpack.c.b16 %v875, %v867
        %v1364 = vpack.c.b16 %v876, %v868
        %v1365 = vpack.c.b16 %v877, %v869
        %v1366 = vpack.c.b16 %v878, %v870
        %v1367 = vpack.c.b16 %v879, %v871
        %v1368 = vpack.c.b16 %v888, %v880
        %v1369 = vpack.c.b16 %v889, %v881
        %v1370 = vpack.c.b16 %v890, %v882
        %v1371 = vpack.c.b16 %v891, %v883
        %v1372 = vpack.c.b16 %v892, %v884
        %v1373 = vpack.c.b16 %v893, %v885
        %v1374 = vpack.c.b16 %v894, %v886
        %v1375 = vpack.c.b16 %v895, %v887
        %v1376 = vpack.c.b16 %v904, %v896
        %v1377 = vpack.c.b16 %v905, %v897
        %v1378 = vpack.c.b16 %v906, %v898
        %v1379 = vpack.c.b16 %v907, %v899
        %v1380 = vpack.c.b16 %v908, %v900
        %v1381 = vpack.c.b16 %v909, %v901
        %v1382 = vpack.c.b16 %v910, %v902
        %v1383 = vpack.c.b16 %v911, %v903
        %v1384 = vpack.c.b16 %v920, %v912
        %v1385 = vpack.c.b16 %v921, %v913
        %v1386 = vpack.c.b16 %v922, %v914
        %v1387 = vpack.c.b16 %v923, %v915
        %v1388 = vpack.c.b16 %v924, %v916
        %v1389 = vpack.c.b16 %v925, %v917
        %v1390 = vpack.c.b16 %v926, %v918
        %v1391 = vpack.c.b16 %v927, %v919
        %v1392 = vpack.c.b16 %v936, %v928
        %v1393 = vpack.c.b16 %v937, %v929
        %v1394 = vpack.c.b16 %v938, %v930
        %v1395 = vpack.c.b16 %v939, %v931
        %v1396 = vpack.c.b16 %v940, %v932
        %v1397 = vpack.c.b16 %v941, %v933
        %v1398 = vpack.c.b16 %v942, %v934
        %v1399 = vpack.c.b16 %v943, %v935
        %v1400 = vpack.c.b16 %v952, %v944
        %v1401 = vpack.c.b16 %v953, %v945
        %v1402 = vpack.c.b16 %v954, %v946
        %v1403 = vpack.c.b16 %v955, %v947
        %v1404 = vpack.c.b16 %v956, %v948
        %v1405 = vpack.c.b16 %v957, %v949
        %v1406 = vpack.c.b16 %v958, %v950
        %v1407 = vpack.c.b16 %v959, %v951
        %v1408 = vpack.c.b16 %v968, %v960
        %v1409 = vpack.c.b16 %v969, %v961
        %v1410 = vpack.c.b16 %v970, %v962
        %v1411 = vpack.c.b16 %v971, %v963
        %v1412 = vpack.c.b16 %v972, %v964
        %v1413 = vpack.c.b16 %v973, %v965
        %v1414 = vpack.c.b16 %v974, %v966
        %v1415 = vpack.c.b16 %v975, %v967
        %v1416 = vpack.c.b16 %v984, %v976
        %v1417 = vpack.c.b16 %v985, %v977
        %v1418 = vpack.c.b16 %v986, %v978
        %v1419 = vpack.c.b16 %v987, %v979
        %v1420 = vpack.c.b16 %v988, %v980
        %v1421 = vpack.c.b16 %v989, %v981
        %v1422 = vpack.c.b16 %v990, %v982
        %v1423 = vpack.c.b16 %v991, %v983
        %v1424 = vpack.c.b16 %v1000, %v992
        %v1425 = vpack.c.b16 %v1001, %v993
        %v1426 = vpack.c.b16 %v1002, %v994
        %v1427 = vpack.c.b16 %v1003, %v995
        %v1428 = vpack.c.b16 %v1004, %v996
        %v1429 = vpack.c.b16 %v1005, %v997
        %v1430 = vpack.c.b16 %v1006, %v998
        %v1431 = vpack.c.b16 %v1007, %v999
        %v1432 = vpack.c.b16 %v1016, %v1008
        %v1433 = vpack.c.b16 %v1017, %v1009
        %v1434 = vpack.c.b16 %v1018, %v1010
        %v1435 = vpack.c.b16 %v1019, %v1011
        %v1436 = vpack.c.b16 %v1020, %v1012
        %v1437 = vpack.c.b16 %v1021, %v1013
        %v1438 = vpack.c.b16 %v1022, %v1014
        %v1439 = vpack.c.b16 %v1023, %v1015
        %v1440 = vpack.c.b16 %v1032, %v1024
        %v1441 = vpack.c.b16 %v1033, %v1025
        %v1442 = vpack.c.b16 %v1034, %v1026
        %v1443 = vpack.c.b16 %v1035, %v1027
        %v1444 = vpack.c.b16 %v1036, %v1028
        %v1445 = vpack.c.b16 %v1037, %v1029
        %v1446 = vpack.c.b16 %v1038, %v1030
        %v1447 = vpack.c.b16 %v1039, %v1031
        %v1448 = vpack.c.b16 %v1048, %v1040
        %v1449 = vpack.c.b16 %v1049, %v1041
        %v1450 = vpack.c.b16 %v1050, %v1042
        %v1451 = vpack.c.b16 %v1051, %v1043
        %v1452 = vpack.c.b16 %v1052, %v1044
        %v1453 = vpack.c.b16 %v1053, %v1045
        %v1454 = vpack.c.b16 %v1054, %v1046
        %v1455 = vpack.c.b16 %v1055, %v1047
        %v1456 = vpack.c.b16 %v1064, %v1056
        %v1457 = vpack.c.b16 %v1065, %v1057
        %v1458 = vpack.c.b16 %v1066, %v1058
        %v1459 = vpack.c.b16 %v1067, %v1059
        %v1460 = vpack.c.b16 %v1068, %v1060
        %v1461 = vpack.c.b16 %v1069, %v1061
        %v1462 = vpack.c.b16 %v1070, %v1062
        %v1463 = vpack.c.b16 %v1071, %v1063
        %v1464 = vpack.c.b16 %v1080, %v1072
        %v1465 = vpack.c.b16 %v1081, %v1073
        %v1466 = vpack.c.b16 %v1082, %v1074
        %v1467 = vpack.c.b16 %v1083, %v1075
        %v1468 = vpack.c.b16 %v1084, %v1076
        %v1469 = vpack.c.b16 %v1085, %v1077
        %v1470 = vpack.c.b16 %v1086, %v1078
        %v1471 = vpack.c.b16 %v1087, %v1079
        %v1472 = vpack.c.b16 %v1096, %v1088
        %v1473 = vpack.c.b16 %v1097, %v1089
        %v1474 = vpack.c.b16 %v1098, %v1090
        %v1475 = vpack.c.b16 %v1099, %v1091
        %v1476 = vpack.c.b16 %v1100, %v1092
        %v1477 = vpack.c.b16 %v1101, %v1093
        %v1478 = vpack.c.b16 %v1102, %v1094
        %v1479 = vpack.c.b16 %v1103, %v1095
        %v1480 = vpack.c.b16 %v1112, %v1104
        %v1481 = vpack.c.b16 %v1113, %v1105
        %v1482 = vpack.c.b16 %v1114, %v1106
        %v1483 = vpack.c.b16 %v1115, %v1107
        %v1484 = vpack.c.b16 %v1116, %v1108
        %v1485 = vpack.c.b16 %v1117, %v1109
        %v1486 = vpack.c.b16 %v1118, %v1110
        %v1487 = vpack.c.b16 %v1119, %v1111
        %v1488 = vpack.c.b16 %v1128, %v1120
        %v1489 = vpack.c.b16 %v1129, %v1121
        %v1490 = vpack.c.b16 %v1130, %v1122
        %v1491 = vpack.c.b16 %v1131, %v1123
        %v1492 = vpack.c.b16 %v1132, %v1124
        %v1493 = vpack.c.b16 %v1133, %v1125
        %v1494 = vpack.c.b16 %v1134, %v1126
        %v1495 = vpack.c.b16 %v1135, %v1127
        %v1496 = vpack.c.b16 %v1144, %v1136
        %v1497 = vpack.c.b16 %v1145, %v1137
        %v1498 = vpack.c.b16 %v1146, %v1138
        %v1499 = vpack.c.b16 %v1147, %v1139
        %v1500 = vpack.c.b16 %v1148, %v1140
        %v1501 = vpack.c.b16 %v1149, %v1141
        %v1502 = vpack.c.b16 %v1150, %v1142
        %v1503 = vpack.c.b16 %v1151, %v1143
        %v1504 = vpack.c.b16 %v1160, %v1152
        %v1505 = vpack.c.b16 %v1161, %v1153
        %v1506 = vpack.c.b16 %v1162, %v1154
        %v1507 = vpack.c.b16 %v1163, %v1155
        %v1508 = vpack.c.b16 %v1164, %v1156
        %v1509 = vpack.c.b16 %v1165, %v1157
        %v1510 = vpack.c.b16 %v1166, %v1158
        %v1511 = vpack.c.b16 %v1167, %v1159
        %v1512 = vpack.c.b16 %v1176, %v1168
        %v1513 = vpack.c.b16 %v1177, %v1169
        %v1514 = vpack.c.b16 %v1178, %v1170
        %v1515 = vpack.c.b16 %v1179, %v1171
        %v1516 = vpack.c.b16 %v1180, %v1172
        %v1517 = vpack.c.b16 %v1181, %v1173
        %v1518 = vpack.c.b16 %v1182, %v1174
        %v1519 = vpack.c.b16 %v1183, %v1175
        %v1520 = vpack.c.b16 %v1192, %v1184
        %v1521 = vpack.c.b16 %v1193, %v1185
        %v1522 = vpack.c.b16 %v1194, %v1186
        %v1523 = vpack.c.b16 %v1195, %v1187
        %v1524 = vpack.c.b16 %v1196, %v1188
        %v1525 = vpack.c.b16 %v1197, %v1189
        %v1526 = vpack.c.b16 %v1198, %v1190
        %v1527 = vpack.c.b16 %v1199, %v1191
        %v1528 = vpack.c.b16 %v1208, %v1200
        %v1529 = vpack.c.b16 %v1209, %v1201
        %v1530 = vpack.c.b16 %v1210, %v1202
        %v1531 = vpack.c.b16 %v1211, %v1203
        %v1532 = vpack.c.b16 %v1212, %v1204
        %v1533 = vpack.c.b16 %v1213, %v1205
        %v1534 = vpack.c.b16 %v1214, %v1206
        %v1535 = vpack.c.b16 %v1215, %v1207
        %v1536 = vpack.c.b16 %v1224, %v1216
        %v1537 = vpack.c.b16 %v1225, %v1217
        %v1538 = vpack.c.b16 %v1226, %v1218
        %v1539 = vpack.c.b16 %v1227, %v1219
        %v1540 = vpack.c.b16 %v1228, %v1220
        %v1541 = vpack.c.b16 %v1229, %v1221
        %v1542 = vpack.c.b16 %v1230, %v1222
        %v1543 = vpack.c.b16 %v1231, %v1223
        %v1544 = vpack.c.b16 %v1240, %v1232
        %v1545 = vpack.c.b16 %v1241, %v1233
        %v1546 = vpack.c.b16 %v1242, %v1234
        %v1547 = vpack.c.b16 %v1243, %v1235
        %v1548 = vpack.c.b16 %v1244, %v1236
        %v1549 = vpack.c.b16 %v1245, %v1237
        %v1550 = vpack.c.b16 %v1246, %v1238
        %v1551 = vpack.c.b16 %v1247, %v1239
        %v1552 = vpack.c.b16 %v1256, %v1248
        %v1553 = vpack.c.b16 %v1257, %v1249
        %v1554 = vpack.c.b16 %v1258, %v1250
        %v1555 = vpack.c.b16 %v1259, %v1251
        %v1556 = vpack.c.b16 %v1260, %v1252
        %v1557 = vpack.c.b16 %v1261, %v1253
        %v1558 = vpack.c.b16 %v1262, %v1254
        %v1559 = vpack.c.b16 %v1263, %v1255
        %v1560 = vpack.c.b16 %v1272, %v1264
        %v1561 = vpack.c.b16 %v1273, %v1265
        %v1562 = vpack.c.b16 %v1274, %v1266
        %v1563 = vpack.c.b16 %v1275, %v1267
        %v1564 = vpack.c.b16 %v1276, %v1268
        %v1565 = vpack.c.b16 %v1277, %v1269
        %v1566 = vpack.c.b16 %v1278, %v1270
        %v1567 = vpack.c.b16 %v1279, %v1271
        %v1568 = vpack.c.b16 %v1288, %v1280
        %v1569 = vpack.c.b16 %v1289, %v1281
        %v1570 = vpack.c.b16 %v1290, %v1282
        %v1571 = vpack.c.b16 %v1291, %v1283
        %v1572 = vpack.c.b16 %v1292, %v1284
        %v1573 = vpack.c.b16 %v1293, %v1285
        %v1574 = vpack.c.b16 %v1294, %v1286
        %v1575 = vpack.c.b16 %v1295, %v1287
        %v1576 = vpack.c.b16 %v1304, %v1296
        %v1577 = vpack.c.b16 %v1305, %v1297
        %v1578 = vpack.c.b16 %v1306, %v1298
        %v1579 = vpack.c.b16 %v1307, %v1299
        %v1580 = vpack.c.b16 %v1308, %v1300
        %v1581 = vpack.c.b16 %v1309, %v1301
        %v1582 = vpack.c.b16 %v1310, %v1302
        %v1583 = vpack.c.b16 %v1311, %v1303
        %v1584 = vpack.c.b16 %v1320, %v1312
        %v1585 = vpack.c.b16 %v1321, %v1313
        %v1586 = vpack.c.b16 %v1322, %v1314
        %v1587 = vpack.c.b16 %v1323, %v1315
        %v1588 = vpack.c.b16 %v1324, %v1316
        %v1589 = vpack.c.b16 %v1325, %v1317
        %v1590 = vpack.c.b16 %v1326, %v1318
        %v1591 = vpack.c.b16 %v1327, %v1319
        %v1592 = vpack.c.b16 %v1336, %v1328
        %v1593 = vpack.c.b16 %v1337, %v1329
        %v1594 = vpack.c.b16 %v1338, %v1330
        %v1595 = vpack.c.b16 %v1339, %v1331
        %v1596 = vpack.c.b16 %v1340, %v1332
        %v1597 = vpack.c.b16 %v1341, %v1333
        %v1598 = vpack.c.b16 %v1342, %v1334
        %v1599 = vpack.c.b16 %v1343, %v1335
        %1856 = vmatprep.subr.bf16.mxu0 %v1345
        %1857 = vmatpush1.bf16.msra.mxu0 %v1344
        %1858 = vmatprep.subr.bf16.mxu0 %v1353
        %1859 = vmatpush1.bf16.msra.mxu0 %v1352
        %1860 = vmatprep.subr.bf16.mxu0 %v1361
        %1861 = vmatpush1.bf16.msra.mxu0 %v1360
        %1862 = vmatprep.subr.bf16.mxu0 %v1369
        %1863 = vmatpush1.bf16.msra.mxu0 %v1368
        %1864 = vmatprep.subr.bf16.mxu0 %v1377
        %1865 = vmatpush1.bf16.msra.mxu0 %v1376
        %1866 = vmatprep.subr.bf16.mxu0 %v1385
        %1867 = vmatpush1.bf16.msra.mxu0 %v1384
        %1868 = vmatprep.subr.bf16.mxu0 %v1393
        %1869 = vmatpush1.bf16.msra.mxu0 %v1392
        %1870 = vmatprep.subr.bf16.mxu0 %v1401
        %1871 = vmatpush1.bf16.msra.mxu0 %v1400
        %1872 = vmatprep.subr.bf16.mxu0 %v1409
        %1873 = vmatpush1.bf16.msra.mxu0 %v1408
        %1874 = vmatprep.subr.bf16.mxu0 %v1417
        %1875 = vmatpush1.bf16.msra.mxu0 %v1416
        %1876 = vmatprep.subr.bf16.mxu0 %v1425
        %1877 = vmatpush1.bf16.msra.mxu0 %v1424
        %1878 = vmatprep.subr.bf16.mxu0 %v1433
        %1879 = vmatpush1.bf16.msra.mxu0 %v1432
        %1880 = vmatprep.subr.bf16.mxu0 %v1441
        %1881 = vmatpush1.bf16.msra.mxu0 %v1440
        %1882 = vmatprep.subr.bf16.mxu0 %v1449
        %1883 = vmatpush1.bf16.msra.mxu0 %v1448
        %1884 = vmatprep.subr.bf16.mxu0 %v1457
        %1885 = vmatpush1.bf16.msra.mxu0 %v1456
        %1886 = vmatprep.subr.bf16.mxu0 %v1465
        %1887 = vmatpush1.bf16.msra.mxu0 %v1464
        %1888 = vmatprep.mubr.bf16.mxu0 %v569
        %1889 = vmatmul.mubr.bf16.gmra.mrb[0].mxu0 %v568
        %v1890 = vpop.f32.mrb[0].mxu0
        %v1891 = vadd.f32 0.0, %v1890
        %v1892 = vpop.f32.mrb[0].mxu0
        %v1893 = vadd.f32 0.0, %v1892
        %v1894 = vpop.f32.mrb[0].mxu0
        %v1895 = vadd.f32 0.0, %v1894
        %v1896 = vpop.f32.mrb[0].mxu0
        %v1897 = vadd.f32 0.0, %v1896
        %1898 = vdwg.mxu0
        %1899 = vmatprep.subr.bf16.mxu0 %v1473
        %1900 = vmatpush1.bf16.msra.mxu0 %v1472
        %1901 = vmatprep.subr.bf16.mxu0 %v1481
        %1902 = vmatpush1.bf16.msra.mxu0 %v1480
        %1903 = vmatprep.subr.bf16.mxu0 %v1489
        %1904 = vmatpush1.bf16.msra.mxu0 %v1488
        %1905 = vmatprep.subr.bf16.mxu0 %v1497
        %1906 = vmatpush1.bf16.msra.mxu0 %v1496
        %1907 = vmatprep.subr.bf16.mxu0 %v1505
        %1908 = vmatpush1.bf16.msra.mxu0 %v1504
        %1909 = vmatprep.subr.bf16.mxu0 %v1513
        %1910 = vmatpush1.bf16.msra.mxu0 %v1512
        %1911 = vmatprep.subr.bf16.mxu0 %v1521
        %1912 = vmatpush1.bf16.msra.mxu0 %v1520
        %1913 = vmatprep.subr.bf16.mxu0 %v1529
        %1914 = vmatpush1.bf16.msra.mxu0 %v1528
        %1915 = vmatprep.subr.bf16.mxu0 %v1537
        %1916 = vmatpush1.bf16.msra.mxu0 %v1536
        %1917 = vmatprep.subr.bf16.mxu0 %v1545
        %1918 = vmatpush1.bf16.msra.mxu0 %v1544
        %1919 = vmatprep.subr.bf16.mxu0 %v1553
        %1920 = vmatpush1.bf16.msra.mxu0 %v1552
        %1921 = vmatprep.subr.bf16.mxu0 %v1561
        %1922 = vmatpush1.bf16.msra.mxu0 %v1560
        %1923 = vmatprep.subr.bf16.mxu0 %v1569
        %1924 = vmatpush1.bf16.msra.mxu0 %v1568
        %1925 = vmatprep.subr.bf16.mxu0 %v1577
        %1926 = vmatpush1.bf16.msra.mxu0 %v1576
        %1927 = vmatprep.subr.bf16.mxu0 %v1585
        %1928 = vmatpush1.bf16.msra.mxu0 %v1584
        %1929 = vmatprep.subr.bf16.mxu0 %v1593
        %1930 = vmatpush1.bf16.msra.mxu0 %v1592
        %1931 = vmatprep.mubr.bf16.mxu0 %v571
        %1932 = vmatmul.mubr.bf16.gmra.mrb[0].mxu0 %v570
        %v1933 = vpop.f32.mrb[0].mxu0
        %v1934 = vadd.f32 %v1891, %v1933
        %v1935 = vpop.f32.mrb[0].mxu0
        %v1936 = vadd.f32 %v1893, %v1935
        %v1937 = vpop.f32.mrb[0].mxu0
        %v1938 = vadd.f32 %v1895, %v1937
        %v1939 = vpop.f32.mrb[0].mxu0
        %v1940 = vadd.f32 %v1897, %v1939
        %1941 = vdwg.mxu0
        %1942 = vmatprep.subr.bf16.mxu0 %v1347
        %1943 = vmatpush1.bf16.msra.mxu0 %v1346
        %1944 = vmatprep.subr.bf16.mxu0 %v1355
        %1945 = vmatpush1.bf16.msra.mxu0 %v1354
        %1946 = vmatprep.subr.bf16.mxu0 %v1363
        %1947 = vmatpush1.bf16.msra.mxu0 %v1362
        %1948 = vmatprep.subr.bf16.mxu0 %v1371
        %1949 = vmatpush1.bf16.msra.mxu0 %v1370
        %1950 = vmatprep.subr.bf16.mxu0 %v1379
        %1951 = vmatpush1.bf16.msra.mxu0 %v1378
        %1952 = vmatprep.subr.bf16.mxu0 %v1387
        %1953 = vmatpush1.bf16.msra.mxu0 %v1386
        %1954 = vmatprep.subr.bf16.mxu0 %v1395
        %1955 = vmatpush1.bf16.msra.mxu0 %v1394
        %1956 = vmatprep.subr.bf16.mxu0 %v1403
        %1957 = vmatpush1.bf16.msra.mxu0 %v1402
        %1958 = vmatprep.subr.bf16.mxu0 %v1411
        %1959 = vmatpush1.bf16.msra.mxu0 %v1410
        %1960 = vmatprep.subr.bf16.mxu0 %v1419
        %1961 = vmatpush1.bf16.msra.mxu0 %v1418
        %1962 = vmatprep.subr.bf16.mxu0 %v1427
        %1963 = vmatpush1.bf16.msra.mxu0 %v1426
        %1964 = vmatprep.subr.bf16.mxu0 %v1435
        %1965 = vmatpush1.bf16.msra.mxu0 %v1434
        %1966 = vmatprep.subr.bf16.mxu0 %v1443
        %1967 = vmatpush1.bf16.msra.mxu0 %v1442
        %1968 = vmatprep.subr.bf16.mxu0 %v1451
        %1969 = vmatpush1.bf16.msra.mxu0 %v1450
        %1970 = vmatprep.subr.bf16.mxu0 %v1459
        %1971 = vmatpush1.bf16.msra.mxu0 %v1458
        %1972 = vmatprep.subr.bf16.mxu0 %v1467
        %1973 = vmatpush1.bf16.msra.mxu0 %v1466
        %1974 = vmatprep.mubr.bf16.mxu0 %v569
        %1975 = vmatmul.mubr.bf16.gmra.mrb[0].mxu0 %v568
        %v1976 = vpop.f32.mrb[0].mxu0
        %v1977 = vadd.f32 0.0, %v1976
        %v1978 = vpop.f32.mrb[0].mxu0
        %v1979 = vadd.f32 0.0, %v1978
        %v1980 = vpop.f32.mrb[0].mxu0
        %v1981 = vadd.f32 0.0, %v1980
        %v1982 = vpop.f32.mrb[0].mxu0
        %v1983 = vadd.f32 0.0, %v1982
        %1984 = vdwg.mxu0
        %1985 = vmatprep.subr.bf16.mxu0 %v1475
        %1986 = vmatpush1.bf16.msra.mxu0 %v1474
        %1987 = vmatprep.subr.bf16.mxu0 %v1483
        %1988 = vmatpush1.bf16.msra.mxu0 %v1482
        %1989 = vmatprep.subr.bf16.mxu0 %v1491
        %1990 = vmatpush1.bf16.msra.mxu0 %v1490
        %1991 = vmatprep.subr.bf16.mxu0 %v1499
        %1992 = vmatpush1.bf16.msra.mxu0 %v1498
        %1993 = vmatprep.subr.bf16.mxu0 %v1507
        %1994 = vmatpush1.bf16.msra.mxu0 %v1506
        %1995 = vmatprep.subr.bf16.mxu0 %v1515
        %1996 = vmatpush1.bf16.msra.mxu0 %v1514
        %1997 = vmatprep.subr.bf16.mxu0 %v1523
        %1998 = vmatpush1.bf16.msra.mxu0 %v1522
        %1999 = vmatprep.subr.bf16.mxu0 %v1531
        %2000 = vmatpush1.bf16.msra.mxu0 %v1530
        %2001 = vmatprep.subr.bf16.mxu0 %v1539
        %2002 = vmatpush1.bf16.msra.mxu0 %v1538
        %2003 = vmatprep.subr.bf16.mxu0 %v1547
        %2004 = vmatpush1.bf16.msra.mxu0 %v1546
        %2005 = vmatprep.subr.bf16.mxu0 %v1555
        %2006 = vmatpush1.bf16.msra.mxu0 %v1554
        %2007 = vmatprep.subr.bf16.mxu0 %v1563
        %2008 = vmatpush1.bf16.msra.mxu0 %v1562
        %2009 = vmatprep.subr.bf16.mxu0 %v1571
        %2010 = vmatpush1.bf16.msra.mxu0 %v1570
        %2011 = vmatprep.subr.bf16.mxu0 %v1579
        %2012 = vmatpush1.bf16.msra.mxu0 %v1578
        %2013 = vmatprep.subr.bf16.mxu0 %v1587
        %2014 = vmatpush1.bf16.msra.mxu0 %v1586
        %2015 = vmatprep.subr.bf16.mxu0 %v1595
        %2016 = vmatpush1.bf16.msra.mxu0 %v1594
        %2017 = vmatprep.mubr.bf16.mxu0 %v571
        %2018 = vmatmul.mubr.bf16.gmra.mrb[0].mxu0 %v570
        %v2019 = vpop.f32.mrb[0].mxu0
        %v2020 = vadd.f32 %v1977, %v2019
        %v2021 = vpop.f32.mrb[0].mxu0
        %v2022 = vadd.f32 %v1979, %v2021
        %v2023 = vpop.f32.mrb[0].mxu0
        %v2024 = vadd.f32 %v1981, %v2023
        %v2025 = vpop.f32.mrb[0].mxu0
        %v2026 = vadd.f32 %v1983, %v2025
        %2027 = vdwg.mxu0
        %2028 = vmatprep.subr.bf16.mxu0 %v1349
        %2029 = vmatpush1.bf16.msra.mxu0 %v1348
        %2030 = vmatprep.subr.bf16.mxu0 %v1357
        %2031 = vmatpush1.bf16.msra.mxu0 %v1356
        %2032 = vmatprep.subr.bf16.mxu0 %v1365
        %2033 = vmatpush1.bf16.msra.mxu0 %v1364
        %2034 = vmatprep.subr.bf16.mxu0 %v1373
        %2035 = vmatpush1.bf16.msra.mxu0 %v1372
        %2036 = vmatprep.subr.bf16.mxu0 %v1381
        %2037 = vmatpush1.bf16.msra.mxu0 %v1380
        %2038 = vmatprep.subr.bf16.mxu0 %v1389
        %2039 = vmatpush1.bf16.msra.mxu0 %v1388
        %2040 = vmatprep.subr.bf16.mxu0 %v1397
        %2041 = vmatpush1.bf16.msra.mxu0 %v1396
        %2042 = vmatprep.subr.bf16.mxu0 %v1405
        %2043 = vmatpush1.bf16.msra.mxu0 %v1404
        %2044 = vmatprep.subr.bf16.mxu0 %v1413
        %2045 = vmatpush1.bf16.msra.mxu0 %v1412
        %2046 = vmatprep.subr.bf16.mxu0 %v1421
        %2047 = vmatpush1.bf16.msra.mxu0 %v1420
        %2048 = vmatprep.subr.bf16.mxu0 %v1429
        %2049 = vmatpush1.bf16.msra.mxu0 %v1428
        %2050 = vmatprep.subr.bf16.mxu0 %v1437
        %2051 = vmatpush1.bf16.msra.mxu0 %v1436
        %2052 = vmatprep.subr.bf16.mxu0 %v1445
        %2053 = vmatpush1.bf16.msra.mxu0 %v1444
        %2054 = vmatprep.subr.bf16.mxu0 %v1453
        %2055 = vmatpush1.bf16.msra.mxu0 %v1452
        %2056 = vmatprep.subr.bf16.mxu0 %v1461
        %2057 = vmatpush1.bf16.msra.mxu0 %v1460
        %2058 = vmatprep.subr.bf16.mxu0 %v1469
        %2059 = vmatpush1.bf16.msra.mxu0 %v1468
        %2060 = vmatprep.mubr.bf16.mxu0 %v569
        %2061 = vmatmul.mubr.bf16.gmra.mrb[0].mxu0 %v568
        %v2062 = vpop.f32.mrb[0].mxu0
        %v2063 = vadd.f32 0.0, %v2062
        %v2064 = vpop.f32.mrb[0].mxu0
        %v2065 = vadd.f32 0.0, %v2064
        %v2066 = vpop.f32.mrb[0].mxu0
        %v2067 = vadd.f32 0.0, %v2066
        %v2068 = vpop.f32.mrb[0].mxu0
        %v2069 = vadd.f32 0.0, %v2068
        %2070 = vdwg.mxu0
        %2071 = vmatprep.subr.bf16.mxu0 %v1477
        %2072 = vmatpush1.bf16.msra.mxu0 %v1476
        %2073 = vmatprep.subr.bf16.mxu0 %v1485
        %2074 = vmatpush1.bf16.msra.mxu0 %v1484
        %2075 = vmatprep.subr.bf16.mxu0 %v1493
        %2076 = vmatpush1.bf16.msra.mxu0 %v1492
        %2077 = vmatprep.subr.bf16.mxu0 %v1501
        %2078 = vmatpush1.bf16.msra.mxu0 %v1500
        %2079 = vmatprep.subr.bf16.mxu0 %v1509
        %2080 = vmatpush1.bf16.msra.mxu0 %v1508
        %2081 = vmatprep.subr.bf16.mxu0 %v1517
        %2082 = vmatpush1.bf16.msra.mxu0 %v1516
        %2083 = vmatprep.subr.bf16.mxu0 %v1525
        %2084 = vmatpush1.bf16.msra.mxu0 %v1524
        %2085 = vmatprep.subr.bf16.mxu0 %v1533
        %2086 = vmatpush1.bf16.msra.mxu0 %v1532
        %2087 = vmatprep.subr.bf16.mxu0 %v1541
        %2088 = vmatpush1.bf16.msra.mxu0 %v1540
        %2089 = vmatprep.subr.bf16.mxu0 %v1549
        %2090 = vmatpush1.bf16.msra.mxu0 %v1548
        %2091 = vmatprep.subr.bf16.mxu0 %v1557
        %2092 = vmatpush1.bf16.msra.mxu0 %v1556
        %2093 = vmatprep.subr.bf16.mxu0 %v1565
        %2094 = vmatpush1.bf16.msra.mxu0 %v1564
        %2095 = vmatprep.subr.bf16.mxu0 %v1573
        %2096 = vmatpush1.bf16.msra.mxu0 %v1572
        %2097 = vmatprep.subr.bf16.mxu0 %v1581
        %2098 = vmatpush1.bf16.msra.mxu0 %v1580
        %2099 = vmatprep.subr.bf16.mxu0 %v1589
        %2100 = vmatpush1.bf16.msra.mxu0 %v1588
        %2101 = vmatprep.subr.bf16.mxu0 %v1597
        %2102 = vmatpush1.bf16.msra.mxu0 %v1596
        %2103 = vmatprep.mubr.bf16.mxu0 %v571
        %2104 = vmatmul.mubr.bf16.gmra.mrb[0].mxu0 %v570
        %v2105 = vpop.f32.mrb[0].mxu0
        %v2106 = vadd.f32 %v2063, %v2105
        %v2107 = vpop.f32.mrb[0].mxu0
        %v2108 = vadd.f32 %v2065, %v2107
        %v2109 = vpop.f32.mrb[0].mxu0
        %v2110 = vadd.f32 %v2067, %v2109
        %v2111 = vpop.f32.mrb[0].mxu0
        %v2112 = vadd.f32 %v2069, %v2111
        %2113 = vdwg.mxu0
        %2114 = vmatprep.subr.bf16.mxu0 %v1351
        %2115 = vmatpush1.bf16.msra.mxu0 %v1350
        %2116 = vmatprep.subr.bf16.mxu0 %v1359
        %2117 = vmatpush1.bf16.msra.mxu0 %v1358
        %2118 = vmatprep.subr.bf16.mxu0 %v1367
        %2119 = vmatpush1.bf16.msra.mxu0 %v1366
        %2120 = vmatprep.subr.bf16.mxu0 %v1375
        %2121 = vmatpush1.bf16.msra.mxu0 %v1374
        %2122 = vmatprep.subr.bf16.mxu0 %v1383
        %2123 = vmatpush1.bf16.msra.mxu0 %v1382
        %2124 = vmatprep.subr.bf16.mxu0 %v1391
        %2125 = vmatpush1.bf16.msra.mxu0 %v1390
        %2126 = vmatprep.subr.bf16.mxu0 %v1399
        %2127 = vmatpush1.bf16.msra.mxu0 %v1398
        %2128 = vmatprep.subr.bf16.mxu0 %v1407
        %2129 = vmatpush1.bf16.msra.mxu0 %v1406
        %2130 = vmatprep.subr.bf16.mxu0 %v1415
        %2131 = vmatpush1.bf16.msra.mxu0 %v1414
        %2132 = vmatprep.subr.bf16.mxu0 %v1423
        %2133 = vmatpush1.bf16.msra.mxu0 %v1422
        %2134 = vmatprep.subr.bf16.mxu0 %v1431
        %2135 = vmatpush1.bf16.msra.mxu0 %v1430
        %2136 = vmatprep.subr.bf16.mxu0 %v1439
        %2137 = vmatpush1.bf16.msra.mxu0 %v1438
        %2138 = vmatprep.subr.bf16.mxu0 %v1447
        %2139 = vmatpush1.bf16.msra.mxu0 %v1446
        %2140 = vmatprep.subr.bf16.mxu0 %v1455
        %2141 = vmatpush1.bf16.msra.mxu0 %v1454
        %2142 = vmatprep.subr.bf16.mxu0 %v1463
        %2143 = vmatpush1.bf16.msra.mxu0 %v1462
        %2144 = vmatprep.subr.bf16.mxu0 %v1471
        %2145 = vmatpush1.bf16.msra.mxu0 %v1470
        %2146 = vmatprep.mubr.bf16.mxu0 %v569
        %2147 = vmatmul.mubr.bf16.gmra.mrb[0].mxu0 %v568
        %v2148 = vpop.f32.mrb[0].mxu0
        %v2149 = vadd.f32 0.0, %v2148
        %v2150 = vpop.f32.mrb[0].mxu0
        %v2151 = vadd.f32 0.0, %v2150
        %v2152 = vpop.f32.mrb[0].mxu0
        %v2153 = vadd.f32 0.0, %v2152
        %v2154 = vpop.f32.mrb[0].mxu0
        %v2155 = vadd.f32 0.0, %v2154
        %2156 = vdwg.mxu0
        %2157 = vmatprep.subr.bf16.mxu0 %v1479
        %2158 = vmatpush1.bf16.msra.mxu0 %v1478
        %2159 = vmatprep.subr.bf16.mxu0 %v1487
        %2160 = vmatpush1.bf16.msra.mxu0 %v1486
        %2161 = vmatprep.subr.bf16.mxu0 %v1495
        %2162 = vmatpush1.bf16.msra.mxu0 %v1494
        %2163 = vmatprep.subr.bf16.mxu0 %v1503
        %2164 = vmatpush1.bf16.msra.mxu0 %v1502
        %2165 = vmatprep.subr.bf16.mxu0 %v1511
        %2166 = vmatpush1.bf16.msra.mxu0 %v1510
        %2167 = vmatprep.subr.bf16.mxu0 %v1519
        %2168 = vmatpush1.bf16.msra.mxu0 %v1518
        %2169 = vmatprep.subr.bf16.mxu0 %v1527
        %2170 = vmatpush1.bf16.msra.mxu0 %v1526
        %2171 = vmatprep.subr.bf16.mxu0 %v1535
        %2172 = vmatpush1.bf16.msra.mxu0 %v1534
        %2173 = vmatprep.subr.bf16.mxu0 %v1543
        %2174 = vmatpush1.bf16.msra.mxu0 %v1542
        %2175 = vmatprep.subr.bf16.mxu0 %v1551
        %2176 = vmatpush1.bf16.msra.mxu0 %v1550
        %2177 = vmatprep.subr.bf16.mxu0 %v1559
        %2178 = vmatpush1.bf16.msra.mxu0 %v1558
        %2179 = vmatprep.subr.bf16.mxu0 %v1567
        %2180 = vmatpush1.bf16.msra.mxu0 %v1566
        %2181 = vmatprep.subr.bf16.mxu0 %v1575
        %2182 = vmatpush1.bf16.msra.mxu0 %v1574
        %2183 = vmatprep.subr.bf16.mxu0 %v1583
        %2184 = vmatpush1.bf16.msra.mxu0 %v1582
        %2185 = vmatprep.subr.bf16.mxu0 %v1591
        %2186 = vmatpush1.bf16.msra.mxu0 %v1590
        %2187 = vmatprep.subr.bf16.mxu0 %v1599
        %2188 = vmatpush1.bf16.msra.mxu0 %v1598
        %2189 = vmatprep.mubr.bf16.mxu0 %v571
        %2190 = vmatmul.mubr.bf16.gmra.mrb[0].mxu0 %v570
        %v2191 = vpop.f32.mrb[0].mxu0
        %v2192 = vadd.f32 %v2149, %v2191
        %v2193 = vpop.f32.mrb[0].mxu0
        %v2194 = vadd.f32 %v2151, %v2193
        %v2195 = vpop.f32.mrb[0].mxu0
        %v2196 = vadd.f32 %v2153, %v2195
        %v2197 = vpop.f32.mrb[0].mxu0
        %v2198 = vadd.f32 %v2155, %v2197
        %2199 = vdwg.mxu0
        %v2200 = vld [vmem:[#allocation4] sm:$0xff]
        %v2202 = vlaneseq
        %v2203 = vshrl.u32 %v2202, 7
        %v2204 = vsub.s32 0, %v2203
        %v2205 = vrot.slane %v2200, %v2204
        %v2206 = vlaneseq
        %v2207 = vshrl.u32 %v2206, 7
        %v2208 = vsub.s32 1, %v2207
        %v2209 = vrot.slane %v2200, %v2208
        %v2210 = vlaneseq
        %v2211 = vshrl.u32 %v2210, 7
        %v2212 = vsub.s32 2, %v2211
        %v2213 = vrot.slane %v2200, %v2212
        %v2214 = vlaneseq
        %v2215 = vshrl.u32 %v2214, 7
        %v2216 = vsub.s32 3, %v2215
        %v2217 = vrot.slane %v2200, %v2216
        %v2218 = vlaneseq
        %v2219 = vshrl.u32 %v2218, 7
        %v2220 = vsub.s32 4, %v2219
        %v2221 = vrot.slane %v2200, %v2220
        %v2222 = vlaneseq
        %v2223 = vshrl.u32 %v2222, 7
        %v2224 = vsub.s32 5, %v2223
        %v2225 = vrot.slane %v2200, %v2224
        %v2226 = vlaneseq
        %v2227 = vshrl.u32 %v2226, 7
        %v2228 = vsub.s32 6, %v2227
        %v2229 = vrot.slane %v2200, %v2228
        %v2230 = vlaneseq
        %v2231 = vshrl.u32 %v2230, 7
        %v2232 = vsub.s32 7, %v2231
        %v2233 = vrot.slane %v2200, %v2232
        %v2242 = vmul.f32 %v1934, %v2205
        %v2243 = vmul.f32 %v1936, %v2209
        %v2244 = vmul.f32 %v2020, %v2213
        %v2245 = vmul.f32 %v2022, %v2217
        %v2246 = vmul.f32 %v2106, %v2221
        %v2247 = vmul.f32 %v2108, %v2225
        %v2248 = vmul.f32 %v2192, %v2229
        %v2249 = vmul.f32 %v2194, %v2233
        %v2250 = vmul.f32 %v1938, %v2205
        %v2251 = vmul.f32 %v1940, %v2209
        %v2252 = vmul.f32 %v2024, %v2213
        %v2253 = vmul.f32 %v2026, %v2217
        %v2254 = vmul.f32 %v2110, %v2221
        %v2255 = vmul.f32 %v2112, %v2225
        %v2256 = vmul.f32 %v2196, %v2229
        %v2257 = vmul.f32 %v2198, %v2233
        %v2258 = vld [vmem:[#allocation6] sm:$0xff]
        %v2260 = vlaneseq
        %v2261 = vshrl.u32 %v2260, 7
        %v2262 = vsub.s32 0, %v2261
        %v2263 = vrot.slane %v2258, %v2262
        %v2264 = vlaneseq
        %v2265 = vshrl.u32 %v2264, 7
        %v2266 = vsub.s32 1, %v2265
        %v2267 = vrot.slane %v2258, %v2266
        %v2268 = vlaneseq
        %v2269 = vshrl.u32 %v2268, 7
        %v2270 = vsub.s32 2, %v2269
        %v2271 = vrot.slane %v2258, %v2270
        %v2272 = vlaneseq
        %v2273 = vshrl.u32 %v2272, 7
        %v2274 = vsub.s32 3, %v2273
        %v2275 = vrot.slane %v2258, %v2274
        %v2276 = vlaneseq
        %v2277 = vshrl.u32 %v2276, 7
        %v2278 = vsub.s32 4, %v2277
        %v2279 = vrot.slane %v2258, %v2278
        %v2280 = vlaneseq
        %v2281 = vshrl.u32 %v2280, 7
        %v2282 = vsub.s32 5, %v2281
        %v2283 = vrot.slane %v2258, %v2282
        %v2284 = vlaneseq
        %v2285 = vshrl.u32 %v2284, 7
        %v2286 = vsub.s32 6, %v2285
        %v2287 = vrot.slane %v2258, %v2286
        %v2288 = vlaneseq
        %v2289 = vshrl.u32 %v2288, 7
        %v2290 = vsub.s32 7, %v2289
        %v2291 = vrot.slane %v2258, %v2290
        %v2300 = vadd.f32 %v2242, %v2263
        %v2301 = vadd.f32 %v2243, %v2267
        %v2302 = vadd.f32 %v2244, %v2271
        %v2303 = vadd.f32 %v2245, %v2275
        %v2304 = vadd.f32 %v2246, %v2279
        %v2305 = vadd.f32 %v2247, %v2283
        %v2306 = vadd.f32 %v2248, %v2287
        %v2307 = vadd.f32 %v2249, %v2291
        %v2308 = vadd.f32 %v2250, %v2263
        %v2309 = vadd.f32 %v2251, %v2267
        %v2310 = vadd.f32 %v2252, %v2271
        %v2311 = vadd.f32 %v2253, %v2275
        %v2312 = vadd.f32 %v2254, %v2279
        %v2313 = vadd.f32 %v2255, %v2283
        %v2314 = vadd.f32 %v2256, %v2287
        %v2315 = vadd.f32 %v2257, %v2291
        %v2316 = vmax.f32 %v2300, 0.0
        %v2317 = vmax.f32 %v2301, 0.0
        %v2318 = vmax.f32 %v2302, 0.0
        %v2319 = vmax.f32 %v2303, 0.0
        %v2320 = vmax.f32 %v2304, 0.0
        %v2321 = vmax.f32 %v2305, 0.0
        %v2322 = vmax.f32 %v2306, 0.0
        %v2323 = vmax.f32 %v2307, 0.0
        %v2324 = vmax.f32 %v2308, 0.0
        %v2325 = vmax.f32 %v2309, 0.0
        %v2326 = vmax.f32 %v2310, 0.0
        %v2327 = vmax.f32 %v2311, 0.0
        %v2328 = vmax.f32 %v2312, 0.0
        %v2329 = vmax.f32 %v2313, 0.0
        %v2330 = vmax.f32 %v2314, 0.0
        %v2331 = vmax.f32 %v2315, 0.0
        %v2332 = vpack.c.bf16 %v2324, %v2316
        %v2333 = vpack.c.bf16 %v2325, %v2317
        %v2334 = vpack.c.bf16 %v2326, %v2318
        %v2335 = vpack.c.bf16 %v2327, %v2319
        %v2336 = vpack.c.bf16 %v2328, %v2320
        %v2337 = vpack.c.bf16 %v2329, %v2321
        %v2338 = vpack.c.bf16 %v2330, %v2322
        %v2339 = vpack.c.bf16 %v2331, %v2323
        %v2348 = vunpack.c.l.b16 %v2332
        %v2349 = vunpack.c.l.b16 %v2333
        %v2350 = vunpack.c.l.b16 %v2334
        %v2351 = vunpack.c.l.b16 %v2335
        %v2352 = vunpack.c.l.b16 %v2336
        %v2353 = vunpack.c.l.b16 %v2337
        %v2354 = vunpack.c.l.b16 %v2338
        %v2355 = vunpack.c.l.b16 %v2339
        %v2356 = vunpack.c.h.b16 %v2332
        %v2357 = vunpack.c.h.b16 %v2333
        %v2358 = vunpack.c.h.b16 %v2334
        %v2359 = vunpack.c.h.b16 %v2335
        %v2360 = vunpack.c.h.b16 %v2336
        %v2361 = vunpack.c.h.b16 %v2337
        %v2362 = vunpack.c.h.b16 %v2338
        %v2363 = vunpack.c.h.b16 %v2339
        %v2364 = vpack.c.b16 %v2349, %v2348
        %v2365 = vpack.c.b16 %v2351, %v2350
        %v2366 = vpack.c.b16 %v2353, %v2352
        %v2367 = vpack.c.b16 %v2355, %v2354
        %v2368 = vpack.c.b16 %v2357, %v2356
        %v2369 = vpack.c.b16 %v2359, %v2358
        %v2370 = vpack.c.b16 %v2361, %v2360
        %v2371 = vpack.c.b16 %v2363, %v2362
        %2380 = vst [vmem:[%s293] sm:$0xff] %v2364
        %2381 = vst [vmem:[%s293 + $0x8] sm:$0xff] %v2365
        %2382 = vst [vmem:[%s293 + $0x10] sm:$0xff] %v2366
        %2383 = vst [vmem:[%s293 + $0x18] sm:$0xff] %v2367
        %2384 = vst [vmem:[%s293 + $0x20] sm:$0xff] %v2368
        %2385 = vst [vmem:[%s293 + $0x28] sm:$0xff] %v2369
        %2386 = vst [vmem:[%s293 + $0x30] sm:$0xff] %v2370
        %2387 = vst [vmem:[%s293 + $0x38] sm:$0xff] %v2371
        %s2388 = smul.u32 2, %s21
        %s2389 = smul.u32 8, %s22
        %p2390 = scmp.lt.s32.totalorder %s2388, 3
        %s2391 = scalar_select %p2390, %s2388, 3
        %p2392 = scmp.lt.s32.totalorder %s2389, 7
        %s2393 = scalar_select %p2392, %s2389, 7
        %s2394 = smul.addr %s2391, 8
        %s2395 = sadd.s32 %s2393, %s2394
        %s2396 = smul.addr %s2395, 4
        %s2397 = scalar_lea.vmem %s4, %s2396
        // Predicated region
        $region49: #{gfe_two_apply.6} parent=35 // pred_check
          %p2398 = pneg %p153
        $region50: #{gfe_two_apply.6} parent=35 // pred_check_branch
          %2400 = sbr.rel (%p2398) target = $region52
        $region51: #{gfe_two_apply.6} parent=35 // pred_region
          %s2401 = smul.u32 2, %s21
          %s2402 = smul.u32 8, %s22
        $region52: #{gfe_two_apply.6} parent=35 // pred_fallthru
          _
      $region36: #{gfe_two_apply.6} parent=5 // pred_fallthru
        _
      %p2403 = scmp.le.s32.totalorder 2, %s12
      // Predicated region
      $region53: #{gfe_two_apply.6} parent=5 // pred_check
        %p2404 = pneg %p2403
      $region54: #{gfe_two_apply.6} parent=5 // pred_check_branch
        %2406 = sbr.rel (%p2404) target = $region56
      $region55: #{gfe_two_apply.6} parent=5 // pred_region
        %s2407 = ssub.s32 %s12, 2
        // Predicated region
        $region57: #{gfe_two_apply.6} parent=55 // pred_check
          %p2408 = pneg %p159
        $region58: #{gfe_two_apply.6} parent=55 // pred_check_branch
          %2410 = sbr.rel (%p2408) target = $region60
        $region59: #{gfe_two_apply.6} parent=55 // pred_region
          %s2411 = smul.u32 2, %s23
          %s2412 = smul.u32 8, %s24
          %p2413 = scmp.lt.s32.totalorder %s2411, 3
          %s2414 = scalar_select %p2413, %s2411, 3
          %p2415 = scmp.lt.s32.totalorder %s2412, 7
          %s2416 = scalar_select %p2415, %s2412, 7
          %s2417 = smul.addr %s2414, 8
          %s2418 = sadd.s32 %s2416, %s2417
          %s2419 = smul.addr %s2418, 4
          %s2420 = scalar_lea.vmem %s4, %s2419
        $region60: #{gfe_two_apply.6} parent=55 // pred_fallthru
          _
      $region56: #{gfe_two_apply.6} parent=5 // pred_fallthru
        _
    $region6: #{gfe_two_apply.6} parent=1 // loop_footer
      %s16 = sadd.s32 1, %s12
    $region7: #{gfe_two_apply.6} parent=1 // loop_footer_branch
      %11 = sbr.rel target = $region3
    $region8: #{gfe_two_apply.6} parent=1 // loop_exit
      _
    %2421 = vsyncpa [#allocation3], 1
    %s2422 = scalar_lea.sflag [#allocation3], 1
    %2423 = vsyncpa %s2422, 1
    %2424 = vsyncpa [#allocation5], 1

// kernel: gfe_two_apply.7
$region0: #{gfe_two_apply.7}
  #allocation0 [shape = 'u32[]', space=smem, size = 0x4, offset = 0x4, fixed_abs, tag = 'smem constant byte address 0x4 - core index']
  #allocation1 [shape = 'u32[144,128]{1,0:T(1,128)}', space=vmem, size = 0x12000, scoped, tag = 'internal scratch']
  #allocation2 [shape = 'bf16[64,1152]{1,0:T(16,128)(2,1)}', space=vmem, size = 0x24000, scoped, tag = 'scratch operand']
  %s0 = inlined_call_operand.vmem [shape: bf16[2,2,96,128], index: 0, kind: input, shape index: {}]
  %s1 = inlined_call_operand.vmem [shape: bf16[2,64,64], index: 1, kind: input, shape index: {}]
  %s2 = inlined_call_operand.hbm [shape: bf16[1152,128], index: 2, kind: input, shape index: {}]
  %s3 = inlined_call_operand.hbm [shape: f32[1,128], index: 3, kind: input, shape index: {}]
  %s4 = inlined_call_operand.hbm [shape: f32[1,128], index: 4, kind: input, shape index: {}]
  %s5 = inlined_call_operand.hbm [shape: bf16[64,128], index: 5, kind: input, shape index: {}]
  %s6 = inlined_call_operand.hbm [shape: f32[1,128], index: 6, kind: input, shape index: {}]
  %s7 = inlined_call_operand.hbm [shape: f32[1,128], index: 7, kind: input, shape index: {}]
  %s8 = inlined_call_operand.vmem [shape: bf16[2,64,128], index: 8, kind: output, shape index: {}]
  %s9 = sld [smem:[#allocation0]]
  $region89: #{gfe_two_apply.7} parent=0
    _
  %s11 = ssub.s32 1, %s9
  %s12 = scalar_select 0, %s11, %s9
  $region1: #{gfe_two_apply.7} parent=0
    #allocation3 [shape = 'u8[294912]{0}', space=vmem, size = 0x48000, scoped, tag = 'input window, operand 2, single buffered']
    #allocation4 [shape = 's32[2]{0}', space=sflag, size = 0x8, scoped, tag = 'scoped memory for gfe_two_apply.7']
    #allocation5 [shape = 'u8[512]{0}', space=vmem, size = 0x400, scoped, tag = 'input window, operand 3, single buffered']
    #allocation6 [shape = 's32[1]{0}', space=sflag, size = 0x4, scoped, tag = 'scoped memory for gfe_two_apply.7']
    #allocation7 [shape = 'u8[512]{0}', space=vmem, size = 0x400, scoped, tag = 'input window, operand 4, single buffered']
    #allocation8 [shape = 'u8[16384]{0}', space=vmem, size = 0x4000, scoped, tag = 'input window, operand 5, single buffered']
    #allocation9 [shape = 's32[1]{0}', space=sflag, size = 0x4, scoped, tag = 'scoped memory for gfe_two_apply.7']
    #allocation10 [shape = 'u8[512]{0}', space=vmem, size = 0x400, scoped, tag = 'input window, operand 6, single buffered']
    #allocation11 [shape = 'u8[512]{0}', space=vmem, size = 0x400, scoped, tag = 'input window, operand 7, single buffered']
    #allocation12 [shape = 's32[1]{0}', space=sflag, size = 0x4, scoped, tag = 'scoped memory for gfe_two_apply.7']
    %13 = vsyncpa [#allocation4], 0
    %14 = vsyncpa [#allocation6], 0
    %15 = vsyncpa [#allocation9], 0
    %16 = vsyncpa [#allocation12], 0
    loop: start=0, step=1, limit=4
    $region2: #{gfe_two_apply.7} parent=1 // loop_pre_header
      _
    $region3: #{gfe_two_apply.7} parent=1 // loop_header
      %s18 = sphi 0, %s22
      %p19 = scmp.ge.s32.totalorder %s18, 4
      %s25 = sphi 0, %s37
      %s26 = sphi 0, %s33
      %s27 = sphi 0, %s25
      %s28 = sphi 0, %s26
      %s29 = sphi 0, %s27
      %s30 = sphi 0, %s28
      %s40 = sphi 0, %s42
      %s43 = sphi 0, %s40
      %s44 = sphi 0, %s43
      %s60 = sphi 0, %s44
      %s68 = sphi 0, %s70
      %s71 = sphi 0, %s68
      %s72 = sphi 0, %s71
      %s88 = sphi 0, %s72
      %s92 = sphi 0, %s92
      %s94 = sphi 0, %s92
      %s95 = sphi 0, %s94
      %s109 = sphi 0, %s95
      %s113 = sphi 0, %s113
      %s115 = sphi 0, %s113
      %s116 = sphi 0, %s115
      %s130 = sphi 0, %s116
      %s134 = sphi 0, %s134
      %s136 = sphi 0, %s134
      %s137 = sphi 0, %s136
      %s151 = sphi 0, %s137
      %s155 = sphi 0, %s155
      %s157 = sphi 0, %s155
      %s158 = sphi 0, %s157
      %s172 = sphi 0, %s158
      %s176 = sphi 0, %s176
      %s178 = sphi 0, %s176
      %s179 = sphi 0, %s178
      %s193 = sphi 0, %s179
      %s197 = sphi 0, %s197
      %s199 = sphi 0, %s197
      %s200 = sphi 0, %s199
      %s214 = sphi 0, %s200
      %s222 = sphi 0, %s224
      %s225 = sphi 0, %s222
      %s226 = sphi 0, %s225
      %s242 = sphi 0, %s226
    $region4: #{gfe_two_apply.7} parent=1 // loop_header_branch
      %21 = sbr.rel (%p19) target = $region8
    $region5: #{gfe_two_apply.7} parent=1 // loop_body
      %s23 = ssub.s32 %s18, 1
      %s24 = ssub.s32 %s18, 2
      %s31 = sadd.s32 1, %s26
      %p32 = scmp.ge.s32.totalorder %s31, 1
      %s33 = scalar_select %p32, 0, %s31
      %s34 = sadd.s32 1, %s25
      %s35 = scalar_select %p32, %s34, %s25
      %p36 = scmp.ge.s32.totalorder %s35, 2
      %s37 = scalar_select %p36, 0, %s35
      %s38 = ssub.s32 %s25, %s37
      %p39 = scmp.eq.s32.totalorder %s38, 0
      %s41 = sadd.s32 %s40, 1
      %s42 = scalar_select %p39, %s40, %s41
      %p45 = pneg %p39
      %p46 = scmp.eq.s32.totalorder %s18, 1
      %p47 = por %p45, %p46
      %p48 = scmp.ne.s32.totalorder %s40, %s43
      %p49 = scmp.eq.s32.totalorder %s18, 0
      %p50 = por %p48, %p49
      %p51 = scmp.ne.s32.totalorder %s40, %s43
      %p52 = scmp.eq.s32.totalorder %s23, 1
      %p53 = por %p51, %p52
      %p54 = scmp.ne.s32.totalorder %s43, %s44
      %p55 = scmp.eq.s32.totalorder %s23, 0
      %p56 = por %p54, %p55
      %p57 = scmp.ne.s32.totalorder %s43, %s44
      %p58 = scmp.eq.s32.totalorder %s24, 1
      %p59 = por %p57, %p58
      %p61 = scmp.ne.s32.totalorder %s44, %s60
      %p62 = scmp.eq.s32.totalorder %s24, 0
      %p63 = por %p61, %p62
      %s64 = ssub.s32 %s25, %s37
      %s65 = ssub.s32 %s26, %s33
      %s66 = sor.u32 %s64, %s65
      %p67 = scmp.eq.s32.totalorder %s66, 0
      %s69 = sadd.s32 %s68, 1
      %s70 = scalar_select %p67, %s68, %s69
      %p73 = pneg %p67
      %p74 = scmp.eq.s32.totalorder %s18, 1
      %p75 = por %p73, %p74
      %p76 = scmp.ne.s32.totalorder %s68, %s71
      %p77 = scmp.eq.s32.totalorder %s18, 0
      %p78 = por %p76, %p77
      %p79 = scmp.ne.s32.totalorder %s68, %s71
      %p80 = scmp.eq.s32.totalorder %s23, 1
      %p81 = por %p79, %p80
      %p82 = scmp.ne.s32.totalorder %s71, %s72
      %p83 = scmp.eq.s32.totalorder %s23, 0
      %p84 = por %p82, %p83
      %p85 = scmp.ne.s32.totalorder %s71, %s72
      %p86 = scmp.eq.s32.totalorder %s24, 1
      %p87 = por %p85, %p86
      %p89 = scmp.ne.s32.totalorder %s72, %s88
      %p90 = scmp.eq.s32.totalorder %s24, 0
      %p91 = por %p89, %p90
      %s93 = sadd.s32 %s92, 1
      %p96 = scmp.eq.s32.totalorder %s18, 1
      %p97 = scmp.ne.s32.totalorder %s92, %s94
      %p98 = scmp.eq.s32.totalorder %s18, 0
      %p99 = por %p97, %p98
      %p100 = scmp.ne.s32.totalorder %s92, %s94
      %p101 = scmp.eq.s32.totalorder %s23, 1
      %p102 = por %p100, %p101
      %p103 = scmp.ne.s32.totalorder %s94, %s95
      %p104 = scmp.eq.s32.totalorder %s23, 0
      %p105 = por %p103, %p104
      %p106 = scmp.ne.s32.totalorder %s94, %s95
      %p107 = scmp.eq.s32.totalorder %s24, 1
      %p108 = por %p106, %p107
      %p110 = scmp.ne.s32.totalorder %s95, %s109
      %p111 = scmp.eq.s32.totalorder %s24, 0
      %p112 = por %p110, %p111
      %s114 = sadd.s32 %s113, 1
      %p117 = scmp.eq.s32.totalorder %s18, 1
      %p118 = scmp.ne.s32.totalorder %s113, %s115
      %p119 = scmp.eq.s32.totalorder %s18, 0
      %p120 = por %p118, %p119
      %p121 = scmp.ne.s32.totalorder %s113, %s115
      %p122 = scmp.eq.s32.totalorder %s23, 1
      %p123 = por %p121, %p122
      %p124 = scmp.ne.s32.totalorder %s115, %s116
      %p125 = scmp.eq.s32.totalorder %s23, 0
      %p126 = por %p124, %p125
      %p127 = scmp.ne.s32.totalorder %s115, %s116
      %p128 = scmp.eq.s32.totalorder %s24, 1
      %p129 = por %p127, %p128
      %p131 = scmp.ne.s32.totalorder %s116, %s130
      %p132 = scmp.eq.s32.totalorder %s24, 0
      %p133 = por %p131, %p132
      %s135 = sadd.s32 %s134, 1
      %p138 = scmp.eq.s32.totalorder %s18, 1
      %p139 = scmp.ne.s32.totalorder %s134, %s136
      %p140 = scmp.eq.s32.totalorder %s18, 0
      %p141 = por %p139, %p140
      %p142 = scmp.ne.s32.totalorder %s134, %s136
      %p143 = scmp.eq.s32.totalorder %s23, 1
      %p144 = por %p142, %p143
      %p145 = scmp.ne.s32.totalorder %s136, %s137
      %p146 = scmp.eq.s32.totalorder %s23, 0
      %p147 = por %p145, %p146
      %p148 = scmp.ne.s32.totalorder %s136, %s137
      %p149 = scmp.eq.s32.totalorder %s24, 1
      %p150 = por %p148, %p149
      %p152 = scmp.ne.s32.totalorder %s137, %s151
      %p153 = scmp.eq.s32.totalorder %s24, 0
      %p154 = por %p152, %p153
      %s156 = sadd.s32 %s155, 1
      %p159 = scmp.eq.s32.totalorder %s18, 1
      %p160 = scmp.ne.s32.totalorder %s155, %s157
      %p161 = scmp.eq.s32.totalorder %s18, 0
      %p162 = por %p160, %p161
      %p163 = scmp.ne.s32.totalorder %s155, %s157
      %p164 = scmp.eq.s32.totalorder %s23, 1
      %p165 = por %p163, %p164
      %p166 = scmp.ne.s32.totalorder %s157, %s158
      %p167 = scmp.eq.s32.totalorder %s23, 0
      %p168 = por %p166, %p167
      %p169 = scmp.ne.s32.totalorder %s157, %s158
      %p170 = scmp.eq.s32.totalorder %s24, 1
      %p171 = por %p169, %p170
      %p173 = scmp.ne.s32.totalorder %s158, %s172
      %p174 = scmp.eq.s32.totalorder %s24, 0
      %p175 = por %p173, %p174
      %s177 = sadd.s32 %s176, 1
      %p180 = scmp.eq.s32.totalorder %s18, 1
      %p181 = scmp.ne.s32.totalorder %s176, %s178
      %p182 = scmp.eq.s32.totalorder %s18, 0
      %p183 = por %p181, %p182
      %p184 = scmp.ne.s32.totalorder %s176, %s178
      %p185 = scmp.eq.s32.totalorder %s23, 1
      %p186 = por %p184, %p185
      %p187 = scmp.ne.s32.totalorder %s178, %s179
      %p188 = scmp.eq.s32.totalorder %s23, 0
      %p189 = por %p187, %p188
      %p190 = scmp.ne.s32.totalorder %s178, %s179
      %p191 = scmp.eq.s32.totalorder %s24, 1
      %p192 = por %p190, %p191
      %p194 = scmp.ne.s32.totalorder %s179, %s193
      %p195 = scmp.eq.s32.totalorder %s24, 0
      %p196 = por %p194, %p195
      %s198 = sadd.s32 %s197, 1
      %p201 = scmp.eq.s32.totalorder %s18, 1
      %p202 = scmp.ne.s32.totalorder %s197, %s199
      %p203 = scmp.eq.s32.totalorder %s18, 0
      %p204 = por %p202, %p203
      %p205 = scmp.ne.s32.totalorder %s197, %s199
      %p206 = scmp.eq.s32.totalorder %s23, 1
      %p207 = por %p205, %p206
      %p208 = scmp.ne.s32.totalorder %s199, %s200
      %p209 = scmp.eq.s32.totalorder %s23, 0
      %p210 = por %p208, %p209
      %p211 = scmp.ne.s32.totalorder %s199, %s200
      %p212 = scmp.eq.s32.totalorder %s24, 1
      %p213 = por %p211, %p212
      %p215 = scmp.ne.s32.totalorder %s200, %s214
      %p216 = scmp.eq.s32.totalorder %s24, 0
      %p217 = por %p215, %p216
      %s218 = ssub.s32 %s25, %s37
      %s219 = ssub.s32 %s26, %s33
      %s220 = sor.u32 %s218, %s219
      %p221 = scmp.eq.s32.totalorder %s220, 0
      %s223 = sadd.s32 %s222, 1
      %s224 = scalar_select %p221, %s222, %s223
      %p227 = pneg %p221
      %p228 = scmp.eq.s32.totalorder %s18, 1
      %p229 = por %p227, %p228
      %p230 = scmp.ne.s32.totalorder %s222, %s225
      %p231 = scmp.eq.s32.totalorder %s18, 0
      %p232 = por %p230, %p231
      %p233 = scmp.ne.s32.totalorder %s222, %s225
      %p234 = scmp.eq.s32.totalorder %s23, 1
      %p235 = por %p233, %p234
      %p236 = scmp.ne.s32.totalorder %s225, %s226
      %p237 = scmp.eq.s32.totalorder %s23, 0
      %p238 = por %p236, %p237
      %p239 = scmp.ne.s32.totalorder %s225, %s226
      %p240 = scmp.eq.s32.totalorder %s24, 1
      %p241 = por %p239, %p240
      %p243 = scmp.ne.s32.totalorder %s226, %s242
      %p244 = scmp.eq.s32.totalorder %s24, 0
      %p245 = por %p243, %p244
      %p246 = scmp.le.s32.totalorder 1, %s18
      %p247 = scmp.lt.s32.totalorder %s18, 3
      %p248 = pnand %p246, %p247
      %p249 = pneg %p248
      // Predicated region
      $region9: #{gfe_two_apply.7} parent=5 // pred_check
        _
      $region10: #{gfe_two_apply.7} parent=5 // pred_check_branch
        %251 = sbr.rel (%p248) target = $region12
      $region11: #{gfe_two_apply.7} parent=5 // pred_region
        %s252 = ssub.s32 %s18, 1
        // Predicated region
        $region13: #{gfe_two_apply.7} parent=11 // pred_check
          %p253 = pneg %p105
        $region14: #{gfe_two_apply.7} parent=11 // pred_check_branch
          %255 = sbr.rel (%p253) target = $region16
        $region15: #{gfe_two_apply.7} parent=11 // pred_region
          %s257 = ssub.s32 9216, 9216
          %258 = vsyncadd [#allocation4], %s257
          %s259 = sshll.u32 [#allocation3], 4
          %s260 = int_to_ptr.vmem [resolvable:$true] %s259
          %265 = dma.hbm_to_vmem [thread:$0]  %s2, 9216, %s260, [#allocation4], 64, 64, 4
        $region16: #{gfe_two_apply.7} parent=11 // pred_fallthru
          _
        // Predicated region
        $region17: #{gfe_two_apply.7} parent=11 // pred_check
          %p266 = pneg %p126
        $region18: #{gfe_two_apply.7} parent=11 // pred_check_branch
          %268 = sbr.rel (%p266) target = $region20
        $region19: #{gfe_two_apply.7} parent=11 // pred_region
          %s270 = ssub.s32 16, 16
          %271 = vsyncadd [#allocation6], %s270
          %s273 = sshll.u32 [#allocation5], 4
          %s274 = int_to_ptr.vmem [resolvable:$true] %s273
          %276 = dma.hbm_to_vmem [thread:$0]  %s3, 16, %s274, [#allocation6]
        $region20: #{gfe_two_apply.7} parent=11 // pred_fallthru
          _
        // Predicated region
        $region21: #{gfe_two_apply.7} parent=11 // pred_check
          %p277 = pneg %p147
        $region22: #{gfe_two_apply.7} parent=11 // pred_check_branch
          %279 = sbr.rel (%p277) target = $region24
        $region23: #{gfe_two_apply.7} parent=11 // pred_region
          %s281 = ssub.s32 16, 16
          %282 = vsyncadd [#allocation6], %s281
          %s284 = sshll.u32 [#allocation7], 4
          %s285 = int_to_ptr.vmem [resolvable:$true] %s284
          %287 = dma.hbm_to_vmem [thread:$0]  %s4, 16, %s285, [#allocation6]
        $region24: #{gfe_two_apply.7} parent=11 // pred_fallthru
          _
        // Predicated region
        $region25: #{gfe_two_apply.7} parent=11 // pred_check
          %p288 = pneg %p168
        $region26: #{gfe_two_apply.7} parent=11 // pred_check_branch
          %290 = sbr.rel (%p288) target = $region28
        $region27: #{gfe_two_apply.7} parent=11 // pred_region
          %s292 = ssub.s32 512, 512
          %293 = vsyncadd [#allocation9], %s292
          %s294 = sshll.u32 [#allocation8], 4
          %s295 = int_to_ptr.vmem [resolvable:$true] %s294
          %300 = dma.hbm_to_vmem [thread:$0]  %s5, 512, %s295, [#allocation9], 64, 64, 4
        $region28: #{gfe_two_apply.7} parent=11 // pred_fallthru
          _
        // Predicated region
        $region29: #{gfe_two_apply.7} parent=11 // pred_check
          %p301 = pneg %p189
        $region30: #{gfe_two_apply.7} parent=11 // pred_check_branch
          %303 = sbr.rel (%p301) target = $region32
        $region31: #{gfe_two_apply.7} parent=11 // pred_region
          %s305 = ssub.s32 16, 16
          %306 = vsyncadd [#allocation9], %s305
          %s308 = sshll.u32 [#allocation10], 4
          %s309 = int_to_ptr.vmem [resolvable:$true] %s308
          %311 = dma.hbm_to_vmem [thread:$0]  %s6, 16, %s309, [#allocation9]
        $region32: #{gfe_two_apply.7} parent=11 // pred_fallthru
          _
        // Predicated region
        $region33: #{gfe_two_apply.7} parent=11 // pred_check
          %p312 = pneg %p210
        $region34: #{gfe_two_apply.7} parent=11 // pred_check_branch
          %314 = sbr.rel (%p312) target = $region36
        $region35: #{gfe_two_apply.7} parent=11 // pred_region
          %s316 = ssub.s32 16, 16
          %317 = vsyncadd [#allocation12], %s316
          %s319 = sshll.u32 [#allocation11], 4
          %s320 = int_to_ptr.vmem [resolvable:$true] %s319
          %322 = dma.hbm_to_vmem [thread:$0]  %s7, 16, %s320, [#allocation12]
        $region36: #{gfe_two_apply.7} parent=11 // pred_fallthru
          _
      $region12: #{gfe_two_apply.7} parent=5 // pred_fallthru
        _
      %p323 = scmp.lt.s32.totalorder %s18, 2
      // Predicated region
      $region37: #{gfe_two_apply.7} parent=5 // pred_check
        %p324 = pneg %p323
      $region38: #{gfe_two_apply.7} parent=5 // pred_check_branch
        %326 = sbr.rel (%p324) target = $region40
      $region39: #{gfe_two_apply.7} parent=5 // pred_region
        // Predicated region
        $region41: #{gfe_two_apply.7} parent=39 // pred_check
          %p327 = pneg %p50
        $region42: #{gfe_two_apply.7} parent=39 // pred_check_branch
          %329 = sbr.rel (%p327) target = $region44
        $region43: #{gfe_two_apply.7} parent=39 // pred_region
          %p330 = scmp.lt.s32.totalorder %s25, 1
          %s331 = scalar_select %p330, %s25, 1
          %s332 = smul.addr %s331, 24
          %s333 = smul.addr %s332, 4
          %s334 = scalar_lea.vmem %s0, %s333
        $region44: #{gfe_two_apply.7} parent=39 // pred_fallthru
          _
        // Predicated region
        $region45: #{gfe_two_apply.7} parent=39 // pred_check
          %p335 = pneg %p78
        $region46: #{gfe_two_apply.7} parent=39 // pred_check_branch
          %337 = sbr.rel (%p335) target = $region48
        $region47: #{gfe_two_apply.7} parent=39 // pred_region
          %s338 = smul.u32 8, %s26
          %p339 = scmp.lt.s32.totalorder %s25, 1
          %s340 = scalar_select %p339, %s25, 1
          %p341 = scmp.lt.s32.totalorder %s338, 7
          %s342 = scalar_select %p341, %s338, 7
          %s343 = smul.addr %s340, 8
          %s344 = sadd.s32 %s342, %s343
          %s345 = smul.addr %s344, 4
          %s346 = scalar_lea.vmem %s1, %s345
          %s347 = smul.u32 8, %s26
        $region48: #{gfe_two_apply.7} parent=39 // pred_fallthru
          _
      $region40: #{gfe_two_apply.7} parent=5 // pred_fallthru
        _
      %p348 = scmp.le.s32.totalorder 1, %s18
      %p349 = scmp.lt.s32.totalorder %s18, 3
      %p350 = pnand %p348, %p349
      %p351 = pneg %p350
      // Predicated region
      $region49: #{gfe_two_apply.7} parent=5 // pred_check
        _
      $region50: #{gfe_two_apply.7} parent=5 // pred_check_branch
        %353 = sbr.rel (%p350) target = $region52
      $region51: #{gfe_two_apply.7} parent=5 // pred_region
        %s354 = ssub.s32 %s18, 1
        // Predicated region
        $region53: #{gfe_two_apply.7} parent=51 // pred_check
          %p355 = pneg %p105
        $region54: #{gfe_two_apply.7} parent=51 // pred_check_branch
          %357 = sbr.rel (%p355) target = $region56
        $region55: #{gfe_two_apply.7} parent=51 // pred_region
          %358 = dma.done [#allocation4], 9216
        $region56: #{gfe_two_apply.7} parent=51 // pred_fallthru
          _
        // Predicated region
        $region57: #{gfe_two_apply.7} parent=51 // pred_check
          %p359 = pneg %p126
        $region58: #{gfe_two_apply.7} parent=51 // pred_check_branch
          %361 = sbr.rel (%p359) target = $region60
        $region59: #{gfe_two_apply.7} parent=51 // pred_region
          %362 = dma.done [#allocation6], 16
        $region60: #{gfe_two_apply.7} parent=51 // pred_fallthru
          _
        // Predicated region
        $region61: #{gfe_two_apply.7} parent=51 // pred_check
          %p363 = pneg %p147
        $region62: #{gfe_two_apply.7} parent=51 // pred_check_branch
          %365 = sbr.rel (%p363) target = $region64
        $region63: #{gfe_two_apply.7} parent=51 // pred_region
          %366 = dma.done [#allocation6], 16
        $region64: #{gfe_two_apply.7} parent=51 // pred_fallthru
          _
        // Predicated region
        $region65: #{gfe_two_apply.7} parent=51 // pred_check
          %p367 = pneg %p168
        $region66: #{gfe_two_apply.7} parent=51 // pred_check_branch
          %369 = sbr.rel (%p367) target = $region68
        $region67: #{gfe_two_apply.7} parent=51 // pred_region
          %370 = dma.done [#allocation9], 512
        $region68: #{gfe_two_apply.7} parent=51 // pred_fallthru
          _
        // Predicated region
        $region69: #{gfe_two_apply.7} parent=51 // pred_check
          %p371 = pneg %p189
        $region70: #{gfe_two_apply.7} parent=51 // pred_check_branch
          %373 = sbr.rel (%p371) target = $region72
        $region71: #{gfe_two_apply.7} parent=51 // pred_region
          %374 = dma.done [#allocation9], 16
        $region72: #{gfe_two_apply.7} parent=51 // pred_fallthru
          _
        // Predicated region
        $region73: #{gfe_two_apply.7} parent=51 // pred_check
          %p375 = pneg %p210
        $region74: #{gfe_two_apply.7} parent=51 // pred_check_branch
          %377 = sbr.rel (%p375) target = $region76
        $region75: #{gfe_two_apply.7} parent=51 // pred_region
          %378 = dma.done [#allocation12], 16
        $region76: #{gfe_two_apply.7} parent=51 // pred_fallthru
          _
        %p379 = scmp.lt.s32.totalorder %s27, 1
        %s380 = scalar_select %p379, %s27, 1
        %s381 = smul.addr %s380, 24
        %s382 = smul.addr %s381, 4
        %s383 = scalar_lea.vmem %s0, %s382
        %p384 = pneg %p56
        %p385 = pneg %p53
        %s386 = smul.u32 8, %s28
        %p387 = scmp.lt.s32.totalorder %s27, 1
        %s388 = scalar_select %p387, %s27, 1
        %p389 = scmp.lt.s32.totalorder %s386, 7
        %s390 = scalar_select %p389, %s386, 7
        %s391 = smul.addr %s388, 8
        %s392 = sadd.s32 %s390, %s391
        %s393 = smul.addr %s392, 4
        %s394 = scalar_lea.vmem %s1, %s393
        %p395 = pneg %p84
        %p396 = pneg %p81
        %p397 = pneg %p105
        %p398 = pneg %p102
        %p399 = pneg %p126
        %p400 = pneg %p123
        %p401 = pneg %p147
        %p402 = pneg %p144
        %p403 = pneg %p168
        %p404 = pneg %p165
        %p405 = pneg %p189
        %p406 = pneg %p186
        %p407 = pneg %p210
        %p408 = pneg %p207
        %p409 = pneg %p238
        %p410 = pneg %p235
        %s411 = smul.u32 8, %s28
        %p412 = scmp.lt.s32.totalorder %s27, 1
        %s413 = scalar_select %p412, %s27, 1
        %p414 = scmp.lt.s32.totalorder %s411, 7
        %s415 = scalar_select %p414, %s411, 7
        %s416 = smul.addr %s413, 8
        %s417 = sadd.s32 %s415, %s416
        %s418 = smul.addr %s417, 4
        %s419 = scalar_lea.vmem %s8, %s418
        %p420 = scmp.lt.s32.totalorder %s27, 1
        %s421 = scalar_select %p420, %s27, 1
        %s422 = smul.addr %s421, 24
        %s423 = smul.addr %s422, 4
        %s424 = scalar_lea.vmem %s0, %s423
        %s425 = smul.u32 8, %s28
        %p426 = scmp.lt.s32.totalorder %s27, 1
        %s427 = scalar_select %p426, %s27, 1
        %p428 = scmp.lt.s32.totalorder %s425, 7
        %s429 = scalar_select %p428, %s425, 7
        %s430 = smul.addr %s427, 8
        %s431 = sadd.s32 %s429, %s430
        %s432 = smul.addr %s431, 4
        %s433 = scalar_lea.vmem %s1, %s432
        %s434 = smul.u32 8, %s28
        %s435 = smul.u32 8, %s28
        %p436 = scmp.lt.s32.totalorder %s27, 1
        %s437 = scalar_select %p436, %s27, 1
        %p438 = scmp.lt.s32.totalorder %s435, 7
        %s439 = scalar_select %p438, %s435, 7
        %s440 = smul.addr %s437, 8
        %s441 = sadd.s32 %s439, %s440
        %s442 = smul.addr %s441, 4
        %s443 = scalar_lea.vmem %s8, %s442
        %s444 = smul.u32 8, %s28
        %s446 = smul.u32 %s28, 8
        %s447 = smul.u32 %s28, 64
        %s448 = sshra.s32 %s447, 3
        %s449 = sand.u32 %s447, 7
        %s450 = smul.addr %s448, 4
        %s451 = scalar_lea.vmem %s424, %s450
        %v452 = vld [vmem:[%s451] sm:$0xf]
        %v453 = vld [vmem:[%s451 + $0x4] sm:$0xf]
        %v454 = vld [vmem:[%s451 + $0x8] sm:$0xf]
        %v455 = vld [vmem:[%s451 + $0xc] sm:$0xf]
        %v456 = vld [vmem:[%s451 + $0x10] sm:$0xf]
        %v457 = vld [vmem:[%s451 + $0x14] sm:$0xf]
        %v458 = vld [vmem:[%s451 + $0x18] sm:$0xf]
        %v459 = vld [vmem:[%s451 + $0x1c] sm:$0xf]
        %v468 = vunpack.c.l.b16 %v452
        %v469 = vunpack.c.l.b16 %v453
        %v470 = vunpack.c.l.b16 %v454
        %v471 = vunpack.c.l.b16 %v455
        %v472 = vunpack.c.l.b16 %v456
        %v473 = vunpack.c.l.b16 %v457
        %v474 = vunpack.c.l.b16 %v458
        %v475 = vunpack.c.l.b16 %v459
        %v476 = vpack.c.b16 %v469, %v468
        %v477 = vpack.c.b16 %v471, %v470
        %v478 = vpack.c.b16 %v473, %v472
        %v479 = vpack.c.b16 %v475, %v474
        %484 = vst [vmem:[#allocation2] sm:$0xff] %v476
        %485 = vst [vmem:[#allocation2 + $0x48] sm:$0xff] %v477
        %486 = vst [vmem:[#allocation2 + $0x90] sm:$0xff] %v478
        %487 = vst [vmem:[#allocation2 + $0xd8] sm:$0xff] %v479
        %s488 = sadd.s32 %s448, 12
        %s489 = smul.addr %s488, 4
        %s490 = scalar_lea.vmem %s424, %s489
        %v491 = vld [vmem:[%s490] sm:$0xf]
        %v492 = vld [vmem:[%s490 + $0x4] sm:$0xf]
        %v493 = vld [vmem:[%s490 + $0x8] sm:$0xf]
        %v494 = vld [vmem:[%s490 + $0xc] sm:$0xf]
        %v495 = vld [vmem:[%s490 + $0x10] sm:$0xf]
        %v496 = vld [vmem:[%s490 + $0x14] sm:$0xf]
        %v497 = vld [vmem:[%s490 + $0x18] sm:$0xf]
        %v498 = vld [vmem:[%s490 + $0x1c] sm:$0xf]
        %v507 = vunpack.c.l.b16 %v491
        %v508 = vunpack.c.l.b16 %v492
        %v509 = vunpack.c.l.b16 %v493
        %v510 = vunpack.c.l.b16 %v494
        %v511 = vunpack.c.l.b16 %v495
        %v512 = vunpack.c.l.b16 %v496
        %v513 = vunpack.c.l.b16 %v497
        %v514 = vunpack.c.l.b16 %v498
        %v515 = vpack.c.b16 %v508, %v507
        %v516 = vpack.c.b16 %v510, %v509
        %v517 = vpack.c.b16 %v512, %v511
        %v518 = vpack.c.b16 %v514, %v513
        %523 = vst [vmem:[#allocation2 + $0x8] sm:$0xff] %v515
        %524 = vst [vmem:[#allocation2 + $0x50] sm:$0xff] %v516
        %525 = vst [vmem:[#allocation2 + $0x98] sm:$0xff] %v517
        %526 = vst [vmem:[#allocation2 + $0xe0] sm:$0xff] %v518
        %s527 = sadd.s32 %s446, 1
        %s528 = smul.u32 %s527, 8
        %s529 = sshra.s32 %s528, 3
        %s530 = sand.u32 %s528, 7
        %s531 = smul.addr %s529, 4
        %s532 = scalar_lea.vmem %s424, %s531
        %v533 = vld [vmem:[%s532] sm:$0xf]
        %v534 = vld [vmem:[%s532 + $0x4] sm:$0xf]
        %v535 = vld [vmem:[%s532 + $0x8] sm:$0xf]
        %v536 = vld [vmem:[%s532 + $0xc] sm:$0xf]
        %v537 = vld [vmem:[%s532 + $0x10] sm:$0xf]
        %v538 = vld [vmem:[%s532 + $0x14] sm:$0xf]
        %v539 = vld [vmem:[%s532 + $0x18] sm:$0xf]
        %v540 = vld [vmem:[%s532 + $0x1c] sm:$0xf]
        %v549 = vunpack.c.l.b16 %v533
        %v550 = vunpack.c.l.b16 %v534
        %v551 = vunpack.c.l.b16 %v535
        %v552 = vunpack.c.l.b16 %v536
        %v553 = vunpack.c.l.b16 %v537
        %v554 = vunpack.c.l.b16 %v538
        %v555 = vunpack.c.l.b16 %v539
        %v556 = vunpack.c.l.b16 %v540
        %v557 = vpack.c.b16 %v550, %v549
        %v558 = vpack.c.b16 %v552, %v551
        %v559 = vpack.c.b16 %v554, %v553
        %v560 = vpack.c.b16 %v556, %v555
        %565 = vst [vmem:[#allocation2 + $0x10] sm:$0xff] %v557
        %566 = vst [vmem:[#allocation2 + $0x58] sm:$0xff] %v558
        %567 = vst [vmem:[#allocation2 + $0xa0] sm:$0xff] %v559
        %568 = vst [vmem:[#allocation2 + $0xe8] sm:$0xff] %v560
        %s569 = sadd.s32 %s529, 12
        %s570 = smul.addr %s569, 4
        %s571 = scalar_lea.vmem %s424, %s570
        %v572 = vld [vmem:[%s571] sm:$0xf]
        %v573 = vld [vmem:[%s571 + $0x4] sm:$0xf]
        %v574 = vld [vmem:[%s571 + $0x8] sm:$0xf]
        %v575 = vld [vmem:[%s571 + $0xc] sm:$0xf]
        %v576 = vld [vmem:[%s571 + $0x10] sm:$0xf]
        %v577 = vld [vmem:[%s571 + $0x14] sm:$0xf]
        %v578 = vld [vmem:[%s571 + $0x18] sm:$0xf]
        %v579 = vld [vmem:[%s571 + $0x1c] sm:$0xf]
        %v588 = vunpack.c.l.b16 %v572
        %v589 = vunpack.c.l.b16 %v573
        %v590 = vunpack.c.l.b16 %v574
        %v591 = vunpack.c.l.b16 %v575
        %v592 = vunpack.c.l.b16 %v576
        %v593 = vunpack.c.l.b16 %v577
        %v594 = vunpack.c.l.b16 %v578
        %v595 = vunpack.c.l.b16 %v579
        %v596 = vpack.c.b16 %v589, %v588
        %v597 = vpack.c.b16 %v591, %v590
        %v598 = vpack.c.b16 %v593, %v592
        %v599 = vpack.c.b16 %v595, %v594
        %604 = vst [vmem:[#allocation2 + $0x18] sm:$0xff] %v596
        %605 = vst [vmem:[#allocation2 + $0x60] sm:$0xff] %v597
        %606 = vst [vmem:[#allocation2 + $0xa8] sm:$0xff] %v598
        %607 = vst [vmem:[#allocation2 + $0xf0] sm:$0xff] %v599
        %s608 = sadd.s32 %s446, 2
        %s609 = smul.u32 %s608, 8
        %s610 = sshra.s32 %s609, 3
        %s611 = sand.u32 %s609, 7
        %s612 = smul.addr %s610, 4
        %s613 = scalar_lea.vmem %s424, %s612
        %v614 = vld [vmem:[%s613] sm:$0xf]
        %v615 = vld [vmem:[%s613 + $0x4] sm:$0xf]
        %v616 = vld [vmem:[%s613 + $0x8] sm:$0xf]
        %v617 = vld [vmem:[%s613 + $0xc] sm:$0xf]
        %v618 = vld [vmem:[%s613 + $0x10] sm:$0xf]
        %v619 = vld [vmem:[%s613 + $0x14] sm:$0xf]
        %v620 = vld [vmem:[%s613 + $0x18] sm:$0xf]
        %v621 = vld [vmem:[%s613 + $0x1c] sm:$0xf]
        %v630 = vunpack.c.l.b16 %v614
        %v631 = vunpack.c.l.b16 %v615
        %v632 = vunpack.c.l.b16 %v616
        %v633 = vunpack.c.l.b16 %v617
        %v634 = vunpack.c.l.b16 %v618
        %v635 = vunpack.c.l.b16 %v619
        %v636 = vunpack.c.l.b16 %v620
        %v637 = vunpack.c.l.b16 %v621
        %v638 = vpack.c.b16 %v631, %v630
        %v639 = vpack.c.b16 %v633, %v632
        %v640 = vpack.c.b16 %v635, %v634
        %v641 = vpack.c.b16 %v637, %v636
        %646 = vst [vmem:[#allocation2 + $0x20] sm:$0xff] %v638
        %647 = vst [vmem:[#allocation2 + $0x68] sm:$0xff] %v639
        %648 = vst [vmem:[#allocation2 + $0xb0] sm:$0xff] %v640
        %649 = vst [vmem:[#allocation2 + $0xf8] sm:$0xff] %v641
        %s650 = sadd.s32 %s610, 12
        %s651 = smul.addr %s650, 4
        %s652 = scalar_lea.vmem %s424, %s651
        %v653 = vld [vmem:[%s652] sm:$0xf]
        %v654 = vld [vmem:[%s652 + $0x4] sm:$0xf]
        %v655 = vld [vmem:[%s652 + $0x8] sm:$0xf]
        %v656 = vld [vmem:[%s652 + $0xc] sm:$0xf]
        %v657 = vld [vmem:[%s652 + $0x10] sm:$0xf]
        %v658 = vld [vmem:[%s652 + $0x14] sm:$0xf]
        %v659 = vld [vmem:[%s652 + $0x18] sm:$0xf]
        %v660 = vld [vmem:[%s652 + $0x1c] sm:$0xf]
        %v669 = vunpack.c.l.b16 %v653
        %v670 = vunpack.c.l.b16 %v654
        %v671 = vunpack.c.l.b16 %v655
        %v672 = vunpack.c.l.b16 %v656
        %v673 = vunpack.c.l.b16 %v657
        %v674 = vunpack.c.l.b16 %v658
        %v675 = vunpack.c.l.b16 %v659
        %v676 = vunpack.c.l.b16 %v660
        %v677 = vpack.c.b16 %v670, %v669
        %v678 = vpack.c.b16 %v672, %v671
        %v679 = vpack.c.b16 %v674, %v673
        %v680 = vpack.c.b16 %v676, %v675
        %685 = vst [vmem:[#allocation2 + $0x28] sm:$0xff] %v677
        %686 = vst [vmem:[#allocation2 + $0x70] sm:$0xff] %v678
        %687 = vst [vmem:[#allocation2 + $0xb8] sm:$0xff] %v679
        %688 = vst [vmem:[#allocation2 + $0x100] sm:$0xff] %v680
        %s689 = sadd.s32 %s446, 3
        %s690 = smul.u32 %s689, 8
        %s691 = sshra.s32 %s690, 3
        %s692 = sand.u32 %s690, 7
        %s693 = smul.addr %s691, 4
        %s694 = scalar_lea.vmem %s424, %s693
        %v695 = vld [vmem:[%s694] sm:$0xf]
        %v696 = vld [vmem:[%s694 + $0x4] sm:$0xf]
        %v697 = vld [vmem:[%s694 + $0x8] sm:$0xf]
        %v698 = vld [vmem:[%s694 + $0xc] sm:$0xf]
        %v699 = vld [vmem:[%s694 + $0x10] sm:$0xf]
        %v700 = vld [vmem:[%s694 + $0x14] sm:$0xf]
        %v701 = vld [vmem:[%s694 + $0x18] sm:$0xf]
        %v702 = vld [vmem:[%s694 + $0x1c] sm:$0xf]
        %v711 = vunpack.c.l.b16 %v695
        %v712 = vunpack.c.l.b16 %v696
        %v713 = vunpack.c.l.b16 %v697
        %v714 = vunpack.c.l.b16 %v698
        %v715 = vunpack.c.l.b16 %v699
        %v716 = vunpack.c.l.b16 %v700
        %v717 = vunpack.c.l.b16 %v701
        %v718 = vunpack.c.l.b16 %v702
        %v719 = vpack.c.b16 %v712, %v711
        %v720 = vpack.c.b16 %v714, %v713
        %v721 = vpack.c.b16 %v716, %v715
        %v722 = vpack.c.b16 %v718, %v717
        %727 = vst [vmem:[#allocation2 + $0x30] sm:$0xff] %v719
        %728 = vst [vmem:[#allocation2 + $0x78] sm:$0xff] %v720
        %729 = vst [vmem:[#allocation2 + $0xc0] sm:$0xff] %v721
        %730 = vst [vmem:[#allocation2 + $0x108] sm:$0xff] %v722
        %s731 = sadd.s32 %s691, 12
        %s732 = smul.addr %s731, 4
        %s733 = scalar_lea.vmem %s424, %s732
        %v734 = vld [vmem:[%s733] sm:$0xf]
        %v735 = vld [vmem:[%s733 + $0x4] sm:$0xf]
        %v736 = vld [vmem:[%s733 + $0x8] sm:$0xf]
        %v737 = vld [vmem:[%s733 + $0xc] sm:$0xf]
        %v738 = vld [vmem:[%s733 + $0x10] sm:$0xf]
        %v739 = vld [vmem:[%s733 + $0x14] sm:$0xf]
        %v740 = vld [vmem:[%s733 + $0x18] sm:$0xf]
        %v741 = vld [vmem:[%s733 + $0x1c] sm:$0xf]
        %v750 = vunpack.c.l.b16 %v734
        %v751 = vunpack.c.l.b16 %v735
        %v752 = vunpack.c.l.b16 %v736
        %v753 = vunpack.c.l.b16 %v737
        %v754 = vunpack.c.l.b16 %v738
        %v755 = vunpack.c.l.b16 %v739
        %v756 = vunpack.c.l.b16 %v740
        %v757 = vunpack.c.l.b16 %v741
        %v758 = vpack.c.b16 %v751, %v750
        %v759 = vpack.c.b16 %v753, %v752
        %v760 = vpack.c.b16 %v755, %v754
        %v761 = vpack.c.b16 %v757, %v756
        %766 = vst [vmem:[#allocation2 + $0x38] sm:$0xff] %v758
        %767 = vst [vmem:[#allocation2 + $0x80] sm:$0xff] %v759
        %768 = vst [vmem:[#allocation2 + $0xc8] sm:$0xff] %v760
        %769 = vst [vmem:[#allocation2 + $0x110] sm:$0xff] %v761
        %s770 = sadd.s32 %s446, 4
        %s771 = smul.u32 %s770, 8
        %s772 = sshra.s32 %s771, 3
        %s773 = sand.u32 %s771, 7
        %s774 = smul.addr %s772, 4
        %s775 = scalar_lea.vmem %s424, %s774
        %v776 = vld [vmem:[%s775] sm:$0xf]
        %v777 = vld [vmem:[%s775 + $0x4] sm:$0xf]
        %v778 = vld [vmem:[%s775 + $0x8] sm:$0xf]
        %v779 = vld [vmem:[%s775 + $0xc] sm:$0xf]
        %v780 = vld [vmem:[%s775 + $0x10] sm:$0xf]
        %v781 = vld [vmem:[%s775 + $0x14] sm:$0xf]
        %v782 = vld [vmem:[%s775 + $0x18] sm:$0xf]
        %v783 = vld [vmem:[%s775 + $0x1c] sm:$0xf]
        %v792 = vunpack.c.l.b16 %v776
        %v793 = vunpack.c.l.b16 %v777
        %v794 = vunpack.c.l.b16 %v778
        %v795 = vunpack.c.l.b16 %v779
        %v796 = vunpack.c.l.b16 %v780
        %v797 = vunpack.c.l.b16 %v781
        %v798 = vunpack.c.l.b16 %v782
        %v799 = vunpack.c.l.b16 %v783
        %v800 = vpack.c.b16 %v793, %v792
        %v801 = vpack.c.b16 %v795, %v794
        %v802 = vpack.c.b16 %v797, %v796
        %v803 = vpack.c.b16 %v799, %v798
        %808 = vst [vmem:[#allocation2 + $0x40] sm:$0xff] %v800
        %809 = vst [vmem:[#allocation2 + $0x88] sm:$0xff] %v801
        %810 = vst [vmem:[#allocation2 + $0xd0] sm:$0xff] %v802
        %811 = vst [vmem:[#allocation2 + $0x118] sm:$0xff] %v803
        %v812 = vld [vmem:[#allocation2] sm:$0xff]
        %v813 = vld [vmem:[#allocation2 + $0x8] sm:$0xff]
        %v814 = vld [vmem:[#allocation2 + $0x10] sm:$0xff]
        %v815 = vld [vmem:[#allocation2 + $0x18] sm:$0xff]
        %v816 = vld [vmem:[#allocation2 + $0x20] sm:$0xff]
        %v817 = vld [vmem:[#allocation2 + $0x28] sm:$0xff]
        %v818 = vld [vmem:[#allocation2 + $0x30] sm:$0xff]
        %v819 = vld [vmem:[#allocation2 + $0x38] sm:$0xff]
        %v820 = vld [vmem:[#allocation2 + $0x40] sm:$0xff]
        %v821 = vld [vmem:[#allocation2 + $0x48] sm:$0xff]
        %v822 = vld [vmem:[#allocation2 + $0x50] sm:$0xff]
        %v823 = vld [vmem:[#allocation2 + $0x58] sm:$0xff]
        %v824 = vld [vmem:[#allocation2 + $0x60] sm:$0xff]
        %v825 = vld [vmem:[#allocation2 + $0x68] sm:$0xff]
        %v826 = vld [vmem:[#allocation2 + $0x70] sm:$0xff]
        %v827 = vld [vmem:[#allocation2 + $0x78] sm:$0xff]
        %v828 = vld [vmem:[#allocation2 + $0x80] sm:$0xff]
        %v829 = vld [vmem:[#allocation2 + $0x88] sm:$0xff]
        %v830 = vld [vmem:[#allocation2 + $0x90] sm:$0xff]
        %v831 = vld [vmem:[#allocation2 + $0x98] sm:$0xff]
        %v832 = vld [vmem:[#allocation2 + $0xa0] sm:$0xff]
        %v833 = vld [vmem:[#allocation2 + $0xa8] sm:$0xff]
        %v834 = vld [vmem:[#allocation2 + $0xb0] sm:$0xff]
        %v835 = vld [vmem:[#allocation2 + $0xb8] sm:$0xff]
        %v836 = vld [vmem:[#allocation2 + $0xc0] sm:$0xff]
        %v837 = vld [vmem:[#allocation2 + $0xc8] sm:$0xff]
        %v838 = vld [vmem:[#allocation2 + $0xd0] sm:$0xff]
        %v839 = vld [vmem:[#allocation2 + $0xd8] sm:$0xff]
        %v840 = vld [vmem:[#allocation2 + $0xe0] sm:$0xff]
        %v841 = vld [vmem:[#allocation2 + $0xe8] sm:$0xff]
        %v842 = vld [vmem:[#allocation2 + $0xf0] sm:$0xff]
        %v843 = vld [vmem:[#allocation2 + $0xf8] sm:$0xff]
        %v844 = vld [vmem:[#allocation2 + $0x100] sm:$0xff]
        %v845 = vld [vmem:[#allocation2 + $0x108] sm:$0xff]
        %v846 = vld [vmem:[#allocation2 + $0x110] sm:$0xff]
        %v847 = vld [vmem:[#allocation2 + $0x118] sm:$0xff]
        %v848 = vld [vmem:[#allocation3] sm:$0xf]
        %v849 = vld [vmem:[#allocation3 + $0x4] sm:$0xf]
        %v850 = vld [vmem:[#allocation3 + $0x8] sm:$0xf]
        %v851 = vld [vmem:[#allocation3 + $0xc] sm:$0xf]
        %v852 = vld [vmem:[#allocation3 + $0x10] sm:$0xf]
        %v853 = vld [vmem:[#allocation3 + $0x14] sm:$0xf]
        %v854 = vld [vmem:[#allocation3 + $0x18] sm:$0xf]
        %v855 = vld [vmem:[#allocation3 + $0x1c] sm:$0xf]
        %v856 = vld [vmem:[#allocation3 + $0x20] sm:$0xf]
        %v857 = vld [vmem:[#allocation3 + $0x24] sm:$0xf]
        %v858 = vld [vmem:[#allocation3 + $0x28] sm:$0xf]
        %v859 = vld [vmem:[#allocation3 + $0x2c] sm:$0xf]
        %v860 = vld [vmem:[#allocation3 + $0x30] sm:$0xf]
        %v861 = vld [vmem:[#allocation3 + $0x34] sm:$0xf]
        %v862 = vld [vmem:[#allocation3 + $0x38] sm:$0xf]
        %v863 = vld [vmem:[#allocation3 + $0x3c] sm:$0xf]
        %v864 = vld [vmem:[#allocation3 + $0x40] sm:$0xf]
        %v865 = vld [vmem:[#allocation3 + $0x44] sm:$0xf]
        %v866 = vld [vmem:[#allocation3 + $0x48] sm:$0xf]
        %v867 = vld [vmem:[#allocation3 + $0x4c] sm:$0xf]
        %v868 = vld [vmem:[#allocation3 + $0x50] sm:$0xf]
        %v869 = vld [vmem:[#allocation3 + $0x54] sm:$0xf]
        %v870 = vld [vmem:[#allocation3 + $0x58] sm:$0xf]
        %v871 = vld [vmem:[#allocation3 + $0x5c] sm:$0xf]
        %v872 = vld [vmem:[#allocation3 + $0x60] sm:$0xf]
        %v873 = vld [vmem:[#allocation3 + $0x64] sm:$0xf]
        %v874 = vld [vmem:[#allocation3 + $0x68] sm:$0xf]
        %v875 = vld [vmem:[#allocation3 + $0x6c] sm:$0xf]
        %v876 = vld [vmem:[#allocation3 + $0x70] sm:$0xf]
        %v877 = vld [vmem:[#allocation3 + $0x74] sm:$0xf]
        %v878 = vld [vmem:[#allocation3 + $0x78] sm:$0xf]
        %v879 = vld [vmem:[#allocation3 + $0x7c] sm:$0xf]
        %v880 = vld [vmem:[#allocation3 + $0x80] sm:$0xf]
        %v881 = vld [vmem:[#allocation3 + $0x84] sm:$0xf]
        %v882 = vld [vmem:[#allocation3 + $0x88] sm:$0xf]
        %v883 = vld [vmem:[#allocation3 + $0x8c] sm:$0xf]
        %v884 = vld [vmem:[#allocation3 + $0x90] sm:$0xf]
        %v885 = vld [vmem:[#allocation3 + $0x94] sm:$0xf]
        %v886 = vld [vmem:[#allocation3 + $0x98] sm:$0xf]
        %v887 = vld [vmem:[#allocation3 + $0x9c] sm:$0xf]
        %v888 = vld [vmem:[#allocation3 + $0xa0] sm:$0xf]
        %v889 = vld [vmem:[#allocation3 + $0xa4] sm:$0xf]
        %v890 = vld [vmem:[#allocation3 + $0xa8] sm:$0xf]
        %v891 = vld [vmem:[#allocation3 + $0xac] sm:$0xf]
        %v892 = vld [vmem:[#allocation3 + $0xb0] sm:$0xf]
        %v893 = vld [vmem:[#allocation3 + $0xb4] sm:$0xf]
        %v894 = vld [vmem:[#allocation3 + $0xb8] sm:$0xf]
        %v895 = vld [vmem:[#allocation3 + $0xbc] sm:$0xf]
        %v896 = vld [vmem:[#allocation3 + $0xc0] sm:$0xf]
        %v897 = vld [vmem:[#allocation3 + $0xc4] sm:$0xf]
        %v898 = vld [vmem:[#allocation3 + $0xc8] sm:$0xf]
        %v899 = vld [vmem:[#allocation3 + $0xcc] sm:$0xf]
        %v900 = vld [vmem:[#allocation3 + $0xd0] sm:$0xf]
        %v901 = vld [vmem:[#allocation3 + $0xd4] sm:$0xf]
        %v902 = vld [vmem:[#allocation3 + $0xd8] sm:$0xf]
        %v903 = vld [vmem:[#allocation3 + $0xdc] sm:$0xf]
        %v904 = vld [vmem:[#allocation3 + $0xe0] sm:$0xf]
        %v905 = vld [vmem:[#allocation3 + $0xe4] sm:$0xf]
        %v906 = vld [vmem:[#allocation3 + $0xe8] sm:$0xf]
        %v907 = vld [vmem:[#allocation3 + $0xec] sm:$0xf]
        %v908 = vld [vmem:[#allocation3 + $0xf0] sm:$0xf]
        %v909 = vld [vmem:[#allocation3 + $0xf4] sm:$0xf]
        %v910 = vld [vmem:[#allocation3 + $0xf8] sm:$0xf]
        %v911 = vld [vmem:[#allocation3 + $0xfc] sm:$0xf]
        %v912 = vld [vmem:[#allocation3 + $0x100] sm:$0xf]
        %v913 = vld [vmem:[#allocation3 + $0x104] sm:$0xf]
        %v914 = vld [vmem:[#allocation3 + $0x108] sm:$0xf]
        %v915 = vld [vmem:[#allocation3 + $0x10c] sm:$0xf]
        %v916 = vld [vmem:[#allocation3 + $0x110] sm:$0xf]
        %v917 = vld [vmem:[#allocation3 + $0x114] sm:$0xf]
        %v918 = vld [vmem:[#allocation3 + $0x118] sm:$0xf]
        %v919 = vld [vmem:[#allocation3 + $0x11c] sm:$0xf]
        %v920 = vld [vmem:[#allocation3 + $0x120] sm:$0xf]
        %v921 = vld [vmem:[#allocation3 + $0x124] sm:$0xf]
        %v922 = vld [vmem:[#allocation3 + $0x128] sm:$0xf]
        %v923 = vld [vmem:[#allocation3 + $0x12c] sm:$0xf]
        %v924 = vld [vmem:[#allocation3 + $0x130] sm:$0xf]
        %v925 = vld [vmem:[#allocation3 + $0x134] sm:$0xf]
        %v926 = vld [vmem:[#allocation3 + $0x138] sm:$0xf]
        %v927 = vld [vmem:[#allocation3 + $0x13c] sm:$0xf]
        %v928 = vld [vmem:[#allocation3 + $0x140] sm:$0xf]
        %v929 = vld [vmem:[#allocation3 + $0x144] sm:$0xf]
        %v930 = vld [vmem:[#allocation3 + $0x148] sm:$0xf]
        %v931 = vld [vmem:[#allocation3 + $0x14c] sm:$0xf]
        %v932 = vld [vmem:[#allocation3 + $0x150] sm:$0xf]
        %v933 = vld [vmem:[#allocation3 + $0x154] sm:$0xf]
        %v934 = vld [vmem:[#allocation3 + $0x158] sm:$0xf]
        %v935 = vld [vmem:[#allocation3 + $0x15c] sm:$0xf]
        %v936 = vld [vmem:[#allocation3 + $0x160] sm:$0xf]
        %v937 = vld [vmem:[#allocation3 + $0x164] sm:$0xf]
        %v938 = vld [vmem:[#allocation3 + $0x168] sm:$0xf]
        %v939 = vld [vmem:[#allocation3 + $0x16c] sm:$0xf]
        %v940 = vld [vmem:[#allocation3 + $0x170] sm:$0xf]
        %v941 = vld [vmem:[#allocation3 + $0x174] sm:$0xf]
        %v942 = vld [vmem:[#allocation3 + $0x178] sm:$0xf]
        %v943 = vld [vmem:[#allocation3 + $0x17c] sm:$0xf]
        %v944 = vld [vmem:[#allocation3 + $0x180] sm:$0xf]
        %v945 = vld [vmem:[#allocation3 + $0x184] sm:$0xf]
        %v946 = vld [vmem:[#allocation3 + $0x188] sm:$0xf]
        %v947 = vld [vmem:[#allocation3 + $0x18c] sm:$0xf]
        %v948 = vld [vmem:[#allocation3 + $0x190] sm:$0xf]
        %v949 = vld [vmem:[#allocation3 + $0x194] sm:$0xf]
        %v950 = vld [vmem:[#allocation3 + $0x198] sm:$0xf]
        %v951 = vld [vmem:[#allocation3 + $0x19c] sm:$0xf]
        %v952 = vld [vmem:[#allocation3 + $0x1a0] sm:$0xf]
        %v953 = vld [vmem:[#allocation3 + $0x1a4] sm:$0xf]
        %v954 = vld [vmem:[#allocation3 + $0x1a8] sm:$0xf]
        %v955 = vld [vmem:[#allocation3 + $0x1ac] sm:$0xf]
        %v956 = vld [vmem:[#allocation3 + $0x1b0] sm:$0xf]
        %v957 = vld [vmem:[#allocation3 + $0x1b4] sm:$0xf]
        %v958 = vld [vmem:[#allocation3 + $0x1b8] sm:$0xf]
        %v959 = vld [vmem:[#allocation3 + $0x1bc] sm:$0xf]
        %v960 = vld [vmem:[#allocation3 + $0x1c0] sm:$0xf]
        %v961 = vld [vmem:[#allocation3 + $0x1c4] sm:$0xf]
        %v962 = vld [vmem:[#allocation3 + $0x1c8] sm:$0xf]
        %v963 = vld [vmem:[#allocation3 + $0x1cc] sm:$0xf]
        %v964 = vld [vmem:[#allocation3 + $0x1d0] sm:$0xf]
        %v965 = vld [vmem:[#allocation3 + $0x1d4] sm:$0xf]
        %v966 = vld [vmem:[#allocation3 + $0x1d8] sm:$0xf]
        %v967 = vld [vmem:[#allocation3 + $0x1dc] sm:$0xf]
        %v968 = vld [vmem:[#allocation3 + $0x1e0] sm:$0xf]
        %v969 = vld [vmem:[#allocation3 + $0x1e4] sm:$0xf]
        %v970 = vld [vmem:[#allocation3 + $0x1e8] sm:$0xf]
        %v971 = vld [vmem:[#allocation3 + $0x1ec] sm:$0xf]
        %v972 = vld [vmem:[#allocation3 + $0x1f0] sm:$0xf]
        %v973 = vld [vmem:[#allocation3 + $0x1f4] sm:$0xf]
        %v974 = vld [vmem:[#allocation3 + $0x1f8] sm:$0xf]
        %v975 = vld [vmem:[#allocation3 + $0x1fc] sm:$0xf]
        %v976 = vld [vmem:[#allocation3 + $0x200] sm:$0xf]
        %v977 = vld [vmem:[#allocation3 + $0x204] sm:$0xf]
        %v978 = vld [vmem:[#allocation3 + $0x208] sm:$0xf]
        %v979 = vld [vmem:[#allocation3 + $0x20c] sm:$0xf]
        %v980 = vld [vmem:[#allocation3 + $0x210] sm:$0xf]
        %v981 = vld [vmem:[#allocation3 + $0x214] sm:$0xf]
        %v982 = vld [vmem:[#allocation3 + $0x218] sm:$0xf]
        %v983 = vld [vmem:[#allocation3 + $0x21c] sm:$0xf]
        %v984 = vld [vmem:[#allocation3 + $0x220] sm:$0xf]
        %v985 = vld [vmem:[#allocation3 + $0x224] sm:$0xf]
        %v986 = vld [vmem:[#allocation3 + $0x228] sm:$0xf]
        %v987 = vld [vmem:[#allocation3 + $0x22c] sm:$0xf]
        %v988 = vld [vmem:[#allocation3 + $0x230] sm:$0xf]
        %v989 = vld [vmem:[#allocation3 + $0x234] sm:$0xf]
        %v990 = vld [vmem:[#allocation3 + $0x238] sm:$0xf]
        %v991 = vld [vmem:[#allocation3 + $0x23c] sm:$0xf]
        %v1136 = vunpack.c.l.b16 %v848
        %v1137 = vunpack.c.l.b16 %v849
        %v1138 = vunpack.c.l.b16 %v850
        %v1139 = vunpack.c.l.b16 %v851
        %v1140 = vunpack.c.l.b16 %v852
        %v1141 = vunpack.c.l.b16 %v853
        %v1142 = vunpack.c.l.b16 %v854
        %v1143 = vunpack.c.l.b16 %v855
        %v1144 = vunpack.c.l.b16 %v856
        %v1145 = vunpack.c.l.b16 %v857
        %v1146 = vunpack.c.l.b16 %v858
        %v1147 = vunpack.c.l.b16 %v859
        %v1148 = vunpack.c.l.b16 %v860
        %v1149 = vunpack.c.l.b16 %v861
        %v1150 = vunpack.c.l.b16 %v862
        %v1151 = vunpack.c.l.b16 %v863
        %v1152 = vunpack.c.l.b16 %v864
        %v1153 = vunpack.c.l.b16 %v865
        %v1154 = vunpack.c.l.b16 %v866
        %v1155 = vunpack.c.l.b16 %v867
        %v1156 = vunpack.c.l.b16 %v868
        %v1157 = vunpack.c.l.b16 %v869
        %v1158 = vunpack.c.l.b16 %v870
        %v1159 = vunpack.c.l.b16 %v871
        %v1160 = vunpack.c.l.b16 %v872
        %v1161 = vunpack.c.l.b16 %v873
        %v1162 = vunpack.c.l.b16 %v874
        %v1163 = vunpack.c.l.b16 %v875
        %v1164 = vunpack.c.l.b16 %v876
        %v1165 = vunpack.c.l.b16 %v877
        %v1166 = vunpack.c.l.b16 %v878
        %v1167 = vunpack.c.l.b16 %v879
        %v1168 = vunpack.c.l.b16 %v880
        %v1169 = vunpack.c.l.b16 %v881
        %v1170 = vunpack.c.l.b16 %v882
        %v1171 = vunpack.c.l.b16 %v883
        %v1172 = vunpack.c.l.b16 %v884
        %v1173 = vunpack.c.l.b16 %v885
        %v1174 = vunpack.c.l.b16 %v886
        %v1175 = vunpack.c.l.b16 %v887
        %v1176 = vunpack.c.l.b16 %v888
        %v1177 = vunpack.c.l.b16 %v889
        %v1178 = vunpack.c.l.b16 %v890
        %v1179 = vunpack.c.l.b16 %v891
        %v1180 = vunpack.c.l.b16 %v892
        %v1181 = vunpack.c.l.b16 %v893
        %v1182 = vunpack.c.l.b16 %v894
        %v1183 = vunpack.c.l.b16 %v895
        %v1184 = vunpack.c.l.b16 %v896
        %v1185 = vunpack.c.l.b16 %v897
        %v1186 = vunpack.c.l.b16 %v898
        %v1187 = vunpack.c.l.b16 %v899
        %v1188 = vunpack.c.l.b16 %v900
        %v1189 = vunpack.c.l.b16 %v901
        %v1190 = vunpack.c.l.b16 %v902
        %v1191 = vunpack.c.l.b16 %v903
        %v1192 = vunpack.c.l.b16 %v904
        %v1193 = vunpack.c.l.b16 %v905
        %v1194 = vunpack.c.l.b16 %v906
        %v1195 = vunpack.c.l.b16 %v907
        %v1196 = vunpack.c.l.b16 %v908
        %v1197 = vunpack.c.l.b16 %v909
        %v1198 = vunpack.c.l.b16 %v910
        %v1199 = vunpack.c.l.b16 %v911
        %v1200 = vunpack.c.l.b16 %v912
        %v1201 = vunpack.c.l.b16 %v913
        %v1202 = vunpack.c.l.b16 %v914
        %v1203 = vunpack.c.l.b16 %v915
        %v1204 = vunpack.c.l.b16 %v916
        %v1205 = vunpack.c.l.b16 %v917
        %v1206 = vunpack.c.l.b16 %v918
        %v1207 = vunpack.c.l.b16 %v919
        %v1208 = vunpack.c.l.b16 %v920
        %v1209 = vunpack.c.l.b16 %v921
        %v1210 = vunpack.c.l.b16 %v922
        %v1211 = vunpack.c.l.b16 %v923
        %v1212 = vunpack.c.l.b16 %v924
        %v1213 = vunpack.c.l.b16 %v925
        %v1214 = vunpack.c.l.b16 %v926
        %v1215 = vunpack.c.l.b16 %v927
        %v1216 = vunpack.c.l.b16 %v928
        %v1217 = vunpack.c.l.b16 %v929
        %v1218 = vunpack.c.l.b16 %v930
        %v1219 = vunpack.c.l.b16 %v931
        %v1220 = vunpack.c.l.b16 %v932
        %v1221 = vunpack.c.l.b16 %v933
        %v1222 = vunpack.c.l.b16 %v934
        %v1223 = vunpack.c.l.b16 %v935
        %v1224 = vunpack.c.l.b16 %v936
        %v1225 = vunpack.c.l.b16 %v937
        %v1226 = vunpack.c.l.b16 %v938
        %v1227 = vunpack.c.l.b16 %v939
        %v1228 = vunpack.c.l.b16 %v940
        %v1229 = vunpack.c.l.b16 %v941
        %v1230 = vunpack.c.l.b16 %v942
        %v1231 = vunpack.c.l.b16 %v943
        %v1232 = vunpack.c.l.b16 %v944
        %v1233 = vunpack.c.l.b16 %v945
        %v1234 = vunpack.c.l.b16 %v946
        %v1235 = vunpack.c.l.b16 %v947
        %v1236 = vunpack.c.l.b16 %v948
        %v1237 = vunpack.c.l.b16 %v949
        %v1238 = vunpack.c.l.b16 %v950
        %v1239 = vunpack.c.l.b16 %v951
        %v1240 = vunpack.c.l.b16 %v952
        %v1241 = vunpack.c.l.b16 %v953
        %v1242 = vunpack.c.l.b16 %v954
        %v1243 = vunpack.c.l.b16 %v955
        %v1244 = vunpack.c.l.b16 %v956
        %v1245 = vunpack.c.l.b16 %v957
        %v1246 = vunpack.c.l.b16 %v958
        %v1247 = vunpack.c.l.b16 %v959
        %v1248 = vunpack.c.l.b16 %v960
        %v1249 = vunpack.c.l.b16 %v961
        %v1250 = vunpack.c.l.b16 %v962
        %v1251 = vunpack.c.l.b16 %v963
        %v1252 = vunpack.c.l.b16 %v964
        %v1253 = vunpack.c.l.b16 %v965
        %v1254 = vunpack.c.l.b16 %v966
        %v1255 = vunpack.c.l.b16 %v967
        %v1256 = vunpack.c.l.b16 %v968
        %v1257 = vunpack.c.l.b16 %v969
        %v1258 = vunpack.c.l.b16 %v970
        %v1259 = vunpack.c.l.b16 %v971
        %v1260 = vunpack.c.l.b16 %v972
        %v1261 = vunpack.c.l.b16 %v973
        %v1262 = vunpack.c.l.b16 %v974
        %v1263 = vunpack.c.l.b16 %v975
        %v1264 = vunpack.c.l.b16 %v976
        %v1265 = vunpack.c.l.b16 %v977
        %v1266 = vunpack.c.l.b16 %v978
        %v1267 = vunpack.c.l.b16 %v979
        %v1268 = vunpack.c.l.b16 %v980
        %v1269 = vunpack.c.l.b16 %v981
        %v1270 = vunpack.c.l.b16 %v982
        %v1271 = vunpack.c.l.b16 %v983
        %v1272 = vunpack.c.l.b16 %v984
        %v1273 = vunpack.c.l.b16 %v985
        %v1274 = vunpack.c.l.b16 %v986
        %v1275 = vunpack.c.l.b16 %v987
        %v1276 = vunpack.c.l.b16 %v988
        %v1277 = vunpack.c.l.b16 %v989
        %v1278 = vunpack.c.l.b16 %v990
        %v1279 = vunpack.c.l.b16 %v991
        %v1280 = vpack.c.b16 %v1137, %v1136
        %v1281 = vpack.c.b16 %v1139, %v1138
        %v1282 = vpack.c.b16 %v1141, %v1140
        %v1283 = vpack.c.b16 %v1143, %v1142
        %v1284 = vpack.c.b16 %v1145, %v1144
        %v1285 = vpack.c.b16 %v1147, %v1146
        %v1286 = vpack.c.b16 %v1149, %v1148
        %v1287 = vpack.c.b16 %v1151, %v1150
        %v1288 = vpack.c.b16 %v1153, %v1152
        %v1289 = vpack.c.b16 %v1155, %v1154
        %v1290 = vpack.c.b16 %v1157, %v1156
        %v1291 = vpack.c.b16 %v1159, %v1158
        %v1292 = vpack.c.b16 %v1161, %v1160
        %v1293 = vpack.c.b16 %v1163, %v1162
        %v1294 = vpack.c.b16 %v1165, %v1164
        %v1295 = vpack.c.b16 %v1167, %v1166
        %v1296 = vpack.c.b16 %v1169, %v1168
        %v1297 = vpack.c.b16 %v1171, %v1170
        %v1298 = vpack.c.b16 %v1173, %v1172
        %v1299 = vpack.c.b16 %v1175, %v1174
        %v1300 = vpack.c.b16 %v1177, %v1176
        %v1301 = vpack.c.b16 %v1179, %v1178
        %v1302 = vpack.c.b16 %v1181, %v1180
        %v1303 = vpack.c.b16 %v1183, %v1182
        %v1304 = vpack.c.b16 %v1185, %v1184
        %v1305 = vpack.c.b16 %v1187, %v1186
        %v1306 = vpack.c.b16 %v1189, %v1188
        %v1307 = vpack.c.b16 %v1191, %v1190
        %v1308 = vpack.c.b16 %v1193, %v1192
        %v1309 = vpack.c.b16 %v1195, %v1194
        %v1310 = vpack.c.b16 %v1197, %v1196
        %v1311 = vpack.c.b16 %v1199, %v1198
        %v1312 = vpack.c.b16 %v1201, %v1200
        %v1313 = vpack.c.b16 %v1203, %v1202
        %v1314 = vpack.c.b16 %v1205, %v1204
        %v1315 = vpack.c.b16 %v1207, %v1206
        %v1316 = vpack.c.b16 %v1209, %v1208
        %v1317 = vpack.c.b16 %v1211, %v1210
        %v1318 = vpack.c.b16 %v1213, %v1212
        %v1319 = vpack.c.b16 %v1215, %v1214
        %v1320 = vpack.c.b16 %v1217, %v1216
        %v1321 = vpack.c.b16 %v1219, %v1218
        %v1322 = vpack.c.b16 %v1221, %v1220
        %v1323 = vpack.c.b16 %v1223, %v1222
        %v1324 = vpack.c.b16 %v1225, %v1224
        %v1325 = vpack.c.b16 %v1227, %v1226
        %v1326 = vpack.c.b16 %v1229, %v1228
        %v1327 = vpack.c.b16 %v1231, %v1230
        %v1328 = vpack.c.b16 %v1233, %v1232
        %v1329 = vpack.c.b16 %v1235, %v1234
        %v1330 = vpack.c.b16 %v1237, %v1236
        %v1331 = vpack.c.b16 %v1239, %v1238
        %v1332 = vpack.c.b16 %v1241, %v1240
        %v1333 = vpack.c.b16 %v1243, %v1242
        %v1334 = vpack.c.b16 %v1245, %v1244
        %v1335 = vpack.c.b16 %v1247, %v1246
        %v1336 = vpack.c.b16 %v1249, %v1248
        %v1337 = vpack.c.b16 %v1251, %v1250
        %v1338 = vpack.c.b16 %v1253, %v1252
        %v1339 = vpack.c.b16 %v1255, %v1254
        %v1340 = vpack.c.b16 %v1257, %v1256
        %v1341 = vpack.c.b16 %v1259, %v1258
        %v1342 = vpack.c.b16 %v1261, %v1260
        %v1343 = vpack.c.b16 %v1263, %v1262
        %v1344 = vpack.c.b16 %v1265, %v1264
        %v1345 = vpack.c.b16 %v1267, %v1266
        %v1346 = vpack.c.b16 %v1269, %v1268
        %v1347 = vpack.c.b16 %v1271, %v1270
        %v1348 = vpack.c.b16 %v1273, %v1272
        %v1349 = vpack.c.b16 %v1275, %v1274
        %v1350 = vpack.c.b16 %v1277, %v1276
        %v1351 = vpack.c.b16 %v1279, %v1278
        %1424 = vmatprep.subr.bf16.mxu0 0
        %1425 = vmatpush1.bf16.msra.mxu0 %v1280
        %1426 = vmatprep.subr.bf16.mxu0 0
        %1427 = vmatpush1.bf16.msra.mxu0 %v1281
        %1428 = vmatprep.subr.bf16.mxu0 0
        %1429 = vmatpush1.bf16.msra.mxu0 %v1282
        %1430 = vmatprep.subr.bf16.mxu0 0
        %1431 = vmatpush1.bf16.msra.mxu0 %v1283
        %1432 = vmatprep.subr.bf16.mxu0 0
        %1433 = vmatpush1.bf16.msra.mxu0 %v1284
        %1434 = vmatprep.subr.bf16.mxu0 0
        %1435 = vmatpush1.bf16.msra.mxu0 %v1285
        %1436 = vmatprep.subr.bf16.mxu0 0
        %1437 = vmatpush1.bf16.msra.mxu0 %v1286
        %1438 = vmatprep.subr.bf16.mxu0 0
        %1439 = vmatpush1.bf16.msra.mxu0 %v1287
        %1440 = vmatprep.subr.bf16.mxu0 0
        %1441 = vmatpush1.bf16.msra.mxu0 %v1288
        %1442 = vmatprep.subr.bf16.mxu0 0
        %1443 = vmatpush1.bf16.msra.mxu0 %v1289
        %1444 = vmatprep.subr.bf16.mxu0 0
        %1445 = vmatpush1.bf16.msra.mxu0 %v1290
        %1446 = vmatprep.subr.bf16.mxu0 0
        %1447 = vmatpush1.bf16.msra.mxu0 %v1291
        %1448 = vmatprep.subr.bf16.mxu0 0
        %1449 = vmatpush1.bf16.msra.mxu0 %v1292
        %1450 = vmatprep.subr.bf16.mxu0 0
        %1451 = vmatpush1.bf16.msra.mxu0 %v1293
        %1452 = vmatprep.subr.bf16.mxu0 0
        %1453 = vmatpush1.bf16.msra.mxu0 %v1294
        %1454 = vmatprep.subr.bf16.mxu0 0
        %1455 = vmatpush1.bf16.msra.mxu0 %v1295
        %1456 = vmatprep.mubr.bf16.mxu0 %v813
        %1457 = vmatmul.mubr.bf16.gmra.mrb[0].mxu0 %v812
        %v1458 = vpop.f32.mrb[0].mxu0
        %v1459 = vadd.f32 0.0, %v1458
        %v1460 = vpop.f32.mrb[0].mxu0
        %v1461 = vpop.f32.mrb[0].mxu0
        %v1462 = vadd.f32 0.0, %v1461
        %v1463 = vpop.f32.mrb[0].mxu0
        %1464 = vmatprep.mubr.bf16.mxu0 %v822
        %1465 = vmatmul.mubr.bf16.gmra.mrb[0].mxu0 %v821
        %v1466 = vpop.f32.mrb[0].mxu0
        %v1467 = vadd.f32 0.0, %v1466
        %v1468 = vpop.f32.mrb[0].mxu0
        %v1469 = vpop.f32.mrb[0].mxu0
        %v1470 = vadd.f32 0.0, %v1469
        %v1471 = vpop.f32.mrb[0].mxu0
        %1472 = vmatprep.mubr.bf16.mxu0 %v831
        %1473 = vmatmul.mubr.bf16.gmra.mrb[0].mxu0 %v830
        %v1474 = vpop.f32.mrb[0].mxu0
        %v1475 = vadd.f32 0.0, %v1474
        %v1476 = vpop.f32.mrb[0].mxu0
        %v1477 = vpop.f32.mrb[0].mxu0
        %v1478 = vadd.f32 0.0, %v1477
        %v1479 = vpop.f32.mrb[0].mxu0
        %1480 = vmatprep.mubr.bf16.mxu0 %v840
        %1481 = vmatmul.mubr.bf16.gmra.mrb[0].mxu0 %v839
        %v1482 = vpop.f32.mrb[0].mxu0
        %v1483 = vadd.f32 0.0, %v1482
        %v1484 = vpop.f32.mrb[0].mxu0
        %v1485 = vpop.f32.mrb[0].mxu0
        %v1486 = vadd.f32 0.0, %v1485
        %v1487 = vpop.f32.mrb[0].mxu0
        %1488 = vdwg.mxu0
        %1489 = vmatprep.subr.bf16.mxu0 0
        %1490 = vmatpush1.bf16.msra.mxu0 %v1296
        %1491 = vmatprep.subr.bf16.mxu0 0
        %1492 = vmatpush1.bf16.msra.mxu0 %v1297
        %1493 = vmatprep.subr.bf16.mxu0 0
        %1494 = vmatpush1.bf16.msra.mxu0 %v1298
        %1495 = vmatprep.subr.bf16.mxu0 0
        %1496 = vmatpush1.bf16.msra.mxu0 %v1299
        %1497 = vmatprep.subr.bf16.mxu0 0
        %1498 = vmatpush1.bf16.msra.mxu0 %v1300
        %1499 = vmatprep.subr.bf16.mxu0 0
        %1500 = vmatpush1.bf16.msra.mxu0 %v1301
        %1501 = vmatprep.subr.bf16.mxu0 0
        %1502 = vmatpush1.bf16.msra.mxu0 %v1302
        %1503 = vmatprep.subr.bf16.mxu0 0
        %1504 = vmatpush1.bf16.msra.mxu0 %v1303
        %1505 = vmatprep.subr.bf16.mxu0 0
        %1506 = vmatpush1.bf16.msra.mxu0 %v1304
        %1507 = vmatprep.subr.bf16.mxu0 0
        %1508 = vmatpush1.bf16.msra.mxu0 %v1305
        %1509 = vmatprep.subr.bf16.mxu0 0
        %1510 = vmatpush1.bf16.msra.mxu0 %v1306
        %1511 = vmatprep.subr.bf16.mxu0 0
        %1512 = vmatpush1.bf16.msra.mxu0 %v1307
        %1513 = vmatprep.subr.bf16.mxu0 0
        %1514 = vmatpush1.bf16.msra.mxu0 %v1308
        %1515 = vmatprep.subr.bf16.mxu0 0
        %1516 = vmatpush1.bf16.msra.mxu0 %v1309
        %1517 = vmatprep.subr.bf16.mxu0 0
        %1518 = vmatpush1.bf16.msra.mxu0 %v1310
        %1519 = vmatprep.subr.bf16.mxu0 0
        %1520 = vmatpush1.bf16.msra.mxu0 %v1311
        %1521 = vmatprep.mubr.bf16.mxu0 %v815
        %1522 = vmatmul.mubr.bf16.gmra.mrb[0].mxu0 %v814
        %v1523 = vpop.f32.mrb[0].mxu0
        %v1524 = vadd.f32 %v1459, %v1523
        %v1525 = vpop.f32.mrb[0].mxu0
        %v1526 = vpop.f32.mrb[0].mxu0
        %v1527 = vadd.f32 %v1462, %v1526
        %v1528 = vpop.f32.mrb[0].mxu0
        %1529 = vmatprep.mubr.bf16.mxu0 %v824
        %1530 = vmatmul.mubr.bf16.gmra.mrb[0].mxu0 %v823
        %v1531 = vpop.f32.mrb[0].mxu0
        %v1532 = vadd.f32 %v1467, %v1531
        %v1533 = vpop.f32.mrb[0].mxu0
        %v1534 = vpop.f32.mrb[0].mxu0
        %v1535 = vadd.f32 %v1470, %v1534
        %v1536 = vpop.f32.mrb[0].mxu0
        %1537 = vmatprep.mubr.bf16.mxu0 %v833
        %1538 = vmatmul.mubr.bf16.gmra.mrb[0].mxu0 %v832
        %v1539 = vpop.f32.mrb[0].mxu0
        %v1540 = vadd.f32 %v1475, %v1539
        %v1541 = vpop.f32.mrb[0].mxu0
        %v1542 = vpop.f32.mrb[0].mxu0
        %v1543 = vadd.f32 %v1478, %v1542
        %v1544 = vpop.f32.mrb[0].mxu0
        %1545 = vmatprep.mubr.bf16.mxu0 %v842
        %1546 = vmatmul.mubr.bf16.gmra.mrb[0].mxu0 %v841
        %v1547 = vpop.f32.mrb[0].mxu0
        %v1548 = vadd.f32 %v1483, %v1547
        %v1549 = vpop.f32.mrb[0].mxu0
        %v1550 = vpop.f32.mrb[0].mxu0
        %v1551 = vadd.f32 %v1486, %v1550
        %v1552 = vpop.f32.mrb[0].mxu0
        %1553 = vdwg.mxu0
        %1554 = vmatprep.subr.bf16.mxu0 0
        %1555 = vmatpush1.bf16.msra.mxu0 %v1312
        %1556 = vmatprep.subr.bf16.mxu0 0
        %1557 = vmatpush1.bf16.msra.mxu0 %v1313
        %1558 = vmatprep.subr.bf16.mxu0 0
        %1559 = vmatpush1.bf16.msra.mxu0 %v1314
        %1560 = vmatprep.subr.bf16.mxu0 0
        %1561 = vmatpush1.bf16.msra.mxu0 %v1315
        %1562 = vmatprep.subr.bf16.mxu0 0
        %1563 = vmatpush1.bf16.msra.mxu0 %v1316
        %1564 = vmatprep.subr.bf16.mxu0 0
        %1565 = vmatpush1.bf16.msra.mxu0 %v1317
        %1566 = vmatprep.subr.bf16.mxu0 0
        %1567 = vmatpush1.bf16.msra.mxu0 %v1318
        %1568 = vmatprep.subr.bf16.mxu0 0
        %1569 = vmatpush1.bf16.msra.mxu0 %v1319
        %1570 = vmatprep.subr.bf16.mxu0 0
        %1571 = vmatpush1.bf16.msra.mxu0 %v1320
        %1572 = vmatprep.subr.bf16.mxu0 0
        %1573 = vmatpush1.bf16.msra.mxu0 %v1321
        %1574 = vmatprep.subr.bf16.mxu0 0
        %1575 = vmatpush1.bf16.msra.mxu0 %v1322
        %1576 = vmatprep.subr.bf16.mxu0 0
        %1577 = vmatpush1.bf16.msra.mxu0 %v1323
        %1578 = vmatprep.subr.bf16.mxu0 0
        %1579 = vmatpush1.bf16.msra.mxu0 %v1324
        %1580 = vmatprep.subr.bf16.mxu0 0
        %1581 = vmatpush1.bf16.msra.mxu0 %v1325
        %1582 = vmatprep.subr.bf16.mxu0 0
        %1583 = vmatpush1.bf16.msra.mxu0 %v1326
        %1584 = vmatprep.subr.bf16.mxu0 0
        %1585 = vmatpush1.bf16.msra.mxu0 %v1327
        %1586 = vmatprep.mubr.bf16.mxu0 %v817
        %1587 = vmatmul.mubr.bf16.gmra.mrb[0].mxu0 %v816
        %v1588 = vpop.f32.mrb[0].mxu0
        %v1589 = vadd.f32 %v1524, %v1588
        %v1590 = vpop.f32.mrb[0].mxu0
        %v1591 = vpop.f32.mrb[0].mxu0
        %v1592 = vadd.f32 %v1527, %v1591
        %v1593 = vpop.f32.mrb[0].mxu0
        %1594 = vmatprep.mubr.bf16.mxu0 %v826
        %1595 = vmatmul.mubr.bf16.gmra.mrb[0].mxu0 %v825
        %v1596 = vpop.f32.mrb[0].mxu0
        %v1597 = vadd.f32 %v1532, %v1596
        %v1598 = vpop.f32.mrb[0].mxu0
        %v1599 = vpop.f32.mrb[0].mxu0
        %v1600 = vadd.f32 %v1535, %v1599
        %v1601 = vpop.f32.mrb[0].mxu0
        %1602 = vmatprep.mubr.bf16.mxu0 %v835
        %1603 = vmatmul.mubr.bf16.gmra.mrb[0].mxu0 %v834
        %v1604 = vpop.f32.mrb[0].mxu0
        %v1605 = vadd.f32 %v1540, %v1604
        %v1606 = vpop.f32.mrb[0].mxu0
        %v1607 = vpop.f32.mrb[0].mxu0
        %v1608 = vadd.f32 %v1543, %v1607
        %v1609 = vpop.f32.mrb[0].mxu0
        %1610 = vmatprep.mubr.bf16.mxu0 %v844
        %1611 = vmatmul.mubr.bf16.gmra.mrb[0].mxu0 %v843
        %v1612 = vpop.f32.mrb[0].mxu0
        %v1613 = vadd.f32 %v1548, %v1612
        %v1614 = vpop.f32.mrb[0].mxu0
        %v1615 = vpop.f32.mrb[0].mxu0
        %v1616 = vadd.f32 %v1551, %v1615
        %v1617 = vpop.f32.mrb[0].mxu0
        %1618 = vdwg.mxu0
        %1619 = vmatprep.subr.bf16.mxu0 0
        %1620 = vmatpush1.bf16.msra.mxu0 %v1328
        %1621 = vmatprep.subr.bf16.mxu0 0
        %1622 = vmatpush1.bf16.msra.mxu0 %v1329
        %1623 = vmatprep.subr.bf16.mxu0 0
        %1624 = vmatpush1.bf16.msra.mxu0 %v1330
        %1625 = vmatprep.subr.bf16.mxu0 0
        %1626 = vmatpush1.bf16.msra.mxu0 %v1331
        %1627 = vmatprep.subr.bf16.mxu0 0
        %1628 = vmatpush1.bf16.msra.mxu0 %v1332
        %1629 = vmatprep.subr.bf16.mxu0 0
        %1630 = vmatpush1.bf16.msra.mxu0 %v1333
        %1631 = vmatprep.subr.bf16.mxu0 0
        %1632 = vmatpush1.bf16.msra.mxu0 %v1334
        %1633 = vmatprep.subr.bf16.mxu0 0
        %1634 = vmatpush1.bf16.msra.mxu0 %v1335
        %1635 = vmatprep.subr.bf16.mxu0 0
        %1636 = vmatpush1.bf16.msra.mxu0 %v1336
        %1637 = vmatprep.subr.bf16.mxu0 0
        %1638 = vmatpush1.bf16.msra.mxu0 %v1337
        %1639 = vmatprep.subr.bf16.mxu0 0
        %1640 = vmatpush1.bf16.msra.mxu0 %v1338
        %1641 = vmatprep.subr.bf16.mxu0 0
        %1642 = vmatpush1.bf16.msra.mxu0 %v1339
        %1643 = vmatprep.subr.bf16.mxu0 0
        %1644 = vmatpush1.bf16.msra.mxu0 %v1340
        %1645 = vmatprep.subr.bf16.mxu0 0
        %1646 = vmatpush1.bf16.msra.mxu0 %v1341
        %1647 = vmatprep.subr.bf16.mxu0 0
        %1648 = vmatpush1.bf16.msra.mxu0 %v1342
        %1649 = vmatprep.subr.bf16.mxu0 0
        %1650 = vmatpush1.bf16.msra.mxu0 %v1343
        %1651 = vmatprep.mubr.bf16.mxu0 %v819
        %1652 = vmatmul.mubr.bf16.gmra.mrb[0].mxu0 %v818
        %v1653 = vpop.f32.mrb[0].mxu0
        %v1654 = vadd.f32 %v1589, %v1653
        %v1655 = vpop.f32.mrb[0].mxu0
        %v1656 = vpop.f32.mrb[0].mxu0
        %v1657 = vadd.f32 %v1592, %v1656
        %v1658 = vpop.f32.mrb[0].mxu0
        %1659 = vmatprep.mubr.bf16.mxu0 %v828
        %1660 = vmatmul.mubr.bf16.gmra.mrb[0].mxu0 %v827
        %v1661 = vpop.f32.mrb[0].mxu0
        %v1662 = vadd.f32 %v1597, %v1661
        %v1663 = vpop.f32.mrb[0].mxu0
        %v1664 = vpop.f32.mrb[0].mxu0
        %v1665 = vadd.f32 %v1600, %v1664
        %v1666 = vpop.f32.mrb[0].mxu0
        %1667 = vmatprep.mubr.bf16.mxu0 %v837
        %1668 = vmatmul.mubr.bf16.gmra.mrb[0].mxu0 %v836
        %v1669 = vpop.f32.mrb[0].mxu0
        %v1670 = vadd.f32 %v1605, %v1669
        %v1671 = vpop.f32.mrb[0].mxu0
        %v1672 = vpop.f32.mrb[0].mxu0
        %v1673 = vadd.f32 %v1608, %v1672
        %v1674 = vpop.f32.mrb[0].mxu0
        %1675 = vmatprep.mubr.bf16.mxu0 %v846
        %1676 = vmatmul.mubr.bf16.gmra.mrb[0].mxu0 %v845
        %v1677 = vpop.f32.mrb[0].mxu0
        %v1678 = vadd.f32 %v1613, %v1677
        %v1679 = vpop.f32.mrb[0].mxu0
        %v1680 = vpop.f32.mrb[0].mxu0
        %v1681 = vadd.f32 %v1616, %v1680
        %v1682 = vpop.f32.mrb[0].mxu0
        %1683 = vdwg.mxu0
        %1684 = vmatprep.subr.bf16.mxu0 0
        %1685 = vmatpush1.bf16.msra.mxu0 %v1344
        %1686 = vmatprep.subr.bf16.mxu0 0
        %1687 = vmatpush1.bf16.msra.mxu0 %v1345
        %1688 = vmatprep.subr.bf16.mxu0 0
        %1689 = vmatpush1.bf16.msra.mxu0 %v1346
        %1690 = vmatprep.subr.bf16.mxu0 0
        %1691 = vmatpush1.bf16.msra.mxu0 %v1347
        %1692 = vmatprep.subr.bf16.mxu0 0
        %1693 = vmatpush1.bf16.msra.mxu0 %v1348
        %1694 = vmatprep.subr.bf16.mxu0 0
        %1695 = vmatpush1.bf16.msra.mxu0 %v1349
        %1696 = vmatprep.subr.bf16.mxu0 0
        %1697 = vmatpush1.bf16.msra.mxu0 %v1350
        %1698 = vmatprep.subr.bf16.mxu0 0
        %1699 = vmatpush1.bf16.msra.mxu0 %v1351
        %1700 = vmatprep.subr.bf16.mxu0 0
        %1701 = vmatpush1.bf16.msra.mxu0 0
        %1702 = vmatprep.subr.bf16.mxu0 0
        %1703 = vmatpush1.bf16.msra.mxu0 0
        %1704 = vmatprep.subr.bf16.mxu0 0
        %1705 = vmatpush1.bf16.msra.mxu0 0
        %1706 = vmatprep.subr.bf16.mxu0 0
        %1707 = vmatpush1.bf16.msra.mxu0 0
        %1708 = vmatprep.subr.bf16.mxu0 0
        %1709 = vmatpush1.bf16.msra.mxu0 0
        %1710 = vmatprep.subr.bf16.mxu0 0
        %1711 = vmatpush1.bf16.msra.mxu0 0
        %1712 = vmatprep.subr.bf16.mxu0 0
        %1713 = vmatpush1.bf16.msra.mxu0 0
        %1714 = vmatprep.subr.bf16.mxu0 0
        %1715 = vmatpush1.bf16.msra.mxu0 0
        %1716 = vmatprep.mubr.bf16.mxu0 0
        %1717 = vmatmul.mubr.bf16.gmra.mrb[0].mxu0 %v820
        %v1718 = vpop.f32.mrb[0].mxu0
        %v1719 = vadd.f32 %v1654, %v1718
        %v1720 = vpop.f32.mrb[0].mxu0
        %v1721 = vpop.f32.mrb[0].mxu0
        %v1722 = vadd.f32 %v1657, %v1721
        %v1723 = vpop.f32.mrb[0].mxu0
        %1724 = vmatprep.mubr.bf16.mxu0 0
        %1725 = vmatmul.mubr.bf16.gmra.mrb[0].mxu0 %v829
        %v1726 = vpop.f32.mrb[0].mxu0
        %v1727 = vadd.f32 %v1662, %v1726
        %v1728 = vpop.f32.mrb[0].mxu0
        %v1729 = vpop.f32.mrb[0].mxu0
        %v1730 = vadd.f32 %v1665, %v1729
        %v1731 = vpop.f32.mrb[0].mxu0
        %1732 = vmatprep.mubr.bf16.mxu0 0
        %1733 = vmatmul.mubr.bf16.gmra.mrb[0].mxu0 %v838
        %v1734 = vpop.f32.mrb[0].mxu0
        %v1735 = vadd.f32 %v1670, %v1734
        %v1736 = vpop.f32.mrb[0].mxu0
        %v1737 = vpop.f32.mrb[0].mxu0
        %v1738 = vadd.f32 %v1673, %v1737
        %v1739 = vpop.f32.mrb[0].mxu0
        %1740 = vmatprep.mubr.bf16.mxu0 0
        %1741 = vmatmul.mubr.bf16.gmra.mrb[0].mxu0 %v847
        %v1742 = vpop.f32.mrb[0].mxu0
        %v1743 = vadd.f32 %v1678, %v1742
        %v1744 = vpop.f32.mrb[0].mxu0
        %v1745 = vpop.f32.mrb[0].mxu0
        %v1746 = vadd.f32 %v1681, %v1745
        %v1747 = vpop.f32.mrb[0].mxu0
        %1748 = vdwg.mxu0
        %v1749 = vld [vmem:[#allocation5] sm:$0x1]
        %v1751 = vlaneseq
        %v1752 = vshrl.u32 %v1751, 7
        %v1753 = vsub.s32 0, %v1752
        %v1754 = vrot.slane %v1749, %v1753
        %v1756 = vmul.f32 %v1719, %v1754
        %v1757 = vmul.f32 %v1722, %v1754
        %v1758 = vmul.f32 %v1727, %v1754
        %v1759 = vmul.f32 %v1730, %v1754
        %v1760 = vmul.f32 %v1735, %v1754
        %v1761 = vmul.f32 %v1738, %v1754
        %v1762 = vmul.f32 %v1743, %v1754
        %v1763 = vmul.f32 %v1746, %v1754
        %v1764 = vld [vmem:[#allocation7] sm:$0x1]
        %v1766 = vlaneseq
        %v1767 = vshrl.u32 %v1766, 7
        %v1768 = vsub.s32 0, %v1767
        %v1769 = vrot.slane %v1764, %v1768
        %v1771 = vadd.f32 %v1756, %v1769
        %v1772 = vadd.f32 %v1757, %v1769
        %v1773 = vadd.f32 %v1758, %v1769
        %v1774 = vadd.f32 %v1759, %v1769
        %v1775 = vadd.f32 %v1760, %v1769
        %v1776 = vadd.f32 %v1761, %v1769
        %v1777 = vadd.f32 %v1762, %v1769
        %v1778 = vadd.f32 %v1763, %v1769
        %v1779 = vld [vmem:[%s433] sm:$0xf]
        %v1780 = vld [vmem:[%s433 + $0x4] sm:$0xf]
        %v1781 = vld [vmem:[%s433 + $0x8] sm:$0xf]
        %v1782 = vld [vmem:[%s433 + $0xc] sm:$0xf]
        %v1783 = vld [vmem:[%s433 + $0x10] sm:$0xf]
        %v1784 = vld [vmem:[%s433 + $0x14] sm:$0xf]
        %v1785 = vld [vmem:[%s433 + $0x18] sm:$0xf]
        %v1786 = vld [vmem:[%s433 + $0x1c] sm:$0xf]
        %v1787 = vld [vmem:[#allocation8] sm:$0xf]
        %v1788 = vld [vmem:[#allocation8 + $0x4] sm:$0xf]
        %v1789 = vld [vmem:[#allocation8 + $0x8] sm:$0xf]
        %v1790 = vld [vmem:[#allocation8 + $0xc] sm:$0xf]
        %v1791 = vld [vmem:[#allocation8 + $0x10] sm:$0xf]
        %v1792 = vld [vmem:[#allocation8 + $0x14] sm:$0xf]
        %v1793 = vld [vmem:[#allocation8 + $0x18] sm:$0xf]
        %v1794 = vld [vmem:[#allocation8 + $0x1c] sm:$0xf]
        %v1803 = vunpack.c.l.b16 %v1779
        %v1804 = vunpack.c.l.b16 %v1780
        %v1805 = vunpack.c.l.b16 %v1781
        %v1806 = vunpack.c.l.b16 %v1782
        %v1807 = vunpack.c.l.b16 %v1783
        %v1808 = vunpack.c.l.b16 %v1784
        %v1809 = vunpack.c.l.b16 %v1785
        %v1810 = vunpack.c.l.b16 %v1786
        %v1811 = vpack.c.b16 %v1804, %v1803
        %v1812 = vpack.c.b16 %v1806, %v1805
        %v1813 = vpack.c.b16 %v1808, %v1807
        %v1814 = vpack.c.b16 %v1810, %v1809
        %v1823 = vunpack.c.l.b16 %v1787
        %v1824 = vunpack.c.l.b16 %v1788
        %v1825 = vunpack.c.l.b16 %v1789
        %v1826 = vunpack.c.l.b16 %v1790
        %v1827 = vunpack.c.l.b16 %v1791
        %v1828 = vunpack.c.l.b16 %v1792
        %v1829 = vunpack.c.l.b16 %v1793
        %v1830 = vunpack.c.l.b16 %v1794
        %v1831 = vpack.c.b16 %v1824, %v1823
        %v1832 = vpack.c.b16 %v1826, %v1825
        %v1833 = vpack.c.b16 %v1828, %v1827
        %v1834 = vpack.c.b16 %v1830, %v1829
        %vm1839 = vcmask 523264
        %v1841 = vsel %vm1839, %v1811, 0
        %v1844 = vsel %vm1839, %v1812, 0
        %v1847 = vsel %vm1839, %v1813, 0
        %v1850 = vsel %vm1839, %v1814, 0
        %1852 = vmatprep.subr.bf16.mxu0 0
        %1853 = vmatpush1.bf16.msra.mxu0 %v1831
        %1854 = vmatprep.subr.bf16.mxu0 0
        %1855 = vmatpush1.bf16.msra.mxu0 %v1832
        %1856 = vmatprep.subr.bf16.mxu0 0
        %1857 = vmatpush1.bf16.msra.mxu0 %v1833
        %1858 = vmatprep.subr.bf16.mxu0 0
        %1859 = vmatpush1.bf16.msra.mxu0 %v1834
        %1860 = vmatprep.subr.bf16.mxu0 0
        %1861 = vmatpush1.bf16.msra.mxu0 0
        %1862 = vmatprep.subr.bf16.mxu0 0
        %1863 = vmatpush1.bf16.msra.mxu0 0
        %1864 = vmatprep.subr.bf16.mxu0 0
        %1865 = vmatpush1.bf16.msra.mxu0 0
        %1866 = vmatprep.subr.bf16.mxu0 0
        %1867 = vmatpush1.bf16.msra.mxu0 0
        %1868 = vmatprep.subr.bf16.mxu0 0
        %1869 = vmatpush1.bf16.msra.mxu0 0
        %1870 = vmatprep.subr.bf16.mxu0 0
        %1871 = vmatpush1.bf16.msra.mxu0 0
        %1872 = vmatprep.subr.bf16.mxu0 0
        %1873 = vmatpush1.bf16.msra.mxu0 0
        %1874 = vmatprep.subr.bf16.mxu0 0
        %1875 = vmatpush1.bf16.msra.mxu0 0
        %1876 = vmatprep.subr.bf16.mxu0 0
        %1877 = vmatpush1.bf16.msra.mxu0 0
        %1878 = vmatprep.subr.bf16.mxu0 0
        %1879 = vmatpush1.bf16.msra.mxu0 0
        %1880 = vmatprep.subr.bf16.mxu0 0
        %1881 = vmatpush1.bf16.msra.mxu0 0
        %1882 = vmatprep.subr.bf16.mxu0 0
        %1883 = vmatpush1.bf16.msra.mxu0 0
        %1884 = vmatprep.mubr.bf16.mxu0 0
        %1885 = vmatmul.mubr.bf16.gmra.mrb[0].mxu0 %v1841
        %v1886 = vpop.f32.mrb[0].mxu0
        %v1887 = vadd.f32 0.0, %v1886
        %v1888 = vpop.f32.mrb[0].mxu0
        %v1889 = vpop.f32.mrb[0].mxu0
        %v1890 = vadd.f32 0.0, %v1889
        %v1891 = vpop.f32.mrb[0].mxu0
        %1892 = vmatprep.mubr.bf16.mxu0 0
        %1893 = vmatmul.mubr.bf16.gmra.mrb[0].mxu0 %v1844
        %v1894 = vpop.f32.mrb[0].mxu0
        %v1895 = vadd.f32 0.0, %v1894
        %v1896 = vpop.f32.mrb[0].mxu0
        %v1897 = vpop.f32.mrb[0].mxu0
        %v1898 = vadd.f32 0.0, %v1897
        %v1899 = vpop.f32.mrb[0].mxu0
        %1900 = vmatprep.mubr.bf16.mxu0 0
        %1901 = vmatmul.mubr.bf16.gmra.mrb[0].mxu0 %v1847
        %v1902 = vpop.f32.mrb[0].mxu0
        %v1903 = vadd.f32 0.0, %v1902
        %v1904 = vpop.f32.mrb[0].mxu0
        %v1905 = vpop.f32.mrb[0].mxu0
        %v1906 = vadd.f32 0.0, %v1905
        %v1907 = vpop.f32.mrb[0].mxu0
        %1908 = vmatprep.mubr.bf16.mxu0 0
        %1909 = vmatmul.mubr.bf16.gmra.mrb[0].mxu0 %v1850
        %v1910 = vpop.f32.mrb[0].mxu0
        %v1911 = vadd.f32 0.0, %v1910
        %v1912 = vpop.f32.mrb[0].mxu0
        %v1913 = vpop.f32.mrb[0].mxu0
        %v1914 = vadd.f32 0.0, %v1913
        %v1915 = vpop.f32.mrb[0].mxu0
        %1916 = vdwg.mxu0
        %v1917 = vld [vmem:[#allocation10] sm:$0x1]
        %v1919 = vlaneseq
        %v1920 = vshrl.u32 %v1919, 7
        %v1921 = vsub.s32 0, %v1920
        %v1922 = vrot.slane %v1917, %v1921
        %v1924 = vmul.f32 %v1887, %v1922
        %v1925 = vmul.f32 %v1890, %v1922
        %v1926 = vmul.f32 %v1895, %v1922
        %v1927 = vmul.f32 %v1898, %v1922
        %v1928 = vmul.f32 %v1903, %v1922
        %v1929 = vmul.f32 %v1906, %v1922
        %v1930 = vmul.f32 %v1911, %v1922
        %v1931 = vmul.f32 %v1914, %v1922
        %v1932 = vld [vmem:[#allocation11] sm:$0x1]
        %v1934 = vlaneseq
        %v1935 = vshrl.u32 %v1934, 7
        %v1936 = vsub.s32 0, %v1935
        %v1937 = vrot.slane %v1932, %v1936
        %v1939 = vadd.f32 %v1924, %v1937
        %v1940 = vadd.f32 %v1925, %v1937
        %v1941 = vadd.f32 %v1926, %v1937
        %v1942 = vadd.f32 %v1927, %v1937
        %v1943 = vadd.f32 %v1928, %v1937
        %v1944 = vadd.f32 %v1929, %v1937
        %v1945 = vadd.f32 %v1930, %v1937
        %v1946 = vadd.f32 %v1931, %v1937
        %v1947 = vadd.f32 %v1771, %v1939
        %v1948 = vadd.f32 %v1772, %v1940
        %v1949 = vadd.f32 %v1773, %v1941
        %v1950 = vadd.f32 %v1774, %v1942
        %v1951 = vadd.f32 %v1775, %v1943
        %v1952 = vadd.f32 %v1776, %v1944
        %v1953 = vadd.f32 %v1777, %v1945
        %v1954 = vadd.f32 %v1778, %v1946
        %v1955 = vmax.f32 %v1947, 0.0
        %v1956 = vmax.f32 %v1948, 0.0
        %v1957 = vmax.f32 %v1949, 0.0
        %v1958 = vmax.f32 %v1950, 0.0
        %v1959 = vmax.f32 %v1951, 0.0
        %v1960 = vmax.f32 %v1952, 0.0
        %v1961 = vmax.f32 %v1953, 0.0
        %v1962 = vmax.f32 %v1954, 0.0
        %v1963 = vpack.c.bf16 %v1956, %v1955
        %v1964 = vpack.c.bf16 %v1958, %v1957
        %v1965 = vpack.c.bf16 %v1960, %v1959
        %v1966 = vpack.c.bf16 %v1962, %v1961
        %v1971 = vunpack.c.l.b16 %v1963
        %v1972 = vunpack.c.h.b16 %v1963
        %v1973 = vunpack.c.l.b16 %v1964
        %v1974 = vunpack.c.h.b16 %v1964
        %v1975 = vunpack.c.l.b16 %v1965
        %v1976 = vunpack.c.h.b16 %v1965
        %v1977 = vunpack.c.l.b16 %v1966
        %v1978 = vunpack.c.h.b16 %v1966
        %v1979 = vpack.c.b16 %v1971, %v1971
        %v1980 = vpack.c.b16 %v1972, %v1972
        %v1981 = vpack.c.b16 %v1973, %v1973
        %v1982 = vpack.c.b16 %v1974, %v1974
        %v1983 = vpack.c.b16 %v1975, %v1975
        %v1984 = vpack.c.b16 %v1976, %v1976
        %v1985 = vpack.c.b16 %v1977, %v1977
        %v1986 = vpack.c.b16 %v1978, %v1978
        %1995 = vst [vmem:[%s443] sm:$0xf] %v1979
        %1996 = vst [vmem:[%s443 + $0x4] sm:$0xf] %v1980
        %1997 = vst [vmem:[%s443 + $0x8] sm:$0xf] %v1981
        %1998 = vst [vmem:[%s443 + $0xc] sm:$0xf] %v1982
        %1999 = vst [vmem:[%s443 + $0x10] sm:$0xf] %v1983
        %2000 = vst [vmem:[%s443 + $0x14] sm:$0xf] %v1984
        %2001 = vst [vmem:[%s443 + $0x18] sm:$0xf] %v1985
        %2002 = vst [vmem:[%s443 + $0x1c] sm:$0xf] %v1986
        %s2003 = smul.u32 8, %s28
        %p2004 = scmp.lt.s32.totalorder %s27, 1
        %s2005 = scalar_select %p2004, %s27, 1
        %p2006 = scmp.lt.s32.totalorder %s2003, 7
        %s2007 = scalar_select %p2006, %s2003, 7
        %s2008 = smul.addr %s2005, 8
        %s2009 = sadd.s32 %s2007, %s2008
        %s2010 = smul.addr %s2009, 4
        %s2011 = scalar_lea.vmem %s8, %s2010
        // Predicated region
        $region77: #{gfe_two_apply.7} parent=51 // pred_check
          %p2012 = pneg %p235
        $region78: #{gfe_two_apply.7} parent=51 // pred_check_branch
          %2014 = sbr.rel (%p2012) target = $region80
        $region79: #{gfe_two_apply.7} parent=51 // pred_region
          %s2015 = smul.u32 8, %s28
        $region80: #{gfe_two_apply.7} parent=51 // pred_fallthru
          _
      $region52: #{gfe_two_apply.7} parent=5 // pred_fallthru
        _
      %p2016 = scmp.le.s32.totalorder 2, %s18
      // Predicated region
      $region81: #{gfe_two_apply.7} parent=5 // pred_check
        %p2017 = pneg %p2016
      $region82: #{gfe_two_apply.7} parent=5 // pred_check_branch
        %2019 = sbr.rel (%p2017) target = $region84
      $region83: #{gfe_two_apply.7} parent=5 // pred_region
        %s2020 = ssub.s32 %s18, 2
        // Predicated region
        $region85: #{gfe_two_apply.7} parent=83 // pred_check
          %p2021 = pneg %p241
        $region86: #{gfe_two_apply.7} parent=83 // pred_check_branch
          %2023 = sbr.rel (%p2021) target = $region88
        $region87: #{gfe_two_apply.7} parent=83 // pred_region
          %s2024 = smul.u32 8, %s30
          %p2025 = scmp.lt.s32.totalorder %s29, 1
          %s2026 = scalar_select %p2025, %s29, 1
          %p2027 = scmp.lt.s32.totalorder %s2024, 7
          %s2028 = scalar_select %p2027, %s2024, 7
          %s2029 = smul.addr %s2026, 8
          %s2030 = sadd.s32 %s2028, %s2029
          %s2031 = smul.addr %s2030, 4
          %s2032 = scalar_lea.vmem %s8, %s2031
        $region88: #{gfe_two_apply.7} parent=83 // pred_fallthru
          _
      $region84: #{gfe_two_apply.7} parent=5 // pred_fallthru
        _
    $region6: #{gfe_two_apply.7} parent=1 // loop_footer
      %s22 = sadd.s32 1, %s18
    $region7: #{gfe_two_apply.7} parent=1 // loop_footer_branch
      %17 = sbr.rel target = $region3
    $region8: #{gfe_two_apply.7} parent=1 // loop_exit
      _
    %2033 = vsyncpa [#allocation4], 1
    %s2034 = scalar_lea.sflag [#allocation4], 1
    %2035 = vsyncpa %s2034, 1
    %2036 = vsyncpa [#allocation6], 1
    %2037 = vsyncpa [#allocation9], 1
    %2038 = vsyncpa [#allocation12], 1

// kernel: gfe_two_apply.9
$region0: #{gfe_two_apply.9}
  #allocation0 [shape = 'u32[]', space=smem, size = 0x4, offset = 0x4, fixed_abs, tag = 'smem constant byte address 0x4 - core index']
  #allocation1 [shape = 'u32[144,128]{1,0:T(1,128)}', space=vmem, size = 0x12000, scoped, tag = 'internal scratch']
  #allocation2 [shape = 'bf16[64,1152]{1,0:T(16,128)(2,1)}', space=vmem, size = 0x24000, scoped, tag = 'scratch operand']
  %s0 = inlined_call_operand.vmem [shape: bf16[2,1,128,128], index: 0, kind: input, shape index: {}]
  %s1 = inlined_call_operand.vmem [shape: bf16[2,64,128], index: 1, kind: input, shape index: {}]
  %s2 = inlined_call_operand.vmem [shape: bf16[1152,128], index: 2, kind: input, shape index: {}]
  %s3 = inlined_call_operand.vmem [shape: f32[1,128], index: 3, kind: input, shape index: {}]
  %s4 = inlined_call_operand.vmem [shape: f32[1,128], index: 4, kind: input, shape index: {}]
  %s5 = inlined_call_operand.vmem [shape: bf16[2,64,128], index: 5, kind: output, shape index: {}]
  %s6 = sld [smem:[#allocation0]]
  $region53: #{gfe_two_apply.9} parent=0
    _
  %s8 = ssub.s32 1, %s6
  %s9 = scalar_select 0, %s8, %s6
  loop: start=0, step=1, limit=4
  $region2: #{gfe_two_apply.9} parent=0 // loop_pre_header
    _
  $region3: #{gfe_two_apply.9} parent=0 // loop_header
    %s11 = sphi 0, %s15
    %p12 = scmp.ge.s32.totalorder %s11, 4
    %s18 = sphi 0, %s30
    %s19 = sphi 0, %s26
    %s20 = sphi 0, %s18
    %s21 = sphi 0, %s19
    %s22 = sphi 0, %s20
    %s23 = sphi 0, %s21
    %s33 = sphi 0, %s35
    %s36 = sphi 0, %s33
    %s37 = sphi 0, %s36
    %s53 = sphi 0, %s37
    %s61 = sphi 0, %s63
    %s64 = sphi 0, %s61
    %s65 = sphi 0, %s64
    %s81 = sphi 0, %s65
    %s85 = sphi 0, %s85
    %s87 = sphi 0, %s85
    %s88 = sphi 0, %s87
    %s102 = sphi 0, %s88
    %s106 = sphi 0, %s106
    %s108 = sphi 0, %s106
    %s109 = sphi 0, %s108
    %s123 = sphi 0, %s109
    %s127 = sphi 0, %s127
    %s129 = sphi 0, %s127
    %s130 = sphi 0, %s129
    %s144 = sphi 0, %s130
    %s152 = sphi 0, %s154
    %s155 = sphi 0, %s152
    %s156 = sphi 0, %s155
    %s172 = sphi 0, %s156
  $region4: #{gfe_two_apply.9} parent=0 // loop_header_branch
    %14 = sbr.rel (%p12) target = $region8
  $region5: #{gfe_two_apply.9} parent=0 // loop_body
    %s16 = ssub.s32 %s11, 1
    %s17 = ssub.s32 %s11, 2
    %s24 = sadd.s32 1, %s19
    %p25 = scmp.ge.s32.totalorder %s24, 1
    %s26 = scalar_select %p25, 0, %s24
    %s27 = sadd.s32 1, %s18
    %s28 = scalar_select %p25, %s27, %s18
    %p29 = scmp.ge.s32.totalorder %s28, 2
    %s30 = scalar_select %p29, 0, %s28
    %s31 = ssub.s32 %s18, %s30
    %p32 = scmp.eq.s32.totalorder %s31, 0
    %s34 = sadd.s32 %s33, 1
    %s35 = scalar_select %p32, %s33, %s34
    %p38 = pneg %p32
    %p39 = scmp.eq.s32.totalorder %s11, 1
    %p40 = por %p38, %p39
    %p41 = scmp.ne.s32.totalorder %s33, %s36
    %p42 = scmp.eq.s32.totalorder %s11, 0
    %p43 = por %p41, %p42
    %p44 = scmp.ne.s32.totalorder %s33, %s36
    %p45 = scmp.eq.s32.totalorder %s16, 1
    %p46 = por %p44, %p45
    %p47 = scmp.ne.s32.totalorder %s36, %s37
    %p48 = scmp.eq.s32.totalorder %s16, 0
    %p49 = por %p47, %p48
    %p50 = scmp.ne.s32.totalorder %s36, %s37
    %p51 = scmp.eq.s32.totalorder %s17, 1
    %p52 = por %p50, %p51
    %p54 = scmp.ne.s32.totalorder %s37, %s53
    %p55 = scmp.eq.s32.totalorder %s17, 0
    %p56 = por %p54, %p55
    %s57 = ssub.s32 %s18, %s30
    %s58 = ssub.s32 %s19, %s26
    %s59 = sor.u32 %s57, %s58
    %p60 = scmp.eq.s32.totalorder %s59, 0
    %s62 = sadd.s32 %s61, 1
    %s63 = scalar_select %p60, %s61, %s62
    %p66 = pneg %p60
    %p67 = scmp.eq.s32.totalorder %s11, 1
    %p68 = por %p66, %p67
    %p69 = scmp.ne.s32.totalorder %s61, %s64
    %p70 = scmp.eq.s32.totalorder %s11, 0
    %p71 = por %p69, %p70
    %p72 = scmp.ne.s32.totalorder %s61, %s64
    %p73 = scmp.eq.s32.totalorder %s16, 1
    %p74 = por %p72, %p73
    %p75 = scmp.ne.s32.totalorder %s64, %s65
    %p76 = scmp.eq.s32.totalorder %s16, 0
    %p77 = por %p75, %p76
    %p78 = scmp.ne.s32.totalorder %s64, %s65
    %p79 = scmp.eq.s32.totalorder %s17, 1
    %p80 = por %p78, %p79
    %p82 = scmp.ne.s32.totalorder %s65, %s81
    %p83 = scmp.eq.s32.totalorder %s17, 0
    %p84 = por %p82, %p83
    %s86 = sadd.s32 %s85, 1
    %p89 = scmp.eq.s32.totalorder %s11, 1
    %p90 = scmp.ne.s32.totalorder %s85, %s87
    %p91 = scmp.eq.s32.totalorder %s11, 0
    %p92 = por %p90, %p91
    %p93 = scmp.ne.s32.totalorder %s85, %s87
    %p94 = scmp.eq.s32.totalorder %s16, 1
    %p95 = por %p93, %p94
    %p96 = scmp.ne.s32.totalorder %s87, %s88
    %p97 = scmp.eq.s32.totalorder %s16, 0
    %p98 = por %p96, %p97
    %p99 = scmp.ne.s32.totalorder %s87, %s88
    %p100 = scmp.eq.s32.totalorder %s17, 1
    %p101 = por %p99, %p100
    %p103 = scmp.ne.s32.totalorder %s88, %s102
    %p104 = scmp.eq.s32.totalorder %s17, 0
    %p105 = por %p103, %p104
    %s107 = sadd.s32 %s106, 1
    %p110 = scmp.eq.s32.totalorder %s11, 1
    %p111 = scmp.ne.s32.totalorder %s106, %s108
    %p112 = scmp.eq.s32.totalorder %s11, 0
    %p113 = por %p111, %p112
    %p114 = scmp.ne.s32.totalorder %s106, %s108
    %p115 = scmp.eq.s32.totalorder %s16, 1
    %p116 = por %p114, %p115
    %p117 = scmp.ne.s32.totalorder %s108, %s109
    %p118 = scmp.eq.s32.totalorder %s16, 0
    %p119 = por %p117, %p118
    %p120 = scmp.ne.s32.totalorder %s108, %s109
    %p121 = scmp.eq.s32.totalorder %s17, 1
    %p122 = por %p120, %p121
    %p124 = scmp.ne.s32.totalorder %s109, %s123
    %p125 = scmp.eq.s32.totalorder %s17, 0
    %p126 = por %p124, %p125
    %s128 = sadd.s32 %s127, 1
    %p131 = scmp.eq.s32.totalorder %s11, 1
    %p132 = scmp.ne.s32.totalorder %s127, %s129
    %p133 = scmp.eq.s32.totalorder %s11, 0
    %p134 = por %p132, %p133
    %p135 = scmp.ne.s32.totalorder %s127, %s129
    %p136 = scmp.eq.s32.totalorder %s16, 1
    %p137 = por %p135, %p136
    %p138 = scmp.ne.s32.totalorder %s129, %s130
    %p139 = scmp.eq.s32.totalorder %s16, 0
    %p140 = por %p138, %p139
    %p141 = scmp.ne.s32.totalorder %s129, %s130
    %p142 = scmp.eq.s32.totalorder %s17, 1
    %p143 = por %p141, %p142
    %p145 = scmp.ne.s32.totalorder %s130, %s144
    %p146 = scmp.eq.s32.totalorder %s17, 0
    %p147 = por %p145, %p146
    %s148 = ssub.s32 %s18, %s30
    %s149 = ssub.s32 %s19, %s26
    %s150 = sor.u32 %s148, %s149
    %p151 = scmp.eq.s32.totalorder %s150, 0
    %s153 = sadd.s32 %s152, 1
    %s154 = scalar_select %p151, %s152, %s153
    %p157 = pneg %p151
    %p158 = scmp.eq.s32.totalorder %s11, 1
    %p159 = por %p157, %p158
    %p160 = scmp.ne.s32.totalorder %s152, %s155
    %p161 = scmp.eq.s32.totalorder %s11, 0
    %p162 = por %p160, %p161
    %p163 = scmp.ne.s32.totalorder %s152, %s155
    %p164 = scmp.eq.s32.totalorder %s16, 1
    %p165 = por %p163, %p164
    %p166 = scmp.ne.s32.totalorder %s155, %s156
    %p167 = scmp.eq.s32.totalorder %s16, 0
    %p168 = por %p166, %p167
    %p169 = scmp.ne.s32.totalorder %s155, %s156
    %p170 = scmp.eq.s32.totalorder %s17, 1
    %p171 = por %p169, %p170
    %p173 = scmp.ne.s32.totalorder %s156, %s172
    %p174 = scmp.eq.s32.totalorder %s17, 0
    %p175 = por %p173, %p174
    %p176 = scmp.le.s32.totalorder 1, %s11
    %p177 = scmp.lt.s32.totalorder %s11, 3
    %p178 = pnand %p176, %p177
    %p179 = pneg %p178
    // Predicated region
    $region9: #{gfe_two_apply.9} parent=5 // pred_check
      _
    $region10: #{gfe_two_apply.9} parent=5 // pred_check_branch
      %181 = sbr.rel (%p178) target = $region12
    $region11: #{gfe_two_apply.9} parent=5 // pred_region
      %s182 = ssub.s32 %s11, 1
      // Predicated region
      $region13: #{gfe_two_apply.9} parent=11 // pred_check
        %p183 = pneg %p98
      $region14: #{gfe_two_apply.9} parent=11 // pred_check_branch
        %185 = sbr.rel (%p183) target = $region16
      $region15: #{gfe_two_apply.9} parent=11 // pred_region
        _
      $region16: #{gfe_two_apply.9} parent=11 // pred_fallthru
        _
      // Predicated region
      $region17: #{gfe_two_apply.9} parent=11 // pred_check
        %p186 = pneg %p119
      $region18: #{gfe_two_apply.9} parent=11 // pred_check_branch
        %188 = sbr.rel (%p186) target = $region20
      $region19: #{gfe_two_apply.9} parent=11 // pred_region
        _
      $region20: #{gfe_two_apply.9} parent=11 // pred_fallthru
        _
      // Predicated region
      $region21: #{gfe_two_apply.9} parent=11 // pred_check
        %p189 = pneg %p140
      $region22: #{gfe_two_apply.9} parent=11 // pred_check_branch
        %191 = sbr.rel (%p189) target = $region24
      $region23: #{gfe_two_apply.9} parent=11 // pred_region
        _
      $region24: #{gfe_two_apply.9} parent=11 // pred_fallthru
        _
    $region12: #{gfe_two_apply.9} parent=5 // pred_fallthru
      _
    %p192 = scmp.lt.s32.totalorder %s11, 2
    // Predicated region
    $region25: #{gfe_two_apply.9} parent=5 // pred_check
      %p193 = pneg %p192
    $region26: #{gfe_two_apply.9} parent=5 // pred_check_branch
      %195 = sbr.rel (%p193) target = $region28
    $region27: #{gfe_two_apply.9} parent=5 // pred_region
      // Predicated region
      $region29: #{gfe_two_apply.9} parent=27 // pred_check
        %p196 = pneg %p43
      $region30: #{gfe_two_apply.9} parent=27 // pred_check_branch
        %198 = sbr.rel (%p196) target = $region32
      $region31: #{gfe_two_apply.9} parent=27 // pred_region
        %p199 = scmp.lt.s32.totalorder %s18, 1
        %s200 = scalar_select %p199, %s18, 1
        %s201 = smul.addr %s200, 16
        %s202 = smul.addr %s201, 4
        %s203 = scalar_lea.vmem %s0, %s202
      $region32: #{gfe_two_apply.9} parent=27 // pred_fallthru
        _
      // Predicated region
      $region33: #{gfe_two_apply.9} parent=27 // pred_check
        %p204 = pneg %p71
      $region34: #{gfe_two_apply.9} parent=27 // pred_check_branch
        %206 = sbr.rel (%p204) target = $region36
      $region35: #{gfe_two_apply.9} parent=27 // pred_region
        %s207 = smul.u32 8, %s19
        %p208 = scmp.lt.s32.totalorder %s18, 1
        %s209 = scalar_select %p208, %s18, 1
        %p210 = scmp.lt.s32.totalorder %s207, 7
        %s211 = scalar_select %p210, %s207, 7
        %s212 = smul.addr %s209, 8
        %s213 = sadd.s32 %s211, %s212
        %s214 = smul.addr %s213, 4
        %s215 = scalar_lea.vmem %s1, %s214
        %s216 = smul.u32 8, %s19
      $region36: #{gfe_two_apply.9} parent=27 // pred_fallthru
        _
    $region28: #{gfe_two_apply.9} parent=5 // pred_fallthru
      _
    %p217 = scmp.le.s32.totalorder 1, %s11
    %p218 = scmp.lt.s32.totalorder %s11, 3
    %p219 = pnand %p217, %p218
    %p220 = pneg %p219
    // Predicated region
    $region37: #{gfe_two_apply.9} parent=5 // pred_check
      _
    $region38: #{gfe_two_apply.9} parent=5 // pred_check_branch
      %222 = sbr.rel (%p219) target = $region40
    $region39: #{gfe_two_apply.9} parent=5 // pred_region
      %s223 = ssub.s32 %s11, 1
      %p224 = scmp.lt.s32.totalorder %s20, 1
      %s225 = scalar_select %p224, %s20, 1
      %s226 = smul.addr %s225, 16
      %s227 = smul.addr %s226, 4
      %s228 = scalar_lea.vmem %s0, %s227
      %p229 = pneg %p49
      %p230 = pneg %p46
      %s231 = smul.u32 8, %s21
      %p232 = scmp.lt.s32.totalorder %s20, 1
      %s233 = scalar_select %p232, %s20, 1
      %p234 = scmp.lt.s32.totalorder %s231, 7
      %s235 = scalar_select %p234, %s231, 7
      %s236 = smul.addr %s233, 8
      %s237 = sadd.s32 %s235, %s236
      %s238 = smul.addr %s237, 4
      %s239 = scalar_lea.vmem %s1, %s238
      %p240 = pneg %p77
      %p241 = pneg %p74
      %p242 = pneg %p98
      %p243 = pneg %p95
      %p244 = pneg %p119
      %p245 = pneg %p116
      %p246 = pneg %p140
      %p247 = pneg %p137
      %p248 = pneg %p168
      %p249 = pneg %p165
      %s250 = smul.u32 8, %s21
      %p251 = scmp.lt.s32.totalorder %s20, 1
      %s252 = scalar_select %p251, %s20, 1
      %p253 = scmp.lt.s32.totalorder %s250, 7
      %s254 = scalar_select %p253, %s250, 7
      %s255 = smul.addr %s252, 8
      %s256 = sadd.s32 %s254, %s255
      %s257 = smul.addr %s256, 4
      %s258 = scalar_lea.vmem %s5, %s257
      %p259 = scmp.lt.s32.totalorder %s20, 1
      %s260 = scalar_select %p259, %s20, 1
      %s261 = smul.addr %s260, 16
      %s262 = smul.addr %s261, 4
      %s263 = scalar_lea.vmem %s0, %s262
      %s264 = smul.u32 8, %s21
      %p265 = scmp.lt.s32.totalorder %s20, 1
      %s266 = scalar_select %p265, %s20, 1
      %p267 = scmp.lt.s32.totalorder %s264, 7
      %s268 = scalar_select %p267, %s264, 7
      %s269 = smul.addr %s266, 8
      %s270 = sadd.s32 %s268, %s269
      %s271 = smul.addr %s270, 4
      %s272 = scalar_lea.vmem %s1, %s271
      %s273 = smul.u32 8, %s21
      %s274 = smul.u32 8, %s21
      %p275 = scmp.lt.s32.totalorder %s20, 1
      %s276 = scalar_select %p275, %s20, 1
      %p277 = scmp.lt.s32.totalorder %s274, 7
      %s278 = scalar_select %p277, %s274, 7
      %s279 = smul.addr %s276, 8
      %s280 = sadd.s32 %s278, %s279
      %s281 = smul.addr %s280, 4
      %s282 = scalar_lea.vmem %s5, %s281
      %s283 = smul.u32 8, %s21
      %s285 = smul.u32 %s21, 8
      %s286 = smul.u32 %s21, 64
      %s287 = sshra.s32 %s286, 3
      %s288 = sand.u32 %s286, 7
      %s289 = smul.addr %s287, 4
      %s290 = scalar_lea.vmem %s263, %s289
      %v291 = vld [vmem:[%s290] sm:$0xf]
      %v292 = vld [vmem:[%s290 + $0x4] sm:$0xf]
      %v293 = vld [vmem:[%s290 + $0x8] sm:$0xf]
      %v294 = vld [vmem:[%s290 + $0xc] sm:$0xf]
      %v295 = vld [vmem:[%s290 + $0x10] sm:$0xf]
      %v296 = vld [vmem:[%s290 + $0x14] sm:$0xf]
      %v297 = vld [vmem:[%s290 + $0x18] sm:$0xf]
      %v298 = vld [vmem:[%s290 + $0x1c] sm:$0xf]
      %v307 = vunpack.c.l.b16 %v291
      %v308 = vunpack.c.l.b16 %v292
      %v309 = vunpack.c.l.b16 %v293
      %v310 = vunpack.c.l.b16 %v294
      %v311 = vunpack.c.l.b16 %v295
      %v312 = vunpack.c.l.b16 %v296
      %v313 = vunpack.c.l.b16 %v297
      %v314 = vunpack.c.l.b16 %v298
      %v315 = vpack.c.b16 %v308, %v307
      %v316 = vpack.c.b16 %v310, %v309
      %v317 = vpack.c.b16 %v312, %v311
      %v318 = vpack.c.b16 %v314, %v313
      %323 = vst [vmem:[#allocation2] sm:$0xff] %v315
      %324 = vst [vmem:[#allocation2 + $0x48] sm:$0xff] %v316
      %325 = vst [vmem:[#allocation2 + $0x90] sm:$0xff] %v317
      %326 = vst [vmem:[#allocation2 + $0xd8] sm:$0xff] %v318
      %s327 = sadd.s32 %s285, 1
      %s328 = smul.u32 %s327, 8
      %s329 = sshra.s32 %s328, 3
      %s330 = sand.u32 %s328, 7
      %s331 = smul.addr %s329, 4
      %s332 = scalar_lea.vmem %s263, %s331
      %v333 = vld [vmem:[%s332] sm:$0xf]
      %v334 = vld [vmem:[%s332 + $0x4] sm:$0xf]
      %v335 = vld [vmem:[%s332 + $0x8] sm:$0xf]
      %v336 = vld [vmem:[%s332 + $0xc] sm:$0xf]
      %v337 = vld [vmem:[%s332 + $0x10] sm:$0xf]
      %v338 = vld [vmem:[%s332 + $0x14] sm:$0xf]
      %v339 = vld [vmem:[%s332 + $0x18] sm:$0xf]
      %v340 = vld [vmem:[%s332 + $0x1c] sm:$0xf]
      %v349 = vunpack.c.l.b16 %v333
      %v350 = vunpack.c.l.b16 %v334
      %v351 = vunpack.c.l.b16 %v335
      %v352 = vunpack.c.l.b16 %v336
      %v353 = vunpack.c.l.b16 %v337
      %v354 = vunpack.c.l.b16 %v338
      %v355 = vunpack.c.l.b16 %v339
      %v356 = vunpack.c.l.b16 %v340
      %v357 = vpack.c.b16 %v350, %v349
      %v358 = vpack.c.b16 %v352, %v351
      %v359 = vpack.c.b16 %v354, %v353
      %v360 = vpack.c.b16 %v356, %v355
      %365 = vst [vmem:[#allocation2 + $0x8] sm:$0xff] %v357
      %366 = vst [vmem:[#allocation2 + $0x50] sm:$0xff] %v358
      %367 = vst [vmem:[#allocation2 + $0x98] sm:$0xff] %v359
      %368 = vst [vmem:[#allocation2 + $0xe0] sm:$0xff] %v360
      %s369 = sadd.s32 %s285, 2
      %s370 = smul.u32 %s369, 8
      %s371 = sshra.s32 %s370, 3
      %s372 = sand.u32 %s370, 7
      %s373 = smul.addr %s371, 4
      %s374 = scalar_lea.vmem %s263, %s373
      %v375 = vld [vmem:[%s374] sm:$0xf]
      %v376 = vld [vmem:[%s374 + $0x4] sm:$0xf]
      %v377 = vld [vmem:[%s374 + $0x8] sm:$0xf]
      %v378 = vld [vmem:[%s374 + $0xc] sm:$0xf]
      %v379 = vld [vmem:[%s374 + $0x10] sm:$0xf]
      %v380 = vld [vmem:[%s374 + $0x14] sm:$0xf]
      %v381 = vld [vmem:[%s374 + $0x18] sm:$0xf]
      %v382 = vld [vmem:[%s374 + $0x1c] sm:$0xf]
      %v391 = vunpack.c.l.b16 %v375
      %v392 = vunpack.c.l.b16 %v376
      %v393 = vunpack.c.l.b16 %v377
      %v394 = vunpack.c.l.b16 %v378
      %v395 = vunpack.c.l.b16 %v379
      %v396 = vunpack.c.l.b16 %v380
      %v397 = vunpack.c.l.b16 %v381
      %v398 = vunpack.c.l.b16 %v382
      %v399 = vpack.c.b16 %v392, %v391
      %v400 = vpack.c.b16 %v394, %v393
      %v401 = vpack.c.b16 %v396, %v395
      %v402 = vpack.c.b16 %v398, %v397
      %407 = vst [vmem:[#allocation2 + $0x10] sm:$0xff] %v399
      %408 = vst [vmem:[#allocation2 + $0x58] sm:$0xff] %v400
      %409 = vst [vmem:[#allocation2 + $0xa0] sm:$0xff] %v401
      %410 = vst [vmem:[#allocation2 + $0xe8] sm:$0xff] %v402
      %s411 = sadd.s32 %s285, 3
      %s412 = smul.u32 %s411, 8
      %s413 = sshra.s32 %s412, 3
      %s414 = sand.u32 %s412, 7
      %s415 = smul.addr %s413, 4
      %s416 = scalar_lea.vmem %s263, %s415
      %v417 = vld [vmem:[%s416] sm:$0xf]
      %v418 = vld [vmem:[%s416 + $0x4] sm:$0xf]
      %v419 = vld [vmem:[%s416 + $0x8] sm:$0xf]
      %v420 = vld [vmem:[%s416 + $0xc] sm:$0xf]
      %v421 = vld [vmem:[%s416 + $0x10] sm:$0xf]
      %v422 = vld [vmem:[%s416 + $0x14] sm:$0xf]
      %v423 = vld [vmem:[%s416 + $0x18] sm:$0xf]
      %v424 = vld [vmem:[%s416 + $0x1c] sm:$0xf]
      %v433 = vunpack.c.l.b16 %v417
      %v434 = vunpack.c.l.b16 %v418
      %v435 = vunpack.c.l.b16 %v419
      %v436 = vunpack.c.l.b16 %v420
      %v437 = vunpack.c.l.b16 %v421
      %v438 = vunpack.c.l.b16 %v422
      %v439 = vunpack.c.l.b16 %v423
      %v440 = vunpack.c.l.b16 %v424
      %v441 = vpack.c.b16 %v434, %v433
      %v442 = vpack.c.b16 %v436, %v435
      %v443 = vpack.c.b16 %v438, %v437
      %v444 = vpack.c.b16 %v440, %v439
      %449 = vst [vmem:[#allocation2 + $0x18] sm:$0xff] %v441
      %450 = vst [vmem:[#allocation2 + $0x60] sm:$0xff] %v442
      %451 = vst [vmem:[#allocation2 + $0xa8] sm:$0xff] %v443
      %452 = vst [vmem:[#allocation2 + $0xf0] sm:$0xff] %v444
      %s453 = sadd.s32 %s285, 4
      %s454 = smul.u32 %s453, 8
      %s455 = sshra.s32 %s454, 3
      %s456 = sand.u32 %s454, 7
      %s457 = smul.addr %s455, 4
      %s458 = scalar_lea.vmem %s263, %s457
      %v459 = vld [vmem:[%s458] sm:$0xf]
      %v460 = vld [vmem:[%s458 + $0x4] sm:$0xf]
      %v461 = vld [vmem:[%s458 + $0x8] sm:$0xf]
      %v462 = vld [vmem:[%s458 + $0xc] sm:$0xf]
      %v463 = vld [vmem:[%s458 + $0x10] sm:$0xf]
      %v464 = vld [vmem:[%s458 + $0x14] sm:$0xf]
      %v465 = vld [vmem:[%s458 + $0x18] sm:$0xf]
      %v466 = vld [vmem:[%s458 + $0x1c] sm:$0xf]
      %v475 = vunpack.c.l.b16 %v459
      %v476 = vunpack.c.l.b16 %v460
      %v477 = vunpack.c.l.b16 %v461
      %v478 = vunpack.c.l.b16 %v462
      %v479 = vunpack.c.l.b16 %v463
      %v480 = vunpack.c.l.b16 %v464
      %v481 = vunpack.c.l.b16 %v465
      %v482 = vunpack.c.l.b16 %v466
      %v483 = vpack.c.b16 %v476, %v475
      %v484 = vpack.c.b16 %v478, %v477
      %v485 = vpack.c.b16 %v480, %v479
      %v486 = vpack.c.b16 %v482, %v481
      %491 = vst [vmem:[#allocation2 + $0x20] sm:$0xff] %v483
      %492 = vst [vmem:[#allocation2 + $0x68] sm:$0xff] %v484
      %493 = vst [vmem:[#allocation2 + $0xb0] sm:$0xff] %v485
      %494 = vst [vmem:[#allocation2 + $0xf8] sm:$0xff] %v486
      %s495 = sadd.s32 %s285, 5
      %s496 = smul.u32 %s495, 8
      %s497 = sshra.s32 %s496, 3
      %s498 = sand.u32 %s496, 7
      %s499 = smul.addr %s497, 4
      %s500 = scalar_lea.vmem %s263, %s499
      %v501 = vld [vmem:[%s500] sm:$0xf]
      %v502 = vld [vmem:[%s500 + $0x4] sm:$0xf]
      %v503 = vld [vmem:[%s500 + $0x8] sm:$0xf]
      %v504 = vld [vmem:[%s500 + $0xc] sm:$0xf]
      %v505 = vld [vmem:[%s500 + $0x10] sm:$0xf]
      %v506 = vld [vmem:[%s500 + $0x14] sm:$0xf]
      %v507 = vld [vmem:[%s500 + $0x18] sm:$0xf]
      %v508 = vld [vmem:[%s500 + $0x1c] sm:$0xf]
      %v517 = vunpack.c.l.b16 %v501
      %v518 = vunpack.c.l.b16 %v502
      %v519 = vunpack.c.l.b16 %v503
      %v520 = vunpack.c.l.b16 %v504
      %v521 = vunpack.c.l.b16 %v505
      %v522 = vunpack.c.l.b16 %v506
      %v523 = vunpack.c.l.b16 %v507
      %v524 = vunpack.c.l.b16 %v508
      %v525 = vpack.c.b16 %v518, %v517
      %v526 = vpack.c.b16 %v520, %v519
      %v527 = vpack.c.b16 %v522, %v521
      %v528 = vpack.c.b16 %v524, %v523
      %533 = vst [vmem:[#allocation2 + $0x28] sm:$0xff] %v525
      %534 = vst [vmem:[#allocation2 + $0x70] sm:$0xff] %v526
      %535 = vst [vmem:[#allocation2 + $0xb8] sm:$0xff] %v527
      %536 = vst [vmem:[#allocation2 + $0x100] sm:$0xff] %v528
      %s537 = sadd.s32 %s285, 6
      %s538 = smul.u32 %s537, 8
      %s539 = sshra.s32 %s538, 3
      %s540 = sand.u32 %s538, 7
      %s541 = smul.addr %s539, 4
      %s542 = scalar_lea.vmem %s263, %s541
      %v543 = vld [vmem:[%s542] sm:$0xf]
      %v544 = vld [vmem:[%s542 + $0x4] sm:$0xf]
      %v545 = vld [vmem:[%s542 + $0x8] sm:$0xf]
      %v546 = vld [vmem:[%s542 + $0xc] sm:$0xf]
      %v547 = vld [vmem:[%s542 + $0x10] sm:$0xf]
      %v548 = vld [vmem:[%s542 + $0x14] sm:$0xf]
      %v549 = vld [vmem:[%s542 + $0x18] sm:$0xf]
      %v550 = vld [vmem:[%s542 + $0x1c] sm:$0xf]
      %v559 = vunpack.c.l.b16 %v543
      %v560 = vunpack.c.l.b16 %v544
      %v561 = vunpack.c.l.b16 %v545
      %v562 = vunpack.c.l.b16 %v546
      %v563 = vunpack.c.l.b16 %v547
      %v564 = vunpack.c.l.b16 %v548
      %v565 = vunpack.c.l.b16 %v549
      %v566 = vunpack.c.l.b16 %v550
      %v567 = vpack.c.b16 %v560, %v559
      %v568 = vpack.c.b16 %v562, %v561
      %v569 = vpack.c.b16 %v564, %v563
      %v570 = vpack.c.b16 %v566, %v565
      %575 = vst [vmem:[#allocation2 + $0x30] sm:$0xff] %v567
      %576 = vst [vmem:[#allocation2 + $0x78] sm:$0xff] %v568
      %577 = vst [vmem:[#allocation2 + $0xc0] sm:$0xff] %v569
      %578 = vst [vmem:[#allocation2 + $0x108] sm:$0xff] %v570
      %s579 = sadd.s32 %s285, 7
      %s580 = smul.u32 %s579, 8
      %s581 = sshra.s32 %s580, 3
      %s582 = sand.u32 %s580, 7
      %s583 = smul.addr %s581, 4
      %s584 = scalar_lea.vmem %s263, %s583
      %v585 = vld [vmem:[%s584] sm:$0xf]
      %v586 = vld [vmem:[%s584 + $0x4] sm:$0xf]
      %v587 = vld [vmem:[%s584 + $0x8] sm:$0xf]
      %v588 = vld [vmem:[%s584 + $0xc] sm:$0xf]
      %v589 = vld [vmem:[%s584 + $0x10] sm:$0xf]
      %v590 = vld [vmem:[%s584 + $0x14] sm:$0xf]
      %v591 = vld [vmem:[%s584 + $0x18] sm:$0xf]
      %v592 = vld [vmem:[%s584 + $0x1c] sm:$0xf]
      %v601 = vunpack.c.l.b16 %v585
      %v602 = vunpack.c.l.b16 %v586
      %v603 = vunpack.c.l.b16 %v587
      %v604 = vunpack.c.l.b16 %v588
      %v605 = vunpack.c.l.b16 %v589
      %v606 = vunpack.c.l.b16 %v590
      %v607 = vunpack.c.l.b16 %v591
      %v608 = vunpack.c.l.b16 %v592
      %v609 = vpack.c.b16 %v602, %v601
      %v610 = vpack.c.b16 %v604, %v603
      %v611 = vpack.c.b16 %v606, %v605
      %v612 = vpack.c.b16 %v608, %v607
      %617 = vst [vmem:[#allocation2 + $0x38] sm:$0xff] %v609
      %618 = vst [vmem:[#allocation2 + $0x80] sm:$0xff] %v610
      %619 = vst [vmem:[#allocation2 + $0xc8] sm:$0xff] %v611
      %620 = vst [vmem:[#allocation2 + $0x110] sm:$0xff] %v612
      %s621 = sadd.s32 %s285, 8
      %s622 = smul.u32 %s621, 8
      %s623 = sshra.s32 %s622, 3
      %s624 = sand.u32 %s622, 7
      %s625 = smul.addr %s623, 4
      %s626 = scalar_lea.vmem %s263, %s625
      %v627 = vld [vmem:[%s626] sm:$0xf]
      %v628 = vld [vmem:[%s626 + $0x4] sm:$0xf]
      %v629 = vld [vmem:[%s626 + $0x8] sm:$0xf]
      %v630 = vld [vmem:[%s626 + $0xc] sm:$0xf]
      %v631 = vld [vmem:[%s626 + $0x10] sm:$0xf]
      %v632 = vld [vmem:[%s626 + $0x14] sm:$0xf]
      %v633 = vld [vmem:[%s626 + $0x18] sm:$0xf]
      %v634 = vld [vmem:[%s626 + $0x1c] sm:$0xf]
      %v643 = vunpack.c.l.b16 %v627
      %v644 = vunpack.c.l.b16 %v628
      %v645 = vunpack.c.l.b16 %v629
      %v646 = vunpack.c.l.b16 %v630
      %v647 = vunpack.c.l.b16 %v631
      %v648 = vunpack.c.l.b16 %v632
      %v649 = vunpack.c.l.b16 %v633
      %v650 = vunpack.c.l.b16 %v634
      %v651 = vpack.c.b16 %v644, %v643
      %v652 = vpack.c.b16 %v646, %v645
      %v653 = vpack.c.b16 %v648, %v647
      %v654 = vpack.c.b16 %v650, %v649
      %659 = vst [vmem:[#allocation2 + $0x40] sm:$0xff] %v651
      %660 = vst [vmem:[#allocation2 + $0x88] sm:$0xff] %v652
      %661 = vst [vmem:[#allocation2 + $0xd0] sm:$0xff] %v653
      %662 = vst [vmem:[#allocation2 + $0x118] sm:$0xff] %v654
      %v663 = vld [vmem:[#allocation2] sm:$0xff]
      %v664 = vld [vmem:[#allocation2 + $0x8] sm:$0xff]
      %v665 = vld [vmem:[#allocation2 + $0x10] sm:$0xff]
      %v666 = vld [vmem:[#allocation2 + $0x18] sm:$0xff]
      %v667 = vld [vmem:[#allocation2 + $0x20] sm:$0xff]
      %v668 = vld [vmem:[#allocation2 + $0x28] sm:$0xff]
      %v669 = vld [vmem:[#allocation2 + $0x30] sm:$0xff]
      %v670 = vld [vmem:[#allocation2 + $0x38] sm:$0xff]
      %v671 = vld [vmem:[#allocation2 + $0x40] sm:$0xff]
      %v672 = vld [vmem:[#allocation2 + $0x48] sm:$0xff]
      %v673 = vld [vmem:[#allocation2 + $0x50] sm:$0xff]
      %v674 = vld [vmem:[#allocation2 + $0x58] sm:$0xff]
      %v675 = vld [vmem:[#allocation2 + $0x60] sm:$0xff]
      %v676 = vld [vmem:[#allocation2 + $0x68] sm:$0xff]
      %v677 = vld [vmem:[#allocation2 + $0x70] sm:$0xff]
      %v678 = vld [vmem:[#allocation2 + $0x78] sm:$0xff]
      %v679 = vld [vmem:[#allocation2 + $0x80] sm:$0xff]
      %v680 = vld [vmem:[#allocation2 + $0x88] sm:$0xff]
      %v681 = vld [vmem:[#allocation2 + $0x90] sm:$0xff]
      %v682 = vld [vmem:[#allocation2 + $0x98] sm:$0xff]
      %v683 = vld [vmem:[#allocation2 + $0xa0] sm:$0xff]
      %v684 = vld [vmem:[#allocation2 + $0xa8] sm:$0xff]
      %v685 = vld [vmem:[#allocation2 + $0xb0] sm:$0xff]
      %v686 = vld [vmem:[#allocation2 + $0xb8] sm:$0xff]
      %v687 = vld [vmem:[#allocation2 + $0xc0] sm:$0xff]
      %v688 = vld [vmem:[#allocation2 + $0xc8] sm:$0xff]
      %v689 = vld [vmem:[#allocation2 + $0xd0] sm:$0xff]
      %v690 = vld [vmem:[#allocation2 + $0xd8] sm:$0xff]
      %v691 = vld [vmem:[#allocation2 + $0xe0] sm:$0xff]
      %v692 = vld [vmem:[#allocation2 + $0xe8] sm:$0xff]
      %v693 = vld [vmem:[#allocation2 + $0xf0] sm:$0xff]
      %v694 = vld [vmem:[#allocation2 + $0xf8] sm:$0xff]
      %v695 = vld [vmem:[#allocation2 + $0x100] sm:$0xff]
      %v696 = vld [vmem:[#allocation2 + $0x108] sm:$0xff]
      %v697 = vld [vmem:[#allocation2 + $0x110] sm:$0xff]
      %v698 = vld [vmem:[#allocation2 + $0x118] sm:$0xff]
      %v699 = vld [vmem:[%s2] sm:$0xf]
      %v700 = vld [vmem:[%s2 + $0x4] sm:$0xf]
      %v701 = vld [vmem:[%s2 + $0x8] sm:$0xf]
      %v702 = vld [vmem:[%s2 + $0xc] sm:$0xf]
      %v703 = vld [vmem:[%s2 + $0x10] sm:$0xf]
      %v704 = vld [vmem:[%s2 + $0x14] sm:$0xf]
      %v705 = vld [vmem:[%s2 + $0x18] sm:$0xf]
      %v706 = vld [vmem:[%s2 + $0x1c] sm:$0xf]
      %v707 = vld [vmem:[%s2 + $0x20] sm:$0xf]
      %v708 = vld [vmem:[%s2 + $0x24] sm:$0xf]
      %v709 = vld [vmem:[%s2 + $0x28] sm:$0xf]
      %v710 = vld [vmem:[%s2 + $0x2c] sm:$0xf]
      %v711 = vld [vmem:[%s2 + $0x30] sm:$0xf]
      %v712 = vld [vmem:[%s2 + $0x34] sm:$0xf]
      %v713 = vld [vmem:[%s2 + $0x38] sm:$0xf]
      %v714 = vld [vmem:[%s2 + $0x3c] sm:$0xf]
      %v715 = vld [vmem:[%s2 + $0x40] sm:$0xf]
      %v716 = vld [vmem:[%s2 + $0x44] sm:$0xf]
      %v717 = vld [vmem:[%s2 + $0x48] sm:$0xf]
      %v718 = vld [vmem:[%s2 + $0x4c] sm:$0xf]
      %v719 = vld [vmem:[%s2 + $0x50] sm:$0xf]
      %v720 = vld [vmem:[%s2 + $0x54] sm:$0xf]
      %v721 = vld [vmem:[%s2 + $0x58] sm:$0xf]
      %v722 = vld [vmem:[%s2 + $0x5c] sm:$0xf]
      %v723 = vld [vmem:[%s2 + $0x60] sm:$0xf]
      %v724 = vld [vmem:[%s2 + $0x64] sm:$0xf]
      %v725 = vld [vmem:[%s2 + $0x68] sm:$0xf]
      %v726 = vld [vmem:[%s2 + $0x6c] sm:$0xf]
      %v727 = vld [vmem:[%s2 + $0x70] sm:$0xf]
      %v728 = vld [vmem:[%s2 + $0x74] sm:$0xf]
      %v729 = vld [vmem:[%s2 + $0x78] sm:$0xf]
      %v730 = vld [vmem:[%s2 + $0x7c] sm:$0xf]
      %v731 = vld [vmem:[%s2 + $0x80] sm:$0xf]
      %v732 = vld [vmem:[%s2 + $0x84] sm:$0xf]
      %v733 = vld [vmem:[%s2 + $0x88] sm:$0xf]
      %v734 = vld [vmem:[%s2 + $0x8c] sm:$0xf]
      %v735 = vld [vmem:[%s2 + $0x90] sm:$0xf]
      %v736 = vld [vmem:[%s2 + $0x94] sm:$0xf]
      %v737 = vld [vmem:[%s2 + $0x98] sm:$0xf]
      %v738 = vld [vmem:[%s2 + $0x9c] sm:$0xf]
      %v739 = vld [vmem:[%s2 + $0xa0] sm:$0xf]
      %v740 = vld [vmem:[%s2 + $0xa4] sm:$0xf]
      %v741 = vld [vmem:[%s2 + $0xa8] sm:$0xf]
      %v742 = vld [vmem:[%s2 + $0xac] sm:$0xf]
      %v743 = vld [vmem:[%s2 + $0xb0] sm:$0xf]
      %v744 = vld [vmem:[%s2 + $0xb4] sm:$0xf]
      %v745 = vld [vmem:[%s2 + $0xb8] sm:$0xf]
      %v746 = vld [vmem:[%s2 + $0xbc] sm:$0xf]
      %v747 = vld [vmem:[%s2 + $0xc0] sm:$0xf]
      %v748 = vld [vmem:[%s2 + $0xc4] sm:$0xf]
      %v749 = vld [vmem:[%s2 + $0xc8] sm:$0xf]
      %v750 = vld [vmem:[%s2 + $0xcc] sm:$0xf]
      %v751 = vld [vmem:[%s2 + $0xd0] sm:$0xf]
      %v752 = vld [vmem:[%s2 + $0xd4] sm:$0xf]
      %v753 = vld [vmem:[%s2 + $0xd8] sm:$0xf]
      %v754 = vld [vmem:[%s2 + $0xdc] sm:$0xf]
      %v755 = vld [vmem:[%s2 + $0xe0] sm:$0xf]
      %v756 = vld [vmem:[%s2 + $0xe4] sm:$0xf]
      %v757 = vld [vmem:[%s2 + $0xe8] sm:$0xf]
      %v758 = vld [vmem:[%s2 + $0xec] sm:$0xf]
      %v759 = vld [vmem:[%s2 + $0xf0] sm:$0xf]
      %v760 = vld [vmem:[%s2 + $0xf4] sm:$0xf]
      %v761 = vld [vmem:[%s2 + $0xf8] sm:$0xf]
      %v762 = vld [vmem:[%s2 + $0xfc] sm:$0xf]
      %v763 = vld [vmem:[%s2 + $0x100] sm:$0xf]
      %v764 = vld [vmem:[%s2 + $0x104] sm:$0xf]
      %v765 = vld [vmem:[%s2 + $0x108] sm:$0xf]
      %v766 = vld [vmem:[%s2 + $0x10c] sm:$0xf]
      %v767 = vld [vmem:[%s2 + $0x110] sm:$0xf]
      %v768 = vld [vmem:[%s2 + $0x114] sm:$0xf]
      %v769 = vld [vmem:[%s2 + $0x118] sm:$0xf]
      %v770 = vld [vmem:[%s2 + $0x11c] sm:$0xf]
      %v771 = vld [vmem:[%s2 + $0x120] sm:$0xf]
      %v772 = vld [vmem:[%s2 + $0x124] sm:$0xf]
      %v773 = vld [vmem:[%s2 + $0x128] sm:$0xf]
      %v774 = vld [vmem:[%s2 + $0x12c] sm:$0xf]
      %v775 = vld [vmem:[%s2 + $0x130] sm:$0xf]
      %v776 = vld [vmem:[%s2 + $0x134] sm:$0xf]
      %v777 = vld [vmem:[%s2 + $0x138] sm:$0xf]
      %v778 = vld [vmem:[%s2 + $0x13c] sm:$0xf]
      %v779 = vld [vmem:[%s2 + $0x140] sm:$0xf]
      %v780 = vld [vmem:[%s2 + $0x144] sm:$0xf]
      %v781 = vld [vmem:[%s2 + $0x148] sm:$0xf]
      %v782 = vld [vmem:[%s2 + $0x14c] sm:$0xf]
      %v783 = vld [vmem:[%s2 + $0x150] sm:$0xf]
      %v784 = vld [vmem:[%s2 + $0x154] sm:$0xf]
      %v785 = vld [vmem:[%s2 + $0x158] sm:$0xf]
      %v786 = vld [vmem:[%s2 + $0x15c] sm:$0xf]
      %v787 = vld [vmem:[%s2 + $0x160] sm:$0xf]
      %v788 = vld [vmem:[%s2 + $0x164] sm:$0xf]
      %v789 = vld [vmem:[%s2 + $0x168] sm:$0xf]
      %v790 = vld [vmem:[%s2 + $0x16c] sm:$0xf]
      %v791 = vld [vmem:[%s2 + $0x170] sm:$0xf]
      %v792 = vld [vmem:[%s2 + $0x174] sm:$0xf]
      %v793 = vld [vmem:[%s2 + $0x178] sm:$0xf]
      %v794 = vld [vmem:[%s2 + $0x17c] sm:$0xf]
      %v795 = vld [vmem:[%s2 + $0x180] sm:$0xf]
      %v796 = vld [vmem:[%s2 + $0x184] sm:$0xf]
      %v797 = vld [vmem:[%s2 + $0x188] sm:$0xf]
      %v798 = vld [vmem:[%s2 + $0x18c] sm:$0xf]
      %v799 = vld [vmem:[%s2 + $0x190] sm:$0xf]
      %v800 = vld [vmem:[%s2 + $0x194] sm:$0xf]
      %v801 = vld [vmem:[%s2 + $0x198] sm:$0xf]
      %v802 = vld [vmem:[%s2 + $0x19c] sm:$0xf]
      %v803 = vld [vmem:[%s2 + $0x1a0] sm:$0xf]
      %v804 = vld [vmem:[%s2 + $0x1a4] sm:$0xf]
      %v805 = vld [vmem:[%s2 + $0x1a8] sm:$0xf]
      %v806 = vld [vmem:[%s2 + $0x1ac] sm:$0xf]
      %v807 = vld [vmem:[%s2 + $0x1b0] sm:$0xf]
      %v808 = vld [vmem:[%s2 + $0x1b4] sm:$0xf]
      %v809 = vld [vmem:[%s2 + $0x1b8] sm:$0xf]
      %v810 = vld [vmem:[%s2 + $0x1bc] sm:$0xf]
      %v811 = vld [vmem:[%s2 + $0x1c0] sm:$0xf]
      %v812 = vld [vmem:[%s2 + $0x1c4] sm:$0xf]
      %v813 = vld [vmem:[%s2 + $0x1c8] sm:$0xf]
      %v814 = vld [vmem:[%s2 + $0x1cc] sm:$0xf]
      %v815 = vld [vmem:[%s2 + $0x1d0] sm:$0xf]
      %v816 = vld [vmem:[%s2 + $0x1d4] sm:$0xf]
      %v817 = vld [vmem:[%s2 + $0x1d8] sm:$0xf]
      %v818 = vld [vmem:[%s2 + $0x1dc] sm:$0xf]
      %v819 = vld [vmem:[%s2 + $0x1e0] sm:$0xf]
      %v820 = vld [vmem:[%s2 + $0x1e4] sm:$0xf]
      %v821 = vld [vmem:[%s2 + $0x1e8] sm:$0xf]
      %v822 = vld [vmem:[%s2 + $0x1ec] sm:$0xf]
      %v823 = vld [vmem:[%s2 + $0x1f0] sm:$0xf]
      %v824 = vld [vmem:[%s2 + $0x1f4] sm:$0xf]
      %v825 = vld [vmem:[%s2 + $0x1f8] sm:$0xf]
      %v826 = vld [vmem:[%s2 + $0x1fc] sm:$0xf]
      %v827 = vld [vmem:[%s2 + $0x200] sm:$0xf]
      %v828 = vld [vmem:[%s2 + $0x204] sm:$0xf]
      %v829 = vld [vmem:[%s2 + $0x208] sm:$0xf]
      %v830 = vld [vmem:[%s2 + $0x20c] sm:$0xf]
      %v831 = vld [vmem:[%s2 + $0x210] sm:$0xf]
      %v832 = vld [vmem:[%s2 + $0x214] sm:$0xf]
      %v833 = vld [vmem:[%s2 + $0x218] sm:$0xf]
      %v834 = vld [vmem:[%s2 + $0x21c] sm:$0xf]
      %v835 = vld [vmem:[%s2 + $0x220] sm:$0xf]
      %v836 = vld [vmem:[%s2 + $0x224] sm:$0xf]
      %v837 = vld [vmem:[%s2 + $0x228] sm:$0xf]
      %v838 = vld [vmem:[%s2 + $0x22c] sm:$0xf]
      %v839 = vld [vmem:[%s2 + $0x230] sm:$0xf]
      %v840 = vld [vmem:[%s2 + $0x234] sm:$0xf]
      %v841 = vld [vmem:[%s2 + $0x238] sm:$0xf]
      %v842 = vld [vmem:[%s2 + $0x23c] sm:$0xf]
      %v987 = vunpack.c.l.b16 %v699
      %v988 = vunpack.c.l.b16 %v700
      %v989 = vunpack.c.l.b16 %v701
      %v990 = vunpack.c.l.b16 %v702
      %v991 = vunpack.c.l.b16 %v703
      %v992 = vunpack.c.l.b16 %v704
      %v993 = vunpack.c.l.b16 %v705
      %v994 = vunpack.c.l.b16 %v706
      %v995 = vunpack.c.l.b16 %v707
      %v996 = vunpack.c.l.b16 %v708
      %v997 = vunpack.c.l.b16 %v709
      %v998 = vunpack.c.l.b16 %v710
      %v999 = vunpack.c.l.b16 %v711
      %v1000 = vunpack.c.l.b16 %v712
      %v1001 = vunpack.c.l.b16 %v713
      %v1002 = vunpack.c.l.b16 %v714
      %v1003 = vunpack.c.l.b16 %v715
      %v1004 = vunpack.c.l.b16 %v716
      %v1005 = vunpack.c.l.b16 %v717
      %v1006 = vunpack.c.l.b16 %v718
      %v1007 = vunpack.c.l.b16 %v719
      %v1008 = vunpack.c.l.b16 %v720
      %v1009 = vunpack.c.l.b16 %v721
      %v1010 = vunpack.c.l.b16 %v722
      %v1011 = vunpack.c.l.b16 %v723
      %v1012 = vunpack.c.l.b16 %v724
      %v1013 = vunpack.c.l.b16 %v725
      %v1014 = vunpack.c.l.b16 %v726
      %v1015 = vunpack.c.l.b16 %v727
      %v1016 = vunpack.c.l.b16 %v728
      %v1017 = vunpack.c.l.b16 %v729
      %v1018 = vunpack.c.l.b16 %v730
      %v1019 = vunpack.c.l.b16 %v731
      %v1020 = vunpack.c.l.b16 %v732
      %v1021 = vunpack.c.l.b16 %v733
      %v1022 = vunpack.c.l.b16 %v734
      %v1023 = vunpack.c.l.b16 %v735
      %v1024 = vunpack.c.l.b16 %v736
      %v1025 = vunpack.c.l.b16 %v737
      %v1026 = vunpack.c.l.b16 %v738
      %v1027 = vunpack.c.l.b16 %v739
      %v1028 = vunpack.c.l.b16 %v740
      %v1029 = vunpack.c.l.b16 %v741
      %v1030 = vunpack.c.l.b16 %v742
      %v1031 = vunpack.c.l.b16 %v743
      %v1032 = vunpack.c.l.b16 %v744
      %v1033 = vunpack.c.l.b16 %v745
      %v1034 = vunpack.c.l.b16 %v746
      %v1035 = vunpack.c.l.b16 %v747
      %v1036 = vunpack.c.l.b16 %v748
      %v1037 = vunpack.c.l.b16 %v749
      %v1038 = vunpack.c.l.b16 %v750
      %v1039 = vunpack.c.l.b16 %v751
      %v1040 = vunpack.c.l.b16 %v752
      %v1041 = vunpack.c.l.b16 %v753
      %v1042 = vunpack.c.l.b16 %v754
      %v1043 = vunpack.c.l.b16 %v755
      %v1044 = vunpack.c.l.b16 %v756
      %v1045 = vunpack.c.l.b16 %v757
      %v1046 = vunpack.c.l.b16 %v758
      %v1047 = vunpack.c.l.b16 %v759
      %v1048 = vunpack.c.l.b16 %v760
      %v1049 = vunpack.c.l.b16 %v761
      %v1050 = vunpack.c.l.b16 %v762
      %v1051 = vunpack.c.l.b16 %v763
      %v1052 = vunpack.c.l.b16 %v764
      %v1053 = vunpack.c.l.b16 %v765
      %v1054 = vunpack.c.l.b16 %v766
      %v1055 = vunpack.c.l.b16 %v767
      %v1056 = vunpack.c.l.b16 %v768
      %v1057 = vunpack.c.l.b16 %v769
      %v1058 = vunpack.c.l.b16 %v770
      %v1059 = vunpack.c.l.b16 %v771
      %v1060 = vunpack.c.l.b16 %v772
      %v1061 = vunpack.c.l.b16 %v773
      %v1062 = vunpack.c.l.b16 %v774
      %v1063 = vunpack.c.l.b16 %v775
      %v1064 = vunpack.c.l.b16 %v776
      %v1065 = vunpack.c.l.b16 %v777
      %v1066 = vunpack.c.l.b16 %v778
      %v1067 = vunpack.c.l.b16 %v779
      %v1068 = vunpack.c.l.b16 %v780
      %v1069 = vunpack.c.l.b16 %v781
      %v1070 = vunpack.c.l.b16 %v782
      %v1071 = vunpack.c.l.b16 %v783
      %v1072 = vunpack.c.l.b16 %v784
      %v1073 = vunpack.c.l.b16 %v785
      %v1074 = vunpack.c.l.b16 %v786
      %v1075 = vunpack.c.l.b16 %v787
      %v1076 = vunpack.c.l.b16 %v788
      %v1077 = vunpack.c.l.b16 %v789
      %v1078 = vunpack.c.l.b16 %v790
      %v1079 = vunpack.c.l.b16 %v791
      %v1080 = vunpack.c.l.b16 %v792
      %v1081 = vunpack.c.l.b16 %v793
      %v1082 = vunpack.c.l.b16 %v794
      %v1083 = vunpack.c.l.b16 %v795
      %v1084 = vunpack.c.l.b16 %v796
      %v1085 = vunpack.c.l.b16 %v797
      %v1086 = vunpack.c.l.b16 %v798
      %v1087 = vunpack.c.l.b16 %v799
      %v1088 = vunpack.c.l.b16 %v800
      %v1089 = vunpack.c.l.b16 %v801
      %v1090 = vunpack.c.l.b16 %v802
      %v1091 = vunpack.c.l.b16 %v803
      %v1092 = vunpack.c.l.b16 %v804
      %v1093 = vunpack.c.l.b16 %v805
      %v1094 = vunpack.c.l.b16 %v806
      %v1095 = vunpack.c.l.b16 %v807
      %v1096 = vunpack.c.l.b16 %v808
      %v1097 = vunpack.c.l.b16 %v809
      %v1098 = vunpack.c.l.b16 %v810
      %v1099 = vunpack.c.l.b16 %v811
      %v1100 = vunpack.c.l.b16 %v812
      %v1101 = vunpack.c.l.b16 %v813
      %v1102 = vunpack.c.l.b16 %v814
      %v1103 = vunpack.c.l.b16 %v815
      %v1104 = vunpack.c.l.b16 %v816
      %v1105 = vunpack.c.l.b16 %v817
      %v1106 = vunpack.c.l.b16 %v818
      %v1107 = vunpack.c.l.b16 %v819
      %v1108 = vunpack.c.l.b16 %v820
      %v1109 = vunpack.c.l.b16 %v821
      %v1110 = vunpack.c.l.b16 %v822
      %v1111 = vunpack.c.l.b16 %v823
      %v1112 = vunpack.c.l.b16 %v824
      %v1113 = vunpack.c.l.b16 %v825
      %v1114 = vunpack.c.l.b16 %v826
      %v1115 = vunpack.c.l.b16 %v827
      %v1116 = vunpack.c.l.b16 %v828
      %v1117 = vunpack.c.l.b16 %v829
      %v1118 = vunpack.c.l.b16 %v830
      %v1119 = vunpack.c.l.b16 %v831
      %v1120 = vunpack.c.l.b16 %v832
      %v1121 = vunpack.c.l.b16 %v833
      %v1122 = vunpack.c.l.b16 %v834
      %v1123 = vunpack.c.l.b16 %v835
      %v1124 = vunpack.c.l.b16 %v836
      %v1125 = vunpack.c.l.b16 %v837
      %v1126 = vunpack.c.l.b16 %v838
      %v1127 = vunpack.c.l.b16 %v839
      %v1128 = vunpack.c.l.b16 %v840
      %v1129 = vunpack.c.l.b16 %v841
      %v1130 = vunpack.c.l.b16 %v842
      %v1131 = vpack.c.b16 %v988, %v987
      %v1132 = vpack.c.b16 %v990, %v989
      %v1133 = vpack.c.b16 %v992, %v991
      %v1134 = vpack.c.b16 %v994, %v993
      %v1135 = vpack.c.b16 %v996, %v995
      %v1136 = vpack.c.b16 %v998, %v997
      %v1137 = vpack.c.b16 %v1000, %v999
      %v1138 = vpack.c.b16 %v1002, %v1001
      %v1139 = vpack.c.b16 %v1004, %v1003
      %v1140 = vpack.c.b16 %v1006, %v1005
      %v1141 = vpack.c.b16 %v1008, %v1007
      %v1142 = vpack.c.b16 %v1010, %v1009
      %v1143 = vpack.c.b16 %v1012, %v1011
      %v1144 = vpack.c.b16 %v1014, %v1013
      %v1145 = vpack.c.b16 %v1016, %v1015
      %v1146 = vpack.c.b16 %v1018, %v1017
      %v1147 = vpack.c.b16 %v1020, %v1019
      %v1148 = vpack.c.b16 %v1022, %v1021
      %v1149 = vpack.c.b16 %v1024, %v1023
      %v1150 = vpack.c.b16 %v1026, %v1025
      %v1151 = vpack.c.b16 %v1028, %v1027
      %v1152 = vpack.c.b16 %v1030, %v1029
      %v1153 = vpack.c.b16 %v1032, %v1031
      %v1154 = vpack.c.b16 %v1034, %v1033
      %v1155 = vpack.c.b16 %v1036, %v1035
      %v1156 = vpack.c.b16 %v1038, %v1037
      %v1157 = vpack.c.b16 %v1040, %v1039
      %v1158 = vpack.c.b16 %v1042, %v1041
      %v1159 = vpack.c.b16 %v1044, %v1043
      %v1160 = vpack.c.b16 %v1046, %v1045
      %v1161 = vpack.c.b16 %v1048, %v1047
      %v1162 = vpack.c.b16 %v1050, %v1049
      %v1163 = vpack.c.b16 %v1052, %v1051
      %v1164 = vpack.c.b16 %v1054, %v1053
      %v1165 = vpack.c.b16 %v1056, %v1055
      %v1166 = vpack.c.b16 %v1058, %v1057
      %v1167 = vpack.c.b16 %v1060, %v1059
      %v1168 = vpack.c.b16 %v1062, %v1061
      %v1169 = vpack.c.b16 %v1064, %v1063
      %v1170 = vpack.c.b16 %v1066, %v1065
      %v1171 = vpack.c.b16 %v1068, %v1067
      %v1172 = vpack.c.b16 %v1070, %v1069
      %v1173 = vpack.c.b16 %v1072, %v1071
      %v1174 = vpack.c.b16 %v1074, %v1073
      %v1175 = vpack.c.b16 %v1076, %v1075
      %v1176 = vpack.c.b16 %v1078, %v1077
      %v1177 = vpack.c.b16 %v1080, %v1079
      %v1178 = vpack.c.b16 %v1082, %v1081
      %v1179 = vpack.c.b16 %v1084, %v1083
      %v1180 = vpack.c.b16 %v1086, %v1085
      %v1181 = vpack.c.b16 %v1088, %v1087
      %v1182 = vpack.c.b16 %v1090, %v1089
      %v1183 = vpack.c.b16 %v1092, %v1091
      %v1184 = vpack.c.b16 %v1094, %v1093
      %v1185 = vpack.c.b16 %v1096, %v1095
      %v1186 = vpack.c.b16 %v1098, %v1097
      %v1187 = vpack.c.b16 %v1100, %v1099
      %v1188 = vpack.c.b16 %v1102, %v1101
      %v1189 = vpack.c.b16 %v1104, %v1103
      %v1190 = vpack.c.b16 %v1106, %v1105
      %v1191 = vpack.c.b16 %v1108, %v1107
      %v1192 = vpack.c.b16 %v1110, %v1109
      %v1193 = vpack.c.b16 %v1112, %v1111
      %v1194 = vpack.c.b16 %v1114, %v1113
      %v1195 = vpack.c.b16 %v1116, %v1115
      %v1196 = vpack.c.b16 %v1118, %v1117
      %v1197 = vpack.c.b16 %v1120, %v1119
      %v1198 = vpack.c.b16 %v1122, %v1121
      %v1199 = vpack.c.b16 %v1124, %v1123
      %v1200 = vpack.c.b16 %v1126, %v1125
      %v1201 = vpack.c.b16 %v1128, %v1127
      %v1202 = vpack.c.b16 %v1130, %v1129
      %1275 = vmatprep.subr.bf16.mxu0 0
      %1276 = vmatpush1.bf16.msra.mxu0 %v1131
      %1277 = vmatprep.subr.bf16.mxu0 0
      %1278 = vmatpush1.bf16.msra.mxu0 %v1132
      %1279 = vmatprep.subr.bf16.mxu0 0
      %1280 = vmatpush1.bf16.msra.mxu0 %v1133
      %1281 = vmatprep.subr.bf16.mxu0 0
      %1282 = vmatpush1.bf16.msra.mxu0 %v1134
      %1283 = vmatprep.subr.bf16.mxu0 0
      %1284 = vmatpush1.bf16.msra.mxu0 %v1135
      %1285 = vmatprep.subr.bf16.mxu0 0
      %1286 = vmatpush1.bf16.msra.mxu0 %v1136
      %1287 = vmatprep.subr.bf16.mxu0 0
      %1288 = vmatpush1.bf16.msra.mxu0 %v1137
      %1289 = vmatprep.subr.bf16.mxu0 0
      %1290 = vmatpush1.bf16.msra.mxu0 %v1138
      %1291 = vmatprep.subr.bf16.mxu0 0
      %1292 = vmatpush1.bf16.msra.mxu0 %v1139
      %1293 = vmatprep.subr.bf16.mxu0 0
      %1294 = vmatpush1.bf16.msra.mxu0 %v1140
      %1295 = vmatprep.subr.bf16.mxu0 0
      %1296 = vmatpush1.bf16.msra.mxu0 %v1141
      %1297 = vmatprep.subr.bf16.mxu0 0
      %1298 = vmatpush1.bf16.msra.mxu0 %v1142
      %1299 = vmatprep.subr.bf16.mxu0 0
      %1300 = vmatpush1.bf16.msra.mxu0 %v1143
      %1301 = vmatprep.subr.bf16.mxu0 0
      %1302 = vmatpush1.bf16.msra.mxu0 %v1144
      %1303 = vmatprep.subr.bf16.mxu0 0
      %1304 = vmatpush1.bf16.msra.mxu0 %v1145
      %1305 = vmatprep.subr.bf16.mxu0 0
      %1306 = vmatpush1.bf16.msra.mxu0 %v1146
      %1307 = vmatprep.mubr.bf16.mxu0 %v664
      %1308 = vmatmul.mubr.bf16.gmra.mrb[0].mxu0 %v663
      %v1309 = vpop.f32.mrb[0].mxu0
      %v1310 = vadd.f32 0.0, %v1309
      %v1311 = vpop.f32.mrb[0].mxu0
      %v1312 = vpop.f32.mrb[0].mxu0
      %v1313 = vadd.f32 0.0, %v1312
      %v1314 = vpop.f32.mrb[0].mxu0
      %1315 = vmatprep.mubr.bf16.mxu0 %v673
      %1316 = vmatmul.mubr.bf16.gmra.mrb[0].mxu0 %v672
      %v1317 = vpop.f32.mrb[0].mxu0
      %v1318 = vadd.f32 0.0, %v1317
      %v1319 = vpop.f32.mrb[0].mxu0
      %v1320 = vpop.f32.mrb[0].mxu0
      %v1321 = vadd.f32 0.0, %v1320
      %v1322 = vpop.f32.mrb[0].mxu0
      %1323 = vmatprep.mubr.bf16.mxu0 %v682
      %1324 = vmatmul.mubr.bf16.gmra.mrb[0].mxu0 %v681
      %v1325 = vpop.f32.mrb[0].mxu0
      %v1326 = vadd.f32 0.0, %v1325
      %v1327 = vpop.f32.mrb[0].mxu0
      %v1328 = vpop.f32.mrb[0].mxu0
      %v1329 = vadd.f32 0.0, %v1328
      %v1330 = vpop.f32.mrb[0].mxu0
      %1331 = vmatprep.mubr.bf16.mxu0 %v691
      %1332 = vmatmul.mubr.bf16.gmra.mrb[0].mxu0 %v690
      %v1333 = vpop.f32.mrb[0].mxu0
      %v1334 = vadd.f32 0.0, %v1333
      %v1335 = vpop.f32.mrb[0].mxu0
      %v1336 = vpop.f32.mrb[0].mxu0
      %v1337 = vadd.f32 0.0, %v1336
      %v1338 = vpop.f32.mrb[0].mxu0
      %1339 = vdwg.mxu0
      %1340 = vmatprep.subr.bf16.mxu0 0
      %1341 = vmatpush1.bf16.msra.mxu0 %v1147
      %1342 = vmatprep.subr.bf16.mxu0 0
      %1343 = vmatpush1.bf16.msra.mxu0 %v1148
      %1344 = vmatprep.subr.bf16.mxu0 0
      %1345 = vmatpush1.bf16.msra.mxu0 %v1149
      %1346 = vmatprep.subr.bf16.mxu0 0
      %1347 = vmatpush1.bf16.msra.mxu0 %v1150
      %1348 = vmatprep.subr.bf16.mxu0 0
      %1349 = vmatpush1.bf16.msra.mxu0 %v1151
      %1350 = vmatprep.subr.bf16.mxu0 0
      %1351 = vmatpush1.bf16.msra.mxu0 %v1152
      %1352 = vmatprep.subr.bf16.mxu0 0
      %1353 = vmatpush1.bf16.msra.mxu0 %v1153
      %1354 = vmatprep.subr.bf16.mxu0 0
      %1355 = vmatpush1.bf16.msra.mxu0 %v1154
      %1356 = vmatprep.subr.bf16.mxu0 0
      %1357 = vmatpush1.bf16.msra.mxu0 %v1155
      %1358 = vmatprep.subr.bf16.mxu0 0
      %1359 = vmatpush1.bf16.msra.mxu0 %v1156
      %1360 = vmatprep.subr.bf16.mxu0 0
      %1361 = vmatpush1.bf16.msra.mxu0 %v1157
      %1362 = vmatprep.subr.bf16.mxu0 0
      %1363 = vmatpush1.bf16.msra.mxu0 %v1158
      %1364 = vmatprep.subr.bf16.mxu0 0
      %1365 = vmatpush1.bf16.msra.mxu0 %v1159
      %1366 = vmatprep.subr.bf16.mxu0 0
      %1367 = vmatpush1.bf16.msra.mxu0 %v1160
      %1368 = vmatprep.subr.bf16.mxu0 0
      %1369 = vmatpush1.bf16.msra.mxu0 %v1161
      %1370 = vmatprep.subr.bf16.mxu0 0
      %1371 = vmatpush1.bf16.msra.mxu0 %v1162
      %1372 = vmatprep.mubr.bf16.mxu0 %v666
      %1373 = vmatmul.mubr.bf16.gmra.mrb[0].mxu0 %v665
      %v1374 = vpop.f32.mrb[0].mxu0
      %v1375 = vadd.f32 %v1310, %v1374
      %v1376 = vpop.f32.mrb[0].mxu0
      %v1377 = vpop.f32.mrb[0].mxu0
      %v1378 = vadd.f32 %v1313, %v1377
      %v1379 = vpop.f32.mrb[0].mxu0
      %1380 = vmatprep.mubr.bf16.mxu0 %v675
      %1381 = vmatmul.mubr.bf16.gmra.mrb[0].mxu0 %v674
      %v1382 = vpop.f32.mrb[0].mxu0
      %v1383 = vadd.f32 %v1318, %v1382
      %v1384 = vpop.f32.mrb[0].mxu0
      %v1385 = vpop.f32.mrb[0].mxu0
      %v1386 = vadd.f32 %v1321, %v1385
      %v1387 = vpop.f32.mrb[0].mxu0
      %1388 = vmatprep.mubr.bf16.mxu0 %v684
      %1389 = vmatmul.mubr.bf16.gmra.mrb[0].mxu0 %v683
      %v1390 = vpop.f32.mrb[0].mxu0
      %v1391 = vadd.f32 %v1326, %v1390
      %v1392 = vpop.f32.mrb[0].mxu0
      %v1393 = vpop.f32.mrb[0].mxu0
      %v1394 = vadd.f32 %v1329, %v1393
      %v1395 = vpop.f32.mrb[0].mxu0
      %1396 = vmatprep.mubr.bf16.mxu0 %v693
      %1397 = vmatmul.mubr.bf16.gmra.mrb[0].mxu0 %v692
      %v1398 = vpop.f32.mrb[0].mxu0
      %v1399 = vadd.f32 %v1334, %v1398
      %v1400 = vpop.f32.mrb[0].mxu0
      %v1401 = vpop.f32.mrb[0].mxu0
      %v1402 = vadd.f32 %v1337, %v1401
      %v1403 = vpop.f32.mrb[0].mxu0
      %1404 = vdwg.mxu0
      %1405 = vmatprep.subr.bf16.mxu0 0
      %1406 = vmatpush1.bf16.msra.mxu0 %v1163
      %1407 = vmatprep.subr.bf16.mxu0 0
      %1408 = vmatpush1.bf16.msra.mxu0 %v1164
      %1409 = vmatprep.subr.bf16.mxu0 0
      %1410 = vmatpush1.bf16.msra.mxu0 %v1165
      %1411 = vmatprep.subr.bf16.mxu0 0
      %1412 = vmatpush1.bf16.msra.mxu0 %v1166
      %1413 = vmatprep.subr.bf16.mxu0 0
      %1414 = vmatpush1.bf16.msra.mxu0 %v1167
      %1415 = vmatprep.subr.bf16.mxu0 0
      %1416 = vmatpush1.bf16.msra.mxu0 %v1168
      %1417 = vmatprep.subr.bf16.mxu0 0
      %1418 = vmatpush1.bf16.msra.mxu0 %v1169
      %1419 = vmatprep.subr.bf16.mxu0 0
      %1420 = vmatpush1.bf16.msra.mxu0 %v1170
      %1421 = vmatprep.subr.bf16.mxu0 0
      %1422 = vmatpush1.bf16.msra.mxu0 %v1171
      %1423 = vmatprep.subr.bf16.mxu0 0
      %1424 = vmatpush1.bf16.msra.mxu0 %v1172
      %1425 = vmatprep.subr.bf16.mxu0 0
      %1426 = vmatpush1.bf16.msra.mxu0 %v1173
      %1427 = vmatprep.subr.bf16.mxu0 0
      %1428 = vmatpush1.bf16.msra.mxu0 %v1174
      %1429 = vmatprep.subr.bf16.mxu0 0
      %1430 = vmatpush1.bf16.msra.mxu0 %v1175
      %1431 = vmatprep.subr.bf16.mxu0 0
      %1432 = vmatpush1.bf16.msra.mxu0 %v1176
      %1433 = vmatprep.subr.bf16.mxu0 0
      %1434 = vmatpush1.bf16.msra.mxu0 %v1177
      %1435 = vmatprep.subr.bf16.mxu0 0
      %1436 = vmatpush1.bf16.msra.mxu0 %v1178
      %1437 = vmatprep.mubr.bf16.mxu0 %v668
      %1438 = vmatmul.mubr.bf16.gmra.mrb[0].mxu0 %v667
      %v1439 = vpop.f32.mrb[0].mxu0
      %v1440 = vadd.f32 %v1375, %v1439
      %v1441 = vpop.f32.mrb[0].mxu0
      %v1442 = vpop.f32.mrb[0].mxu0
      %v1443 = vadd.f32 %v1378, %v1442
      %v1444 = vpop.f32.mrb[0].mxu0
      %1445 = vmatprep.mubr.bf16.mxu0 %v677
      %1446 = vmatmul.mubr.bf16.gmra.mrb[0].mxu0 %v676
      %v1447 = vpop.f32.mrb[0].mxu0
      %v1448 = vadd.f32 %v1383, %v1447
      %v1449 = vpop.f32.mrb[0].mxu0
      %v1450 = vpop.f32.mrb[0].mxu0
      %v1451 = vadd.f32 %v1386, %v1450
      %v1452 = vpop.f32.mrb[0].mxu0
      %1453 = vmatprep.mubr.bf16.mxu0 %v686
      %1454 = vmatmul.mubr.bf16.gmra.mrb[0].mxu0 %v685
      %v1455 = vpop.f32.mrb[0].mxu0
      %v1456 = vadd.f32 %v1391, %v1455
      %v1457 = vpop.f32.mrb[0].mxu0
      %v1458 = vpop.f32.mrb[0].mxu0
      %v1459 = vadd.f32 %v1394, %v1458
      %v1460 = vpop.f32.mrb[0].mxu0
      %1461 = vmatprep.mubr.bf16.mxu0 %v695
      %1462 = vmatmul.mubr.bf16.gmra.mrb[0].mxu0 %v694
      %v1463 = vpop.f32.mrb[0].mxu0
      %v1464 = vadd.f32 %v1399, %v1463
      %v1465 = vpop.f32.mrb[0].mxu0
      %v1466 = vpop.f32.mrb[0].mxu0
      %v1467 = vadd.f32 %v1402, %v1466
      %v1468 = vpop.f32.mrb[0].mxu0
      %1469 = vdwg.mxu0
      %1470 = vmatprep.subr.bf16.mxu0 0
      %1471 = vmatpush1.bf16.msra.mxu0 %v1179
      %1472 = vmatprep.subr.bf16.mxu0 0
      %1473 = vmatpush1.bf16.msra.mxu0 %v1180
      %1474 = vmatprep.subr.bf16.mxu0 0
      %1475 = vmatpush1.bf16.msra.mxu0 %v1181
      %1476 = vmatprep.subr.bf16.mxu0 0
      %1477 = vmatpush1.bf16.msra.mxu0 %v1182
      %1478 = vmatprep.subr.bf16.mxu0 0
      %1479 = vmatpush1.bf16.msra.mxu0 %v1183
      %1480 = vmatprep.subr.bf16.mxu0 0
      %1481 = vmatpush1.bf16.msra.mxu0 %v1184
      %1482 = vmatprep.subr.bf16.mxu0 0
      %1483 = vmatpush1.bf16.msra.mxu0 %v1185
      %1484 = vmatprep.subr.bf16.mxu0 0
      %1485 = vmatpush1.bf16.msra.mxu0 %v1186
      %1486 = vmatprep.subr.bf16.mxu0 0
      %1487 = vmatpush1.bf16.msra.mxu0 %v1187
      %1488 = vmatprep.subr.bf16.mxu0 0
      %1489 = vmatpush1.bf16.msra.mxu0 %v1188
      %1490 = vmatprep.subr.bf16.mxu0 0
      %1491 = vmatpush1.bf16.msra.mxu0 %v1189
      %1492 = vmatprep.subr.bf16.mxu0 0
      %1493 = vmatpush1.bf16.msra.mxu0 %v1190
      %1494 = vmatprep.subr.bf16.mxu0 0
      %1495 = vmatpush1.bf16.msra.mxu0 %v1191
      %1496 = vmatprep.subr.bf16.mxu0 0
      %1497 = vmatpush1.bf16.msra.mxu0 %v1192
      %1498 = vmatprep.subr.bf16.mxu0 0
      %1499 = vmatpush1.bf16.msra.mxu0 %v1193
      %1500 = vmatprep.subr.bf16.mxu0 0
      %1501 = vmatpush1.bf16.msra.mxu0 %v1194
      %1502 = vmatprep.mubr.bf16.mxu0 %v670
      %1503 = vmatmul.mubr.bf16.gmra.mrb[0].mxu0 %v669
      %v1504 = vpop.f32.mrb[0].mxu0
      %v1505 = vadd.f32 %v1440, %v1504
      %v1506 = vpop.f32.mrb[0].mxu0
      %v1507 = vpop.f32.mrb[0].mxu0
      %v1508 = vadd.f32 %v1443, %v1507
      %v1509 = vpop.f32.mrb[0].mxu0
      %1510 = vmatprep.mubr.bf16.mxu0 %v679
      %1511 = vmatmul.mubr.bf16.gmra.mrb[0].mxu0 %v678
      %v1512 = vpop.f32.mrb[0].mxu0
      %v1513 = vadd.f32 %v1448, %v1512
      %v1514 = vpop.f32.mrb[0].mxu0
      %v1515 = vpop.f32.mrb[0].mxu0
      %v1516 = vadd.f32 %v1451, %v1515
      %v1517 = vpop.f32.mrb[0].mxu0
      %1518 = vmatprep.mubr.bf16.mxu0 %v688
      %1519 = vmatmul.mubr.bf16.gmra.mrb[0].mxu0 %v687
      %v1520 = vpop.f32.mrb[0].mxu0
      %v1521 = vadd.f32 %v1456, %v1520
      %v1522 = vpop.f32.mrb[0].mxu0
      %v1523 = vpop.f32.mrb[0].mxu0
      %v1524 = vadd.f32 %v1459, %v1523
      %v1525 = vpop.f32.mrb[0].mxu0
      %1526 = vmatprep.mubr.bf16.mxu0 %v697
      %1527 = vmatmul.mubr.bf16.gmra.mrb[0].mxu0 %v696
      %v1528 = vpop.f32.mrb[0].mxu0
      %v1529 = vadd.f32 %v1464, %v1528
      %v1530 = vpop.f32.mrb[0].mxu0
      %v1531 = vpop.f32.mrb[0].mxu0
      %v1532 = vadd.f32 %v1467, %v1531
      %v1533 = vpop.f32.mrb[0].mxu0
      %1534 = vdwg.mxu0
      %1535 = vmatprep.subr.bf16.mxu0 0
      %1536 = vmatpush1.bf16.msra.mxu0 %v1195
      %1537 = vmatprep.subr.bf16.mxu0 0
      %1538 = vmatpush1.bf16.msra.mxu0 %v1196
      %1539 = vmatprep.subr.bf16.mxu0 0
      %1540 = vmatpush1.bf16.msra.mxu0 %v1197
      %1541 = vmatprep.subr.bf16.mxu0 0
      %1542 = vmatpush1.bf16.msra.mxu0 %v1198
      %1543 = vmatprep.subr.bf16.mxu0 0
      %1544 = vmatpush1.bf16.msra.mxu0 %v1199
      %1545 = vmatprep.subr.bf16.mxu0 0
      %1546 = vmatpush1.bf16.msra.mxu0 %v1200
      %1547 = vmatprep.subr.bf16.mxu0 0
      %1548 = vmatpush1.bf16.msra.mxu0 %v1201
      %1549 = vmatprep.subr.bf16.mxu0 0
      %1550 = vmatpush1.bf16.msra.mxu0 %v1202
      %1551 = vmatprep.subr.bf16.mxu0 0
      %1552 = vmatpush1.bf16.msra.mxu0 0
      %1553 = vmatprep.subr.bf16.mxu0 0
      %1554 = vmatpush1.bf16.msra.mxu0 0
      %1555 = vmatprep.subr.bf16.mxu0 0
      %1556 = vmatpush1.bf16.msra.mxu0 0
      %1557 = vmatprep.subr.bf16.mxu0 0
      %1558 = vmatpush1.bf16.msra.mxu0 0
      %1559 = vmatprep.subr.bf16.mxu0 0
      %1560 = vmatpush1.bf16.msra.mxu0 0
      %1561 = vmatprep.subr.bf16.mxu0 0
      %1562 = vmatpush1.bf16.msra.mxu0 0
      %1563 = vmatprep.subr.bf16.mxu0 0
      %1564 = vmatpush1.bf16.msra.mxu0 0
      %1565 = vmatprep.subr.bf16.mxu0 0
      %1566 = vmatpush1.bf16.msra.mxu0 0
      %1567 = vmatprep.mubr.bf16.mxu0 0
      %1568 = vmatmul.mubr.bf16.gmra.mrb[0].mxu0 %v671
      %v1569 = vpop.f32.mrb[0].mxu0
      %v1570 = vadd.f32 %v1505, %v1569
      %v1571 = vpop.f32.mrb[0].mxu0
      %v1572 = vpop.f32.mrb[0].mxu0
      %v1573 = vadd.f32 %v1508, %v1572
      %v1574 = vpop.f32.mrb[0].mxu0
      %1575 = vmatprep.mubr.bf16.mxu0 0
      %1576 = vmatmul.mubr.bf16.gmra.mrb[0].mxu0 %v680
      %v1577 = vpop.f32.mrb[0].mxu0
      %v1578 = vadd.f32 %v1513, %v1577
      %v1579 = vpop.f32.mrb[0].mxu0
      %v1580 = vpop.f32.mrb[0].mxu0
      %v1581 = vadd.f32 %v1516, %v1580
      %v1582 = vpop.f32.mrb[0].mxu0
      %1583 = vmatprep.mubr.bf16.mxu0 0
      %1584 = vmatmul.mubr.bf16.gmra.mrb[0].mxu0 %v689
      %v1585 = vpop.f32.mrb[0].mxu0
      %v1586 = vadd.f32 %v1521, %v1585
      %v1587 = vpop.f32.mrb[0].mxu0
      %v1588 = vpop.f32.mrb[0].mxu0
      %v1589 = vadd.f32 %v1524, %v1588
      %v1590 = vpop.f32.mrb[0].mxu0
      %1591 = vmatprep.mubr.bf16.mxu0 0
      %1592 = vmatmul.mubr.bf16.gmra.mrb[0].mxu0 %v698
      %v1593 = vpop.f32.mrb[0].mxu0
      %v1594 = vadd.f32 %v1529, %v1593
      %v1595 = vpop.f32.mrb[0].mxu0
      %v1596 = vpop.f32.mrb[0].mxu0
      %v1597 = vadd.f32 %v1532, %v1596
      %v1598 = vpop.f32.mrb[0].mxu0
      %1599 = vdwg.mxu0
      %v1600 = vld [vmem:[%s3] sm:$0x1]
      %v1602 = vlaneseq
      %v1603 = vshrl.u32 %v1602, 7
      %v1604 = vsub.s32 0, %v1603
      %v1605 = vrot.slane %v1600, %v1604
      %v1607 = vmul.f32 %v1570, %v1605
      %v1608 = vmul.f32 %v1573, %v1605
      %v1609 = vmul.f32 %v1578, %v1605
      %v1610 = vmul.f32 %v1581, %v1605
      %v1611 = vmul.f32 %v1586, %v1605
      %v1612 = vmul.f32 %v1589, %v1605
      %v1613 = vmul.f32 %v1594, %v1605
      %v1614 = vmul.f32 %v1597, %v1605
      %v1615 = vld [vmem:[%s4] sm:$0x1]
      %v1617 = vlaneseq
      %v1618 = vshrl.u32 %v1617, 7
      %v1619 = vsub.s32 0, %v1618
      %v1620 = vrot.slane %v1615, %v1619
      %v1622 = vadd.f32 %v1607, %v1620
      %v1623 = vadd.f32 %v1608, %v1620
      %v1624 = vadd.f32 %v1609, %v1620
      %v1625 = vadd.f32 %v1610, %v1620
      %v1626 = vadd.f32 %v1611, %v1620
      %v1627 = vadd.f32 %v1612, %v1620
      %v1628 = vadd.f32 %v1613, %v1620
      %v1629 = vadd.f32 %v1614, %v1620
      %v1630 = vld [vmem:[%s272] sm:$0xf]
      %v1631 = vld [vmem:[%s272 + $0x4] sm:$0xf]
      %v1632 = vld [vmem:[%s272 + $0x8] sm:$0xf]
      %v1633 = vld [vmem:[%s272 + $0xc] sm:$0xf]
      %v1634 = vld [vmem:[%s272 + $0x10] sm:$0xf]
      %v1635 = vld [vmem:[%s272 + $0x14] sm:$0xf]
      %v1636 = vld [vmem:[%s272 + $0x18] sm:$0xf]
      %v1637 = vld [vmem:[%s272 + $0x1c] sm:$0xf]
      %v1638 = vunpack.c.l.bf16 %v1630
      %v1639 = vunpack.c.l.bf16 %v1631
      %v1640 = vunpack.c.l.bf16 %v1632
      %v1641 = vunpack.c.l.bf16 %v1633
      %v1642 = vunpack.c.l.bf16 %v1634
      %v1643 = vunpack.c.l.bf16 %v1635
      %v1644 = vunpack.c.l.bf16 %v1636
      %v1645 = vunpack.c.l.bf16 %v1637
      %v1646 = vadd.f32 %v1622, %v1638
      %v1647 = vadd.f32 %v1623, %v1639
      %v1648 = vadd.f32 %v1624, %v1640
      %v1649 = vadd.f32 %v1625, %v1641
      %v1650 = vadd.f32 %v1626, %v1642
      %v1651 = vadd.f32 %v1627, %v1643
      %v1652 = vadd.f32 %v1628, %v1644
      %v1653 = vadd.f32 %v1629, %v1645
      %v1654 = vmax.f32 %v1646, 0.0
      %v1655 = vmax.f32 %v1647, 0.0
      %v1656 = vmax.f32 %v1648, 0.0
      %v1657 = vmax.f32 %v1649, 0.0
      %v1658 = vmax.f32 %v1650, 0.0
      %v1659 = vmax.f32 %v1651, 0.0
      %v1660 = vmax.f32 %v1652, 0.0
      %v1661 = vmax.f32 %v1653, 0.0
      %v1662 = vpack.c.bf16 %v1655, %v1654
      %v1663 = vpack.c.bf16 %v1657, %v1656
      %v1664 = vpack.c.bf16 %v1659, %v1658
      %v1665 = vpack.c.bf16 %v1661, %v1660
      %v1670 = vunpack.c.l.b16 %v1662
      %v1671 = vunpack.c.h.b16 %v1662
      %v1672 = vunpack.c.l.b16 %v1663
      %v1673 = vunpack.c.h.b16 %v1663
      %v1674 = vunpack.c.l.b16 %v1664
      %v1675 = vunpack.c.h.b16 %v1664
      %v1676 = vunpack.c.l.b16 %v1665
      %v1677 = vunpack.c.h.b16 %v1665
      %v1678 = vpack.c.b16 %v1670, %v1670
      %v1679 = vpack.c.b16 %v1671, %v1671
      %v1680 = vpack.c.b16 %v1672, %v1672
      %v1681 = vpack.c.b16 %v1673, %v1673
      %v1682 = vpack.c.b16 %v1674, %v1674
      %v1683 = vpack.c.b16 %v1675, %v1675
      %v1684 = vpack.c.b16 %v1676, %v1676
      %v1685 = vpack.c.b16 %v1677, %v1677
      %1694 = vst [vmem:[%s282] sm:$0xf] %v1678
      %1695 = vst [vmem:[%s282 + $0x4] sm:$0xf] %v1679
      %1696 = vst [vmem:[%s282 + $0x8] sm:$0xf] %v1680
      %1697 = vst [vmem:[%s282 + $0xc] sm:$0xf] %v1681
      %1698 = vst [vmem:[%s282 + $0x10] sm:$0xf] %v1682
      %1699 = vst [vmem:[%s282 + $0x14] sm:$0xf] %v1683
      %1700 = vst [vmem:[%s282 + $0x18] sm:$0xf] %v1684
      %1701 = vst [vmem:[%s282 + $0x1c] sm:$0xf] %v1685
      %s1702 = smul.u32 8, %s21
      %p1703 = scmp.lt.s32.totalorder %s20, 1
      %s1704 = scalar_select %p1703, %s20, 1
      %p1705 = scmp.lt.s32.totalorder %s1702, 7
      %s1706 = scalar_select %p1705, %s1702, 7
      %s1707 = smul.addr %s1704, 8
      %s1708 = sadd.s32 %s1706, %s1707
      %s1709 = smul.addr %s1708, 4
      %s1710 = scalar_lea.vmem %s5, %s1709
      // Predicated region
      $region41: #{gfe_two_apply.9} parent=39 // pred_check
        %p1711 = pneg %p165
      $region42: #{gfe_two_apply.9} parent=39 // pred_check_branch
        %1713 = sbr.rel (%p1711) target = $region44
      $region43: #{gfe_two_apply.9} parent=39 // pred_region
        %s1714 = smul.u32 8, %s21
      $region44: #{gfe_two_apply.9} parent=39 // pred_fallthru
        _
    $region40: #{gfe_two_apply.9} parent=5 // pred_fallthru
      _
    %p1715 = scmp.le.s32.totalorder 2, %s11
    // Predicated region
    $region45: #{gfe_two_apply.9} parent=5 // pred_check
      %p1716 = pneg %p1715
    $region46: #{gfe_two_apply.9} parent=5 // pred_check_branch
      %1718 = sbr.rel (%p1716) target = $region48
    $region47: #{gfe_two_apply.9} parent=5 // pred_region
      %s1719 = ssub.s32 %s11, 2
      // Predicated region
      $region49: #{gfe_two_apply.9} parent=47 // pred_check
        %p1720 = pneg %p171
      $region50: #{gfe_two_apply.9} parent=47 // pred_check_branch
        %1722 = sbr.rel (%p1720) target = $region52
      $region51: #{gfe_two_apply.9} parent=47 // pred_region
        %s1723 = smul.u32 8, %s23
        %p1724 = scmp.lt.s32.totalorder %s22, 1
        %s1725 = scalar_select %p1724, %s22, 1
        %p1726 = scmp.lt.s32.totalorder %s1723, 7
        %s1727 = scalar_select %p1726, %s1723, 7
        %s1728 = smul.addr %s1725, 8
        %s1729 = sadd.s32 %s1727, %s1728
        %s1730 = smul.addr %s1729, 4
        %s1731 = scalar_lea.vmem %s5, %s1730
      $region52: #{gfe_two_apply.9} parent=47 // pred_fallthru
        _
    $region48: #{gfe_two_apply.9} parent=5 // pred_fallthru
      _
  $region6: #{gfe_two_apply.9} parent=0 // loop_footer
    %s15 = sadd.s32 1, %s11
  $region7: #{gfe_two_apply.9} parent=0 // loop_footer_branch
    %10 = sbr.rel target = $region3
  $region8: #{gfe_two_apply.9} parent=0 // loop_exit
    _

// kernel: gfe_two_apply.8
$region0: #{gfe_two_apply.8}
  #allocation0 [shape = 'u32[]', space=smem, size = 0x4, offset = 0x4, fixed_abs, tag = 'smem constant byte address 0x4 - core index']
  #allocation1 [shape = 'u32[144,128]{1,0:T(1,128)}', space=vmem, size = 0x12000, scoped, tag = 'internal scratch']
  %s0 = inlined_call_operand.vmem [shape: bf16[16,1024], index: 0, kind: input, shape index: {}]
  %s1 = inlined_call_operand.vmem [shape: bf16[1024,1024], index: 1, kind: input, shape index: {}]
  %s2 = inlined_call_operand.vmem [shape: f32[1,1024], index: 2, kind: input, shape index: {}]
  %s3 = inlined_call_operand.vmem [shape: f32[1,1024], index: 3, kind: input, shape index: {}]
  %s4 = inlined_call_operand.vmem [shape: bf16[16,1024], index: 4, kind: output, shape index: {}]
  %s5 = sld [smem:[#allocation0]]
  $region49: #{gfe_two_apply.8} parent=0
    _
  %s7 = ssub.s32 1, %s5
  %s8 = scalar_select 0, %s7, %s5
  loop: start=0, step=1, limit=4
  $region2: #{gfe_two_apply.8} parent=0 // loop_pre_header
    _
  $region3: #{gfe_two_apply.8} parent=0 // loop_header
    %s10 = sphi 0, %s14
    %p11 = scmp.ge.s32.totalorder %s10, 4
    %s17 = sphi 0, %s29
    %s18 = sphi 0, %s25
    %s19 = sphi 0, %s17
    %s20 = sphi 0, %s18
    %s21 = sphi 0, %s19
    %s22 = sphi 0, %s20
    %s32 = sphi 0, %s34
    %s35 = sphi 0, %s32
    %s36 = sphi 0, %s35
    %s52 = sphi 0, %s36
    %s58 = sphi 0, %s60
    %s61 = sphi 0, %s58
    %s62 = sphi 0, %s61
    %s78 = sphi 0, %s62
    %s84 = sphi 0, %s86
    %s87 = sphi 0, %s84
    %s88 = sphi 0, %s87
    %s104 = sphi 0, %s88
    %s110 = sphi 0, %s112
    %s113 = sphi 0, %s110
    %s114 = sphi 0, %s113
    %s130 = sphi 0, %s114
    %s138 = sphi 0, %s140
    %s141 = sphi 0, %s138
    %s142 = sphi 0, %s141
    %s158 = sphi 0, %s142
  $region4: #{gfe_two_apply.8} parent=0 // loop_header_branch
    %13 = sbr.rel (%p11) target = $region8
  $region5: #{gfe_two_apply.8} parent=0 // loop_body
    %s15 = ssub.s32 %s10, 1
    %s16 = ssub.s32 %s10, 2
    %s23 = sadd.s32 1, %s18
    %p24 = scmp.ge.s32.totalorder %s23, 1
    %s25 = scalar_select %p24, 0, %s23
    %s26 = sadd.s32 1, %s17
    %s27 = scalar_select %p24, %s26, %s17
    %p28 = scmp.ge.s32.totalorder %s27, 2
    %s29 = scalar_select %p28, 0, %s27
    %s30 = ssub.s32 %s17, %s29
    %p31 = scmp.eq.s32.totalorder %s30, 0
    %s33 = sadd.s32 %s32, 1
    %s34 = scalar_select %p31, %s32, %s33
    %p37 = pneg %p31
    %p38 = scmp.eq.s32.totalorder %s10, 1
    %p39 = por %p37, %p38
    %p40 = scmp.ne.s32.totalorder %s32, %s35
    %p41 = scmp.eq.s32.totalorder %s10, 0
    %p42 = por %p40, %p41
    %p43 = scmp.ne.s32.totalorder %s32, %s35
    %p44 = scmp.eq.s32.totalorder %s15, 1
    %p45 = por %p43, %p44
    %p46 = scmp.ne.s32.totalorder %s35, %s36
    %p47 = scmp.eq.s32.totalorder %s15, 0
    %p48 = por %p46, %p47
    %p49 = scmp.ne.s32.totalorder %s35, %s36
    %p50 = scmp.eq.s32.totalorder %s16, 1
    %p51 = por %p49, %p50
    %p53 = scmp.ne.s32.totalorder %s36, %s52
    %p54 = scmp.eq.s32.totalorder %s16, 0
    %p55 = por %p53, %p54
    %s56 = ssub.s32 %s18, %s25
    %p57 = scmp.eq.s32.totalorder %s56, 0
    %s59 = sadd.s32 %s58, 1
    %s60 = scalar_select %p57, %s58, %s59
    %p63 = pneg %p57
    %p64 = scmp.eq.s32.totalorder %s10, 1
    %p65 = por %p63, %p64
    %p66 = scmp.ne.s32.totalorder %s58, %s61
    %p67 = scmp.eq.s32.totalorder %s10, 0
    %p68 = por %p66, %p67
    %p69 = scmp.ne.s32.totalorder %s58, %s61
    %p70 = scmp.eq.s32.totalorder %s15, 1
    %p71 = por %p69, %p70
    %p72 = scmp.ne.s32.totalorder %s61, %s62
    %p73 = scmp.eq.s32.totalorder %s15, 0
    %p74 = por %p72, %p73
    %p75 = scmp.ne.s32.totalorder %s61, %s62
    %p76 = scmp.eq.s32.totalorder %s16, 1
    %p77 = por %p75, %p76
    %p79 = scmp.ne.s32.totalorder %s62, %s78
    %p80 = scmp.eq.s32.totalorder %s16, 0
    %p81 = por %p79, %p80
    %s82 = ssub.s32 %s18, %s25
    %p83 = scmp.eq.s32.totalorder %s82, 0
    %s85 = sadd.s32 %s84, 1
    %s86 = scalar_select %p83, %s84, %s85
    %p89 = pneg %p83
    %p90 = scmp.eq.s32.totalorder %s10, 1
    %p91 = por %p89, %p90
    %p92 = scmp.ne.s32.totalorder %s84, %s87
    %p93 = scmp.eq.s32.totalorder %s10, 0
    %p94 = por %p92, %p93
    %p95 = scmp.ne.s32.totalorder %s84, %s87
    %p96 = scmp.eq.s32.totalorder %s15, 1
    %p97 = por %p95, %p96
    %p98 = scmp.ne.s32.totalorder %s87, %s88
    %p99 = scmp.eq.s32.totalorder %s15, 0
    %p100 = por %p98, %p99
    %p101 = scmp.ne.s32.totalorder %s87, %s88
    %p102 = scmp.eq.s32.totalorder %s16, 1
    %p103 = por %p101, %p102
    %p105 = scmp.ne.s32.totalorder %s88, %s104
    %p106 = scmp.eq.s32.totalorder %s16, 0
    %p107 = por %p105, %p106
    %s108 = ssub.s32 %s18, %s25
    %p109 = scmp.eq.s32.totalorder %s108, 0
    %s111 = sadd.s32 %s110, 1
    %s112 = scalar_select %p109, %s110, %s111
    %p115 = pneg %p109
    %p116 = scmp.eq.s32.totalorder %s10, 1
    %p117 = por %p115, %p116
    %p118 = scmp.ne.s32.totalorder %s110, %s113
    %p119 = scmp.eq.s32.totalorder %s10, 0
    %p120 = por %p118, %p119
    %p121 = scmp.ne.s32.totalorder %s110, %s113
    %p122 = scmp.eq.s32.totalorder %s15, 1
    %p123 = por %p121, %p122
    %p124 = scmp.ne.s32.totalorder %s113, %s114
    %p125 = scmp.eq.s32.totalorder %s15, 0
    %p126 = por %p124, %p125
    %p127 = scmp.ne.s32.totalorder %s113, %s114
    %p128 = scmp.eq.s32.totalorder %s16, 1
    %p129 = por %p127, %p128
    %p131 = scmp.ne.s32.totalorder %s114, %s130
    %p132 = scmp.eq.s32.totalorder %s16, 0
    %p133 = por %p131, %p132
    %s134 = ssub.s32 %s17, %s29
    %s135 = ssub.s32 %s18, %s25
    %s136 = sor.u32 %s134, %s135
    %p137 = scmp.eq.s32.totalorder %s136, 0
    %s139 = sadd.s32 %s138, 1
    %s140 = scalar_select %p137, %s138, %s139
    %p143 = pneg %p137
    %p144 = scmp.eq.s32.totalorder %s10, 1
    %p145 = por %p143, %p144
    %p146 = scmp.ne.s32.totalorder %s138, %s141
    %p147 = scmp.eq.s32.totalorder %s10, 0
    %p148 = por %p146, %p147
    %p149 = scmp.ne.s32.totalorder %s138, %s141
    %p150 = scmp.eq.s32.totalorder %s15, 1
    %p151 = por %p149, %p150
    %p152 = scmp.ne.s32.totalorder %s141, %s142
    %p153 = scmp.eq.s32.totalorder %s15, 0
    %p154 = por %p152, %p153
    %p155 = scmp.ne.s32.totalorder %s141, %s142
    %p156 = scmp.eq.s32.totalorder %s16, 1
    %p157 = por %p155, %p156
    %p159 = scmp.ne.s32.totalorder %s142, %s158
    %p160 = scmp.eq.s32.totalorder %s16, 0
    %p161 = por %p159, %p160
    %p162 = scmp.le.s32.totalorder 1, %s10
    %p163 = scmp.lt.s32.totalorder %s10, 3
    %p164 = pnand %p162, %p163
    %p165 = pneg %p164
    // Predicated region
    $region9: #{gfe_two_apply.8} parent=5 // pred_check
      _
    $region10: #{gfe_two_apply.8} parent=5 // pred_check_branch
      %167 = sbr.rel (%p164) target = $region12
    $region11: #{gfe_two_apply.8} parent=5 // pred_region
      %s168 = ssub.s32 %s10, 1
      // Predicated region
      $region13: #{gfe_two_apply.8} parent=11 // pred_check
        %p169 = pneg %p74
      $region14: #{gfe_two_apply.8} parent=11 // pred_check_branch
        %171 = sbr.rel (%p169) target = $region16
      $region15: #{gfe_two_apply.8} parent=11 // pred_region
        %s172 = smul.u32 8, %s20
        %p173 = scmp.lt.s32.totalorder %s172, 7
        %s174 = scalar_select %p173, %s172, 7
        %s175 = smul.addr %s174, 4
        %s176 = scalar_lea.vmem %s1, %s175
        %s177 = smul.u32 8, %s20
      $region16: #{gfe_two_apply.8} parent=11 // pred_fallthru
        _
      // Predicated region
      $region17: #{gfe_two_apply.8} parent=11 // pred_check
        %p178 = pneg %p100
      $region18: #{gfe_two_apply.8} parent=11 // pred_check_branch
        %180 = sbr.rel (%p178) target = $region20
      $region19: #{gfe_two_apply.8} parent=11 // pred_region
        %s181 = smul.u32 8, %s20
        %p182 = scmp.lt.s32.totalorder %s181, 7
        %s183 = scalar_select %p182, %s181, 7
        %s184 = scalar_lea.vmem %s2, %s183
        %s185 = smul.u32 8, %s20
      $region20: #{gfe_two_apply.8} parent=11 // pred_fallthru
        _
      // Predicated region
      $region21: #{gfe_two_apply.8} parent=11 // pred_check
        %p186 = pneg %p126
      $region22: #{gfe_two_apply.8} parent=11 // pred_check_branch
        %188 = sbr.rel (%p186) target = $region24
      $region23: #{gfe_two_apply.8} parent=11 // pred_region
        %s189 = smul.u32 8, %s20
        %p190 = scmp.lt.s32.totalorder %s189, 7
        %s191 = scalar_select %p190, %s189, 7
        %s192 = scalar_lea.vmem %s3, %s191
        %s193 = smul.u32 8, %s20
      $region24: #{gfe_two_apply.8} parent=11 // pred_fallthru
        _
    $region12: #{gfe_two_apply.8} parent=5 // pred_fallthru
      _
    %p194 = scmp.lt.s32.totalorder %s10, 2
    // Predicated region
    $region25: #{gfe_two_apply.8} parent=5 // pred_check
      %p195 = pneg %p194
    $region26: #{gfe_two_apply.8} parent=5 // pred_check_branch
      %197 = sbr.rel (%p195) target = $region28
    $region27: #{gfe_two_apply.8} parent=5 // pred_region
      // Predicated region
      $region29: #{gfe_two_apply.8} parent=27 // pred_check
        %p198 = pneg %p42
      $region30: #{gfe_two_apply.8} parent=27 // pred_check_branch
        %200 = sbr.rel (%p198) target = $region32
      $region31: #{gfe_two_apply.8} parent=27 // pred_region
        %p201 = scmp.lt.s32.totalorder %s17, 1
        %s202 = scalar_select %p201, %s17, 1
        %s203 = smul.addr %s202, 8
        %s204 = smul.addr %s203, 4
        %s205 = scalar_lea.vmem %s0, %s204
      $region32: #{gfe_two_apply.8} parent=27 // pred_fallthru
        _
    $region28: #{gfe_two_apply.8} parent=5 // pred_fallthru
      _
    %p206 = scmp.le.s32.totalorder 1, %s10
    %p207 = scmp.lt.s32.totalorder %s10, 3
    %p208 = pnand %p206, %p207
    %p209 = pneg %p208
    // Predicated region
    $region33: #{gfe_two_apply.8} parent=5 // pred_check
      _
    $region34: #{gfe_two_apply.8} parent=5 // pred_check_branch
      %211 = sbr.rel (%p208) target = $region36
    $region35: #{gfe_two_apply.8} parent=5 // pred_region
      %s212 = ssub.s32 %s10, 1
      %p213 = scmp.lt.s32.totalorder %s19, 1
      %s214 = scalar_select %p213, %s19, 1
      %s215 = smul.addr %s214, 8
      %s216 = smul.addr %s215, 4
      %s217 = scalar_lea.vmem %s0, %s216
      %p218 = pneg %p48
      %p219 = pneg %p45
      %s220 = smul.u32 8, %s20
      %p221 = scmp.lt.s32.totalorder %s220, 7
      %s222 = scalar_select %p221, %s220, 7
      %s223 = smul.addr %s222, 4
      %s224 = scalar_lea.vmem %s1, %s223
      %p225 = pneg %p74
      %p226 = pneg %p71
      %s227 = smul.u32 8, %s20
      %p228 = scmp.lt.s32.totalorder %s227, 7
      %s229 = scalar_select %p228, %s227, 7
      %s230 = scalar_lea.vmem %s2, %s229
      %p231 = pneg %p100
      %p232 = pneg %p97
      %s233 = smul.u32 8, %s20
      %p234 = scmp.lt.s32.totalorder %s233, 7
      %s235 = scalar_select %p234, %s233, 7
      %s236 = scalar_lea.vmem %s3, %s235
      %p237 = pneg %p126
      %p238 = pneg %p123
      %p239 = pneg %p154
      %p240 = pneg %p151
      %s241 = smul.u32 8, %s20
      %p242 = scmp.lt.s32.totalorder %s19, 1
      %s243 = scalar_select %p242, %s19, 1
      %p244 = scmp.lt.s32.totalorder %s241, 7
      %s245 = scalar_select %p244, %s241, 7
      %s246 = smul.addr %s243, 8
      %s247 = sadd.s32 %s245, %s246
      %s248 = smul.addr %s247, 4
      %s249 = scalar_lea.vmem %s4, %s248
      %p250 = scmp.lt.s32.totalorder %s19, 1
      %s251 = scalar_select %p250, %s19, 1
      %s252 = smul.addr %s251, 8
      %s253 = smul.addr %s252, 4
      %s254 = scalar_lea.vmem %s0, %s253
      %s255 = smul.u32 8, %s20
      %p256 = scmp.lt.s32.totalorder %s255, 7
      %s257 = scalar_select %p256, %s255, 7
      %s258 = smul.addr %s257, 4
      %s259 = scalar_lea.vmem %s1, %s258
      %s260 = smul.u32 8, %s20
      %s261 = smul.u32 8, %s20
      %p262 = scmp.lt.s32.totalorder %s261, 7
      %s263 = scalar_select %p262, %s261, 7
      %s264 = scalar_lea.vmem %s2, %s263
      %s265 = smul.u32 8, %s20
      %s266 = smul.u32 8, %s20
      %p267 = scmp.lt.s32.totalorder %s266, 7
      %s268 = scalar_select %p267, %s266, 7
      %s269 = scalar_lea.vmem %s3, %s268
      %s270 = smul.u32 8, %s20
      %s271 = smul.u32 8, %s20
      %p272 = scmp.lt.s32.totalorder %s19, 1
      %s273 = scalar_select %p272, %s19, 1
      %p274 = scmp.lt.s32.totalorder %s271, 7
      %s275 = scalar_select %p274, %s271, 7
      %s276 = smul.addr %s273, 8
      %s277 = sadd.s32 %s275, %s276
      %s278 = smul.addr %s277, 4
      %s279 = scalar_lea.vmem %s4, %s278
      %s280 = smul.u32 8, %s20
      %v281 = vld [vmem:[%s254] sm:$0xff]
      %v282 = vld [vmem:[%s254 + $0x8] sm:$0xff]
      %v283 = vld [vmem:[%s254 + $0x10] sm:$0xff]
      %v284 = vld [vmem:[%s254 + $0x18] sm:$0xff]
      %v285 = vld [vmem:[%s259] sm:$0xff]
      %v286 = vld [vmem:[%s259 + $0x8] sm:$0xff]
      %v287 = vld [vmem:[%s259 + $0x10] sm:$0xff]
      %v288 = vld [vmem:[%s259 + $0x18] sm:$0xff]
      %v289 = vld [vmem:[%s259 + $0x20] sm:$0xff]
      %v290 = vld [vmem:[%s259 + $0x28] sm:$0xff]
      %v291 = vld [vmem:[%s259 + $0x30] sm:$0xff]
      %v292 = vld [vmem:[%s259 + $0x38] sm:$0xff]
      %v293 = vld [vmem:[%s259 + $0x40] sm:$0xff]
      %v294 = vld [vmem:[%s259 + $0x48] sm:$0xff]
      %v295 = vld [vmem:[%s259 + $0x50] sm:$0xff]
      %v296 = vld [vmem:[%s259 + $0x58] sm:$0xff]
      %v297 = vld [vmem:[%s259 + $0x60] sm:$0xff]
      %v298 = vld [vmem:[%s259 + $0x68] sm:$0xff]
      %v299 = vld [vmem:[%s259 + $0x70] sm:$0xff]
      %v300 = vld [vmem:[%s259 + $0x78] sm:$0xff]
      %v301 = vld [vmem:[%s259 + $0x80] sm:$0xff]
      %v302 = vld [vmem:[%s259 + $0x88] sm:$0xff]
      %v303 = vld [vmem:[%s259 + $0x90] sm:$0xff]
      %v304 = vld [vmem:[%s259 + $0x98] sm:$0xff]
      %v305 = vld [vmem:[%s259 + $0xa0] sm:$0xff]
      %v306 = vld [vmem:[%s259 + $0xa8] sm:$0xff]
      %v307 = vld [vmem:[%s259 + $0xb0] sm:$0xff]
      %v308 = vld [vmem:[%s259 + $0xb8] sm:$0xff]
      %v309 = vld [vmem:[%s259 + $0xc0] sm:$0xff]
      %v310 = vld [vmem:[%s259 + $0xc8] sm:$0xff]
      %v311 = vld [vmem:[%s259 + $0xd0] sm:$0xff]
      %v312 = vld [vmem:[%s259 + $0xd8] sm:$0xff]
      %v313 = vld [vmem:[%s259 + $0xe0] sm:$0xff]
      %v314 = vld [vmem:[%s259 + $0xe8] sm:$0xff]
      %v315 = vld [vmem:[%s259 + $0xf0] sm:$0xff]
      %v316 = vld [vmem:[%s259 + $0xf8] sm:$0xff]
      %v317 = vld [vmem:[%s259 + $0x100] sm:$0xff]
      %v318 = vld [vmem:[%s259 + $0x108] sm:$0xff]
      %v319 = vld [vmem:[%s259 + $0x110] sm:$0xff]
      %v320 = vld [vmem:[%s259 + $0x118] sm:$0xff]
      %v321 = vld [vmem:[%s259 + $0x120] sm:$0xff]
      %v322 = vld [vmem:[%s259 + $0x128] sm:$0xff]
      %v323 = vld [vmem:[%s259 + $0x130] sm:$0xff]
      %v324 = vld [vmem:[%s259 + $0x138] sm:$0xff]
      %v325 = vld [vmem:[%s259 + $0x140] sm:$0xff]
      %v326 = vld [vmem:[%s259 + $0x148] sm:$0xff]
      %v327 = vld [vmem:[%s259 + $0x150] sm:$0xff]
      %v328 = vld [vmem:[%s259 + $0x158] sm:$0xff]
      %v329 = vld [vmem:[%s259 + $0x160] sm:$0xff]
      %v330 = vld [vmem:[%s259 + $0x168] sm:$0xff]
      %v331 = vld [vmem:[%s259 + $0x170] sm:$0xff]
      %v332 = vld [vmem:[%s259 + $0x178] sm:$0xff]
      %v333 = vld [vmem:[%s259 + $0x180] sm:$0xff]
      %v334 = vld [vmem:[%s259 + $0x188] sm:$0xff]
      %v335 = vld [vmem:[%s259 + $0x190] sm:$0xff]
      %v336 = vld [vmem:[%s259 + $0x198] sm:$0xff]
      %v337 = vld [vmem:[%s259 + $0x1a0] sm:$0xff]
      %v338 = vld [vmem:[%s259 + $0x1a8] sm:$0xff]
      %v339 = vld [vmem:[%s259 + $0x1b0] sm:$0xff]
      %v340 = vld [vmem:[%s259 + $0x1b8] sm:$0xff]
      %v341 = vld [vmem:[%s259 + $0x1c0] sm:$0xff]
      %v342 = vld [vmem:[%s259 + $0x1c8] sm:$0xff]
      %v343 = vld [vmem:[%s259 + $0x1d0] sm:$0xff]
      %v344 = vld [vmem:[%s259 + $0x1d8] sm:$0xff]
      %v345 = vld [vmem:[%s259 + $0x1e0] sm:$0xff]
      %v346 = vld [vmem:[%s259 + $0x1e8] sm:$0xff]
      %v347 = vld [vmem:[%s259 + $0x1f0] sm:$0xff]
      %v348 = vld [vmem:[%s259 + $0x1f8] sm:$0xff]
      %v349 = vld [vmem:[%s259 + $0x200] sm:$0xff]
      %v350 = vld [vmem:[%s259 + $0x208] sm:$0xff]
      %v351 = vld [vmem:[%s259 + $0x210] sm:$0xff]
      %v352 = vld [vmem:[%s259 + $0x218] sm:$0xff]
      %v353 = vld [vmem:[%s259 + $0x220] sm:$0xff]
      %v354 = vld [vmem:[%s259 + $0x228] sm:$0xff]
      %v355 = vld [vmem:[%s259 + $0x230] sm:$0xff]
      %v356 = vld [vmem:[%s259 + $0x238] sm:$0xff]
      %v357 = vld [vmem:[%s259 + $0x240] sm:$0xff]
      %v358 = vld [vmem:[%s259 + $0x248] sm:$0xff]
      %v359 = vld [vmem:[%s259 + $0x250] sm:$0xff]
      %v360 = vld [vmem:[%s259 + $0x258] sm:$0xff]
      %v361 = vld [vmem:[%s259 + $0x260] sm:$0xff]
      %v362 = vld [vmem:[%s259 + $0x268] sm:$0xff]
      %v363 = vld [vmem:[%s259 + $0x270] sm:$0xff]
      %v364 = vld [vmem:[%s259 + $0x278] sm:$0xff]
      %v365 = vld [vmem:[%s259 + $0x280] sm:$0xff]
      %v366 = vld [vmem:[%s259 + $0x288] sm:$0xff]
      %v367 = vld [vmem:[%s259 + $0x290] sm:$0xff]
      %v368 = vld [vmem:[%s259 + $0x298] sm:$0xff]
      %v369 = vld [vmem:[%s259 + $0x2a0] sm:$0xff]
      %v370 = vld [vmem:[%s259 + $0x2a8] sm:$0xff]
      %v371 = vld [vmem:[%s259 + $0x2b0] sm:$0xff]
      %v372 = vld [vmem:[%s259 + $0x2b8] sm:$0xff]
      %v373 = vld [vmem:[%s259 + $0x2c0] sm:$0xff]
      %v374 = vld [vmem:[%s259 + $0x2c8] sm:$0xff]
      %v375 = vld [vmem:[%s259 + $0x2d0] sm:$0xff]
      %v376 = vld [vmem:[%s259 + $0x2d8] sm:$0xff]
      %v377 = vld [vmem:[%s259 + $0x2e0] sm:$0xff]
      %v378 = vld [vmem:[%s259 + $0x2e8] sm:$0xff]
      %v379 = vld [vmem:[%s259 + $0x2f0] sm:$0xff]
      %v380 = vld [vmem:[%s259 + $0x2f8] sm:$0xff]
      %v381 = vld [vmem:[%s259 + $0x300] sm:$0xff]
      %v382 = vld [vmem:[%s259 + $0x308] sm:$0xff]
      %v383 = vld [vmem:[%s259 + $0x310] sm:$0xff]
      %v384 = vld [vmem:[%s259 + $0x318] sm:$0xff]
      %v385 = vld [vmem:[%s259 + $0x320] sm:$0xff]
      %v386 = vld [vmem:[%s259 + $0x328] sm:$0xff]
      %v387 = vld [vmem:[%s259 + $0x330] sm:$0xff]
      %v388 = vld [vmem:[%s259 + $0x338] sm:$0xff]
      %v389 = vld [vmem:[%s259 + $0x340] sm:$0xff]
      %v390 = vld [vmem:[%s259 + $0x348] sm:$0xff]
      %v391 = vld [vmem:[%s259 + $0x350] sm:$0xff]
      %v392 = vld [vmem:[%s259 + $0x358] sm:$0xff]
      %v393 = vld [vmem:[%s259 + $0x360] sm:$0xff]
      %v394 = vld [vmem:[%s259 + $0x368] sm:$0xff]
      %v395 = vld [vmem:[%s259 + $0x370] sm:$0xff]
      %v396 = vld [vmem:[%s259 + $0x378] sm:$0xff]
      %v397 = vld [vmem:[%s259 + $0x380] sm:$0xff]
      %v398 = vld [vmem:[%s259 + $0x388] sm:$0xff]
      %v399 = vld [vmem:[%s259 + $0x390] sm:$0xff]
      %v400 = vld [vmem:[%s259 + $0x398] sm:$0xff]
      %v401 = vld [vmem:[%s259 + $0x3a0] sm:$0xff]
      %v402 = vld [vmem:[%s259 + $0x3a8] sm:$0xff]
      %v403 = vld [vmem:[%s259 + $0x3b0] sm:$0xff]
      %v404 = vld [vmem:[%s259 + $0x3b8] sm:$0xff]
      %v405 = vld [vmem:[%s259 + $0x3c0] sm:$0xff]
      %v406 = vld [vmem:[%s259 + $0x3c8] sm:$0xff]
      %v407 = vld [vmem:[%s259 + $0x3d0] sm:$0xff]
      %v408 = vld [vmem:[%s259 + $0x3d8] sm:$0xff]
      %v409 = vld [vmem:[%s259 + $0x3e0] sm:$0xff]
      %v410 = vld [vmem:[%s259 + $0x3e8] sm:$0xff]
      %v411 = vld [vmem:[%s259 + $0x3f0] sm:$0xff]
      %v412 = vld [vmem:[%s259 + $0x3f8] sm:$0xff]
      %v413 = vld [vmem:[%s259 + $0x400] sm:$0xff]
      %v414 = vld [vmem:[%s259 + $0x408] sm:$0xff]
      %v415 = vld [vmem:[%s259 + $0x410] sm:$0xff]
      %v416 = vld [vmem:[%s259 + $0x418] sm:$0xff]
      %v417 = vld [vmem:[%s259 + $0x420] sm:$0xff]
      %v418 = vld [vmem:[%s259 + $0x428] sm:$0xff]
      %v419 = vld [vmem:[%s259 + $0x430] sm:$0xff]
      %v420 = vld [vmem:[%s259 + $0x438] sm:$0xff]
      %v421 = vld [vmem:[%s259 + $0x440] sm:$0xff]
      %v422 = vld [vmem:[%s259 + $0x448] sm:$0xff]
      %v423 = vld [vmem:[%s259 + $0x450] sm:$0xff]
      %v424 = vld [vmem:[%s259 + $0x458] sm:$0xff]
      %v425 = vld [vmem:[%s259 + $0x460] sm:$0xff]
      %v426 = vld [vmem:[%s259 + $0x468] sm:$0xff]
      %v427 = vld [vmem:[%s259 + $0x470] sm:$0xff]
      %v428 = vld [vmem:[%s259 + $0x478] sm:$0xff]
      %v429 = vld [vmem:[%s259 + $0x480] sm:$0xff]
      %v430 = vld [vmem:[%s259 + $0x488] sm:$0xff]
      %v431 = vld [vmem:[%s259 + $0x490] sm:$0xff]
      %v432 = vld [vmem:[%s259 + $0x498] sm:$0xff]
      %v433 = vld [vmem:[%s259 + $0x4a0] sm:$0xff]
      %v434 = vld [vmem:[%s259 + $0x4a8] sm:$0xff]
      %v435 = vld [vmem:[%s259 + $0x4b0] sm:$0xff]
      %v436 = vld [vmem:[%s259 + $0x4b8] sm:$0xff]
      %v437 = vld [vmem:[%s259 + $0x4c0] sm:$0xff]
      %v438 = vld [vmem:[%s259 + $0x4c8] sm:$0xff]
      %v439 = vld [vmem:[%s259 + $0x4d0] sm:$0xff]
      %v440 = vld [vmem:[%s259 + $0x4d8] sm:$0xff]
      %v441 = vld [vmem:[%s259 + $0x4e0] sm:$0xff]
      %v442 = vld [vmem:[%s259 + $0x4e8] sm:$0xff]
      %v443 = vld [vmem:[%s259 + $0x4f0] sm:$0xff]
      %v444 = vld [vmem:[%s259 + $0x4f8] sm:$0xff]
      %v445 = vld [vmem:[%s259 + $0x500] sm:$0xff]
      %v446 = vld [vmem:[%s259 + $0x508] sm:$0xff]
      %v447 = vld [vmem:[%s259 + $0x510] sm:$0xff]
      %v448 = vld [vmem:[%s259 + $0x518] sm:$0xff]
      %v449 = vld [vmem:[%s259 + $0x520] sm:$0xff]
      %v450 = vld [vmem:[%s259 + $0x528] sm:$0xff]
      %v451 = vld [vmem:[%s259 + $0x530] sm:$0xff]
      %v452 = vld [vmem:[%s259 + $0x538] sm:$0xff]
      %v453 = vld [vmem:[%s259 + $0x540] sm:$0xff]
      %v454 = vld [vmem:[%s259 + $0x548] sm:$0xff]
      %v455 = vld [vmem:[%s259 + $0x550] sm:$0xff]
      %v456 = vld [vmem:[%s259 + $0x558] sm:$0xff]
      %v457 = vld [vmem:[%s259 + $0x560] sm:$0xff]
      %v458 = vld [vmem:[%s259 + $0x568] sm:$0xff]
      %v459 = vld [vmem:[%s259 + $0x570] sm:$0xff]
      %v460 = vld [vmem:[%s259 + $0x578] sm:$0xff]
      %v461 = vld [vmem:[%s259 + $0x580] sm:$0xff]
      %v462 = vld [vmem:[%s259 + $0x588] sm:$0xff]
      %v463 = vld [vmem:[%s259 + $0x590] sm:$0xff]
      %v464 = vld [vmem:[%s259 + $0x598] sm:$0xff]
      %v465 = vld [vmem:[%s259 + $0x5a0] sm:$0xff]
      %v466 = vld [vmem:[%s259 + $0x5a8] sm:$0xff]
      %v467 = vld [vmem:[%s259 + $0x5b0] sm:$0xff]
      %v468 = vld [vmem:[%s259 + $0x5b8] sm:$0xff]
      %v469 = vld [vmem:[%s259 + $0x5c0] sm:$0xff]
      %v470 = vld [vmem:[%s259 + $0x5c8] sm:$0xff]
      %v471 = vld [vmem:[%s259 + $0x5d0] sm:$0xff]
      %v472 = vld [vmem:[%s259 + $0x5d8] sm:$0xff]
      %v473 = vld [vmem:[%s259 + $0x5e0] sm:$0xff]
      %v474 = vld [vmem:[%s259 + $0x5e8] sm:$0xff]
      %v475 = vld [vmem:[%s259 + $0x5f0] sm:$0xff]
      %v476 = vld [vmem:[%s259 + $0x5f8] sm:$0xff]
      %v477 = vld [vmem:[%s259 + $0x600] sm:$0xff]
      %v478 = vld [vmem:[%s259 + $0x608] sm:$0xff]
      %v479 = vld [vmem:[%s259 + $0x610] sm:$0xff]
      %v480 = vld [vmem:[%s259 + $0x618] sm:$0xff]
      %v481 = vld [vmem:[%s259 + $0x620] sm:$0xff]
      %v482 = vld [vmem:[%s259 + $0x628] sm:$0xff]
      %v483 = vld [vmem:[%s259 + $0x630] sm:$0xff]
      %v484 = vld [vmem:[%s259 + $0x638] sm:$0xff]
      %v485 = vld [vmem:[%s259 + $0x640] sm:$0xff]
      %v486 = vld [vmem:[%s259 + $0x648] sm:$0xff]
      %v487 = vld [vmem:[%s259 + $0x650] sm:$0xff]
      %v488 = vld [vmem:[%s259 + $0x658] sm:$0xff]
      %v489 = vld [vmem:[%s259 + $0x660] sm:$0xff]
      %v490 = vld [vmem:[%s259 + $0x668] sm:$0xff]
      %v491 = vld [vmem:[%s259 + $0x670] sm:$0xff]
      %v492 = vld [vmem:[%s259 + $0x678] sm:$0xff]
      %v493 = vld [vmem:[%s259 + $0x680] sm:$0xff]
      %v494 = vld [vmem:[%s259 + $0x688] sm:$0xff]
      %v495 = vld [vmem:[%s259 + $0x690] sm:$0xff]
      %v496 = vld [vmem:[%s259 + $0x698] sm:$0xff]
      %v497 = vld [vmem:[%s259 + $0x6a0] sm:$0xff]
      %v498 = vld [vmem:[%s259 + $0x6a8] sm:$0xff]
      %v499 = vld [vmem:[%s259 + $0x6b0] sm:$0xff]
      %v500 = vld [vmem:[%s259 + $0x6b8] sm:$0xff]
      %v501 = vld [vmem:[%s259 + $0x6c0] sm:$0xff]
      %v502 = vld [vmem:[%s259 + $0x6c8] sm:$0xff]
      %v503 = vld [vmem:[%s259 + $0x6d0] sm:$0xff]
      %v504 = vld [vmem:[%s259 + $0x6d8] sm:$0xff]
      %v505 = vld [vmem:[%s259 + $0x6e0] sm:$0xff]
      %v506 = vld [vmem:[%s259 + $0x6e8] sm:$0xff]
      %v507 = vld [vmem:[%s259 + $0x6f0] sm:$0xff]
      %v508 = vld [vmem:[%s259 + $0x6f8] sm:$0xff]
      %v509 = vld [vmem:[%s259 + $0x700] sm:$0xff]
      %v510 = vld [vmem:[%s259 + $0x708] sm:$0xff]
      %v511 = vld [vmem:[%s259 + $0x710] sm:$0xff]
      %v512 = vld [vmem:[%s259 + $0x718] sm:$0xff]
      %v513 = vld [vmem:[%s259 + $0x720] sm:$0xff]
      %v514 = vld [vmem:[%s259 + $0x728] sm:$0xff]
      %v515 = vld [vmem:[%s259 + $0x730] sm:$0xff]
      %v516 = vld [vmem:[%s259 + $0x738] sm:$0xff]
      %v517 = vld [vmem:[%s259 + $0x740] sm:$0xff]
      %v518 = vld [vmem:[%s259 + $0x748] sm:$0xff]
      %v519 = vld [vmem:[%s259 + $0x750] sm:$0xff]
      %v520 = vld [vmem:[%s259 + $0x758] sm:$0xff]
      %v521 = vld [vmem:[%s259 + $0x760] sm:$0xff]
      %v522 = vld [vmem:[%s259 + $0x768] sm:$0xff]
      %v523 = vld [vmem:[%s259 + $0x770] sm:$0xff]
      %v524 = vld [vmem:[%s259 + $0x778] sm:$0xff]
      %v525 = vld [vmem:[%s259 + $0x780] sm:$0xff]
      %v526 = vld [vmem:[%s259 + $0x788] sm:$0xff]
      %v527 = vld [vmem:[%s259 + $0x790] sm:$0xff]
      %v528 = vld [vmem:[%s259 + $0x798] sm:$0xff]
      %v529 = vld [vmem:[%s259 + $0x7a0] sm:$0xff]
      %v530 = vld [vmem:[%s259 + $0x7a8] sm:$0xff]
      %v531 = vld [vmem:[%s259 + $0x7b0] sm:$0xff]
      %v532 = vld [vmem:[%s259 + $0x7b8] sm:$0xff]
      %v533 = vld [vmem:[%s259 + $0x7c0] sm:$0xff]
      %v534 = vld [vmem:[%s259 + $0x7c8] sm:$0xff]
      %v535 = vld [vmem:[%s259 + $0x7d0] sm:$0xff]
      %v536 = vld [vmem:[%s259 + $0x7d8] sm:$0xff]
      %v537 = vld [vmem:[%s259 + $0x7e0] sm:$0xff]
      %v538 = vld [vmem:[%s259 + $0x7e8] sm:$0xff]
      %v539 = vld [vmem:[%s259 + $0x7f0] sm:$0xff]
      %v540 = vld [vmem:[%s259 + $0x7f8] sm:$0xff]
      %v541 = vld [vmem:[%s259 + $0x800] sm:$0xff]
      %v542 = vld [vmem:[%s259 + $0x808] sm:$0xff]
      %v543 = vld [vmem:[%s259 + $0x810] sm:$0xff]
      %v544 = vld [vmem:[%s259 + $0x818] sm:$0xff]
      %v545 = vld [vmem:[%s259 + $0x820] sm:$0xff]
      %v546 = vld [vmem:[%s259 + $0x828] sm:$0xff]
      %v547 = vld [vmem:[%s259 + $0x830] sm:$0xff]
      %v548 = vld [vmem:[%s259 + $0x838] sm:$0xff]
      %v549 = vld [vmem:[%s259 + $0x840] sm:$0xff]
      %v550 = vld [vmem:[%s259 + $0x848] sm:$0xff]
      %v551 = vld [vmem:[%s259 + $0x850] sm:$0xff]
      %v552 = vld [vmem:[%s259 + $0x858] sm:$0xff]
      %v553 = vld [vmem:[%s259 + $0x860] sm:$0xff]
      %v554 = vld [vmem:[%s259 + $0x868] sm:$0xff]
      %v555 = vld [vmem:[%s259 + $0x870] sm:$0xff]
      %v556 = vld [vmem:[%s259 + $0x878] sm:$0xff]
      %v557 = vld [vmem:[%s259 + $0x880] sm:$0xff]
      %v558 = vld [vmem:[%s259 + $0x888] sm:$0xff]
      %v559 = vld [vmem:[%s259 + $0x890] sm:$0xff]
      %v560 = vld [vmem:[%s259 + $0x898] sm:$0xff]
      %v561 = vld [vmem:[%s259 + $0x8a0] sm:$0xff]
      %v562 = vld [vmem:[%s259 + $0x8a8] sm:$0xff]
      %v563 = vld [vmem:[%s259 + $0x8b0] sm:$0xff]
      %v564 = vld [vmem:[%s259 + $0x8b8] sm:$0xff]
      %v565 = vld [vmem:[%s259 + $0x8c0] sm:$0xff]
      %v566 = vld [vmem:[%s259 + $0x8c8] sm:$0xff]
      %v567 = vld [vmem:[%s259 + $0x8d0] sm:$0xff]
      %v568 = vld [vmem:[%s259 + $0x8d8] sm:$0xff]
      %v569 = vld [vmem:[%s259 + $0x8e0] sm:$0xff]
      %v570 = vld [vmem:[%s259 + $0x8e8] sm:$0xff]
      %v571 = vld [vmem:[%s259 + $0x8f0] sm:$0xff]
      %v572 = vld [vmem:[%s259 + $0x8f8] sm:$0xff]
      %v573 = vld [vmem:[%s259 + $0x900] sm:$0xff]
      %v574 = vld [vmem:[%s259 + $0x908] sm:$0xff]
      %v575 = vld [vmem:[%s259 + $0x910] sm:$0xff]
      %v576 = vld [vmem:[%s259 + $0x918] sm:$0xff]
      %v577 = vld [vmem:[%s259 + $0x920] sm:$0xff]
      %v578 = vld [vmem:[%s259 + $0x928] sm:$0xff]
      %v579 = vld [vmem:[%s259 + $0x930] sm:$0xff]
      %v580 = vld [vmem:[%s259 + $0x938] sm:$0xff]
      %v581 = vld [vmem:[%s259 + $0x940] sm:$0xff]
      %v582 = vld [vmem:[%s259 + $0x948] sm:$0xff]
      %v583 = vld [vmem:[%s259 + $0x950] sm:$0xff]
      %v584 = vld [vmem:[%s259 + $0x958] sm:$0xff]
      %v585 = vld [vmem:[%s259 + $0x960] sm:$0xff]
      %v586 = vld [vmem:[%s259 + $0x968] sm:$0xff]
      %v587 = vld [vmem:[%s259 + $0x970] sm:$0xff]
      %v588 = vld [vmem:[%s259 + $0x978] sm:$0xff]
      %v589 = vld [vmem:[%s259 + $0x980] sm:$0xff]
      %v590 = vld [vmem:[%s259 + $0x988] sm:$0xff]
      %v591 = vld [vmem:[%s259 + $0x990] sm:$0xff]
      %v592 = vld [vmem:[%s259 + $0x998] sm:$0xff]
      %v593 = vld [vmem:[%s259 + $0x9a0] sm:$0xff]
      %v594 = vld [vmem:[%s259 + $0x9a8] sm:$0xff]
      %v595 = vld [vmem:[%s259 + $0x9b0] sm:$0xff]
      %v596 = vld [vmem:[%s259 + $0x9b8] sm:$0xff]
      %v597 = vld [vmem:[%s259 + $0x9c0] sm:$0xff]
      %v598 = vld [vmem:[%s259 + $0x9c8] sm:$0xff]
      %v599 = vld [vmem:[%s259 + $0x9d0] sm:$0xff]
      %v600 = vld [vmem:[%s259 + $0x9d8] sm:$0xff]
      %v601 = vld [vmem:[%s259 + $0x9e0] sm:$0xff]
      %v602 = vld [vmem:[%s259 + $0x9e8] sm:$0xff]
      %v603 = vld [vmem:[%s259 + $0x9f0] sm:$0xff]
      %v604 = vld [vmem:[%s259 + $0x9f8] sm:$0xff]
      %v605 = vld [vmem:[%s259 + $0xa00] sm:$0xff]
      %v606 = vld [vmem:[%s259 + $0xa08] sm:$0xff]
      %v607 = vld [vmem:[%s259 + $0xa10] sm:$0xff]
      %v608 = vld [vmem:[%s259 + $0xa18] sm:$0xff]
      %v609 = vld [vmem:[%s259 + $0xa20] sm:$0xff]
      %v610 = vld [vmem:[%s259 + $0xa28] sm:$0xff]
      %v611 = vld [vmem:[%s259 + $0xa30] sm:$0xff]
      %v612 = vld [vmem:[%s259 + $0xa38] sm:$0xff]
      %v613 = vld [vmem:[%s259 + $0xa40] sm:$0xff]
      %v614 = vld [vmem:[%s259 + $0xa48] sm:$0xff]
      %v615 = vld [vmem:[%s259 + $0xa50] sm:$0xff]
      %v616 = vld [vmem:[%s259 + $0xa58] sm:$0xff]
      %v617 = vld [vmem:[%s259 + $0xa60] sm:$0xff]
      %v618 = vld [vmem:[%s259 + $0xa68] sm:$0xff]
      %v619 = vld [vmem:[%s259 + $0xa70] sm:$0xff]
      %v620 = vld [vmem:[%s259 + $0xa78] sm:$0xff]
      %v621 = vld [vmem:[%s259 + $0xa80] sm:$0xff]
      %v622 = vld [vmem:[%s259 + $0xa88] sm:$0xff]
      %v623 = vld [vmem:[%s259 + $0xa90] sm:$0xff]
      %v624 = vld [vmem:[%s259 + $0xa98] sm:$0xff]
      %v625 = vld [vmem:[%s259 + $0xaa0] sm:$0xff]
      %v626 = vld [vmem:[%s259 + $0xaa8] sm:$0xff]
      %v627 = vld [vmem:[%s259 + $0xab0] sm:$0xff]
      %v628 = vld [vmem:[%s259 + $0xab8] sm:$0xff]
      %v629 = vld [vmem:[%s259 + $0xac0] sm:$0xff]
      %v630 = vld [vmem:[%s259 + $0xac8] sm:$0xff]
      %v631 = vld [vmem:[%s259 + $0xad0] sm:$0xff]
      %v632 = vld [vmem:[%s259 + $0xad8] sm:$0xff]
      %v633 = vld [vmem:[%s259 + $0xae0] sm:$0xff]
      %v634 = vld [vmem:[%s259 + $0xae8] sm:$0xff]
      %v635 = vld [vmem:[%s259 + $0xaf0] sm:$0xff]
      %v636 = vld [vmem:[%s259 + $0xaf8] sm:$0xff]
      %v637 = vld [vmem:[%s259 + $0xb00] sm:$0xff]
      %v638 = vld [vmem:[%s259 + $0xb08] sm:$0xff]
      %v639 = vld [vmem:[%s259 + $0xb10] sm:$0xff]
      %v640 = vld [vmem:[%s259 + $0xb18] sm:$0xff]
      %v641 = vld [vmem:[%s259 + $0xb20] sm:$0xff]
      %v642 = vld [vmem:[%s259 + $0xb28] sm:$0xff]
      %v643 = vld [vmem:[%s259 + $0xb30] sm:$0xff]
      %v644 = vld [vmem:[%s259 + $0xb38] sm:$0xff]
      %v645 = vld [vmem:[%s259 + $0xb40] sm:$0xff]
      %v646 = vld [vmem:[%s259 + $0xb48] sm:$0xff]
      %v647 = vld [vmem:[%s259 + $0xb50] sm:$0xff]
      %v648 = vld [vmem:[%s259 + $0xb58] sm:$0xff]
      %v649 = vld [vmem:[%s259 + $0xb60] sm:$0xff]
      %v650 = vld [vmem:[%s259 + $0xb68] sm:$0xff]
      %v651 = vld [vmem:[%s259 + $0xb70] sm:$0xff]
      %v652 = vld [vmem:[%s259 + $0xb78] sm:$0xff]
      %v653 = vld [vmem:[%s259 + $0xb80] sm:$0xff]
      %v654 = vld [vmem:[%s259 + $0xb88] sm:$0xff]
      %v655 = vld [vmem:[%s259 + $0xb90] sm:$0xff]
      %v656 = vld [vmem:[%s259 + $0xb98] sm:$0xff]
      %v657 = vld [vmem:[%s259 + $0xba0] sm:$0xff]
      %v658 = vld [vmem:[%s259 + $0xba8] sm:$0xff]
      %v659 = vld [vmem:[%s259 + $0xbb0] sm:$0xff]
      %v660 = vld [vmem:[%s259 + $0xbb8] sm:$0xff]
      %v661 = vld [vmem:[%s259 + $0xbc0] sm:$0xff]
      %v662 = vld [vmem:[%s259 + $0xbc8] sm:$0xff]
      %v663 = vld [vmem:[%s259 + $0xbd0] sm:$0xff]
      %v664 = vld [vmem:[%s259 + $0xbd8] sm:$0xff]
      %v665 = vld [vmem:[%s259 + $0xbe0] sm:$0xff]
      %v666 = vld [vmem:[%s259 + $0xbe8] sm:$0xff]
      %v667 = vld [vmem:[%s259 + $0xbf0] sm:$0xff]
      %v668 = vld [vmem:[%s259 + $0xbf8] sm:$0xff]
      %v669 = vld [vmem:[%s259 + $0xc00] sm:$0xff]
      %v670 = vld [vmem:[%s259 + $0xc08] sm:$0xff]
      %v671 = vld [vmem:[%s259 + $0xc10] sm:$0xff]
      %v672 = vld [vmem:[%s259 + $0xc18] sm:$0xff]
      %v673 = vld [vmem:[%s259 + $0xc20] sm:$0xff]
      %v674 = vld [vmem:[%s259 + $0xc28] sm:$0xff]
      %v675 = vld [vmem:[%s259 + $0xc30] sm:$0xff]
      %v676 = vld [vmem:[%s259 + $0xc38] sm:$0xff]
      %v677 = vld [vmem:[%s259 + $0xc40] sm:$0xff]
      %v678 = vld [vmem:[%s259 + $0xc48] sm:$0xff]
      %v679 = vld [vmem:[%s259 + $0xc50] sm:$0xff]
      %v680 = vld [vmem:[%s259 + $0xc58] sm:$0xff]
      %v681 = vld [vmem:[%s259 + $0xc60] sm:$0xff]
      %v682 = vld [vmem:[%s259 + $0xc68] sm:$0xff]
      %v683 = vld [vmem:[%s259 + $0xc70] sm:$0xff]
      %v684 = vld [vmem:[%s259 + $0xc78] sm:$0xff]
      %v685 = vld [vmem:[%s259 + $0xc80] sm:$0xff]
      %v686 = vld [vmem:[%s259 + $0xc88] sm:$0xff]
      %v687 = vld [vmem:[%s259 + $0xc90] sm:$0xff]
      %v688 = vld [vmem:[%s259 + $0xc98] sm:$0xff]
      %v689 = vld [vmem:[%s259 + $0xca0] sm:$0xff]
      %v690 = vld [vmem:[%s259 + $0xca8] sm:$0xff]
      %v691 = vld [vmem:[%s259 + $0xcb0] sm:$0xff]
      %v692 = vld [vmem:[%s259 + $0xcb8] sm:$0xff]
      %v693 = vld [vmem:[%s259 + $0xcc0] sm:$0xff]
      %v694 = vld [vmem:[%s259 + $0xcc8] sm:$0xff]
      %v695 = vld [vmem:[%s259 + $0xcd0] sm:$0xff]
      %v696 = vld [vmem:[%s259 + $0xcd8] sm:$0xff]
      %v697 = vld [vmem:[%s259 + $0xce0] sm:$0xff]
      %v698 = vld [vmem:[%s259 + $0xce8] sm:$0xff]
      %v699 = vld [vmem:[%s259 + $0xcf0] sm:$0xff]
      %v700 = vld [vmem:[%s259 + $0xcf8] sm:$0xff]
      %v701 = vld [vmem:[%s259 + $0xd00] sm:$0xff]
      %v702 = vld [vmem:[%s259 + $0xd08] sm:$0xff]
      %v703 = vld [vmem:[%s259 + $0xd10] sm:$0xff]
      %v704 = vld [vmem:[%s259 + $0xd18] sm:$0xff]
      %v705 = vld [vmem:[%s259 + $0xd20] sm:$0xff]
      %v706 = vld [vmem:[%s259 + $0xd28] sm:$0xff]
      %v707 = vld [vmem:[%s259 + $0xd30] sm:$0xff]
      %v708 = vld [vmem:[%s259 + $0xd38] sm:$0xff]
      %v709 = vld [vmem:[%s259 + $0xd40] sm:$0xff]
      %v710 = vld [vmem:[%s259 + $0xd48] sm:$0xff]
      %v711 = vld [vmem:[%s259 + $0xd50] sm:$0xff]
      %v712 = vld [vmem:[%s259 + $0xd58] sm:$0xff]
      %v713 = vld [vmem:[%s259 + $0xd60] sm:$0xff]
      %v714 = vld [vmem:[%s259 + $0xd68] sm:$0xff]
      %v715 = vld [vmem:[%s259 + $0xd70] sm:$0xff]
      %v716 = vld [vmem:[%s259 + $0xd78] sm:$0xff]
      %v717 = vld [vmem:[%s259 + $0xd80] sm:$0xff]
      %v718 = vld [vmem:[%s259 + $0xd88] sm:$0xff]
      %v719 = vld [vmem:[%s259 + $0xd90] sm:$0xff]
      %v720 = vld [vmem:[%s259 + $0xd98] sm:$0xff]
      %v721 = vld [vmem:[%s259 + $0xda0] sm:$0xff]
      %v722 = vld [vmem:[%s259 + $0xda8] sm:$0xff]
      %v723 = vld [vmem:[%s259 + $0xdb0] sm:$0xff]
      %v724 = vld [vmem:[%s259 + $0xdb8] sm:$0xff]
      %v725 = vld [vmem:[%s259 + $0xdc0] sm:$0xff]
      %v726 = vld [vmem:[%s259 + $0xdc8] sm:$0xff]
      %v727 = vld [vmem:[%s259 + $0xdd0] sm:$0xff]
      %v728 = vld [vmem:[%s259 + $0xdd8] sm:$0xff]
      %v729 = vld [vmem:[%s259 + $0xde0] sm:$0xff]
      %v730 = vld [vmem:[%s259 + $0xde8] sm:$0xff]
      %v731 = vld [vmem:[%s259 + $0xdf0] sm:$0xff]
      %v732 = vld [vmem:[%s259 + $0xdf8] sm:$0xff]
      %v733 = vld [vmem:[%s259 + $0xe00] sm:$0xff]
      %v734 = vld [vmem:[%s259 + $0xe08] sm:$0xff]
      %v735 = vld [vmem:[%s259 + $0xe10] sm:$0xff]
      %v736 = vld [vmem:[%s259 + $0xe18] sm:$0xff]
      %v737 = vld [vmem:[%s259 + $0xe20] sm:$0xff]
      %v738 = vld [vmem:[%s259 + $0xe28] sm:$0xff]
      %v739 = vld [vmem:[%s259 + $0xe30] sm:$0xff]
      %v740 = vld [vmem:[%s259 + $0xe38] sm:$0xff]
      %v741 = vld [vmem:[%s259 + $0xe40] sm:$0xff]
      %v742 = vld [vmem:[%s259 + $0xe48] sm:$0xff]
      %v743 = vld [vmem:[%s259 + $0xe50] sm:$0xff]
      %v744 = vld [vmem:[%s259 + $0xe58] sm:$0xff]
      %v745 = vld [vmem:[%s259 + $0xe60] sm:$0xff]
      %v746 = vld [vmem:[%s259 + $0xe68] sm:$0xff]
      %v747 = vld [vmem:[%s259 + $0xe70] sm:$0xff]
      %v748 = vld [vmem:[%s259 + $0xe78] sm:$0xff]
      %v749 = vld [vmem:[%s259 + $0xe80] sm:$0xff]
      %v750 = vld [vmem:[%s259 + $0xe88] sm:$0xff]
      %v751 = vld [vmem:[%s259 + $0xe90] sm:$0xff]
      %v752 = vld [vmem:[%s259 + $0xe98] sm:$0xff]
      %v753 = vld [vmem:[%s259 + $0xea0] sm:$0xff]
      %v754 = vld [vmem:[%s259 + $0xea8] sm:$0xff]
      %v755 = vld [vmem:[%s259 + $0xeb0] sm:$0xff]
      %v756 = vld [vmem:[%s259 + $0xeb8] sm:$0xff]
      %v757 = vld [vmem:[%s259 + $0xec0] sm:$0xff]
      %v758 = vld [vmem:[%s259 + $0xec8] sm:$0xff]
      %v759 = vld [vmem:[%s259 + $0xed0] sm:$0xff]
      %v760 = vld [vmem:[%s259 + $0xed8] sm:$0xff]
      %v761 = vld [vmem:[%s259 + $0xee0] sm:$0xff]
      %v762 = vld [vmem:[%s259 + $0xee8] sm:$0xff]
      %v763 = vld [vmem:[%s259 + $0xef0] sm:$0xff]
      %v764 = vld [vmem:[%s259 + $0xef8] sm:$0xff]
      %v765 = vld [vmem:[%s259 + $0xf00] sm:$0xff]
      %v766 = vld [vmem:[%s259 + $0xf08] sm:$0xff]
      %v767 = vld [vmem:[%s259 + $0xf10] sm:$0xff]
      %v768 = vld [vmem:[%s259 + $0xf18] sm:$0xff]
      %v769 = vld [vmem:[%s259 + $0xf20] sm:$0xff]
      %v770 = vld [vmem:[%s259 + $0xf28] sm:$0xff]
      %v771 = vld [vmem:[%s259 + $0xf30] sm:$0xff]
      %v772 = vld [vmem:[%s259 + $0xf38] sm:$0xff]
      %v773 = vld [vmem:[%s259 + $0xf40] sm:$0xff]
      %v774 = vld [vmem:[%s259 + $0xf48] sm:$0xff]
      %v775 = vld [vmem:[%s259 + $0xf50] sm:$0xff]
      %v776 = vld [vmem:[%s259 + $0xf58] sm:$0xff]
      %v777 = vld [vmem:[%s259 + $0xf60] sm:$0xff]
      %v778 = vld [vmem:[%s259 + $0xf68] sm:$0xff]
      %v779 = vld [vmem:[%s259 + $0xf70] sm:$0xff]
      %v780 = vld [vmem:[%s259 + $0xf78] sm:$0xff]
      %v781 = vld [vmem:[%s259 + $0xf80] sm:$0xff]
      %v782 = vld [vmem:[%s259 + $0xf88] sm:$0xff]
      %v783 = vld [vmem:[%s259 + $0xf90] sm:$0xff]
      %v784 = vld [vmem:[%s259 + $0xf98] sm:$0xff]
      %v785 = vld [vmem:[%s259 + $0xfa0] sm:$0xff]
      %v786 = vld [vmem:[%s259 + $0xfa8] sm:$0xff]
      %v787 = vld [vmem:[%s259 + $0xfb0] sm:$0xff]
      %v788 = vld [vmem:[%s259 + $0xfb8] sm:$0xff]
      %v789 = vld [vmem:[%s259 + $0xfc0] sm:$0xff]
      %v790 = vld [vmem:[%s259 + $0xfc8] sm:$0xff]
      %v791 = vld [vmem:[%s259 + $0xfd0] sm:$0xff]
      %v792 = vld [vmem:[%s259 + $0xfd8] sm:$0xff]
      %v793 = vld [vmem:[%s259 + $0xfe0] sm:$0xff]
      %v794 = vld [vmem:[%s259 + $0xfe8] sm:$0xff]
      %v795 = vld [vmem:[%s259 + $0xff0] sm:$0xff]
      %v796 = vld [vmem:[%s259 + $0xff8] sm:$0xff]
      %v801 = vunpack.c.l.b16 %v281
      %v802 = vunpack.c.h.b16 %v281
      %v803 = vunpack.c.l.b16 %v282
      %v804 = vunpack.c.h.b16 %v282
      %v805 = vunpack.c.l.b16 %v283
      %v806 = vunpack.c.h.b16 %v283
      %v807 = vunpack.c.l.b16 %v284
      %v808 = vunpack.c.h.b16 %v284
      %v809 = vpack.c.b16 %v801, %v801
      %v810 = vpack.c.b16 %v802, %v802
      %v811 = vpack.c.b16 %v803, %v803
      %v812 = vpack.c.b16 %v804, %v804
      %v813 = vpack.c.b16 %v805, %v805
      %v814 = vpack.c.b16 %v806, %v806
      %v815 = vpack.c.b16 %v807, %v807
      %v816 = vpack.c.b16 %v808, %v808
      %v1337 = vunpack.c.l.b16 %v285
      %v1338 = vunpack.c.h.b16 %v285
      %v1339 = vunpack.c.l.b16 %v286
      %v1340 = vunpack.c.h.b16 %v286
      %v1341 = vunpack.c.l.b16 %v287
      %v1342 = vunpack.c.h.b16 %v287
      %v1343 = vunpack.c.l.b16 %v288
      %v1344 = vunpack.c.h.b16 %v288
      %v1345 = vunpack.c.l.b16 %v289
      %v1346 = vunpack.c.h.b16 %v289
      %v1347 = vunpack.c.l.b16 %v290
      %v1348 = vunpack.c.h.b16 %v290
      %v1349 = vunpack.c.l.b16 %v291
      %v1350 = vunpack.c.h.b16 %v291
      %v1351 = vunpack.c.l.b16 %v292
      %v1352 = vunpack.c.h.b16 %v292
      %v1353 = vunpack.c.l.b16 %v293
      %v1354 = vunpack.c.h.b16 %v293
      %v1355 = vunpack.c.l.b16 %v294
      %v1356 = vunpack.c.h.b16 %v294
      %v1357 = vunpack.c.l.b16 %v295
      %v1358 = vunpack.c.h.b16 %v295
      %v1359 = vunpack.c.l.b16 %v296
      %v1360 = vunpack.c.h.b16 %v296
      %v1361 = vunpack.c.l.b16 %v297
      %v1362 = vunpack.c.h.b16 %v297
      %v1363 = vunpack.c.l.b16 %v298
      %v1364 = vunpack.c.h.b16 %v298
      %v1365 = vunpack.c.l.b16 %v299
      %v1366 = vunpack.c.h.b16 %v299
      %v1367 = vunpack.c.l.b16 %v300
      %v1368 = vunpack.c.h.b16 %v300
      %v1369 = vunpack.c.l.b16 %v301
      %v1370 = vunpack.c.h.b16 %v301
      %v1371 = vunpack.c.l.b16 %v302
      %v1372 = vunpack.c.h.b16 %v302
      %v1373 = vunpack.c.l.b16 %v303
      %v1374 = vunpack.c.h.b16 %v303
      %v1375 = vunpack.c.l.b16 %v304
      %v1376 = vunpack.c.h.b16 %v304
      %v1377 = vunpack.c.l.b16 %v305
      %v1378 = vunpack.c.h.b16 %v305
      %v1379 = vunpack.c.l.b16 %v306
      %v1380 = vunpack.c.h.b16 %v306
      %v1381 = vunpack.c.l.b16 %v307
      %v1382 = vunpack.c.h.b16 %v307
      %v1383 = vunpack.c.l.b16 %v308
      %v1384 = vunpack.c.h.b16 %v308
      %v1385 = vunpack.c.l.b16 %v309
      %v1386 = vunpack.c.h.b16 %v309
      %v1387 = vunpack.c.l.b16 %v310
      %v1388 = vunpack.c.h.b16 %v310
      %v1389 = vunpack.c.l.b16 %v311
      %v1390 = vunpack.c.h.b16 %v311
      %v1391 = vunpack.c.l.b16 %v312
      %v1392 = vunpack.c.h.b16 %v312
      %v1393 = vunpack.c.l.b16 %v313
      %v1394 = vunpack.c.h.b16 %v313
      %v1395 = vunpack.c.l.b16 %v314
      %v1396 = vunpack.c.h.b16 %v314
      %v1397 = vunpack.c.l.b16 %v315
      %v1398 = vunpack.c.h.b16 %v315
      %v1399 = vunpack.c.l.b16 %v316
      %v1400 = vunpack.c.h.b16 %v316
      %v1401 = vunpack.c.l.b16 %v317
      %v1402 = vunpack.c.h.b16 %v317
      %v1403 = vunpack.c.l.b16 %v318
      %v1404 = vunpack.c.h.b16 %v318
      %v1405 = vunpack.c.l.b16 %v319
      %v1406 = vunpack.c.h.b16 %v319
      %v1407 = vunpack.c.l.b16 %v320
      %v1408 = vunpack.c.h.b16 %v320
      %v1409 = vunpack.c.l.b16 %v321
      %v1410 = vunpack.c.h.b16 %v321
      %v1411 = vunpack.c.l.b16 %v322
      %v1412 = vunpack.c.h.b16 %v322
      %v1413 = vunpack.c.l.b16 %v323
      %v1414 = vunpack.c.h.b16 %v323
      %v1415 = vunpack.c.l.b16 %v324
      %v1416 = vunpack.c.h.b16 %v324
      %v1417 = vunpack.c.l.b16 %v325
      %v1418 = vunpack.c.h.b16 %v325
      %v1419 = vunpack.c.l.b16 %v326
      %v1420 = vunpack.c.h.b16 %v326
      %v1421 = vunpack.c.l.b16 %v327
      %v1422 = vunpack.c.h.b16 %v327
      %v1423 = vunpack.c.l.b16 %v328
      %v1424 = vunpack.c.h.b16 %v328
      %v1425 = vunpack.c.l.b16 %v329
      %v1426 = vunpack.c.h.b16 %v329
      %v1427 = vunpack.c.l.b16 %v330
      %v1428 = vunpack.c.h.b16 %v330
      %v1429 = vunpack.c.l.b16 %v331
      %v1430 = vunpack.c.h.b16 %v331
      %v1431 = vunpack.c.l.b16 %v332
      %v1432 = vunpack.c.h.b16 %v332
      %v1433 = vunpack.c.l.b16 %v333
      %v1434 = vunpack.c.h.b16 %v333
      %v1435 = vunpack.c.l.b16 %v334
      %v1436 = vunpack.c.h.b16 %v334
      %v1437 = vunpack.c.l.b16 %v335
      %v1438 = vunpack.c.h.b16 %v335
      %v1439 = vunpack.c.l.b16 %v336
      %v1440 = vunpack.c.h.b16 %v336
      %v1441 = vunpack.c.l.b16 %v337
      %v1442 = vunpack.c.h.b16 %v337
      %v1443 = vunpack.c.l.b16 %v338
      %v1444 = vunpack.c.h.b16 %v338
      %v1445 = vunpack.c.l.b16 %v339
      %v1446 = vunpack.c.h.b16 %v339
      %v1447 = vunpack.c.l.b16 %v340
      %v1448 = vunpack.c.h.b16 %v340
      %v1449 = vunpack.c.l.b16 %v341
      %v1450 = vunpack.c.h.b16 %v341
      %v1451 = vunpack.c.l.b16 %v342
      %v1452 = vunpack.c.h.b16 %v342
      %v1453 = vunpack.c.l.b16 %v343
      %v1454 = vunpack.c.h.b16 %v343
      %v1455 = vunpack.c.l.b16 %v344
      %v1456 = vunpack.c.h.b16 %v344
      %v1457 = vunpack.c.l.b16 %v345
      %v1458 = vunpack.c.h.b16 %v345
      %v1459 = vunpack.c.l.b16 %v346
      %v1460 = vunpack.c.h.b16 %v346
      %v1461 = vunpack.c.l.b16 %v347
      %v1462 = vunpack.c.h.b16 %v347
      %v1463 = vunpack.c.l.b16 %v348
      %v1464 = vunpack.c.h.b16 %v348
      %v1465 = vunpack.c.l.b16 %v349
      %v1466 = vunpack.c.h.b16 %v349
      %v1467 = vunpack.c.l.b16 %v350
      %v1468 = vunpack.c.h.b16 %v350
      %v1469 = vunpack.c.l.b16 %v351
      %v1470 = vunpack.c.h.b16 %v351
      %v1471 = vunpack.c.l.b16 %v352
      %v1472 = vunpack.c.h.b16 %v352
      %v1473 = vunpack.c.l.b16 %v353
      %v1474 = vunpack.c.h.b16 %v353
      %v1475 = vunpack.c.l.b16 %v354
      %v1476 = vunpack.c.h.b16 %v354
      %v1477 = vunpack.c.l.b16 %v355
      %v1478 = vunpack.c.h.b16 %v355
      %v1479 = vunpack.c.l.b16 %v356
      %v1480 = vunpack.c.h.b16 %v356
      %v1481 = vunpack.c.l.b16 %v357
      %v1482 = vunpack.c.h.b16 %v357
      %v1483 = vunpack.c.l.b16 %v358
      %v1484 = vunpack.c.h.b16 %v358
      %v1485 = vunpack.c.l.b16 %v359
      %v1486 = vunpack.c.h.b16 %v359
      %v1487 = vunpack.c.l.b16 %v360
      %v1488 = vunpack.c.h.b16 %v360
      %v1489 = vunpack.c.l.b16 %v361
      %v1490 = vunpack.c.h.b16 %v361
      %v1491 = vunpack.c.l.b16 %v362
      %v1492 = vunpack.c.h.b16 %v362
      %v1493 = vunpack.c.l.b16 %v363
      %v1494 = vunpack.c.h.b16 %v363
      %v1495 = vunpack.c.l.b16 %v364
      %v1496 = vunpack.c.h.b16 %v364
      %v1497 = vunpack.c.l.b16 %v365
      %v1498 = vunpack.c.h.b16 %v365
      %v1499 = vunpack.c.l.b16 %v366
      %v1500 = vunpack.c.h.b16 %v366
      %v1501 = vunpack.c.l.b16 %v367
      %v1502 = vunpack.c.h.b16 %v367
      %v1503 = vunpack.c.l.b16 %v368
      %v1504 = vunpack.c.h.b16 %v368
      %v1505 = vunpack.c.l.b16 %v369
      %v1506 = vunpack.c.h.b16 %v369
      %v1507 = vunpack.c.l.b16 %v370
      %v1508 = vunpack.c.h.b16 %v370
      %v1509 = vunpack.c.l.b16 %v371
      %v1510 = vunpack.c.h.b16 %v371
      %v1511 = vunpack.c.l.b16 %v372
      %v1512 = vunpack.c.h.b16 %v372
      %v1513 = vunpack.c.l.b16 %v373
      %v1514 = vunpack.c.h.b16 %v373
      %v1515 = vunpack.c.l.b16 %v374
      %v1516 = vunpack.c.h.b16 %v374
      %v1517 = vunpack.c.l.b16 %v375
      %v1518 = vunpack.c.h.b16 %v375
      %v1519 = vunpack.c.l.b16 %v376
      %v1520 = vunpack.c.h.b16 %v376
      %v1521 = vunpack.c.l.b16 %v377
      %v1522 = vunpack.c.h.b16 %v377
      %v1523 = vunpack.c.l.b16 %v378
      %v1524 = vunpack.c.h.b16 %v378
      %v1525 = vunpack.c.l.b16 %v379
      %v1526 = vunpack.c.h.b16 %v379
      %v1527 = vunpack.c.l.b16 %v380
      %v1528 = vunpack.c.h.b16 %v380
      %v1529 = vunpack.c.l.b16 %v381
      %v1530 = vunpack.c.h.b16 %v381
      %v1531 = vunpack.c.l.b16 %v382
      %v1532 = vunpack.c.h.b16 %v382
      %v1533 = vunpack.c.l.b16 %v383
      %v1534 = vunpack.c.h.b16 %v383
      %v1535 = vunpack.c.l.b16 %v384
      %v1536 = vunpack.c.h.b16 %v384
      %v1537 = vunpack.c.l.b16 %v385
      %v1538 = vunpack.c.h.b16 %v385
      %v1539 = vunpack.c.l.b16 %v386
      %v1540 = vunpack.c.h.b16 %v386
      %v1541 = vunpack.c.l.b16 %v387
      %v1542 = vunpack.c.h.b16 %v387
      %v1543 = vunpack.c.l.b16 %v388
      %v1544 = vunpack.c.h.b16 %v388
      %v1545 = vunpack.c.l.b16 %v389
      %v1546 = vunpack.c.h.b16 %v389
      %v1547 = vunpack.c.l.b16 %v390
      %v1548 = vunpack.c.h.b16 %v390
      %v1549 = vunpack.c.l.b16 %v391
      %v1550 = vunpack.c.h.b16 %v391
      %v1551 = vunpack.c.l.b16 %v392
      %v1552 = vunpack.c.h.b16 %v392
      %v1553 = vunpack.c.l.b16 %v393
      %v1554 = vunpack.c.h.b16 %v393
      %v1555 = vunpack.c.l.b16 %v394
      %v1556 = vunpack.c.h.b16 %v394
      %v1557 = vunpack.c.l.b16 %v395
      %v1558 = vunpack.c.h.b16 %v395
      %v1559 = vunpack.c.l.b16 %v396
      %v1560 = vunpack.c.h.b16 %v396
      %v1561 = vunpack.c.l.b16 %v397
      %v1562 = vunpack.c.h.b16 %v397
      %v1563 = vunpack.c.l.b16 %v398
      %v1564 = vunpack.c.h.b16 %v398
      %v1565 = vunpack.c.l.b16 %v399
      %v1566 = vunpack.c.h.b16 %v399
      %v1567 = vunpack.c.l.b16 %v400
      %v1568 = vunpack.c.h.b16 %v400
      %v1569 = vunpack.c.l.b16 %v401
      %v1570 = vunpack.c.h.b16 %v401
      %v1571 = vunpack.c.l.b16 %v402
      %v1572 = vunpack.c.h.b16 %v402
      %v1573 = vunpack.c.l.b16 %v403
      %v1574 = vunpack.c.h.b16 %v403
      %v1575 = vunpack.c.l.b16 %v404
      %v1576 = vunpack.c.h.b16 %v404
      %v1577 = vunpack.c.l.b16 %v405
      %v1578 = vunpack.c.h.b16 %v405
      %v1579 = vunpack.c.l.b16 %v406
      %v1580 = vunpack.c.h.b16 %v406
      %v1581 = vunpack.c.l.b16 %v407
      %v1582 = vunpack.c.h.b16 %v407
      %v1583 = vunpack.c.l.b16 %v408
      %v1584 = vunpack.c.h.b16 %v408
      %v1585 = vunpack.c.l.b16 %v409
      %v1586 = vunpack.c.h.b16 %v409
      %v1587 = vunpack.c.l.b16 %v410
      %v1588 = vunpack.c.h.b16 %v410
      %v1589 = vunpack.c.l.b16 %v411
      %v1590 = vunpack.c.h.b16 %v411
      %v1591 = vunpack.c.l.b16 %v412
      %v1592 = vunpack.c.h.b16 %v412
      %v1593 = vunpack.c.l.b16 %v413
      %v1594 = vunpack.c.h.b16 %v413
      %v1595 = vunpack.c.l.b16 %v414
      %v1596 = vunpack.c.h.b16 %v414
      %v1597 = vunpack.c.l.b16 %v415
      %v1598 = vunpack.c.h.b16 %v415
      %v1599 = vunpack.c.l.b16 %v416
      %v1600 = vunpack.c.h.b16 %v416
      %v1601 = vunpack.c.l.b16 %v417
      %v1602 = vunpack.c.h.b16 %v417
      %v1603 = vunpack.c.l.b16 %v418
      %v1604 = vunpack.c.h.b16 %v418
      %v1605 = vunpack.c.l.b16 %v419
      %v1606 = vunpack.c.h.b16 %v419
      %v1607 = vunpack.c.l.b16 %v420
      %v1608 = vunpack.c.h.b16 %v420
      %v1609 = vunpack.c.l.b16 %v421
      %v1610 = vunpack.c.h.b16 %v421
      %v1611 = vunpack.c.l.b16 %v422
      %v1612 = vunpack.c.h.b16 %v422
      %v1613 = vunpack.c.l.b16 %v423
      %v1614 = vunpack.c.h.b16 %v423
      %v1615 = vunpack.c.l.b16 %v424
      %v1616 = vunpack.c.h.b16 %v424
      %v1617 = vunpack.c.l.b16 %v425
      %v1618 = vunpack.c.h.b16 %v425
      %v1619 = vunpack.c.l.b16 %v426
      %v1620 = vunpack.c.h.b16 %v426
      %v1621 = vunpack.c.l.b16 %v427
      %v1622 = vunpack.c.h.b16 %v427
      %v1623 = vunpack.c.l.b16 %v428
      %v1624 = vunpack.c.h.b16 %v428
      %v1625 = vunpack.c.l.b16 %v429
      %v1626 = vunpack.c.h.b16 %v429
      %v1627 = vunpack.c.l.b16 %v430
      %v1628 = vunpack.c.h.b16 %v430
      %v1629 = vunpack.c.l.b16 %v431
      %v1630 = vunpack.c.h.b16 %v431
      %v1631 = vunpack.c.l.b16 %v432
      %v1632 = vunpack.c.h.b16 %v432
      %v1633 = vunpack.c.l.b16 %v433
      %v1634 = vunpack.c.h.b16 %v433
      %v1635 = vunpack.c.l.b16 %v434
      %v1636 = vunpack.c.h.b16 %v434
      %v1637 = vunpack.c.l.b16 %v435
      %v1638 = vunpack.c.h.b16 %v435
      %v1639 = vunpack.c.l.b16 %v436
      %v1640 = vunpack.c.h.b16 %v436
      %v1641 = vunpack.c.l.b16 %v437
      %v1642 = vunpack.c.h.b16 %v437
      %v1643 = vunpack.c.l.b16 %v438
      %v1644 = vunpack.c.h.b16 %v438
      %v1645 = vunpack.c.l.b16 %v439
      %v1646 = vunpack.c.h.b16 %v439
      %v1647 = vunpack.c.l.b16 %v440
      %v1648 = vunpack.c.h.b16 %v440
      %v1649 = vunpack.c.l.b16 %v441
      %v1650 = vunpack.c.h.b16 %v441
      %v1651 = vunpack.c.l.b16 %v442
      %v1652 = vunpack.c.h.b16 %v442
      %v1653 = vunpack.c.l.b16 %v443
      %v1654 = vunpack.c.h.b16 %v443
      %v1655 = vunpack.c.l.b16 %v444
      %v1656 = vunpack.c.h.b16 %v444
      %v1657 = vunpack.c.l.b16 %v445
      %v1658 = vunpack.c.h.b16 %v445
      %v1659 = vunpack.c.l.b16 %v446
      %v1660 = vunpack.c.h.b16 %v446
      %v1661 = vunpack.c.l.b16 %v447
      %v1662 = vunpack.c.h.b16 %v447
      %v1663 = vunpack.c.l.b16 %v448
      %v1664 = vunpack.c.h.b16 %v448
      %v1665 = vunpack.c.l.b16 %v449
      %v1666 = vunpack.c.h.b16 %v449
      %v1667 = vunpack.c.l.b16 %v450
      %v1668 = vunpack.c.h.b16 %v450
      %v1669 = vunpack.c.l.b16 %v451
      %v1670 = vunpack.c.h.b16 %v451
      %v1671 = vunpack.c.l.b16 %v452
      %v1672 = vunpack.c.h.b16 %v452
      %v1673 = vunpack.c.l.b16 %v453
      %v1674 = vunpack.c.h.b16 %v453
      %v1675 = vunpack.c.l.b16 %v454
      %v1676 = vunpack.c.h.b16 %v454
      %v1677 = vunpack.c.l.b16 %v455
      %v1678 = vunpack.c.h.b16 %v455
      %v1679 = vunpack.c.l.b16 %v456
      %v1680 = vunpack.c.h.b16 %v456
      %v1681 = vunpack.c.l.b16 %v457
      %v1682 = vunpack.c.h.b16 %v457
      %v1683 = vunpack.c.l.b16 %v458
      %v1684 = vunpack.c.h.b16 %v458
      %v1685 = vunpack.c.l.b16 %v459
      %v1686 = vunpack.c.h.b16 %v459
      %v1687 = vunpack.c.l.b16 %v460
      %v1688 = vunpack.c.h.b16 %v460
      %v1689 = vunpack.c.l.b16 %v461
      %v1690 = vunpack.c.h.b16 %v461
      %v1691 = vunpack.c.l.b16 %v462
      %v1692 = vunpack.c.h.b16 %v462
      %v1693 = vunpack.c.l.b16 %v463
      %v1694 = vunpack.c.h.b16 %v463
      %v1695 = vunpack.c.l.b16 %v464
      %v1696 = vunpack.c.h.b16 %v464
      %v1697 = vunpack.c.l.b16 %v465
      %v1698 = vunpack.c.h.b16 %v465
      %v1699 = vunpack.c.l.b16 %v466
      %v1700 = vunpack.c.h.b16 %v466
      %v1701 = vunpack.c.l.b16 %v467
      %v1702 = vunpack.c.h.b16 %v467
      %v1703 = vunpack.c.l.b16 %v468
      %v1704 = vunpack.c.h.b16 %v468
      %v1705 = vunpack.c.l.b16 %v469
      %v1706 = vunpack.c.h.b16 %v469
      %v1707 = vunpack.c.l.b16 %v470
      %v1708 = vunpack.c.h.b16 %v470
      %v1709 = vunpack.c.l.b16 %v471
      %v1710 = vunpack.c.h.b16 %v471
      %v1711 = vunpack.c.l.b16 %v472
      %v1712 = vunpack.c.h.b16 %v472
      %v1713 = vunpack.c.l.b16 %v473
      %v1714 = vunpack.c.h.b16 %v473
      %v1715 = vunpack.c.l.b16 %v474
      %v1716 = vunpack.c.h.b16 %v474
      %v1717 = vunpack.c.l.b16 %v475
      %v1718 = vunpack.c.h.b16 %v475
      %v1719 = vunpack.c.l.b16 %v476
      %v1720 = vunpack.c.h.b16 %v476
      %v1721 = vunpack.c.l.b16 %v477
      %v1722 = vunpack.c.h.b16 %v477
      %v1723 = vunpack.c.l.b16 %v478
      %v1724 = vunpack.c.h.b16 %v478
      %v1725 = vunpack.c.l.b16 %v479
      %v1726 = vunpack.c.h.b16 %v479
      %v1727 = vunpack.c.l.b16 %v480
      %v1728 = vunpack.c.h.b16 %v480
      %v1729 = vunpack.c.l.b16 %v481
      %v1730 = vunpack.c.h.b16 %v481
      %v1731 = vunpack.c.l.b16 %v482
      %v1732 = vunpack.c.h.b16 %v482
      %v1733 = vunpack.c.l.b16 %v483
      %v1734 = vunpack.c.h.b16 %v483
      %v1735 = vunpack.c.l.b16 %v484
      %v1736 = vunpack.c.h.b16 %v484
      %v1737 = vunpack.c.l.b16 %v485
      %v1738 = vunpack.c.h.b16 %v485
      %v1739 = vunpack.c.l.b16 %v486
      %v1740 = vunpack.c.h.b16 %v486
      %v1741 = vunpack.c.l.b16 %v487
      %v1742 = vunpack.c.h.b16 %v487
      %v1743 = vunpack.c.l.b16 %v488
      %v1744 = vunpack.c.h.b16 %v488
      %v1745 = vunpack.c.l.b16 %v489
      %v1746 = vunpack.c.h.b16 %v489
      %v1747 = vunpack.c.l.b16 %v490
      %v1748 = vunpack.c.h.b16 %v490
      %v1749 = vunpack.c.l.b16 %v491
      %v1750 = vunpack.c.h.b16 %v491
      %v1751 = vunpack.c.l.b16 %v492
      %v1752 = vunpack.c.h.b16 %v492
      %v1753 = vunpack.c.l.b16 %v493
      %v1754 = vunpack.c.h.b16 %v493
      %v1755 = vunpack.c.l.b16 %v494
      %v1756 = vunpack.c.h.b16 %v494
      %v1757 = vunpack.c.l.b16 %v495
      %v1758 = vunpack.c.h.b16 %v495
      %v1759 = vunpack.c.l.b16 %v496
      %v1760 = vunpack.c.h.b16 %v496
      %v1761 = vunpack.c.l.b16 %v497
      %v1762 = vunpack.c.h.b16 %v497
      %v1763 = vunpack.c.l.b16 %v498
      %v1764 = vunpack.c.h.b16 %v498
      %v1765 = vunpack.c.l.b16 %v499
      %v1766 = vunpack.c.h.b16 %v499
      %v1767 = vunpack.c.l.b16 %v500
      %v1768 = vunpack.c.h.b16 %v500
      %v1769 = vunpack.c.l.b16 %v501
      %v1770 = vunpack.c.h.b16 %v501
      %v1771 = vunpack.c.l.b16 %v502
      %v1772 = vunpack.c.h.b16 %v502
      %v1773 = vunpack.c.l.b16 %v503
      %v1774 = vunpack.c.h.b16 %v503
      %v1775 = vunpack.c.l.b16 %v504
      %v1776 = vunpack.c.h.b16 %v504
      %v1777 = vunpack.c.l.b16 %v505
      %v1778 = vunpack.c.h.b16 %v505
      %v1779 = vunpack.c.l.b16 %v506
      %v1780 = vunpack.c.h.b16 %v506
      %v1781 = vunpack.c.l.b16 %v507
      %v1782 = vunpack.c.h.b16 %v507
      %v1783 = vunpack.c.l.b16 %v508
      %v1784 = vunpack.c.h.b16 %v508
      %v1785 = vunpack.c.l.b16 %v509
      %v1786 = vunpack.c.h.b16 %v509
      %v1787 = vunpack.c.l.b16 %v510
      %v1788 = vunpack.c.h.b16 %v510
      %v1789 = vunpack.c.l.b16 %v511
      %v1790 = vunpack.c.h.b16 %v511
      %v1791 = vunpack.c.l.b16 %v512
      %v1792 = vunpack.c.h.b16 %v512
      %v1793 = vunpack.c.l.b16 %v513
      %v1794 = vunpack.c.h.b16 %v513
      %v1795 = vunpack.c.l.b16 %v514
      %v1796 = vunpack.c.h.b16 %v514
      %v1797 = vunpack.c.l.b16 %v515
      %v1798 = vunpack.c.h.b16 %v515
      %v1799 = vunpack.c.l.b16 %v516
      %v1800 = vunpack.c.h.b16 %v516
      %v1801 = vunpack.c.l.b16 %v517
      %v1802 = vunpack.c.h.b16 %v517
      %v1803 = vunpack.c.l.b16 %v518
      %v1804 = vunpack.c.h.b16 %v518
      %v1805 = vunpack.c.l.b16 %v519
      %v1806 = vunpack.c.h.b16 %v519
      %v1807 = vunpack.c.l.b16 %v520
      %v1808 = vunpack.c.h.b16 %v520
      %v1809 = vunpack.c.l.b16 %v521
      %v1810 = vunpack.c.h.b16 %v521
      %v1811 = vunpack.c.l.b16 %v522
      %v1812 = vunpack.c.h.b16 %v522
      %v1813 = vunpack.c.l.b16 %v523
      %v1814 = vunpack.c.h.b16 %v523
      %v1815 = vunpack.c.l.b16 %v524
      %v1816 = vunpack.c.h.b16 %v524
      %v1817 = vunpack.c.l.b16 %v525
      %v1818 = vunpack.c.h.b16 %v525
      %v1819 = vunpack.c.l.b16 %v526
      %v1820 = vunpack.c.h.b16 %v526
      %v1821 = vunpack.c.l.b16 %v527
      %v1822 = vunpack.c.h.b16 %v527
      %v1823 = vunpack.c.l.b16 %v528
      %v1824 = vunpack.c.h.b16 %v528
      %v1825 = vunpack.c.l.b16 %v529
      %v1826 = vunpack.c.h.b16 %v529
      %v1827 = vunpack.c.l.b16 %v530
      %v1828 = vunpack.c.h.b16 %v530
      %v1829 = vunpack.c.l.b16 %v531
      %v1830 = vunpack.c.h.b16 %v531
      %v1831 = vunpack.c.l.b16 %v532
      %v1832 = vunpack.c.h.b16 %v532
      %v1833 = vunpack.c.l.b16 %v533
      %v1834 = vunpack.c.h.b16 %v533
      %v1835 = vunpack.c.l.b16 %v534
      %v1836 = vunpack.c.h.b16 %v534
      %v1837 = vunpack.c.l.b16 %v535
      %v1838 = vunpack.c.h.b16 %v535
      %v1839 = vunpack.c.l.b16 %v536
      %v1840 = vunpack.c.h.b16 %v536
      %v1841 = vunpack.c.l.b16 %v537
      %v1842 = vunpack.c.h.b16 %v537
      %v1843 = vunpack.c.l.b16 %v538
      %v1844 = vunpack.c.h.b16 %v538
      %v1845 = vunpack.c.l.b16 %v539
      %v1846 = vunpack.c.h.b16 %v539
      %v1847 = vunpack.c.l.b16 %v540
      %v1848 = vunpack.c.h.b16 %v540
      %v1849 = vunpack.c.l.b16 %v541
      %v1850 = vunpack.c.h.b16 %v541
      %v1851 = vunpack.c.l.b16 %v542
      %v1852 = vunpack.c.h.b16 %v542
      %v1853 = vunpack.c.l.b16 %v543
      %v1854 = vunpack.c.h.b16 %v543
      %v1855 = vunpack.c.l.b16 %v544
      %v1856 = vunpack.c.h.b16 %v544
      %v1857 = vunpack.c.l.b16 %v545
      %v1858 = vunpack.c.h.b16 %v545
      %v1859 = vunpack.c.l.b16 %v546
      %v1860 = vunpack.c.h.b16 %v546
      %v1861 = vunpack.c.l.b16 %v547
      %v1862 = vunpack.c.h.b16 %v547
      %v1863 = vunpack.c.l.b16 %v548
      %v1864 = vunpack.c.h.b16 %v548
      %v1865 = vunpack.c.l.b16 %v549
      %v1866 = vunpack.c.h.b16 %v549
      %v1867 = vunpack.c.l.b16 %v550
      %v1868 = vunpack.c.h.b16 %v550
      %v1869 = vunpack.c.l.b16 %v551
      %v1870 = vunpack.c.h.b16 %v551
      %v1871 = vunpack.c.l.b16 %v552
      %v1872 = vunpack.c.h.b16 %v552
      %v1873 = vunpack.c.l.b16 %v553
      %v1874 = vunpack.c.h.b16 %v553
      %v1875 = vunpack.c.l.b16 %v554
      %v1876 = vunpack.c.h.b16 %v554
      %v1877 = vunpack.c.l.b16 %v555
      %v1878 = vunpack.c.h.b16 %v555
      %v1879 = vunpack.c.l.b16 %v556
      %v1880 = vunpack.c.h.b16 %v556
      %v1881 = vunpack.c.l.b16 %v557
      %v1882 = vunpack.c.h.b16 %v557
      %v1883 = vunpack.c.l.b16 %v558
      %v1884 = vunpack.c.h.b16 %v558
      %v1885 = vunpack.c.l.b16 %v559
      %v1886 = vunpack.c.h.b16 %v559
      %v1887 = vunpack.c.l.b16 %v560
      %v1888 = vunpack.c.h.b16 %v560
      %v1889 = vunpack.c.l.b16 %v561
      %v1890 = vunpack.c.h.b16 %v561
      %v1891 = vunpack.c.l.b16 %v562
      %v1892 = vunpack.c.h.b16 %v562
      %v1893 = vunpack.c.l.b16 %v563
      %v1894 = vunpack.c.h.b16 %v563
      %v1895 = vunpack.c.l.b16 %v564
      %v1896 = vunpack.c.h.b16 %v564
      %v1897 = vunpack.c.l.b16 %v565
      %v1898 = vunpack.c.h.b16 %v565
      %v1899 = vunpack.c.l.b16 %v566
      %v1900 = vunpack.c.h.b16 %v566
      %v1901 = vunpack.c.l.b16 %v567
      %v1902 = vunpack.c.h.b16 %v567
      %v1903 = vunpack.c.l.b16 %v568
      %v1904 = vunpack.c.h.b16 %v568
      %v1905 = vunpack.c.l.b16 %v569
      %v1906 = vunpack.c.h.b16 %v569
      %v1907 = vunpack.c.l.b16 %v570
      %v1908 = vunpack.c.h.b16 %v570
      %v1909 = vunpack.c.l.b16 %v571
      %v1910 = vunpack.c.h.b16 %v571
      %v1911 = vunpack.c.l.b16 %v572
      %v1912 = vunpack.c.h.b16 %v572
      %v1913 = vunpack.c.l.b16 %v573
      %v1914 = vunpack.c.h.b16 %v573
      %v1915 = vunpack.c.l.b16 %v574
      %v1916 = vunpack.c.h.b16 %v574
      %v1917 = vunpack.c.l.b16 %v575
      %v1918 = vunpack.c.h.b16 %v575
      %v1919 = vunpack.c.l.b16 %v576
      %v1920 = vunpack.c.h.b16 %v576
      %v1921 = vunpack.c.l.b16 %v577
      %v1922 = vunpack.c.h.b16 %v577
      %v1923 = vunpack.c.l.b16 %v578
      %v1924 = vunpack.c.h.b16 %v578
      %v1925 = vunpack.c.l.b16 %v579
      %v1926 = vunpack.c.h.b16 %v579
      %v1927 = vunpack.c.l.b16 %v580
      %v1928 = vunpack.c.h.b16 %v580
      %v1929 = vunpack.c.l.b16 %v581
      %v1930 = vunpack.c.h.b16 %v581
      %v1931 = vunpack.c.l.b16 %v582
      %v1932 = vunpack.c.h.b16 %v582
      %v1933 = vunpack.c.l.b16 %v583
      %v1934 = vunpack.c.h.b16 %v583
      %v1935 = vunpack.c.l.b16 %v584
      %v1936 = vunpack.c.h.b16 %v584
      %v1937 = vunpack.c.l.b16 %v585
      %v1938 = vunpack.c.h.b16 %v585
      %v1939 = vunpack.c.l.b16 %v586
      %v1940 = vunpack.c.h.b16 %v586
      %v1941 = vunpack.c.l.b16 %v587
      %v1942 = vunpack.c.h.b16 %v587
      %v1943 = vunpack.c.l.b16 %v588
      %v1944 = vunpack.c.h.b16 %v588
      %v1945 = vunpack.c.l.b16 %v589
      %v1946 = vunpack.c.h.b16 %v589
      %v1947 = vunpack.c.l.b16 %v590
      %v1948 = vunpack.c.h.b16 %v590
      %v1949 = vunpack.c.l.b16 %v591
      %v1950 = vunpack.c.h.b16 %v591
      %v1951 = vunpack.c.l.b16 %v592
      %v1952 = vunpack.c.h.b16 %v592
      %v1953 = vunpack.c.l.b16 %v593
      %v1954 = vunpack.c.h.b16 %v593
      %v1955 = vunpack.c.l.b16 %v594
      %v1956 = vunpack.c.h.b16 %v594
      %v1957 = vunpack.c.l.b16 %v595
      %v1958 = vunpack.c.h.b16 %v595
      %v1959 = vunpack.c.l.b16 %v596
      %v1960 = vunpack.c.h.b16 %v596
      %v1961 = vunpack.c.l.b16 %v597
      %v1962 = vunpack.c.h.b16 %v597
      %v1963 = vunpack.c.l.b16 %v598
      %v1964 = vunpack.c.h.b16 %v598
      %v1965 = vunpack.c.l.b16 %v599
      %v1966 = vunpack.c.h.b16 %v599
      %v1967 = vunpack.c.l.b16 %v600
      %v1968 = vunpack.c.h.b16 %v600
      %v1969 = vunpack.c.l.b16 %v601
      %v1970 = vunpack.c.h.b16 %v601
      %v1971 = vunpack.c.l.b16 %v602
      %v1972 = vunpack.c.h.b16 %v602
      %v1973 = vunpack.c.l.b16 %v603
      %v1974 = vunpack.c.h.b16 %v603
      %v1975 = vunpack.c.l.b16 %v604
      %v1976 = vunpack.c.h.b16 %v604
      %v1977 = vunpack.c.l.b16 %v605
      %v1978 = vunpack.c.h.b16 %v605
      %v1979 = vunpack.c.l.b16 %v606
      %v1980 = vunpack.c.h.b16 %v606
      %v1981 = vunpack.c.l.b16 %v607
      %v1982 = vunpack.c.h.b16 %v607
      %v1983 = vunpack.c.l.b16 %v608
      %v1984 = vunpack.c.h.b16 %v608
      %v1985 = vunpack.c.l.b16 %v609
      %v1986 = vunpack.c.h.b16 %v609
      %v1987 = vunpack.c.l.b16 %v610
      %v1988 = vunpack.c.h.b16 %v610
      %v1989 = vunpack.c.l.b16 %v611
      %v1990 = vunpack.c.h.b16 %v611
      %v1991 = vunpack.c.l.b16 %v612
      %v1992 = vunpack.c.h.b16 %v612
      %v1993 = vunpack.c.l.b16 %v613
      %v1994 = vunpack.c.h.b16 %v613
      %v1995 = vunpack.c.l.b16 %v614
      %v1996 = vunpack.c.h.b16 %v614
      %v1997 = vunpack.c.l.b16 %v615
      %v1998 = vunpack.c.h.b16 %v615
      %v1999 = vunpack.c.l.b16 %v616
      %v2000 = vunpack.c.h.b16 %v616
      %v2001 = vunpack.c.l.b16 %v617
      %v2002 = vunpack.c.h.b16 %v617
      %v2003 = vunpack.c.l.b16 %v618
      %v2004 = vunpack.c.h.b16 %v618
      %v2005 = vunpack.c.l.b16 %v619
      %v2006 = vunpack.c.h.b16 %v619
      %v2007 = vunpack.c.l.b16 %v620
      %v2008 = vunpack.c.h.b16 %v620
      %v2009 = vunpack.c.l.b16 %v621
      %v2010 = vunpack.c.h.b16 %v621
      %v2011 = vunpack.c.l.b16 %v622
      %v2012 = vunpack.c.h.b16 %v622
      %v2013 = vunpack.c.l.b16 %v623
      %v2014 = vunpack.c.h.b16 %v623
      %v2015 = vunpack.c.l.b16 %v624
      %v2016 = vunpack.c.h.b16 %v624
      %v2017 = vunpack.c.l.b16 %v625
      %v2018 = vunpack.c.h.b16 %v625
      %v2019 = vunpack.c.l.b16 %v626
      %v2020 = vunpack.c.h.b16 %v626
      %v2021 = vunpack.c.l.b16 %v627
      %v2022 = vunpack.c.h.b16 %v627
      %v2023 = vunpack.c.l.b16 %v628
      %v2024 = vunpack.c.h.b16 %v628
      %v2025 = vunpack.c.l.b16 %v629
      %v2026 = vunpack.c.h.b16 %v629
      %v2027 = vunpack.c.l.b16 %v630
      %v2028 = vunpack.c.h.b16 %v630
      %v2029 = vunpack.c.l.b16 %v631
      %v2030 = vunpack.c.h.b16 %v631
      %v2031 = vunpack.c.l.b16 %v632
      %v2032 = vunpack.c.h.b16 %v632
      %v2033 = vunpack.c.l.b16 %v633
      %v2034 = vunpack.c.h.b16 %v633
      %v2035 = vunpack.c.l.b16 %v634
      %v2036 = vunpack.c.h.b16 %v634
      %v2037 = vunpack.c.l.b16 %v635
      %v2038 = vunpack.c.h.b16 %v635
      %v2039 = vunpack.c.l.b16 %v636
      %v2040 = vunpack.c.h.b16 %v636
      %v2041 = vunpack.c.l.b16 %v637
      %v2042 = vunpack.c.h.b16 %v637
      %v2043 = vunpack.c.l.b16 %v638
      %v2044 = vunpack.c.h.b16 %v638
      %v2045 = vunpack.c.l.b16 %v639
      %v2046 = vunpack.c.h.b16 %v639
      %v2047 = vunpack.c.l.b16 %v640
      %v2048 = vunpack.c.h.b16 %v640
      %v2049 = vunpack.c.l.b16 %v641
      %v2050 = vunpack.c.h.b16 %v641
      %v2051 = vunpack.c.l.b16 %v642
      %v2052 = vunpack.c.h.b16 %v642
      %v2053 = vunpack.c.l.b16 %v643
      %v2054 = vunpack.c.h.b16 %v643
      %v2055 = vunpack.c.l.b16 %v644
      %v2056 = vunpack.c.h.b16 %v644
      %v2057 = vunpack.c.l.b16 %v645
      %v2058 = vunpack.c.h.b16 %v645
      %v2059 = vunpack.c.l.b16 %v646
      %v2060 = vunpack.c.h.b16 %v646
      %v2061 = vunpack.c.l.b16 %v647
      %v2062 = vunpack.c.h.b16 %v647
      %v2063 = vunpack.c.l.b16 %v648
      %v2064 = vunpack.c.h.b16 %v648
      %v2065 = vunpack.c.l.b16 %v649
      %v2066 = vunpack.c.h.b16 %v649
      %v2067 = vunpack.c.l.b16 %v650
      %v2068 = vunpack.c.h.b16 %v650
      %v2069 = vunpack.c.l.b16 %v651
      %v2070 = vunpack.c.h.b16 %v651
      %v2071 = vunpack.c.l.b16 %v652
      %v2072 = vunpack.c.h.b16 %v652
      %v2073 = vunpack.c.l.b16 %v653
      %v2074 = vunpack.c.h.b16 %v653
      %v2075 = vunpack.c.l.b16 %v654
      %v2076 = vunpack.c.h.b16 %v654
      %v2077 = vunpack.c.l.b16 %v655
      %v2078 = vunpack.c.h.b16 %v655
      %v2079 = vunpack.c.l.b16 %v656
      %v2080 = vunpack.c.h.b16 %v656
      %v2081 = vunpack.c.l.b16 %v657
      %v2082 = vunpack.c.h.b16 %v657
      %v2083 = vunpack.c.l.b16 %v658
      %v2084 = vunpack.c.h.b16 %v658
      %v2085 = vunpack.c.l.b16 %v659
      %v2086 = vunpack.c.h.b16 %v659
      %v2087 = vunpack.c.l.b16 %v660
      %v2088 = vunpack.c.h.b16 %v660
      %v2089 = vunpack.c.l.b16 %v661
      %v2090 = vunpack.c.h.b16 %v661
      %v2091 = vunpack.c.l.b16 %v662
      %v2092 = vunpack.c.h.b16 %v662
      %v2093 = vunpack.c.l.b16 %v663
      %v2094 = vunpack.c.h.b16 %v663
      %v2095 = vunpack.c.l.b16 %v664
      %v2096 = vunpack.c.h.b16 %v664
      %v2097 = vunpack.c.l.b16 %v665
      %v2098 = vunpack.c.h.b16 %v665
      %v2099 = vunpack.c.l.b16 %v666
      %v2100 = vunpack.c.h.b16 %v666
      %v2101 = vunpack.c.l.b16 %v667
      %v2102 = vunpack.c.h.b16 %v667
      %v2103 = vunpack.c.l.b16 %v668
      %v2104 = vunpack.c.h.b16 %v668
      %v2105 = vunpack.c.l.b16 %v669
      %v2106 = vunpack.c.h.b16 %v669
      %v2107 = vunpack.c.l.b16 %v670
      %v2108 = vunpack.c.h.b16 %v670
      %v2109 = vunpack.c.l.b16 %v671
      %v2110 = vunpack.c.h.b16 %v671
      %v2111 = vunpack.c.l.b16 %v672
      %v2112 = vunpack.c.h.b16 %v672
      %v2113 = vunpack.c.l.b16 %v673
      %v2114 = vunpack.c.h.b16 %v673
      %v2115 = vunpack.c.l.b16 %v674
      %v2116 = vunpack.c.h.b16 %v674
      %v2117 = vunpack.c.l.b16 %v675
      %v2118 = vunpack.c.h.b16 %v675
      %v2119 = vunpack.c.l.b16 %v676
      %v2120 = vunpack.c.h.b16 %v676
      %v2121 = vunpack.c.l.b16 %v677
      %v2122 = vunpack.c.h.b16 %v677
      %v2123 = vunpack.c.l.b16 %v678
      %v2124 = vunpack.c.h.b16 %v678
      %v2125 = vunpack.c.l.b16 %v679
      %v2126 = vunpack.c.h.b16 %v679
      %v2127 = vunpack.c.l.b16 %v680
      %v2128 = vunpack.c.h.b16 %v680
      %v2129 = vunpack.c.l.b16 %v681
      %v2130 = vunpack.c.h.b16 %v681
      %v2131 = vunpack.c.l.b16 %v682
      %v2132 = vunpack.c.h.b16 %v682
      %v2133 = vunpack.c.l.b16 %v683
      %v2134 = vunpack.c.h.b16 %v683
      %v2135 = vunpack.c.l.b16 %v684
      %v2136 = vunpack.c.h.b16 %v684
      %v2137 = vunpack.c.l.b16 %v685
      %v2138 = vunpack.c.h.b16 %v685
      %v2139 = vunpack.c.l.b16 %v686
      %v2140 = vunpack.c.h.b16 %v686
      %v2141 = vunpack.c.l.b16 %v687
      %v2142 = vunpack.c.h.b16 %v687
      %v2143 = vunpack.c.l.b16 %v688
      %v2144 = vunpack.c.h.b16 %v688
      %v2145 = vunpack.c.l.b16 %v689
      %v2146 = vunpack.c.h.b16 %v689
      %v2147 = vunpack.c.l.b16 %v690
      %v2148 = vunpack.c.h.b16 %v690
      %v2149 = vunpack.c.l.b16 %v691
      %v2150 = vunpack.c.h.b16 %v691
      %v2151 = vunpack.c.l.b16 %v692
      %v2152 = vunpack.c.h.b16 %v692
      %v2153 = vunpack.c.l.b16 %v693
      %v2154 = vunpack.c.h.b16 %v693
      %v2155 = vunpack.c.l.b16 %v694
      %v2156 = vunpack.c.h.b16 %v694
      %v2157 = vunpack.c.l.b16 %v695
      %v2158 = vunpack.c.h.b16 %v695
      %v2159 = vunpack.c.l.b16 %v696
      %v2160 = vunpack.c.h.b16 %v696
      %v2161 = vunpack.c.l.b16 %v697
      %v2162 = vunpack.c.h.b16 %v697
      %v2163 = vunpack.c.l.b16 %v698
      %v2164 = vunpack.c.h.b16 %v698
      %v2165 = vunpack.c.l.b16 %v699
      %v2166 = vunpack.c.h.b16 %v699
      %v2167 = vunpack.c.l.b16 %v700
      %v2168 = vunpack.c.h.b16 %v700
      %v2169 = vunpack.c.l.b16 %v701
      %v2170 = vunpack.c.h.b16 %v701
      %v2171 = vunpack.c.l.b16 %v702
      %v2172 = vunpack.c.h.b16 %v702
      %v2173 = vunpack.c.l.b16 %v703
      %v2174 = vunpack.c.h.b16 %v703
      %v2175 = vunpack.c.l.b16 %v704
      %v2176 = vunpack.c.h.b16 %v704
      %v2177 = vunpack.c.l.b16 %v705
      %v2178 = vunpack.c.h.b16 %v705
      %v2179 = vunpack.c.l.b16 %v706
      %v2180 = vunpack.c.h.b16 %v706
      %v2181 = vunpack.c.l.b16 %v707
      %v2182 = vunpack.c.h.b16 %v707
      %v2183 = vunpack.c.l.b16 %v708
      %v2184 = vunpack.c.h.b16 %v708
      %v2185 = vunpack.c.l.b16 %v709
      %v2186 = vunpack.c.h.b16 %v709
      %v2187 = vunpack.c.l.b16 %v710
      %v2188 = vunpack.c.h.b16 %v710
      %v2189 = vunpack.c.l.b16 %v711
      %v2190 = vunpack.c.h.b16 %v711
      %v2191 = vunpack.c.l.b16 %v712
      %v2192 = vunpack.c.h.b16 %v712
      %v2193 = vunpack.c.l.b16 %v713
      %v2194 = vunpack.c.h.b16 %v713
      %v2195 = vunpack.c.l.b16 %v714
      %v2196 = vunpack.c.h.b16 %v714
      %v2197 = vunpack.c.l.b16 %v715
      %v2198 = vunpack.c.h.b16 %v715
      %v2199 = vunpack.c.l.b16 %v716
      %v2200 = vunpack.c.h.b16 %v716
      %v2201 = vunpack.c.l.b16 %v717
      %v2202 = vunpack.c.h.b16 %v717
      %v2203 = vunpack.c.l.b16 %v718
      %v2204 = vunpack.c.h.b16 %v718
      %v2205 = vunpack.c.l.b16 %v719
      %v2206 = vunpack.c.h.b16 %v719
      %v2207 = vunpack.c.l.b16 %v720
      %v2208 = vunpack.c.h.b16 %v720
      %v2209 = vunpack.c.l.b16 %v721
      %v2210 = vunpack.c.h.b16 %v721
      %v2211 = vunpack.c.l.b16 %v722
      %v2212 = vunpack.c.h.b16 %v722
      %v2213 = vunpack.c.l.b16 %v723
      %v2214 = vunpack.c.h.b16 %v723
      %v2215 = vunpack.c.l.b16 %v724
      %v2216 = vunpack.c.h.b16 %v724
      %v2217 = vunpack.c.l.b16 %v725
      %v2218 = vunpack.c.h.b16 %v725
      %v2219 = vunpack.c.l.b16 %v726
      %v2220 = vunpack.c.h.b16 %v726
      %v2221 = vunpack.c.l.b16 %v727
      %v2222 = vunpack.c.h.b16 %v727
      %v2223 = vunpack.c.l.b16 %v728
      %v2224 = vunpack.c.h.b16 %v728
      %v2225 = vunpack.c.l.b16 %v729
      %v2226 = vunpack.c.h.b16 %v729
      %v2227 = vunpack.c.l.b16 %v730
      %v2228 = vunpack.c.h.b16 %v730
      %v2229 = vunpack.c.l.b16 %v731
      %v2230 = vunpack.c.h.b16 %v731
      %v2231 = vunpack.c.l.b16 %v732
      %v2232 = vunpack.c.h.b16 %v732
      %v2233 = vunpack.c.l.b16 %v733
      %v2234 = vunpack.c.h.b16 %v733
      %v2235 = vunpack.c.l.b16 %v734
      %v2236 = vunpack.c.h.b16 %v734
      %v2237 = vunpack.c.l.b16 %v735
      %v2238 = vunpack.c.h.b16 %v735
      %v2239 = vunpack.c.l.b16 %v736
      %v2240 = vunpack.c.h.b16 %v736
      %v2241 = vunpack.c.l.b16 %v737
      %v2242 = vunpack.c.h.b16 %v737
      %v2243 = vunpack.c.l.b16 %v738
      %v2244 = vunpack.c.h.b16 %v738
      %v2245 = vunpack.c.l.b16 %v739
      %v2246 = vunpack.c.h.b16 %v739
      %v2247 = vunpack.c.l.b16 %v740
      %v2248 = vunpack.c.h.b16 %v740
      %v2249 = vunpack.c.l.b16 %v741
      %v2250 = vunpack.c.h.b16 %v741
      %v2251 = vunpack.c.l.b16 %v742
      %v2252 = vunpack.c.h.b16 %v742
      %v2253 = vunpack.c.l.b16 %v743
      %v2254 = vunpack.c.h.b16 %v743
      %v2255 = vunpack.c.l.b16 %v744
      %v2256 = vunpack.c.h.b16 %v744
      %v2257 = vunpack.c.l.b16 %v745
      %v2258 = vunpack.c.h.b16 %v745
      %v2259 = vunpack.c.l.b16 %v746
      %v2260 = vunpack.c.h.b16 %v746
      %v2261 = vunpack.c.l.b16 %v747
      %v2262 = vunpack.c.h.b16 %v747
      %v2263 = vunpack.c.l.b16 %v748
      %v2264 = vunpack.c.h.b16 %v748
      %v2265 = vunpack.c.l.b16 %v749
      %v2266 = vunpack.c.h.b16 %v749
      %v2267 = vunpack.c.l.b16 %v750
      %v2268 = vunpack.c.h.b16 %v750
      %v2269 = vunpack.c.l.b16 %v751
      %v2270 = vunpack.c.h.b16 %v751
      %v2271 = vunpack.c.l.b16 %v752
      %v2272 = vunpack.c.h.b16 %v752
      %v2273 = vunpack.c.l.b16 %v753
      %v2274 = vunpack.c.h.b16 %v753
      %v2275 = vunpack.c.l.b16 %v754
      %v2276 = vunpack.c.h.b16 %v754
      %v2277 = vunpack.c.l.b16 %v755
      %v2278 = vunpack.c.h.b16 %v755
      %v2279 = vunpack.c.l.b16 %v756
      %v2280 = vunpack.c.h.b16 %v756
      %v2281 = vunpack.c.l.b16 %v757
      %v2282 = vunpack.c.h.b16 %v757
      %v2283 = vunpack.c.l.b16 %v758
      %v2284 = vunpack.c.h.b16 %v758
      %v2285 = vunpack.c.l.b16 %v759
      %v2286 = vunpack.c.h.b16 %v759
      %v2287 = vunpack.c.l.b16 %v760
      %v2288 = vunpack.c.h.b16 %v760
      %v2289 = vunpack.c.l.b16 %v761
      %v2290 = vunpack.c.h.b16 %v761
      %v2291 = vunpack.c.l.b16 %v762
      %v2292 = vunpack.c.h.b16 %v762
      %v2293 = vunpack.c.l.b16 %v763
      %v2294 = vunpack.c.h.b16 %v763
      %v2295 = vunpack.c.l.b16 %v764
      %v2296 = vunpack.c.h.b16 %v764
      %v2297 = vunpack.c.l.b16 %v765
      %v2298 = vunpack.c.h.b16 %v765
      %v2299 = vunpack.c.l.b16 %v766
      %v2300 = vunpack.c.h.b16 %v766
      %v2301 = vunpack.c.l.b16 %v767
      %v2302 = vunpack.c.h.b16 %v767
      %v2303 = vunpack.c.l.b16 %v768
      %v2304 = vunpack.c.h.b16 %v768
      %v2305 = vunpack.c.l.b16 %v769
      %v2306 = vunpack.c.h.b16 %v769
      %v2307 = vunpack.c.l.b16 %v770
      %v2308 = vunpack.c.h.b16 %v770
      %v2309 = vunpack.c.l.b16 %v771
      %v2310 = vunpack.c.h.b16 %v771
      %v2311 = vunpack.c.l.b16 %v772
      %v2312 = vunpack.c.h.b16 %v772
      %v2313 = vunpack.c.l.b16 %v773
      %v2314 = vunpack.c.h.b16 %v773
      %v2315 = vunpack.c.l.b16 %v774
      %v2316 = vunpack.c.h.b16 %v774
      %v2317 = vunpack.c.l.b16 %v775
      %v2318 = vunpack.c.h.b16 %v775
      %v2319 = vunpack.c.l.b16 %v776
      %v2320 = vunpack.c.h.b16 %v776
      %v2321 = vunpack.c.l.b16 %v777
      %v2322 = vunpack.c.h.b16 %v777
      %v2323 = vunpack.c.l.b16 %v778
      %v2324 = vunpack.c.h.b16 %v778
      %v2325 = vunpack.c.l.b16 %v779
      %v2326 = vunpack.c.h.b16 %v779
      %v2327 = vunpack.c.l.b16 %v780
      %v2328 = vunpack.c.h.b16 %v780
      %v2329 = vunpack.c.l.b16 %v781
      %v2330 = vunpack.c.h.b16 %v781
      %v2331 = vunpack.c.l.b16 %v782
      %v2332 = vunpack.c.h.b16 %v782
      %v2333 = vunpack.c.l.b16 %v783
      %v2334 = vunpack.c.h.b16 %v783
      %v2335 = vunpack.c.l.b16 %v784
      %v2336 = vunpack.c.h.b16 %v784
      %v2337 = vunpack.c.l.b16 %v785
      %v2338 = vunpack.c.h.b16 %v785
      %v2339 = vunpack.c.l.b16 %v786
      %v2340 = vunpack.c.h.b16 %v786
      %v2341 = vunpack.c.l.b16 %v787
      %v2342 = vunpack.c.h.b16 %v787
      %v2343 = vunpack.c.l.b16 %v788
      %v2344 = vunpack.c.h.b16 %v788
      %v2345 = vunpack.c.l.b16 %v789
      %v2346 = vunpack.c.h.b16 %v789
      %v2347 = vunpack.c.l.b16 %v790
      %v2348 = vunpack.c.h.b16 %v790
      %v2349 = vunpack.c.l.b16 %v791
      %v2350 = vunpack.c.h.b16 %v791
      %v2351 = vunpack.c.l.b16 %v792
      %v2352 = vunpack.c.h.b16 %v792
      %v2353 = vunpack.c.l.b16 %v793
      %v2354 = vunpack.c.h.b16 %v793
      %v2355 = vunpack.c.l.b16 %v794
      %v2356 = vunpack.c.h.b16 %v794
      %v2357 = vunpack.c.l.b16 %v795
      %v2358 = vunpack.c.h.b16 %v795
      %v2359 = vunpack.c.l.b16 %v796
      %v2360 = vunpack.c.h.b16 %v796
      %v2361 = vpack.c.b16 %v1345, %v1337
      %v2362 = vpack.c.b16 %v1346, %v1338
      %v2363 = vpack.c.b16 %v1347, %v1339
      %v2364 = vpack.c.b16 %v1348, %v1340
      %v2365 = vpack.c.b16 %v1349, %v1341
      %v2366 = vpack.c.b16 %v1350, %v1342
      %v2367 = vpack.c.b16 %v1351, %v1343
      %v2368 = vpack.c.b16 %v1352, %v1344
      %v2369 = vpack.c.b16 %v1361, %v1353
      %v2370 = vpack.c.b16 %v1362, %v1354
      %v2371 = vpack.c.b16 %v1363, %v1355
      %v2372 = vpack.c.b16 %v1364, %v1356
      %v2373 = vpack.c.b16 %v1365, %v1357
      %v2374 = vpack.c.b16 %v1366, %v1358
      %v2375 = vpack.c.b16 %v1367, %v1359
      %v2376 = vpack.c.b16 %v1368, %v1360
      %v2377 = vpack.c.b16 %v1377, %v1369
      %v2378 = vpack.c.b16 %v1378, %v1370
      %v2379 = vpack.c.b16 %v1379, %v1371
      %v2380 = vpack.c.b16 %v1380, %v1372
      %v2381 = vpack.c.b16 %v1381, %v1373
      %v2382 = vpack.c.b16 %v1382, %v1374
      %v2383 = vpack.c.b16 %v1383, %v1375
      %v2384 = vpack.c.b16 %v1384, %v1376
      %v2385 = vpack.c.b16 %v1393, %v1385
      %v2386 = vpack.c.b16 %v1394, %v1386
      %v2387 = vpack.c.b16 %v1395, %v1387
      %v2388 = vpack.c.b16 %v1396, %v1388
      %v2389 = vpack.c.b16 %v1397, %v1389
      %v2390 = vpack.c.b16 %v1398, %v1390
      %v2391 = vpack.c.b16 %v1399, %v1391
      %v2392 = vpack.c.b16 %v1400, %v1392
      %v2393 = vpack.c.b16 %v1409, %v1401
      %v2394 = vpack.c.b16 %v1410, %v1402
      %v2395 = vpack.c.b16 %v1411, %v1403
      %v2396 = vpack.c.b16 %v1412, %v1404
      %v2397 = vpack.c.b16 %v1413, %v1405
      %v2398 = vpack.c.b16 %v1414, %v1406
      %v2399 = vpack.c.b16 %v1415, %v1407
      %v2400 = vpack.c.b16 %v1416, %v1408
      %v2401 = vpack.c.b16 %v1425, %v1417
      %v2402 = vpack.c.b16 %v1426, %v1418
      %v2403 = vpack.c.b16 %v1427, %v1419
      %v2404 = vpack.c.b16 %v1428, %v1420
      %v2405 = vpack.c.b16 %v1429, %v1421
      %v2406 = vpack.c.b16 %v1430, %v1422
      %v2407 = vpack.c.b16 %v1431, %v1423
      %v2408 = vpack.c.b16 %v1432, %v1424
      %v2409 = vpack.c.b16 %v1441, %v1433
      %v2410 = vpack.c.b16 %v1442, %v1434
      %v2411 = vpack.c.b16 %v1443, %v1435
      %v2412 = vpack.c.b16 %v1444, %v1436
      %v2413 = vpack.c.b16 %v1445, %v1437
      %v2414 = vpack.c.b16 %v1446, %v1438
      %v2415 = vpack.c.b16 %v1447, %v1439
      %v2416 = vpack.c.b16 %v1448, %v1440
      %v2417 = vpack.c.b16 %v1457, %v1449
      %v2418 = vpack.c.b16 %v1458, %v1450
      %v2419 = vpack.c.b16 %v1459, %v1451
      %v2420 = vpack.c.b16 %v1460, %v1452
      %v2421 = vpack.c.b16 %v1461, %v1453
      %v2422 = vpack.c.b16 %v1462, %v1454
      %v2423 = vpack.c.b16 %v1463, %v1455
      %v2424 = vpack.c.b16 %v1464, %v1456
      %v2425 = vpack.c.b16 %v1473, %v1465
      %v2426 = vpack.c.b16 %v1474, %v1466
      %v2427 = vpack.c.b16 %v1475, %v1467
      %v2428 = vpack.c.b16 %v1476, %v1468
      %v2429 = vpack.c.b16 %v1477, %v1469
      %v2430 = vpack.c.b16 %v1478, %v1470
      %v2431 = vpack.c.b16 %v1479, %v1471
      %v2432 = vpack.c.b16 %v1480, %v1472
      %v2433 = vpack.c.b16 %v1489, %v1481
      %v2434 = vpack.c.b16 %v1490, %v1482
      %v2435 = vpack.c.b16 %v1491, %v1483
      %v2436 = vpack.c.b16 %v1492, %v1484
      %v2437 = vpack.c.b16 %v1493, %v1485
      %v2438 = vpack.c.b16 %v1494, %v1486
      %v2439 = vpack.c.b16 %v1495, %v1487
      %v2440 = vpack.c.b16 %v1496, %v1488
      %v2441 = vpack.c.b16 %v1505, %v1497
      %v2442 = vpack.c.b16 %v1506, %v1498
      %v2443 = vpack.c.b16 %v1507, %v1499
      %v2444 = vpack.c.b16 %v1508, %v1500
      %v2445 = vpack.c.b16 %v1509, %v1501
      %v2446 = vpack.c.b16 %v1510, %v1502
      %v2447 = vpack.c.b16 %v1511, %v1503
      %v2448 = vpack.c.b16 %v1512, %v1504
      %v2449 = vpack.c.b16 %v1521, %v1513
      %v2450 = vpack.c.b16 %v1522, %v1514
      %v2451 = vpack.c.b16 %v1523, %v1515
      %v2452 = vpack.c.b16 %v1524, %v1516
      %v2453 = vpack.c.b16 %v1525, %v1517
      %v2454 = vpack.c.b16 %v1526, %v1518
      %v2455 = vpack.c.b16 %v1527, %v1519
      %v2456 = vpack.c.b16 %v1528, %v1520
      %v2457 = vpack.c.b16 %v1537, %v1529
      %v2458 = vpack.c.b16 %v1538, %v1530
      %v2459 = vpack.c.b16 %v1539, %v1531
      %v2460 = vpack.c.b16 %v1540, %v1532
      %v2461 = vpack.c.b16 %v1541, %v1533
      %v2462 = vpack.c.b16 %v1542, %v1534
      %v2463 = vpack.c.b16 %v1543, %v1535
      %v2464 = vpack.c.b16 %v1544, %v1536
      %v2465 = vpack.c.b16 %v1553, %v1545
      %v2466 = vpack.c.b16 %v1554, %v1546
      %v2467 = vpack.c.b16 %v1555, %v1547
      %v2468 = vpack.c.b16 %v1556, %v1548
      %v2469 = vpack.c.b16 %v1557, %v1549
      %v2470 = vpack.c.b16 %v1558, %v1550
      %v2471 = vpack.c.b16 %v1559, %v1551
      %v2472 = vpack.c.b16 %v1560, %v1552
      %v2473 = vpack.c.b16 %v1569, %v1561
      %v2474 = vpack.c.b16 %v1570, %v1562
      %v2475 = vpack.c.b16 %v1571, %v1563
      %v2476 = vpack.c.b16 %v1572, %v1564
      %v2477 = vpack.c.b16 %v1573, %v1565
      %v2478 = vpack.c.b16 %v1574, %v1566
      %v2479 = vpack.c.b16 %v1575, %v1567
      %v2480 = vpack.c.b16 %v1576, %v1568
      %v2481 = vpack.c.b16 %v1585, %v1577
      %v2482 = vpack.c.b16 %v1586, %v1578
      %v2483 = vpack.c.b16 %v1587, %v1579
      %v2484 = vpack.c.b16 %v1588, %v1580
      %v2485 = vpack.c.b16 %v1589, %v1581
      %v2486 = vpack.c.b16 %v1590, %v1582
      %v2487 = vpack.c.b16 %v1591, %v1583
      %v2488 = vpack.c.b16 %v1592, %v1584
      %v2489 = vpack.c.b16 %v1601, %v1593
      %v2490 = vpack.c.b16 %v1602, %v1594
      %v2491 = vpack.c.b16 %v1603, %v1595
      %v2492 = vpack.c.b16 %v1604, %v1596
      %v2493 = vpack.c.b16 %v1605, %v1597
      %v2494 = vpack.c.b16 %v1606, %v1598
      %v2495 = vpack.c.b16 %v1607, %v1599
      %v2496 = vpack.c.b16 %v1608, %v1600
      %v2497 = vpack.c.b16 %v1617, %v1609
      %v2498 = vpack.c.b16 %v1618, %v1610
      %v2499 = vpack.c.b16 %v1619, %v1611
      %v2500 = vpack.c.b16 %v1620, %v1612
      %v2501 = vpack.c.b16 %v1621, %v1613
      %v2502 = vpack.c.b16 %v1622, %v1614
      %v2503 = vpack.c.b16 %v1623, %v1615
      %v2504 = vpack.c.b16 %v1624, %v1616
      %v2505 = vpack.c.b16 %v1633, %v1625
      %v2506 = vpack.c.b16 %v1634, %v1626
      %v2507 = vpack.c.b16 %v1635, %v1627
      %v2508 = vpack.c.b16 %v1636, %v1628
      %v2509 = vpack.c.b16 %v1637, %v1629
      %v2510 = vpack.c.b16 %v1638, %v1630
      %v2511 = vpack.c.b16 %v1639, %v1631
      %v2512 = vpack.c.b16 %v1640, %v1632
      %v2513 = vpack.c.b16 %v1649, %v1641
      %v2514 = vpack.c.b16 %v1650, %v1642
      %v2515 = vpack.c.b16 %v1651, %v1643
      %v2516 = vpack.c.b16 %v1652, %v1644
      %v2517 = vpack.c.b16 %v1653, %v1645
      %v2518 = vpack.c.b16 %v1654, %v1646
      %v2519 = vpack.c.b16 %v1655, %v1647
      %v2520 = vpack.c.b16 %v1656, %v1648
      %v2521 = vpack.c.b16 %v1665, %v1657
      %v2522 = vpack.c.b16 %v1666, %v1658
      %v2523 = vpack.c.b16 %v1667, %v1659
      %v2524 = vpack.c.b16 %v1668, %v1660
      %v2525 = vpack.c.b16 %v1669, %v1661
      %v2526 = vpack.c.b16 %v1670, %v1662
      %v2527 = vpack.c.b16 %v1671, %v1663
      %v2528 = vpack.c.b16 %v1672, %v1664
      %v2529 = vpack.c.b16 %v1681, %v1673
      %v2530 = vpack.c.b16 %v1682, %v1674
      %v2531 = vpack.c.b16 %v1683, %v1675
      %v2532 = vpack.c.b16 %v1684, %v1676
      %v2533 = vpack.c.b16 %v1685, %v1677
      %v2534 = vpack.c.b16 %v1686, %v1678
      %v2535 = vpack.c.b16 %v1687, %v1679
      %v2536 = vpack.c.b16 %v1688, %v1680
      %v2537 = vpack.c.b16 %v1697, %v1689
      %v2538 = vpack.c.b16 %v1698, %v1690
      %v2539 = vpack.c.b16 %v1699, %v1691
      %v2540 = vpack.c.b16 %v1700, %v1692
      %v2541 = vpack.c.b16 %v1701, %v1693
      %v2542 = vpack.c.b16 %v1702, %v1694
      %v2543 = vpack.c.b16 %v1703, %v1695
      %v2544 = vpack.c.b16 %v1704, %v1696
      %v2545 = vpack.c.b16 %v1713, %v1705
      %v2546 = vpack.c.b16 %v1714, %v1706
      %v2547 = vpack.c.b16 %v1715, %v1707
      %v2548 = vpack.c.b16 %v1716, %v1708
      %v2549 = vpack.c.b16 %v1717, %v1709
      %v2550 = vpack.c.b16 %v1718, %v1710
      %v2551 = vpack.c.b16 %v1719, %v1711
      %v2552 = vpack.c.b16 %v1720, %v1712
      %v2553 = vpack.c.b16 %v1729, %v1721
      %v2554 = vpack.c.b16 %v1730, %v1722
      %v2555 = vpack.c.b16 %v1731, %v1723
      %v2556 = vpack.c.b16 %v1732, %v1724
      %v2557 = vpack.c.b16 %v1733, %v1725
      %v2558 = vpack.c.b16 %v1734, %v1726
      %v2559 = vpack.c.b16 %v1735, %v1727
      %v2560 = vpack.c.b16 %v1736, %v1728
      %v2561 = vpack.c.b16 %v1745, %v1737
      %v2562 = vpack.c.b16 %v1746, %v1738
      %v2563 = vpack.c.b16 %v1747, %v1739
      %v2564 = vpack.c.b16 %v1748, %v1740
      %v2565 = vpack.c.b16 %v1749, %v1741
      %v2566 = vpack.c.b16 %v1750, %v1742
      %v2567 = vpack.c.b16 %v1751, %v1743
      %v2568 = vpack.c.b16 %v1752, %v1744
      %v2569 = vpack.c.b16 %v1761, %v1753
      %v2570 = vpack.c.b16 %v1762, %v1754
      %v2571 = vpack.c.b16 %v1763, %v1755
      %v2572 = vpack.c.b16 %v1764, %v1756
      %v2573 = vpack.c.b16 %v1765, %v1757
      %v2574 = vpack.c.b16 %v1766, %v1758
      %v2575 = vpack.c.b16 %v1767, %v1759
      %v2576 = vpack.c.b16 %v1768, %v1760
      %v2577 = vpack.c.b16 %v1777, %v1769
      %v2578 = vpack.c.b16 %v1778, %v1770
      %v2579 = vpack.c.b16 %v1779, %v1771
      %v2580 = vpack.c.b16 %v1780, %v1772
      %v2581 = vpack.c.b16 %v1781, %v1773
      %v2582 = vpack.c.b16 %v1782, %v1774
      %v2583 = vpack.c.b16 %v1783, %v1775
      %v2584 = vpack.c.b16 %v1784, %v1776
      %v2585 = vpack.c.b16 %v1793, %v1785
      %v2586 = vpack.c.b16 %v1794, %v1786
      %v2587 = vpack.c.b16 %v1795, %v1787
      %v2588 = vpack.c.b16 %v1796, %v1788
      %v2589 = vpack.c.b16 %v1797, %v1789
      %v2590 = vpack.c.b16 %v1798, %v1790
      %v2591 = vpack.c.b16 %v1799, %v1791
      %v2592 = vpack.c.b16 %v1800, %v1792
      %v2593 = vpack.c.b16 %v1809, %v1801
      %v2594 = vpack.c.b16 %v1810, %v1802
      %v2595 = vpack.c.b16 %v1811, %v1803
      %v2596 = vpack.c.b16 %v1812, %v1804
      %v2597 = vpack.c.b16 %v1813, %v1805
      %v2598 = vpack.c.b16 %v1814, %v1806
      %v2599 = vpack.c.b16 %v1815, %v1807
      %v2600 = vpack.c.b16 %v1816, %v1808
      %v2601 = vpack.c.b16 %v1825, %v1817
      %v2602 = vpack.c.b16 %v1826, %v1818
      %v2603 = vpack.c.b16 %v1827, %v1819
      %v2604 = vpack.c.b16 %v1828, %v1820
      %v2605 = vpack.c.b16 %v1829, %v1821
      %v2606 = vpack.c.b16 %v1830, %v1822
      %v2607 = vpack.c.b16 %v1831, %v1823
      %v2608 = vpack.c.b16 %v1832, %v1824
      %v2609 = vpack.c.b16 %v1841, %v1833
      %v2610 = vpack.c.b16 %v1842, %v1834
      %v2611 = vpack.c.b16 %v1843, %v1835
      %v2612 = vpack.c.b16 %v1844, %v1836
      %v2613 = vpack.c.b16 %v1845, %v1837
      %v2614 = vpack.c.b16 %v1846, %v1838
      %v2615 = vpack.c.b16 %v1847, %v1839
      %v2616 = vpack.c.b16 %v1848, %v1840
      %v2617 = vpack.c.b16 %v1857, %v1849
      %v2618 = vpack.c.b16 %v1858, %v1850
      %v2619 = vpack.c.b16 %v1859, %v1851
      %v2620 = vpack.c.b16 %v1860, %v1852
      %v2621 = vpack.c.b16 %v1861, %v1853
      %v2622 = vpack.c.b16 %v1862, %v1854
      %v2623 = vpack.c.b16 %v1863, %v1855
      %v2624 = vpack.c.b16 %v1864, %v1856
      %v2625 = vpack.c.b16 %v1873, %v1865
      %v2626 = vpack.c.b16 %v1874, %v1866
      %v2627 = vpack.c.b16 %v1875, %v1867
      %v2628 = vpack.c.b16 %v1876, %v1868
      %v2629 = vpack.c.b16 %v1877, %v1869
      %v2630 = vpack.c.b16 %v1878, %v1870
      %v2631 = vpack.c.b16 %v1879, %v1871
      %v2632 = vpack.c.b16 %v1880, %v1872
      %v2633 = vpack.c.b16 %v1889, %v1881
      %v2634 = vpack.c.b16 %v1890, %v1882
      %v2635 = vpack.c.b16 %v1891, %v1883
      %v2636 = vpack.c.b16 %v1892, %v1884
      %v2637 = vpack.c.b16 %v1893, %v1885
      %v2638 = vpack.c.b16 %v1894, %v1886
      %v2639 = vpack.c.b16 %v1895, %v1887
      %v2640 = vpack.c.b16 %v1896, %v1888
      %v2641 = vpack.c.b16 %v1905, %v1897
      %v2642 = vpack.c.b16 %v1906, %v1898
      %v2643 = vpack.c.b16 %v1907, %v1899
      %v2644 = vpack.c.b16 %v1908, %v1900
      %v2645 = vpack.c.b16 %v1909, %v1901
      %v2646 = vpack.c.b16 %v1910, %v1902
      %v2647 = vpack.c.b16 %v1911, %v1903
      %v2648 = vpack.c.b16 %v1912, %v1904
      %v2649 = vpack.c.b16 %v1921, %v1913
      %v2650 = vpack.c.b16 %v1922, %v1914
      %v2651 = vpack.c.b16 %v1923, %v1915
      %v2652 = vpack.c.b16 %v1924, %v1916
      %v2653 = vpack.c.b16 %v1925, %v1917
      %v2654 = vpack.c.b16 %v1926, %v1918
      %v2655 = vpack.c.b16 %v1927, %v1919
      %v2656 = vpack.c.b16 %v1928, %v1920
      %v2657 = vpack.c.b16 %v1937, %v1929
      %v2658 = vpack.c.b16 %v1938, %v1930
      %v2659 = vpack.c.b16 %v1939, %v1931
      %v2660 = vpack.c.b16 %v1940, %v1932
      %v2661 = vpack.c.b16 %v1941, %v1933
      %v2662 = vpack.c.b16 %v1942, %v1934
      %v2663 = vpack.c.b16 %v1943, %v1935
      %v2664 = vpack.c.b16 %v1944, %v1936
      %v2665 = vpack.c.b16 %v1953, %v1945
      %v2666 = vpack.c.b16 %v1954, %v1946
      %v2667 = vpack.c.b16 %v1955, %v1947
      %v2668 = vpack.c.b16 %v1956, %v1948
      %v2669 = vpack.c.b16 %v1957, %v1949
      %v2670 = vpack.c.b16 %v1958, %v1950
      %v2671 = vpack.c.b16 %v1959, %v1951
      %v2672 = vpack.c.b16 %v1960, %v1952
      %v2673 = vpack.c.b16 %v1969, %v1961
      %v2674 = vpack.c.b16 %v1970, %v1962
      %v2675 = vpack.c.b16 %v1971, %v1963
      %v2676 = vpack.c.b16 %v1972, %v1964
      %v2677 = vpack.c.b16 %v1973, %v1965
      %v2678 = vpack.c.b16 %v1974, %v1966
      %v2679 = vpack.c.b16 %v1975, %v1967
      %v2680 = vpack.c.b16 %v1976, %v1968
      %v2681 = vpack.c.b16 %v1985, %v1977
      %v2682 = vpack.c.b16 %v1986, %v1978
      %v2683 = vpack.c.b16 %v1987, %v1979
      %v2684 = vpack.c.b16 %v1988, %v1980
      %v2685 = vpack.c.b16 %v1989, %v1981
      %v2686 = vpack.c.b16 %v1990, %v1982
      %v2687 = vpack.c.b16 %v1991, %v1983
      %v2688 = vpack.c.b16 %v1992, %v1984
      %v2689 = vpack.c.b16 %v2001, %v1993
      %v2690 = vpack.c.b16 %v2002, %v1994
      %v2691 = vpack.c.b16 %v2003, %v1995
      %v2692 = vpack.c.b16 %v2004, %v1996
      %v2693 = vpack.c.b16 %v2005, %v1997
      %v2694 = vpack.c.b16 %v2006, %v1998
      %v2695 = vpack.c.b16 %v2007, %v1999
      %v2696 = vpack.c.b16 %v2008, %v2000
      %v2697 = vpack.c.b16 %v2017, %v2009
      %v2698 = vpack.c.b16 %v2018, %v2010
      %v2699 = vpack.c.b16 %v2019, %v2011
      %v2700 = vpack.c.b16 %v2020, %v2012
      %v2701 = vpack.c.b16 %v2021, %v2013
      %v2702 = vpack.c.b16 %v2022, %v2014
      %v2703 = vpack.c.b16 %v2023, %v2015
      %v2704 = vpack.c.b16 %v2024, %v2016
      %v2705 = vpack.c.b16 %v2033, %v2025
      %v2706 = vpack.c.b16 %v2034, %v2026
      %v2707 = vpack.c.b16 %v2035, %v2027
      %v2708 = vpack.c.b16 %v2036, %v2028
      %v2709 = vpack.c.b16 %v2037, %v2029
      %v2710 = vpack.c.b16 %v2038, %v2030
      %v2711 = vpack.c.b16 %v2039, %v2031
      %v2712 = vpack.c.b16 %v2040, %v2032
      %v2713 = vpack.c.b16 %v2049, %v2041
      %v2714 = vpack.c.b16 %v2050, %v2042
      %v2715 = vpack.c.b16 %v2051, %v2043
      %v2716 = vpack.c.b16 %v2052, %v2044
      %v2717 = vpack.c.b16 %v2053, %v2045
      %v2718 = vpack.c.b16 %v2054, %v2046
      %v2719 = vpack.c.b16 %v2055, %v2047
      %v2720 = vpack.c.b16 %v2056, %v2048
      %v2721 = vpack.c.b16 %v2065, %v2057
      %v2722 = vpack.c.b16 %v2066, %v2058
      %v2723 = vpack.c.b16 %v2067, %v2059
      %v2724 = vpack.c.b16 %v2068, %v2060
      %v2725 = vpack.c.b16 %v2069, %v2061
      %v2726 = vpack.c.b16 %v2070, %v2062
      %v2727 = vpack.c.b16 %v2071, %v2063
      %v2728 = vpack.c.b16 %v2072, %v2064
      %v2729 = vpack.c.b16 %v2081, %v2073
      %v2730 = vpack.c.b16 %v2082, %v2074
      %v2731 = vpack.c.b16 %v2083, %v2075
      %v2732 = vpack.c.b16 %v2084, %v2076
      %v2733 = vpack.c.b16 %v2085, %v2077
      %v2734 = vpack.c.b16 %v2086, %v2078
      %v2735 = vpack.c.b16 %v2087, %v2079
      %v2736 = vpack.c.b16 %v2088, %v2080
      %v2737 = vpack.c.b16 %v2097, %v2089
      %v2738 = vpack.c.b16 %v2098, %v2090
      %v2739 = vpack.c.b16 %v2099, %v2091
      %v2740 = vpack.c.b16 %v2100, %v2092
      %v2741 = vpack.c.b16 %v2101, %v2093
      %v2742 = vpack.c.b16 %v2102, %v2094
      %v2743 = vpack.c.b16 %v2103, %v2095
      %v2744 = vpack.c.b16 %v2104, %v2096
      %v2745 = vpack.c.b16 %v2113, %v2105
      %v2746 = vpack.c.b16 %v2114, %v2106
      %v2747 = vpack.c.b16 %v2115, %v2107
      %v2748 = vpack.c.b16 %v2116, %v2108
      %v2749 = vpack.c.b16 %v2117, %v2109
      %v2750 = vpack.c.b16 %v2118, %v2110
      %v2751 = vpack.c.b16 %v2119, %v2111
      %v2752 = vpack.c.b16 %v2120, %v2112
      %v2753 = vpack.c.b16 %v2129, %v2121
      %v2754 = vpack.c.b16 %v2130, %v2122
      %v2755 = vpack.c.b16 %v2131, %v2123
      %v2756 = vpack.c.b16 %v2132, %v2124
      %v2757 = vpack.c.b16 %v2133, %v2125
      %v2758 = vpack.c.b16 %v2134, %v2126
      %v2759 = vpack.c.b16 %v2135, %v2127
      %v2760 = vpack.c.b16 %v2136, %v2128
      %v2761 = vpack.c.b16 %v2145, %v2137
      %v2762 = vpack.c.b16 %v2146, %v2138
      %v2763 = vpack.c.b16 %v2147, %v2139
      %v2764 = vpack.c.b16 %v2148, %v2140
      %v2765 = vpack.c.b16 %v2149, %v2141
      %v2766 = vpack.c.b16 %v2150, %v2142
      %v2767 = vpack.c.b16 %v2151, %v2143
      %v2768 = vpack.c.b16 %v2152, %v2144
      %v2769 = vpack.c.b16 %v2161, %v2153
      %v2770 = vpack.c.b16 %v2162, %v2154
      %v2771 = vpack.c.b16 %v2163, %v2155
      %v2772 = vpack.c.b16 %v2164, %v2156
      %v2773 = vpack.c.b16 %v2165, %v2157
      %v2774 = vpack.c.b16 %v2166, %v2158
      %v2775 = vpack.c.b16 %v2167, %v2159
      %v2776 = vpack.c.b16 %v2168, %v2160
      %v2777 = vpack.c.b16 %v2177, %v2169
      %v2778 = vpack.c.b16 %v2178, %v2170
      %v2779 = vpack.c.b16 %v2179, %v2171
      %v2780 = vpack.c.b16 %v2180, %v2172
      %v2781 = vpack.c.b16 %v2181, %v2173
      %v2782 = vpack.c.b16 %v2182, %v2174
      %v2783 = vpack.c.b16 %v2183, %v2175
      %v2784 = vpack.c.b16 %v2184, %v2176
      %v2785 = vpack.c.b16 %v2193, %v2185
      %v2786 = vpack.c.b16 %v2194, %v2186
      %v2787 = vpack.c.b16 %v2195, %v2187
      %v2788 = vpack.c.b16 %v2196, %v2188
      %v2789 = vpack.c.b16 %v2197, %v2189
      %v2790 = vpack.c.b16 %v2198, %v2190
      %v2791 = vpack.c.b16 %v2199, %v2191
      %v2792 = vpack.c.b16 %v2200, %v2192
      %v2793 = vpack.c.b16 %v2209, %v2201
      %v2794 = vpack.c.b16 %v2210, %v2202
      %v2795 = vpack.c.b16 %v2211, %v2203
      %v2796 = vpack.c.b16 %v2212, %v2204
      %v2797 = vpack.c.b16 %v2213, %v2205
      %v2798 = vpack.c.b16 %v2214, %v2206
      %v2799 = vpack.c.b16 %v2215, %v2207
      %v2800 = vpack.c.b16 %v2216, %v2208
      %v2801 = vpack.c.b16 %v2225, %v2217
      %v2802 = vpack.c.b16 %v2226, %v2218
      %v2803 = vpack.c.b16 %v2227, %v2219
      %v2804 = vpack.c.b16 %v2228, %v2220
      %v2805 = vpack.c.b16 %v2229, %v2221
      %v2806 = vpack.c.b16 %v2230, %v2222
      %v2807 = vpack.c.b16 %v2231, %v2223
      %v2808 = vpack.c.b16 %v2232, %v2224
      %v2809 = vpack.c.b16 %v2241, %v2233
      %v2810 = vpack.c.b16 %v2242, %v2234
      %v2811 = vpack.c.b16 %v2243, %v2235
      %v2812 = vpack.c.b16 %v2244, %v2236
      %v2813 = vpack.c.b16 %v2245, %v2237
      %v2814 = vpack.c.b16 %v2246, %v2238
      %v2815 = vpack.c.b16 %v2247, %v2239
      %v2816 = vpack.c.b16 %v2248, %v2240
      %v2817 = vpack.c.b16 %v2257, %v2249
      %v2818 = vpack.c.b16 %v2258, %v2250
      %v2819 = vpack.c.b16 %v2259, %v2251
      %v2820 = vpack.c.b16 %v2260, %v2252
      %v2821 = vpack.c.b16 %v2261, %v2253
      %v2822 = vpack.c.b16 %v2262, %v2254
      %v2823 = vpack.c.b16 %v2263, %v2255
      %v2824 = vpack.c.b16 %v2264, %v2256
      %v2825 = vpack.c.b16 %v2273, %v2265
      %v2826 = vpack.c.b16 %v2274, %v2266
      %v2827 = vpack.c.b16 %v2275, %v2267
      %v2828 = vpack.c.b16 %v2276, %v2268
      %v2829 = vpack.c.b16 %v2277, %v2269
      %v2830 = vpack.c.b16 %v2278, %v2270
      %v2831 = vpack.c.b16 %v2279, %v2271
      %v2832 = vpack.c.b16 %v2280, %v2272
      %v2833 = vpack.c.b16 %v2289, %v2281
      %v2834 = vpack.c.b16 %v2290, %v2282
      %v2835 = vpack.c.b16 %v2291, %v2283
      %v2836 = vpack.c.b16 %v2292, %v2284
      %v2837 = vpack.c.b16 %v2293, %v2285
      %v2838 = vpack.c.b16 %v2294, %v2286
      %v2839 = vpack.c.b16 %v2295, %v2287
      %v2840 = vpack.c.b16 %v2296, %v2288
      %v2841 = vpack.c.b16 %v2305, %v2297
      %v2842 = vpack.c.b16 %v2306, %v2298
      %v2843 = vpack.c.b16 %v2307, %v2299
      %v2844 = vpack.c.b16 %v2308, %v2300
      %v2845 = vpack.c.b16 %v2309, %v2301
      %v2846 = vpack.c.b16 %v2310, %v2302
      %v2847 = vpack.c.b16 %v2311, %v2303
      %v2848 = vpack.c.b16 %v2312, %v2304
      %v2849 = vpack.c.b16 %v2321, %v2313
      %v2850 = vpack.c.b16 %v2322, %v2314
      %v2851 = vpack.c.b16 %v2323, %v2315
      %v2852 = vpack.c.b16 %v2324, %v2316
      %v2853 = vpack.c.b16 %v2325, %v2317
      %v2854 = vpack.c.b16 %v2326, %v2318
      %v2855 = vpack.c.b16 %v2327, %v2319
      %v2856 = vpack.c.b16 %v2328, %v2320
      %v2857 = vpack.c.b16 %v2337, %v2329
      %v2858 = vpack.c.b16 %v2338, %v2330
      %v2859 = vpack.c.b16 %v2339, %v2331
      %v2860 = vpack.c.b16 %v2340, %v2332
      %v2861 = vpack.c.b16 %v2341, %v2333
      %v2862 = vpack.c.b16 %v2342, %v2334
      %v2863 = vpack.c.b16 %v2343, %v2335
      %v2864 = vpack.c.b16 %v2344, %v2336
      %v2865 = vpack.c.b16 %v2353, %v2345
      %v2866 = vpack.c.b16 %v2354, %v2346
      %v2867 = vpack.c.b16 %v2355, %v2347
      %v2868 = vpack.c.b16 %v2356, %v2348
      %v2869 = vpack.c.b16 %v2357, %v2349
      %v2870 = vpack.c.b16 %v2358, %v2350
      %v2871 = vpack.c.b16 %v2359, %v2351
      %v2872 = vpack.c.b16 %v2360, %v2352
      %3385 = vmatprep.subr.bf16.mxu0 %v2362
      %3386 = vmatpush1.bf16.msra.mxu0 %v2361
      %3387 = vmatprep.subr.bf16.mxu0 %v2370
      %3388 = vmatpush1.bf16.msra.mxu0 %v2369
      %3389 = vmatprep.subr.bf16.mxu0 %v2378
      %3390 = vmatpush1.bf16.msra.mxu0 %v2377
      %3391 = vmatprep.subr.bf16.mxu0 %v2386
      %3392 = vmatpush1.bf16.msra.mxu0 %v2385
      %3393 = vmatprep.subr.bf16.mxu0 %v2394
      %3394 = vmatpush1.bf16.msra.mxu0 %v2393
      %3395 = vmatprep.subr.bf16.mxu0 %v2402
      %3396 = vmatpush1.bf16.msra.mxu0 %v2401
      %3397 = vmatprep.subr.bf16.mxu0 %v2410
      %3398 = vmatpush1.bf16.msra.mxu0 %v2409
      %3399 = vmatprep.subr.bf16.mxu0 %v2418
      %3400 = vmatpush1.bf16.msra.mxu0 %v2417
      %3401 = vmatprep.subr.bf16.mxu0 %v2426
      %3402 = vmatpush1.bf16.msra.mxu0 %v2425
      %3403 = vmatprep.subr.bf16.mxu0 %v2434
      %3404 = vmatpush1.bf16.msra.mxu0 %v2433
      %3405 = vmatprep.subr.bf16.mxu0 %v2442
      %3406 = vmatpush1.bf16.msra.mxu0 %v2441
      %3407 = vmatprep.subr.bf16.mxu0 %v2450
      %3408 = vmatpush1.bf16.msra.mxu0 %v2449
      %3409 = vmatprep.subr.bf16.mxu0 %v2458
      %3410 = vmatpush1.bf16.msra.mxu0 %v2457
      %3411 = vmatprep.subr.bf16.mxu0 %v2466
      %3412 = vmatpush1.bf16.msra.mxu0 %v2465
      %3413 = vmatprep.subr.bf16.mxu0 %v2474
      %3414 = vmatpush1.bf16.msra.mxu0 %v2473
      %3415 = vmatprep.subr.bf16.mxu0 %v2482
      %3416 = vmatpush1.bf16.msra.mxu0 %v2481
      %3417 = vmatprep.mubr.bf16.mxu0 %v810
      %3418 = vmatmul.mubr.bf16.gmra.mrb[0].mxu0 %v809
      %v3419 = vpop.f32.mrb[0].mxu0
      %v3420 = vadd.f32 0.0, %v3419
      %v3421 = vpop.f32.mrb[0].mxu0
      %v3422 = vadd.f32 0.0, %v3421
      %v3423 = vpop.f32.mrb[0].mxu0
      %v3424 = vpop.f32.mrb[0].mxu0
      %3425 = vdwg.mxu0
      %3426 = vmatprep.subr.bf16.mxu0 %v2490
      %3427 = vmatpush1.bf16.msra.mxu0 %v2489
      %3428 = vmatprep.subr.bf16.mxu0 %v2498
      %3429 = vmatpush1.bf16.msra.mxu0 %v2497
      %3430 = vmatprep.subr.bf16.mxu0 %v2506
      %3431 = vmatpush1.bf16.msra.mxu0 %v2505
      %3432 = vmatprep.subr.bf16.mxu0 %v2514
      %3433 = vmatpush1.bf16.msra.mxu0 %v2513
      %3434 = vmatprep.subr.bf16.mxu0 %v2522
      %3435 = vmatpush1.bf16.msra.mxu0 %v2521
      %3436 = vmatprep.subr.bf16.mxu0 %v2530
      %3437 = vmatpush1.bf16.msra.mxu0 %v2529
      %3438 = vmatprep.subr.bf16.mxu0 %v2538
      %3439 = vmatpush1.bf16.msra.mxu0 %v2537
      %3440 = vmatprep.subr.bf16.mxu0 %v2546
      %3441 = vmatpush1.bf16.msra.mxu0 %v2545
      %3442 = vmatprep.subr.bf16.mxu0 %v2554
      %3443 = vmatpush1.bf16.msra.mxu0 %v2553
      %3444 = vmatprep.subr.bf16.mxu0 %v2562
      %3445 = vmatpush1.bf16.msra.mxu0 %v2561
      %3446 = vmatprep.subr.bf16.mxu0 %v2570
      %3447 = vmatpush1.bf16.msra.mxu0 %v2569
      %3448 = vmatprep.subr.bf16.mxu0 %v2578
      %3449 = vmatpush1.bf16.msra.mxu0 %v2577
      %3450 = vmatprep.subr.bf16.mxu0 %v2586
      %3451 = vmatpush1.bf16.msra.mxu0 %v2585
      %3452 = vmatprep.subr.bf16.mxu0 %v2594
      %3453 = vmatpush1.bf16.msra.mxu0 %v2593
      %3454 = vmatprep.subr.bf16.mxu0 %v2602
      %3455 = vmatpush1.bf16.msra.mxu0 %v2601
      %3456 = vmatprep.subr.bf16.mxu0 %v2610
      %3457 = vmatpush1.bf16.msra.mxu0 %v2609
      %3458 = vmatprep.mubr.bf16.mxu0 %v812
      %3459 = vmatmul.mubr.bf16.gmra.mrb[0].mxu0 %v811
      %v3460 = vpop.f32.mrb[0].mxu0
      %v3461 = vadd.f32 %v3420, %v3460
      %v3462 = vpop.f32.mrb[0].mxu0
      %v3463 = vadd.f32 %v3422, %v3462
      %v3464 = vpop.f32.mrb[0].mxu0
      %v3465 = vpop.f32.mrb[0].mxu0
      %3466 = vdwg.mxu0
      %3467 = vmatprep.subr.bf16.mxu0 %v2618
      %3468 = vmatpush1.bf16.msra.mxu0 %v2617
      %3469 = vmatprep.subr.bf16.mxu0 %v2626
      %3470 = vmatpush1.bf16.msra.mxu0 %v2625
      %3471 = vmatprep.subr.bf16.mxu0 %v2634
      %3472 = vmatpush1.bf16.msra.mxu0 %v2633
      %3473 = vmatprep.subr.bf16.mxu0 %v2642
      %3474 = vmatpush1.bf16.msra.mxu0 %v2641
      %3475 = vmatprep.subr.bf16.mxu0 %v2650
      %3476 = vmatpush1.bf16.msra.mxu0 %v2649
      %3477 = vmatprep.subr.bf16.mxu0 %v2658
      %3478 = vmatpush1.bf16.msra.mxu0 %v2657
      %3479 = vmatprep.subr.bf16.mxu0 %v2666
      %3480 = vmatpush1.bf16.msra.mxu0 %v2665
      %3481 = vmatprep.subr.bf16.mxu0 %v2674
      %3482 = vmatpush1.bf16.msra.mxu0 %v2673
      %3483 = vmatprep.subr.bf16.mxu0 %v2682
      %3484 = vmatpush1.bf16.msra.mxu0 %v2681
      %3485 = vmatprep.subr.bf16.mxu0 %v2690
      %3486 = vmatpush1.bf16.msra.mxu0 %v2689
      %3487 = vmatprep.subr.bf16.mxu0 %v2698
      %3488 = vmatpush1.bf16.msra.mxu0 %v2697
      %3489 = vmatprep.subr.bf16.mxu0 %v2706
      %3490 = vmatpush1.bf16.msra.mxu0 %v2705
      %3491 = vmatprep.subr.bf16.mxu0 %v2714
      %3492 = vmatpush1.bf16.msra.mxu0 %v2713
      %3493 = vmatprep.subr.bf16.mxu0 %v2722
      %3494 = vmatpush1.bf16.msra.mxu0 %v2721
      %3495 = vmatprep.subr.bf16.mxu0 %v2730
      %3496 = vmatpush1.bf16.msra.mxu0 %v2729
      %3497 = vmatprep.subr.bf16.mxu0 %v2738
      %3498 = vmatpush1.bf16.msra.mxu0 %v2737
      %3499 = vmatprep.mubr.bf16.mxu0 %v814
      %3500 = vmatmul.mubr.bf16.gmra.mrb[0].mxu0 %v813
      %v3501 = vpop.f32.mrb[0].mxu0
      %v3502 = vadd.f32 %v3461, %v3501
      %v3503 = vpop.f32.mrb[0].mxu0
      %v3504 = vadd.f32 %v3463, %v3503
      %v3505 = vpop.f32.mrb[0].mxu0
      %v3506 = vpop.f32.mrb[0].mxu0
      %3507 = vdwg.mxu0
      %3508 = vmatprep.subr.bf16.mxu0 %v2746
      %3509 = vmatpush1.bf16.msra.mxu0 %v2745
      %3510 = vmatprep.subr.bf16.mxu0 %v2754
      %3511 = vmatpush1.bf16.msra.mxu0 %v2753
      %3512 = vmatprep.subr.bf16.mxu0 %v2762
      %3513 = vmatpush1.bf16.msra.mxu0 %v2761
      %3514 = vmatprep.subr.bf16.mxu0 %v2770
      %3515 = vmatpush1.bf16.msra.mxu0 %v2769
      %3516 = vmatprep.subr.bf16.mxu0 %v2778
      %3517 = vmatpush1.bf16.msra.mxu0 %v2777
      %3518 = vmatprep.subr.bf16.mxu0 %v2786
      %3519 = vmatpush1.bf16.msra.mxu0 %v2785
      %3520 = vmatprep.subr.bf16.mxu0 %v2794
      %3521 = vmatpush1.bf16.msra.mxu0 %v2793
      %3522 = vmatprep.subr.bf16.mxu0 %v2802
      %3523 = vmatpush1.bf16.msra.mxu0 %v2801
      %3524 = vmatprep.subr.bf16.mxu0 %v2810
      %3525 = vmatpush1.bf16.msra.mxu0 %v2809
      %3526 = vmatprep.subr.bf16.mxu0 %v2818
      %3527 = vmatpush1.bf16.msra.mxu0 %v2817
      %3528 = vmatprep.subr.bf16.mxu0 %v2826
      %3529 = vmatpush1.bf16.msra.mxu0 %v2825
      %3530 = vmatprep.subr.bf16.mxu0 %v2834
      %3531 = vmatpush1.bf16.msra.mxu0 %v2833
      %3532 = vmatprep.subr.bf16.mxu0 %v2842
      %3533 = vmatpush1.bf16.msra.mxu0 %v2841
      %3534 = vmatprep.subr.bf16.mxu0 %v2850
      %3535 = vmatpush1.bf16.msra.mxu0 %v2849
      %3536 = vmatprep.subr.bf16.mxu0 %v2858
      %3537 = vmatpush1.bf16.msra.mxu0 %v2857
      %3538 = vmatprep.subr.bf16.mxu0 %v2866
      %3539 = vmatpush1.bf16.msra.mxu0 %v2865
      %3540 = vmatprep.mubr.bf16.mxu0 %v816
      %3541 = vmatmul.mubr.bf16.gmra.mrb[0].mxu0 %v815
      %v3542 = vpop.f32.mrb[0].mxu0
      %v3543 = vadd.f32 %v3502, %v3542
      %v3544 = vpop.f32.mrb[0].mxu0
      %v3545 = vadd.f32 %v3504, %v3544
      %v3546 = vpop.f32.mrb[0].mxu0
      %v3547 = vpop.f32.mrb[0].mxu0
      %3548 = vdwg.mxu0
      %3549 = vmatprep.subr.bf16.mxu0 %v2364
      %3550 = vmatpush1.bf16.msra.mxu0 %v2363
      %3551 = vmatprep.subr.bf16.mxu0 %v2372
      %3552 = vmatpush1.bf16.msra.mxu0 %v2371
      %3553 = vmatprep.subr.bf16.mxu0 %v2380
      %3554 = vmatpush1.bf16.msra.mxu0 %v2379
      %3555 = vmatprep.subr.bf16.mxu0 %v2388
      %3556 = vmatpush1.bf16.msra.mxu0 %v2387
      %3557 = vmatprep.subr.bf16.mxu0 %v2396
      %3558 = vmatpush1.bf16.msra.mxu0 %v2395
      %3559 = vmatprep.subr.bf16.mxu0 %v2404
      %3560 = vmatpush1.bf16.msra.mxu0 %v2403
      %3561 = vmatprep.subr.bf16.mxu0 %v2412
      %3562 = vmatpush1.bf16.msra.mxu0 %v2411
      %3563 = vmatprep.subr.bf16.mxu0 %v2420
      %3564 = vmatpush1.bf16.msra.mxu0 %v2419
      %3565 = vmatprep.subr.bf16.mxu0 %v2428
      %3566 = vmatpush1.bf16.msra.mxu0 %v2427
      %3567 = vmatprep.subr.bf16.mxu0 %v2436
      %3568 = vmatpush1.bf16.msra.mxu0 %v2435
      %3569 = vmatprep.subr.bf16.mxu0 %v2444
      %3570 = vmatpush1.bf16.msra.mxu0 %v2443
      %3571 = vmatprep.subr.bf16.mxu0 %v2452
      %3572 = vmatpush1.bf16.msra.mxu0 %v2451
      %3573 = vmatprep.subr.bf16.mxu0 %v2460
      %3574 = vmatpush1.bf16.msra.mxu0 %v2459
      %3575 = vmatprep.subr.bf16.mxu0 %v2468
      %3576 = vmatpush1.bf16.msra.mxu0 %v2467
      %3577 = vmatprep.subr.bf16.mxu0 %v2476
      %3578 = vmatpush1.bf16.msra.mxu0 %v2475
      %3579 = vmatprep.subr.bf16.mxu0 %v2484
      %3580 = vmatpush1.bf16.msra.mxu0 %v2483
      %3581 = vmatprep.mubr.bf16.mxu0 %v810
      %3582 = vmatmul.mubr.bf16.gmra.mrb[0].mxu0 %v809
      %v3583 = vpop.f32.mrb[0].mxu0
      %v3584 = vadd.f32 0.0, %v3583
      %v3585 = vpop.f32.mrb[0].mxu0
      %v3586 = vadd.f32 0.0, %v3585
      %v3587 = vpop.f32.mrb[0].mxu0
      %v3588 = vpop.f32.mrb[0].mxu0
      %3589 = vdwg.mxu0
      %3590 = vmatprep.subr.bf16.mxu0 %v2492
      %3591 = vmatpush1.bf16.msra.mxu0 %v2491
      %3592 = vmatprep.subr.bf16.mxu0 %v2500
      %3593 = vmatpush1.bf16.msra.mxu0 %v2499
      %3594 = vmatprep.subr.bf16.mxu0 %v2508
      %3595 = vmatpush1.bf16.msra.mxu0 %v2507
      %3596 = vmatprep.subr.bf16.mxu0 %v2516
      %3597 = vmatpush1.bf16.msra.mxu0 %v2515
      %3598 = vmatprep.subr.bf16.mxu0 %v2524
      %3599 = vmatpush1.bf16.msra.mxu0 %v2523
      %3600 = vmatprep.subr.bf16.mxu0 %v2532
      %3601 = vmatpush1.bf16.msra.mxu0 %v2531
      %3602 = vmatprep.subr.bf16.mxu0 %v2540
      %3603 = vmatpush1.bf16.msra.mxu0 %v2539
      %3604 = vmatprep.subr.bf16.mxu0 %v2548
      %3605 = vmatpush1.bf16.msra.mxu0 %v2547
      %3606 = vmatprep.subr.bf16.mxu0 %v2556
      %3607 = vmatpush1.bf16.msra.mxu0 %v2555
      %3608 = vmatprep.subr.bf16.mxu0 %v2564
      %3609 = vmatpush1.bf16.msra.mxu0 %v2563
      %3610 = vmatprep.subr.bf16.mxu0 %v2572
      %3611 = vmatpush1.bf16.msra.mxu0 %v2571
      %3612 = vmatprep.subr.bf16.mxu0 %v2580
      %3613 = vmatpush1.bf16.msra.mxu0 %v2579
      %3614 = vmatprep.subr.bf16.mxu0 %v2588
      %3615 = vmatpush1.bf16.msra.mxu0 %v2587
      %3616 = vmatprep.subr.bf16.mxu0 %v2596
      %3617 = vmatpush1.bf16.msra.mxu0 %v2595
      %3618 = vmatprep.subr.bf16.mxu0 %v2604
      %3619 = vmatpush1.bf16.msra.mxu0 %v2603
      %3620 = vmatprep.subr.bf16.mxu0 %v2612
      %3621 = vmatpush1.bf16.msra.mxu0 %v2611
      %3622 = vmatprep.mubr.bf16.mxu0 %v812
      %3623 = vmatmul.mubr.bf16.gmra.mrb[0].mxu0 %v811
      %v3624 = vpop.f32.mrb[0].mxu0
      %v3625 = vadd.f32 %v3584, %v3624
      %v3626 = vpop.f32.mrb[0].mxu0
      %v3627 = vadd.f32 %v3586, %v3626
      %v3628 = vpop.f32.mrb[0].mxu0
      %v3629 = vpop.f32.mrb[0].mxu0
      %3630 = vdwg.mxu0
      %3631 = vmatprep.subr.bf16.mxu0 %v2620
      %3632 = vmatpush1.bf16.msra.mxu0 %v2619
      %3633 = vmatprep.subr.bf16.mxu0 %v2628
      %3634 = vmatpush1.bf16.msra.mxu0 %v2627
      %3635 = vmatprep.subr.bf16.mxu0 %v2636
      %3636 = vmatpush1.bf16.msra.mxu0 %v2635
      %3637 = vmatprep.subr.bf16.mxu0 %v2644
      %3638 = vmatpush1.bf16.msra.mxu0 %v2643
      %3639 = vmatprep.subr.bf16.mxu0 %v2652
      %3640 = vmatpush1.bf16.msra.mxu0 %v2651
      %3641 = vmatprep.subr.bf16.mxu0 %v2660
      %3642 = vmatpush1.bf16.msra.mxu0 %v2659
      %3643 = vmatprep.subr.bf16.mxu0 %v2668
      %3644 = vmatpush1.bf16.msra.mxu0 %v2667
      %3645 = vmatprep.subr.bf16.mxu0 %v2676
      %3646 = vmatpush1.bf16.msra.mxu0 %v2675
      %3647 = vmatprep.subr.bf16.mxu0 %v2684
      %3648 = vmatpush1.bf16.msra.mxu0 %v2683
      %3649 = vmatprep.subr.bf16.mxu0 %v2692
      %3650 = vmatpush1.bf16.msra.mxu0 %v2691
      %3651 = vmatprep.subr.bf16.mxu0 %v2700
      %3652 = vmatpush1.bf16.msra.mxu0 %v2699
      %3653 = vmatprep.subr.bf16.mxu0 %v2708
      %3654 = vmatpush1.bf16.msra.mxu0 %v2707
      %3655 = vmatprep.subr.bf16.mxu0 %v2716
      %3656 = vmatpush1.bf16.msra.mxu0 %v2715
      %3657 = vmatprep.subr.bf16.mxu0 %v2724
      %3658 = vmatpush1.bf16.msra.mxu0 %v2723
      %3659 = vmatprep.subr.bf16.mxu0 %v2732
      %3660 = vmatpush1.bf16.msra.mxu0 %v2731
      %3661 = vmatprep.subr.bf16.mxu0 %v2740
      %3662 = vmatpush1.bf16.msra.mxu0 %v2739
      %3663 = vmatprep.mubr.bf16.mxu0 %v814
      %3664 = vmatmul.mubr.bf16.gmra.mrb[0].mxu0 %v813
      %v3665 = vpop.f32.mrb[0].mxu0
      %v3666 = vadd.f32 %v3625, %v3665
      %v3667 = vpop.f32.mrb[0].mxu0
      %v3668 = vadd.f32 %v3627, %v3667
      %v3669 = vpop.f32.mrb[0].mxu0
      %v3670 = vpop.f32.mrb[0].mxu0
      %3671 = vdwg.mxu0
      %3672 = vmatprep.subr.bf16.mxu0 %v2748
      %3673 = vmatpush1.bf16.msra.mxu0 %v2747
      %3674 = vmatprep.subr.bf16.mxu0 %v2756
      %3675 = vmatpush1.bf16.msra.mxu0 %v2755
      %3676 = vmatprep.subr.bf16.mxu0 %v2764
      %3677 = vmatpush1.bf16.msra.mxu0 %v2763
      %3678 = vmatprep.subr.bf16.mxu0 %v2772
      %3679 = vmatpush1.bf16.msra.mxu0 %v2771
      %3680 = vmatprep.subr.bf16.mxu0 %v2780
      %3681 = vmatpush1.bf16.msra.mxu0 %v2779
      %3682 = vmatprep.subr.bf16.mxu0 %v2788
      %3683 = vmatpush1.bf16.msra.mxu0 %v2787
      %3684 = vmatprep.subr.bf16.mxu0 %v2796
      %3685 = vmatpush1.bf16.msra.mxu0 %v2795
      %3686 = vmatprep.subr.bf16.mxu0 %v2804
      %3687 = vmatpush1.bf16.msra.mxu0 %v2803
      %3688 = vmatprep.subr.bf16.mxu0 %v2812
      %3689 = vmatpush1.bf16.msra.mxu0 %v2811
      %3690 = vmatprep.subr.bf16.mxu0 %v2820
      %3691 = vmatpush1.bf16.msra.mxu0 %v2819
      %3692 = vmatprep.subr.bf16.mxu0 %v2828
      %3693 = vmatpush1.bf16.msra.mxu0 %v2827
      %3694 = vmatprep.subr.bf16.mxu0 %v2836
      %3695 = vmatpush1.bf16.msra.mxu0 %v2835
      %3696 = vmatprep.subr.bf16.mxu0 %v2844
      %3697 = vmatpush1.bf16.msra.mxu0 %v2843
      %3698 = vmatprep.subr.bf16.mxu0 %v2852
      %3699 = vmatpush1.bf16.msra.mxu0 %v2851
      %3700 = vmatprep.subr.bf16.mxu0 %v2860
      %3701 = vmatpush1.bf16.msra.mxu0 %v2859
      %3702 = vmatprep.subr.bf16.mxu0 %v2868
      %3703 = vmatpush1.bf16.msra.mxu0 %v2867
      %3704 = vmatprep.mubr.bf16.mxu0 %v816
      %3705 = vmatmul.mubr.bf16.gmra.mrb[0].mxu0 %v815
      %v3706 = vpop.f32.mrb[0].mxu0
      %v3707 = vadd.f32 %v3666, %v3706
      %v3708 = vpop.f32.mrb[0].mxu0
      %v3709 = vadd.f32 %v3668, %v3708
      %v3710 = vpop.f32.mrb[0].mxu0
      %v3711 = vpop.f32.mrb[0].mxu0
      %3712 = vdwg.mxu0
      %3713 = vmatprep.subr.bf16.mxu0 %v2366
      %3714 = vmatpush1.bf16.msra.mxu0 %v2365
      %3715 = vmatprep.subr.bf16.mxu0 %v2374
      %3716 = vmatpush1.bf16.msra.mxu0 %v2373
      %3717 = vmatprep.subr.bf16.mxu0 %v2382
      %3718 = vmatpush1.bf16.msra.mxu0 %v2381
      %3719 = vmatprep.subr.bf16.mxu0 %v2390
      %3720 = vmatpush1.bf16.msra.mxu0 %v2389
      %3721 = vmatprep.subr.bf16.mxu0 %v2398
      %3722 = vmatpush1.bf16.msra.mxu0 %v2397
      %3723 = vmatprep.subr.bf16.mxu0 %v2406
      %3724 = vmatpush1.bf16.msra.mxu0 %v2405
      %3725 = vmatprep.subr.bf16.mxu0 %v2414
      %3726 = vmatpush1.bf16.msra.mxu0 %v2413
      %3727 = vmatprep.subr.bf16.mxu0 %v2422
      %3728 = vmatpush1.bf16.msra.mxu0 %v2421
      %3729 = vmatprep.subr.bf16.mxu0 %v2430
      %3730 = vmatpush1.bf16.msra.mxu0 %v2429
      %3731 = vmatprep.subr.bf16.mxu0 %v2438
      %3732 = vmatpush1.bf16.msra.mxu0 %v2437
      %3733 = vmatprep.subr.bf16.mxu0 %v2446
      %3734 = vmatpush1.bf16.msra.mxu0 %v2445
      %3735 = vmatprep.subr.bf16.mxu0 %v2454
      %3736 = vmatpush1.bf16.msra.mxu0 %v2453
      %3737 = vmatprep.subr.bf16.mxu0 %v2462
      %3738 = vmatpush1.bf16.msra.mxu0 %v2461
      %3739 = vmatprep.subr.bf16.mxu0 %v2470
      %3740 = vmatpush1.bf16.msra.mxu0 %v2469
      %3741 = vmatprep.subr.bf16.mxu0 %v2478
      %3742 = vmatpush1.bf16.msra.mxu0 %v2477
      %3743 = vmatprep.subr.bf16.mxu0 %v2486
      %3744 = vmatpush1.bf16.msra.mxu0 %v2485
      %3745 = vmatprep.mubr.bf16.mxu0 %v810
      %3746 = vmatmul.mubr.bf16.gmra.mrb[0].mxu0 %v809
      %v3747 = vpop.f32.mrb[0].mxu0
      %v3748 = vadd.f32 0.0, %v3747
      %v3749 = vpop.f32.mrb[0].mxu0
      %v3750 = vadd.f32 0.0, %v3749
      %v3751 = vpop.f32.mrb[0].mxu0
      %v3752 = vpop.f32.mrb[0].mxu0
      %3753 = vdwg.mxu0
      %3754 = vmatprep.subr.bf16.mxu0 %v2494
      %3755 = vmatpush1.bf16.msra.mxu0 %v2493
      %3756 = vmatprep.subr.bf16.mxu0 %v2502
      %3757 = vmatpush1.bf16.msra.mxu0 %v2501
      %3758 = vmatprep.subr.bf16.mxu0 %v2510
      %3759 = vmatpush1.bf16.msra.mxu0 %v2509
      %3760 = vmatprep.subr.bf16.mxu0 %v2518
      %3761 = vmatpush1.bf16.msra.mxu0 %v2517
      %3762 = vmatprep.subr.bf16.mxu0 %v2526
      %3763 = vmatpush1.bf16.msra.mxu0 %v2525
      %3764 = vmatprep.subr.bf16.mxu0 %v2534
      %3765 = vmatpush1.bf16.msra.mxu0 %v2533
      %3766 = vmatprep.subr.bf16.mxu0 %v2542
      %3767 = vmatpush1.bf16.msra.mxu0 %v2541
      %3768 = vmatprep.subr.bf16.mxu0 %v2550
      %3769 = vmatpush1.bf16.msra.mxu0 %v2549
      %3770 = vmatprep.subr.bf16.mxu0 %v2558
      %3771 = vmatpush1.bf16.msra.mxu0 %v2557
      %3772 = vmatprep.subr.bf16.mxu0 %v2566
      %3773 = vmatpush1.bf16.msra.mxu0 %v2565
      %3774 = vmatprep.subr.bf16.mxu0 %v2574
      %3775 = vmatpush1.bf16.msra.mxu0 %v2573
      %3776 = vmatprep.subr.bf16.mxu0 %v2582
      %3777 = vmatpush1.bf16.msra.mxu0 %v2581
      %3778 = vmatprep.subr.bf16.mxu0 %v2590
      %3779 = vmatpush1.bf16.msra.mxu0 %v2589
      %3780 = vmatprep.subr.bf16.mxu0 %v2598
      %3781 = vmatpush1.bf16.msra.mxu0 %v2597
      %3782 = vmatprep.subr.bf16.mxu0 %v2606
      %3783 = vmatpush1.bf16.msra.mxu0 %v2605
      %3784 = vmatprep.subr.bf16.mxu0 %v2614
      %3785 = vmatpush1.bf16.msra.mxu0 %v2613
      %3786 = vmatprep.mubr.bf16.mxu0 %v812
      %3787 = vmatmul.mubr.bf16.gmra.mrb[0].mxu0 %v811
      %v3788 = vpop.f32.mrb[0].mxu0
      %v3789 = vadd.f32 %v3748, %v3788
      %v3790 = vpop.f32.mrb[0].mxu0
      %v3791 = vadd.f32 %v3750, %v3790
      %v3792 = vpop.f32.mrb[0].mxu0
      %v3793 = vpop.f32.mrb[0].mxu0
      %3794 = vdwg.mxu0
      %3795 = vmatprep.subr.bf16.mxu0 %v2622
      %3796 = vmatpush1.bf16.msra.mxu0 %v2621
      %3797 = vmatprep.subr.bf16.mxu0 %v2630
      %3798 = vmatpush1.bf16.msra.mxu0 %v2629
      %3799 = vmatprep.subr.bf16.mxu0 %v2638
      %3800 = vmatpush1.bf16.msra.mxu0 %v2637
      %3801 = vmatprep.subr.bf16.mxu0 %v2646
      %3802 = vmatpush1.bf16.msra.mxu0 %v2645
      %3803 = vmatprep.subr.bf16.mxu0 %v2654
      %3804 = vmatpush1.bf16.msra.mxu0 %v2653
      %3805 = vmatprep.subr.bf16.mxu0 %v2662
      %3806 = vmatpush1.bf16.msra.mxu0 %v2661
      %3807 = vmatprep.subr.bf16.mxu0 %v2670
      %3808 = vmatpush1.bf16.msra.mxu0 %v2669
      %3809 = vmatprep.subr.bf16.mxu0 %v2678
      %3810 = vmatpush1.bf16.msra.mxu0 %v2677
      %3811 = vmatprep.subr.bf16.mxu0 %v2686
      %3812 = vmatpush1.bf16.msra.mxu0 %v2685
      %3813 = vmatprep.subr.bf16.mxu0 %v2694
      %3814 = vmatpush1.bf16.msra.mxu0 %v2693
      %3815 = vmatprep.subr.bf16.mxu0 %v2702
      %3816 = vmatpush1.bf16.msra.mxu0 %v2701
      %3817 = vmatprep.subr.bf16.mxu0 %v2710
      %3818 = vmatpush1.bf16.msra.mxu0 %v2709
      %3819 = vmatprep.subr.bf16.mxu0 %v2718
      %3820 = vmatpush1.bf16.msra.mxu0 %v2717
      %3821 = vmatprep.subr.bf16.mxu0 %v2726
      %3822 = vmatpush1.bf16.msra.mxu0 %v2725
      %3823 = vmatprep.subr.bf16.mxu0 %v2734
      %3824 = vmatpush1.bf16.msra.mxu0 %v2733
      %3825 = vmatprep.subr.bf16.mxu0 %v2742
      %3826 = vmatpush1.bf16.msra.mxu0 %v2741
      %3827 = vmatprep.mubr.bf16.mxu0 %v814
      %3828 = vmatmul.mubr.bf16.gmra.mrb[0].mxu0 %v813
      %v3829 = vpop.f32.mrb[0].mxu0
      %v3830 = vadd.f32 %v3789, %v3829
      %v3831 = vpop.f32.mrb[0].mxu0
      %v3832 = vadd.f32 %v3791, %v3831
      %v3833 = vpop.f32.mrb[0].mxu0
      %v3834 = vpop.f32.mrb[0].mxu0
      %3835 = vdwg.mxu0
      %3836 = vmatprep.subr.bf16.mxu0 %v2750
      %3837 = vmatpush1.bf16.msra.mxu0 %v2749
      %3838 = vmatprep.subr.bf16.mxu0 %v2758
      %3839 = vmatpush1.bf16.msra.mxu0 %v2757
      %3840 = vmatprep.subr.bf16.mxu0 %v2766
      %3841 = vmatpush1.bf16.msra.mxu0 %v2765
      %3842 = vmatprep.subr.bf16.mxu0 %v2774
      %3843 = vmatpush1.bf16.msra.mxu0 %v2773
      %3844 = vmatprep.subr.bf16.mxu0 %v2782
      %3845 = vmatpush1.bf16.msra.mxu0 %v2781
      %3846 = vmatprep.subr.bf16.mxu0 %v2790
      %3847 = vmatpush1.bf16.msra.mxu0 %v2789
      %3848 = vmatprep.subr.bf16.mxu0 %v2798
      %3849 = vmatpush1.bf16.msra.mxu0 %v2797
      %3850 = vmatprep.subr.bf16.mxu0 %v2806
      %3851 = vmatpush1.bf16.msra.mxu0 %v2805
      %3852 = vmatprep.subr.bf16.mxu0 %v2814
      %3853 = vmatpush1.bf16.msra.mxu0 %v2813
      %3854 = vmatprep.subr.bf16.mxu0 %v2822
      %3855 = vmatpush1.bf16.msra.mxu0 %v2821
      %3856 = vmatprep.subr.bf16.mxu0 %v2830
      %3857 = vmatpush1.bf16.msra.mxu0 %v2829
      %3858 = vmatprep.subr.bf16.mxu0 %v2838
      %3859 = vmatpush1.bf16.msra.mxu0 %v2837
      %3860 = vmatprep.subr.bf16.mxu0 %v2846
      %3861 = vmatpush1.bf16.msra.mxu0 %v2845
      %3862 = vmatprep.subr.bf16.mxu0 %v2854
      %3863 = vmatpush1.bf16.msra.mxu0 %v2853
      %3864 = vmatprep.subr.bf16.mxu0 %v2862
      %3865 = vmatpush1.bf16.msra.mxu0 %v2861
      %3866 = vmatprep.subr.bf16.mxu0 %v2870
      %3867 = vmatpush1.bf16.msra.mxu0 %v2869
      %3868 = vmatprep.mubr.bf16.mxu0 %v816
      %3869 = vmatmul.mubr.bf16.gmra.mrb[0].mxu0 %v815
      %v3870 = vpop.f32.mrb[0].mxu0
      %v3871 = vadd.f32 %v3830, %v3870
      %v3872 = vpop.f32.mrb[0].mxu0
      %v3873 = vadd.f32 %v3832, %v3872
      %v3874 = vpop.f32.mrb[0].mxu0
      %v3875 = vpop.f32.mrb[0].mxu0
      %3876 = vdwg.mxu0
      %3877 = vmatprep.subr.bf16.mxu0 %v2368
      %3878 = vmatpush1.bf16.msra.mxu0 %v2367
      %3879 = vmatprep.subr.bf16.mxu0 %v2376
      %3880 = vmatpush1.bf16.msra.mxu0 %v2375
      %3881 = vmatprep.subr.bf16.mxu0 %v2384
      %3882 = vmatpush1.bf16.msra.mxu0 %v2383
      %3883 = vmatprep.subr.bf16.mxu0 %v2392
      %3884 = vmatpush1.bf16.msra.mxu0 %v2391
      %3885 = vmatprep.subr.bf16.mxu0 %v2400
      %3886 = vmatpush1.bf16.msra.mxu0 %v2399
      %3887 = vmatprep.subr.bf16.mxu0 %v2408
      %3888 = vmatpush1.bf16.msra.mxu0 %v2407
      %3889 = vmatprep.subr.bf16.mxu0 %v2416
      %3890 = vmatpush1.bf16.msra.mxu0 %v2415
      %3891 = vmatprep.subr.bf16.mxu0 %v2424
      %3892 = vmatpush1.bf16.msra.mxu0 %v2423
      %3893 = vmatprep.subr.bf16.mxu0 %v2432
      %3894 = vmatpush1.bf16.msra.mxu0 %v2431
      %3895 = vmatprep.subr.bf16.mxu0 %v2440
      %3896 = vmatpush1.bf16.msra.mxu0 %v2439
      %3897 = vmatprep.subr.bf16.mxu0 %v2448
      %3898 = vmatpush1.bf16.msra.mxu0 %v2447
      %3899 = vmatprep.subr.bf16.mxu0 %v2456
      %3900 = vmatpush1.bf16.msra.mxu0 %v2455
      %3901 = vmatprep.subr.bf16.mxu0 %v2464
      %3902 = vmatpush1.bf16.msra.mxu0 %v2463
      %3903 = vmatprep.subr.bf16.mxu0 %v2472
      %3904 = vmatpush1.bf16.msra.mxu0 %v2471
      %3905 = vmatprep.subr.bf16.mxu0 %v2480
      %3906 = vmatpush1.bf16.msra.mxu0 %v2479
      %3907 = vmatprep.subr.bf16.mxu0 %v2488
      %3908 = vmatpush1.bf16.msra.mxu0 %v2487
      %3909 = vmatprep.mubr.bf16.mxu0 %v810
      %3910 = vmatmul.mubr.bf16.gmra.mrb[0].mxu0 %v809
      %v3911 = vpop.f32.mrb[0].mxu0
      %v3912 = vadd.f32 0.0, %v3911
      %v3913 = vpop.f32.mrb[0].mxu0
      %v3914 = vadd.f32 0.0, %v3913
      %v3915 = vpop.f32.mrb[0].mxu0
      %v3916 = vpop.f32.mrb[0].mxu0
      %3917 = vdwg.mxu0
      %3918 = vmatprep.subr.bf16.mxu0 %v2496
      %3919 = vmatpush1.bf16.msra.mxu0 %v2495
      %3920 = vmatprep.subr.bf16.mxu0 %v2504
      %3921 = vmatpush1.bf16.msra.mxu0 %v2503
      %3922 = vmatprep.subr.bf16.mxu0 %v2512
      %3923 = vmatpush1.bf16.msra.mxu0 %v2511
      %3924 = vmatprep.subr.bf16.mxu0 %v2520
      %3925 = vmatpush1.bf16.msra.mxu0 %v2519
      %3926 = vmatprep.subr.bf16.mxu0 %v2528
      %3927 = vmatpush1.bf16.msra.mxu0 %v2527
      %3928 = vmatprep.subr.bf16.mxu0 %v2536
      %3929 = vmatpush1.bf16.msra.mxu0 %v2535
      %3930 = vmatprep.subr.bf16.mxu0 %v2544
      %3931 = vmatpush1.bf16.msra.mxu0 %v2543
      %3932 = vmatprep.subr.bf16.mxu0 %v2552
      %3933 = vmatpush1.bf16.msra.mxu0 %v2551
      %3934 = vmatprep.subr.bf16.mxu0 %v2560
      %3935 = vmatpush1.bf16.msra.mxu0 %v2559
      %3936 = vmatprep.subr.bf16.mxu0 %v2568
      %3937 = vmatpush1.bf16.msra.mxu0 %v2567
      %3938 = vmatprep.subr.bf16.mxu0 %v2576
      %3939 = vmatpush1.bf16.msra.mxu0 %v2575
      %3940 = vmatprep.subr.bf16.mxu0 %v2584
      %3941 = vmatpush1.bf16.msra.mxu0 %v2583
      %3942 = vmatprep.subr.bf16.mxu0 %v2592
      %3943 = vmatpush1.bf16.msra.mxu0 %v2591
      %3944 = vmatprep.subr.bf16.mxu0 %v2600
      %3945 = vmatpush1.bf16.msra.mxu0 %v2599
      %3946 = vmatprep.subr.bf16.mxu0 %v2608
      %3947 = vmatpush1.bf16.msra.mxu0 %v2607
      %3948 = vmatprep.subr.bf16.mxu0 %v2616
      %3949 = vmatpush1.bf16.msra.mxu0 %v2615
      %3950 = vmatprep.mubr.bf16.mxu0 %v812
      %3951 = vmatmul.mubr.bf16.gmra.mrb[0].mxu0 %v811
      %v3952 = vpop.f32.mrb[0].mxu0
      %v3953 = vadd.f32 %v3912, %v3952
      %v3954 = vpop.f32.mrb[0].mxu0
      %v3955 = vadd.f32 %v3914, %v3954
      %v3956 = vpop.f32.mrb[0].mxu0
      %v3957 = vpop.f32.mrb[0].mxu0
      %3958 = vdwg.mxu0
      %3959 = vmatprep.subr.bf16.mxu0 %v2624
      %3960 = vmatpush1.bf16.msra.mxu0 %v2623
      %3961 = vmatprep.subr.bf16.mxu0 %v2632
      %3962 = vmatpush1.bf16.msra.mxu0 %v2631
      %3963 = vmatprep.subr.bf16.mxu0 %v2640
      %3964 = vmatpush1.bf16.msra.mxu0 %v2639
      %3965 = vmatprep.subr.bf16.mxu0 %v2648
      %3966 = vmatpush1.bf16.msra.mxu0 %v2647
      %3967 = vmatprep.subr.bf16.mxu0 %v2656
      %3968 = vmatpush1.bf16.msra.mxu0 %v2655
      %3969 = vmatprep.subr.bf16.mxu0 %v2664
      %3970 = vmatpush1.bf16.msra.mxu0 %v2663
      %3971 = vmatprep.subr.bf16.mxu0 %v2672
      %3972 = vmatpush1.bf16.msra.mxu0 %v2671
      %3973 = vmatprep.subr.bf16.mxu0 %v2680
      %3974 = vmatpush1.bf16.msra.mxu0 %v2679
      %3975 = vmatprep.subr.bf16.mxu0 %v2688
      %3976 = vmatpush1.bf16.msra.mxu0 %v2687
      %3977 = vmatprep.subr.bf16.mxu0 %v2696
      %3978 = vmatpush1.bf16.msra.mxu0 %v2695
      %3979 = vmatprep.subr.bf16.mxu0 %v2704
      %3980 = vmatpush1.bf16.msra.mxu0 %v2703
      %3981 = vmatprep.subr.bf16.mxu0 %v2712
      %3982 = vmatpush1.bf16.msra.mxu0 %v2711
      %3983 = vmatprep.subr.bf16.mxu0 %v2720
      %3984 = vmatpush1.bf16.msra.mxu0 %v2719
      %3985 = vmatprep.subr.bf16.mxu0 %v2728
      %3986 = vmatpush1.bf16.msra.mxu0 %v2727
      %3987 = vmatprep.subr.bf16.mxu0 %v2736
      %3988 = vmatpush1.bf16.msra.mxu0 %v2735
      %3989 = vmatprep.subr.bf16.mxu0 %v2744
      %3990 = vmatpush1.bf16.msra.mxu0 %v2743
      %3991 = vmatprep.mubr.bf16.mxu0 %v814
      %3992 = vmatmul.mubr.bf16.gmra.mrb[0].mxu0 %v813
      %v3993 = vpop.f32.mrb[0].mxu0
      %v3994 = vadd.f32 %v3953, %v3993
      %v3995 = vpop.f32.mrb[0].mxu0
      %v3996 = vadd.f32 %v3955, %v3995
      %v3997 = vpop.f32.mrb[0].mxu0
      %v3998 = vpop.f32.mrb[0].mxu0
      %3999 = vdwg.mxu0
      %4000 = vmatprep.subr.bf16.mxu0 %v2752
      %4001 = vmatpush1.bf16.msra.mxu0 %v2751
      %4002 = vmatprep.subr.bf16.mxu0 %v2760
      %4003 = vmatpush1.bf16.msra.mxu0 %v2759
      %4004 = vmatprep.subr.bf16.mxu0 %v2768
      %4005 = vmatpush1.bf16.msra.mxu0 %v2767
      %4006 = vmatprep.subr.bf16.mxu0 %v2776
      %4007 = vmatpush1.bf16.msra.mxu0 %v2775
      %4008 = vmatprep.subr.bf16.mxu0 %v2784
      %4009 = vmatpush1.bf16.msra.mxu0 %v2783
      %4010 = vmatprep.subr.bf16.mxu0 %v2792
      %4011 = vmatpush1.bf16.msra.mxu0 %v2791
      %4012 = vmatprep.subr.bf16.mxu0 %v2800
      %4013 = vmatpush1.bf16.msra.mxu0 %v2799
      %4014 = vmatprep.subr.bf16.mxu0 %v2808
      %4015 = vmatpush1.bf16.msra.mxu0 %v2807
      %4016 = vmatprep.subr.bf16.mxu0 %v2816
      %4017 = vmatpush1.bf16.msra.mxu0 %v2815
      %4018 = vmatprep.subr.bf16.mxu0 %v2824
      %4019 = vmatpush1.bf16.msra.mxu0 %v2823
      %4020 = vmatprep.subr.bf16.mxu0 %v2832
      %4021 = vmatpush1.bf16.msra.mxu0 %v2831
      %4022 = vmatprep.subr.bf16.mxu0 %v2840
      %4023 = vmatpush1.bf16.msra.mxu0 %v2839
      %4024 = vmatprep.subr.bf16.mxu0 %v2848
      %4025 = vmatpush1.bf16.msra.mxu0 %v2847
      %4026 = vmatprep.subr.bf16.mxu0 %v2856
      %4027 = vmatpush1.bf16.msra.mxu0 %v2855
      %4028 = vmatprep.subr.bf16.mxu0 %v2864
      %4029 = vmatpush1.bf16.msra.mxu0 %v2863
      %4030 = vmatprep.subr.bf16.mxu0 %v2872
      %4031 = vmatpush1.bf16.msra.mxu0 %v2871
      %4032 = vmatprep.mubr.bf16.mxu0 %v816
      %4033 = vmatmul.mubr.bf16.gmra.mrb[0].mxu0 %v815
      %v4034 = vpop.f32.mrb[0].mxu0
      %v4035 = vadd.f32 %v3994, %v4034
      %v4036 = vpop.f32.mrb[0].mxu0
      %v4037 = vadd.f32 %v3996, %v4036
      %v4038 = vpop.f32.mrb[0].mxu0
      %v4039 = vpop.f32.mrb[0].mxu0
      %4040 = vdwg.mxu0
      %v4041 = vld [vmem:[%s264] sm:$0xff]
      %v4043 = vlaneseq
      %v4044 = vshrl.u32 %v4043, 7
      %v4045 = vsub.s32 0, %v4044
      %v4046 = vrot.slane %v4041, %v4045
      %v4047 = vlaneseq
      %v4048 = vshrl.u32 %v4047, 7
      %v4049 = vsub.s32 1, %v4048
      %v4050 = vrot.slane %v4041, %v4049
      %v4051 = vlaneseq
      %v4052 = vshrl.u32 %v4051, 7
      %v4053 = vsub.s32 2, %v4052
      %v4054 = vrot.slane %v4041, %v4053
      %v4055 = vlaneseq
      %v4056 = vshrl.u32 %v4055, 7
      %v4057 = vsub.s32 3, %v4056
      %v4058 = vrot.slane %v4041, %v4057
      %v4059 = vlaneseq
      %v4060 = vshrl.u32 %v4059, 7
      %v4061 = vsub.s32 4, %v4060
      %v4062 = vrot.slane %v4041, %v4061
      %v4063 = vlaneseq
      %v4064 = vshrl.u32 %v4063, 7
      %v4065 = vsub.s32 5, %v4064
      %v4066 = vrot.slane %v4041, %v4065
      %v4067 = vlaneseq
      %v4068 = vshrl.u32 %v4067, 7
      %v4069 = vsub.s32 6, %v4068
      %v4070 = vrot.slane %v4041, %v4069
      %v4071 = vlaneseq
      %v4072 = vshrl.u32 %v4071, 7
      %v4073 = vsub.s32 7, %v4072
      %v4074 = vrot.slane %v4041, %v4073
      %v4083 = vmul.f32 %v3543, %v4046
      %v4084 = vmul.f32 %v3545, %v4050
      %v4085 = vmul.f32 %v3707, %v4054
      %v4086 = vmul.f32 %v3709, %v4058
      %v4087 = vmul.f32 %v3871, %v4062
      %v4088 = vmul.f32 %v3873, %v4066
      %v4089 = vmul.f32 %v4035, %v4070
      %v4090 = vmul.f32 %v4037, %v4074
      %v4091 = vld [vmem:[%s269] sm:$0xff]
      %v4093 = vlaneseq
      %v4094 = vshrl.u32 %v4093, 7
      %v4095 = vsub.s32 0, %v4094
      %v4096 = vrot.slane %v4091, %v4095
      %v4097 = vlaneseq
      %v4098 = vshrl.u32 %v4097, 7
      %v4099 = vsub.s32 1, %v4098
      %v4100 = vrot.slane %v4091, %v4099
      %v4101 = vlaneseq
      %v4102 = vshrl.u32 %v4101, 7
      %v4103 = vsub.s32 2, %v4102
      %v4104 = vrot.slane %v4091, %v4103
      %v4105 = vlaneseq
      %v4106 = vshrl.u32 %v4105, 7
      %v4107 = vsub.s32 3, %v4106
      %v4108 = vrot.slane %v4091, %v4107
      %v4109 = vlaneseq
      %v4110 = vshrl.u32 %v4109, 7
      %v4111 = vsub.s32 4, %v4110
      %v4112 = vrot.slane %v4091, %v4111
      %v4113 = vlaneseq
      %v4114 = vshrl.u32 %v4113, 7
      %v4115 = vsub.s32 5, %v4114
      %v4116 = vrot.slane %v4091, %v4115
      %v4117 = vlaneseq
      %v4118 = vshrl.u32 %v4117, 7
      %v4119 = vsub.s32 6, %v4118
      %v4120 = vrot.slane %v4091, %v4119
      %v4121 = vlaneseq
      %v4122 = vshrl.u32 %v4121, 7
      %v4123 = vsub.s32 7, %v4122
      %v4124 = vrot.slane %v4091, %v4123
      %v4133 = vadd.f32 %v4083, %v4096
      %v4134 = vadd.f32 %v4084, %v4100
      %v4135 = vadd.f32 %v4085, %v4104
      %v4136 = vadd.f32 %v4086, %v4108
      %v4137 = vadd.f32 %v4087, %v4112
      %v4138 = vadd.f32 %v4088, %v4116
      %v4139 = vadd.f32 %v4089, %v4120
      %v4140 = vadd.f32 %v4090, %v4124
      %v4141 = vmax.f32 %v4133, 0.0
      %v4142 = vmax.f32 %v4134, 0.0
      %v4143 = vmax.f32 %v4135, 0.0
      %v4144 = vmax.f32 %v4136, 0.0
      %v4145 = vmax.f32 %v4137, 0.0
      %v4146 = vmax.f32 %v4138, 0.0
      %v4147 = vmax.f32 %v4139, 0.0
      %v4148 = vmax.f32 %v4140, 0.0
      %v4149 = vpack.c.bf16 %v4141, %v4141
      %v4150 = vpack.c.bf16 %v4142, %v4142
      %v4151 = vpack.c.bf16 %v4143, %v4143
      %v4152 = vpack.c.bf16 %v4144, %v4144
      %v4153 = vpack.c.bf16 %v4145, %v4145
      %v4154 = vpack.c.bf16 %v4146, %v4146
      %v4155 = vpack.c.bf16 %v4147, %v4147
      %v4156 = vpack.c.bf16 %v4148, %v4148
      %v4165 = vunpack.c.l.b16 %v4149
      %v4166 = vunpack.c.l.b16 %v4150
      %v4167 = vunpack.c.l.b16 %v4151
      %v4168 = vunpack.c.l.b16 %v4152
      %v4169 = vunpack.c.l.b16 %v4153
      %v4170 = vunpack.c.l.b16 %v4154
      %v4171 = vunpack.c.l.b16 %v4155
      %v4172 = vunpack.c.l.b16 %v4156
      %v4173 = vpack.c.b16 %v4166, %v4165
      %v4174 = vpack.c.b16 %v4168, %v4167
      %v4175 = vpack.c.b16 %v4170, %v4169
      %v4176 = vpack.c.b16 %v4172, %v4171
      %4181 = vst [vmem:[%s279] sm:$0xff] %v4173
      %4182 = vst [vmem:[%s279 + $0x8] sm:$0xff] %v4174
      %4183 = vst [vmem:[%s279 + $0x10] sm:$0xff] %v4175
      %4184 = vst [vmem:[%s279 + $0x18] sm:$0xff] %v4176
      %s4185 = smul.u32 8, %s20
      %p4186 = scmp.lt.s32.totalorder %s19, 1
      %s4187 = scalar_select %p4186, %s19, 1
      %p4188 = scmp.lt.s32.totalorder %s4185, 7
      %s4189 = scalar_select %p4188, %s4185, 7
      %s4190 = smul.addr %s4187, 8
      %s4191 = sadd.s32 %s4189, %s4190
      %s4192 = smul.addr %s4191, 4
      %s4193 = scalar_lea.vmem %s4, %s4192
      // Predicated region
      $region37: #{gfe_two_apply.8} parent=35 // pred_check
        %p4194 = pneg %p151
      $region38: #{gfe_two_apply.8} parent=35 // pred_check_branch
        %4196 = sbr.rel (%p4194) target = $region40
      $region39: #{gfe_two_apply.8} parent=35 // pred_region
        %s4197 = smul.u32 8, %s20
      $region40: #{gfe_two_apply.8} parent=35 // pred_fallthru
        _
    $region36: #{gfe_two_apply.8} parent=5 // pred_fallthru
      _
    %p4198 = scmp.le.s32.totalorder 2, %s10
    // Predicated region
    $region41: #{gfe_two_apply.8} parent=5 // pred_check
      %p4199 = pneg %p4198
    $region42: #{gfe_two_apply.8} parent=5 // pred_check_branch
      %4201 = sbr.rel (%p4199) target = $region44
    $region43: #{gfe_two_apply.8} parent=5 // pred_region
      %s4202 = ssub.s32 %s10, 2
      // Predicated region
      $region45: #{gfe_two_apply.8} parent=43 // pred_check
        %p4203 = pneg %p157
      $region46: #{gfe_two_apply.8} parent=43 // pred_check_branch
        %4205 = sbr.rel (%p4203) target = $region48
      $region47: #{gfe_two_apply.8} parent=43 // pred_region
        %s4206 = smul.u32 8, %s22
        %p4207 = scmp.lt.s32.totalorder %s21, 1
        %s4208 = scalar_select %p4207, %s21, 1
        %p4209 = scmp.lt.s32.totalorder %s4206, 7
        %s4210 = scalar_select %p4209, %s4206, 7
        %s4211 = smul.addr %s4208, 8
        %s4212 = sadd.s32 %s4210, %s4211
        %s4213 = smul.addr %s4212, 4
        %s4214 = scalar_lea.vmem %s4, %s4213
      $region48: #{gfe_two_apply.8} parent=43 // pred_fallthru
        _
    $region44: #{gfe_two_apply.8} parent=5 // pred_fallthru
      _
  $region6: #{gfe_two_apply.8} parent=0 // loop_footer
    %s14 = sadd.s32 1, %s10
  $region7: #{gfe_two_apply.8} parent=0 // loop_footer_branch
    %9 = sbr.rel target = $region3
  $region8: #{gfe_two_apply.8} parent=0 // loop_exit
    _

// kernel: gfe_two_apply.11
$region0: #{gfe_two_apply.11}
  #allocation0 [shape = 'u32[]', space=smem, size = 0x4, offset = 0x4, fixed_abs, tag = 'smem constant byte address 0x4 - core index']
  #allocation1 [shape = 'u32[144,128]{1,0:T(1,128)}', space=vmem, size = 0x12000, scoped, tag = 'internal scratch']
  #allocation2 [shape = 'bf16[64,1152]{1,0:T(16,128)(2,1)}', space=vmem, size = 0x24000, scoped, tag = 'scratch operand']
  %s0 = inlined_call_operand.vmem [shape: bf16[2,1,128,128], index: 0, kind: input, shape index: {}]
  %s1 = inlined_call_operand.vmem [shape: bf16[2,64,128], index: 1, kind: input, shape index: {}]
  %s2 = inlined_call_operand.vmem [shape: bf16[1152,128], index: 2, kind: input, shape index: {}]
  %s3 = inlined_call_operand.vmem [shape: f32[1,128], index: 3, kind: input, shape index: {}]
  %s4 = inlined_call_operand.vmem [shape: f32[1,128], index: 4, kind: input, shape index: {}]
  %s5 = inlined_call_operand.hbm [shape: f32[2,64,128], index: 5, kind: output, shape index: {}]
  %s6 = sld [smem:[#allocation0]]
  $region53: #{gfe_two_apply.11} parent=0
    _
  %s8 = ssub.s32 1, %s6
  %s9 = scalar_select 0, %s8, %s6
  $region1: #{gfe_two_apply.11} parent=0
    #allocation3 [shape = 'u8[65536]{0}', space=vmem, size = 0x10000, scoped, tag = 'output window, operand 0']
    #allocation4 [shape = 's32[2]{0}', space=sflag, size = 0x8, scoped, tag = 'scoped memory for gfe_two_apply.11']
    %10 = vsyncpa [#allocation4], 0
    %s11 = scalar_lea.sflag [#allocation4], 1
    %12 = vsyncpa %s11, 0
    loop: start=0, step=1, limit=4
    $region2: #{gfe_two_apply.11} parent=1 // loop_pre_header
      _
    $region3: #{gfe_two_apply.11} parent=1 // loop_header
      %s14 = sphi 0, %s18
      %p15 = scmp.ge.s32.totalorder %s14, 4
      %s21 = sphi 0, %s33
      %s22 = sphi 0, %s29
      %s23 = sphi 0, %s21
      %s24 = sphi 0, %s22
      %s25 = sphi 0, %s23
      %s26 = sphi 0, %s24
      %s36 = sphi 0, %s38
      %s39 = sphi 0, %s36
      %s40 = sphi 0, %s39
      %s56 = sphi 0, %s40
      %s64 = sphi 0, %s66
      %s67 = sphi 0, %s64
      %s68 = sphi 0, %s67
      %s84 = sphi 0, %s68
      %s88 = sphi 0, %s88
      %s90 = sphi 0, %s88
      %s91 = sphi 0, %s90
      %s105 = sphi 0, %s91
      %s109 = sphi 0, %s109
      %s111 = sphi 0, %s109
      %s112 = sphi 0, %s111
      %s126 = sphi 0, %s112
      %s130 = sphi 0, %s130
      %s132 = sphi 0, %s130
      %s133 = sphi 0, %s132
      %s147 = sphi 0, %s133
      %s155 = sphi 0, %s157
      %s158 = sphi 0, %s155
      %s159 = sphi 0, %s158
      %s175 = sphi 0, %s159
    $region4: #{gfe_two_apply.11} parent=1 // loop_header_branch
      %17 = sbr.rel (%p15) target = $region8
    $region5: #{gfe_two_apply.11} parent=1 // loop_body
      %s19 = ssub.s32 %s14, 1
      %s20 = ssub.s32 %s14, 2
      %s27 = sadd.s32 1, %s22
      %p28 = scmp.ge.s32.totalorder %s27, 1
      %s29 = scalar_select %p28, 0, %s27
      %s30 = sadd.s32 1, %s21
      %s31 = scalar_select %p28, %s30, %s21
      %p32 = scmp.ge.s32.totalorder %s31, 2
      %s33 = scalar_select %p32, 0, %s31
      %s34 = ssub.s32 %s21, %s33
      %p35 = scmp.eq.s32.totalorder %s34, 0
      %s37 = sadd.s32 %s36, 1
      %s38 = scalar_select %p35, %s36, %s37
      %p41 = pneg %p35
      %p42 = scmp.eq.s32.totalorder %s14, 1
      %p43 = por %p41, %p42
      %p44 = scmp.ne.s32.totalorder %s36, %s39
      %p45 = scmp.eq.s32.totalorder %s14, 0
      %p46 = por %p44, %p45
      %p47 = scmp.ne.s32.totalorder %s36, %s39
      %p48 = scmp.eq.s32.totalorder %s19, 1
      %p49 = por %p47, %p48
      %p50 = scmp.ne.s32.totalorder %s39, %s40
      %p51 = scmp.eq.s32.totalorder %s19, 0
      %p52 = por %p50, %p51
      %p53 = scmp.ne.s32.totalorder %s39, %s40
      %p54 = scmp.eq.s32.totalorder %s20, 1
      %p55 = por %p53, %p54
      %p57 = scmp.ne.s32.totalorder %s40, %s56
      %p58 = scmp.eq.s32.totalorder %s20, 0
      %p59 = por %p57, %p58
      %s60 = ssub.s32 %s21, %s33
      %s61 = ssub.s32 %s22, %s29
      %s62 = sor.u32 %s60, %s61
      %p63 = scmp.eq.s32.totalorder %s62, 0
      %s65 = sadd.s32 %s64, 1
      %s66 = scalar_select %p63, %s64, %s65
      %p69 = pneg %p63
      %p70 = scmp.eq.s32.totalorder %s14, 1
      %p71 = por %p69, %p70
      %p72 = scmp.ne.s32.totalorder %s64, %s67
      %p73 = scmp.eq.s32.totalorder %s14, 0
      %p74 = por %p72, %p73
      %p75 = scmp.ne.s32.totalorder %s64, %s67
      %p76 = scmp.eq.s32.totalorder %s19, 1
      %p77 = por %p75, %p76
      %p78 = scmp.ne.s32.totalorder %s67, %s68
      %p79 = scmp.eq.s32.totalorder %s19, 0
      %p80 = por %p78, %p79
      %p81 = scmp.ne.s32.totalorder %s67, %s68
      %p82 = scmp.eq.s32.totalorder %s20, 1
      %p83 = por %p81, %p82
      %p85 = scmp.ne.s32.totalorder %s68, %s84
      %p86 = scmp.eq.s32.totalorder %s20, 0
      %p87 = por %p85, %p86
      %s89 = sadd.s32 %s88, 1
      %p92 = scmp.eq.s32.totalorder %s14, 1
      %p93 = scmp.ne.s32.totalorder %s88, %s90
      %p94 = scmp.eq.s32.totalorder %s14, 0
      %p95 = por %p93, %p94
      %p96 = scmp.ne.s32.totalorder %s88, %s90
      %p97 = scmp.eq.s32.totalorder %s19, 1
      %p98 = por %p96, %p97
      %p99 = scmp.ne.s32.totalorder %s90, %s91
      %p100 = scmp.eq.s32.totalorder %s19, 0
      %p101 = por %p99, %p100
      %p102 = scmp.ne.s32.totalorder %s90, %s91
      %p103 = scmp.eq.s32.totalorder %s20, 1
      %p104 = por %p102, %p103
      %p106 = scmp.ne.s32.totalorder %s91, %s105
      %p107 = scmp.eq.s32.totalorder %s20, 0
      %p108 = por %p106, %p107
      %s110 = sadd.s32 %s109, 1
      %p113 = scmp.eq.s32.totalorder %s14, 1
      %p114 = scmp.ne.s32.totalorder %s109, %s111
      %p115 = scmp.eq.s32.totalorder %s14, 0
      %p116 = por %p114, %p115
      %p117 = scmp.ne.s32.totalorder %s109, %s111
      %p118 = scmp.eq.s32.totalorder %s19, 1
      %p119 = por %p117, %p118
      %p120 = scmp.ne.s32.totalorder %s111, %s112
      %p121 = scmp.eq.s32.totalorder %s19, 0
      %p122 = por %p120, %p121
      %p123 = scmp.ne.s32.totalorder %s111, %s112
      %p124 = scmp.eq.s32.totalorder %s20, 1
      %p125 = por %p123, %p124
      %p127 = scmp.ne.s32.totalorder %s112, %s126
      %p128 = scmp.eq.s32.totalorder %s20, 0
      %p129 = por %p127, %p128
      %s131 = sadd.s32 %s130, 1
      %p134 = scmp.eq.s32.totalorder %s14, 1
      %p135 = scmp.ne.s32.totalorder %s130, %s132
      %p136 = scmp.eq.s32.totalorder %s14, 0
      %p137 = por %p135, %p136
      %p138 = scmp.ne.s32.totalorder %s130, %s132
      %p139 = scmp.eq.s32.totalorder %s19, 1
      %p140 = por %p138, %p139
      %p141 = scmp.ne.s32.totalorder %s132, %s133
      %p142 = scmp.eq.s32.totalorder %s19, 0
      %p143 = por %p141, %p142
      %p144 = scmp.ne.s32.totalorder %s132, %s133
      %p145 = scmp.eq.s32.totalorder %s20, 1
      %p146 = por %p144, %p145
      %p148 = scmp.ne.s32.totalorder %s133, %s147
      %p149 = scmp.eq.s32.totalorder %s20, 0
      %p150 = por %p148, %p149
      %s151 = ssub.s32 %s21, %s33
      %s152 = ssub.s32 %s22, %s29
      %s153 = sor.u32 %s151, %s152
      %p154 = scmp.eq.s32.totalorder %s153, 0
      %s156 = sadd.s32 %s155, 1
      %s157 = scalar_select %p154, %s155, %s156
      %p160 = pneg %p154
      %p161 = scmp.eq.s32.totalorder %s14, 1
      %p162 = por %p160, %p161
      %p163 = scmp.ne.s32.totalorder %s155, %s158
      %p164 = scmp.eq.s32.totalorder %s14, 0
      %p165 = por %p163, %p164
      %p166 = scmp.ne.s32.totalorder %s155, %s158
      %p167 = scmp.eq.s32.totalorder %s19, 1
      %p168 = por %p166, %p167
      %p169 = scmp.ne.s32.totalorder %s158, %s159
      %p170 = scmp.eq.s32.totalorder %s19, 0
      %p171 = por %p169, %p170
      %p172 = scmp.ne.s32.totalorder %s158, %s159
      %p173 = scmp.eq.s32.totalorder %s20, 1
      %p174 = por %p172, %p173
      %p176 = scmp.ne.s32.totalorder %s159, %s175
      %p177 = scmp.eq.s32.totalorder %s20, 0
      %p178 = por %p176, %p177
      %p179 = scmp.le.s32.totalorder 1, %s14
      %p180 = scmp.lt.s32.totalorder %s14, 3
      %p181 = pnand %p179, %p180
      %p182 = pneg %p181
      // Predicated region
      $region9: #{gfe_two_apply.11} parent=5 // pred_check
        _
      $region10: #{gfe_two_apply.11} parent=5 // pred_check_branch
        %184 = sbr.rel (%p181) target = $region12
      $region11: #{gfe_two_apply.11} parent=5 // pred_region
        %s185 = ssub.s32 %s14, 1
        // Predicated region
        $region13: #{gfe_two_apply.11} parent=11 // pred_check
          %p186 = pneg %p101
        $region14: #{gfe_two_apply.11} parent=11 // pred_check_branch
          %188 = sbr.rel (%p186) target = $region16
        $region15: #{gfe_two_apply.11} parent=11 // pred_region
          _
        $region16: #{gfe_two_apply.11} parent=11 // pred_fallthru
          _
        // Predicated region
        $region17: #{gfe_two_apply.11} parent=11 // pred_check
          %p189 = pneg %p122
        $region18: #{gfe_two_apply.11} parent=11 // pred_check_branch
          %191 = sbr.rel (%p189) target = $region20
        $region19: #{gfe_two_apply.11} parent=11 // pred_region
          _
        $region20: #{gfe_two_apply.11} parent=11 // pred_fallthru
          _
        // Predicated region
        $region21: #{gfe_two_apply.11} parent=11 // pred_check
          %p192 = pneg %p143
        $region22: #{gfe_two_apply.11} parent=11 // pred_check_branch
          %194 = sbr.rel (%p192) target = $region24
        $region23: #{gfe_two_apply.11} parent=11 // pred_region
          _
        $region24: #{gfe_two_apply.11} parent=11 // pred_fallthru
          _
      $region12: #{gfe_two_apply.11} parent=5 // pred_fallthru
        _
      %p195 = scmp.lt.s32.totalorder %s14, 2
      // Predicated region
      $region25: #{gfe_two_apply.11} parent=5 // pred_check
        %p196 = pneg %p195
      $region26: #{gfe_two_apply.11} parent=5 // pred_check_branch
        %198 = sbr.rel (%p196) target = $region28
      $region27: #{gfe_two_apply.11} parent=5 // pred_region
        // Predicated region
        $region29: #{gfe_two_apply.11} parent=27 // pred_check
          %p199 = pneg %p46
        $region30: #{gfe_two_apply.11} parent=27 // pred_check_branch
          %201 = sbr.rel (%p199) target = $region32
        $region31: #{gfe_two_apply.11} parent=27 // pred_region
          %p202 = scmp.lt.s32.totalorder %s21, 1
          %s203 = scalar_select %p202, %s21, 1
          %s204 = smul.addr %s203, 16
          %s205 = smul.addr %s204, 4
          %s206 = scalar_lea.vmem %s0, %s205
        $region32: #{gfe_two_apply.11} parent=27 // pred_fallthru
          _
        // Predicated region
        $region33: #{gfe_two_apply.11} parent=27 // pred_check
          %p207 = pneg %p74
        $region34: #{gfe_two_apply.11} parent=27 // pred_check_branch
          %209 = sbr.rel (%p207) target = $region36
        $region35: #{gfe_two_apply.11} parent=27 // pred_region
          %s210 = smul.u32 8, %s22
          %p211 = scmp.lt.s32.totalorder %s21, 1
          %s212 = scalar_select %p211, %s21, 1
          %p213 = scmp.lt.s32.totalorder %s210, 7
          %s214 = scalar_select %p213, %s210, 7
          %s215 = smul.addr %s212, 8
          %s216 = sadd.s32 %s214, %s215
          %s217 = smul.addr %s216, 4
          %s218 = scalar_lea.vmem %s1, %s217
          %s219 = smul.u32 8, %s22
        $region36: #{gfe_two_apply.11} parent=27 // pred_fallthru
          _
      $region28: #{gfe_two_apply.11} parent=5 // pred_fallthru
        _
      %p220 = scmp.le.s32.totalorder 1, %s14
      %p221 = scmp.lt.s32.totalorder %s14, 3
      %p222 = pnand %p220, %p221
      %p223 = pneg %p222
      // Predicated region
      $region37: #{gfe_two_apply.11} parent=5 // pred_check
        _
      $region38: #{gfe_two_apply.11} parent=5 // pred_check_branch
        %225 = sbr.rel (%p222) target = $region40
      $region39: #{gfe_two_apply.11} parent=5 // pred_region
        %s226 = ssub.s32 %s14, 1
        %p227 = scmp.lt.s32.totalorder %s23, 1
        %s228 = scalar_select %p227, %s23, 1
        %s229 = smul.addr %s228, 16
        %s230 = smul.addr %s229, 4
        %s231 = scalar_lea.vmem %s0, %s230
        %p232 = pneg %p52
        %p233 = pneg %p49
        %s234 = smul.u32 8, %s24
        %p235 = scmp.lt.s32.totalorder %s23, 1
        %s236 = scalar_select %p235, %s23, 1
        %p237 = scmp.lt.s32.totalorder %s234, 7
        %s238 = scalar_select %p237, %s234, 7
        %s239 = smul.addr %s236, 8
        %s240 = sadd.s32 %s238, %s239
        %s241 = smul.addr %s240, 4
        %s242 = scalar_lea.vmem %s1, %s241
        %p243 = pneg %p80
        %p244 = pneg %p77
        %p245 = pneg %p101
        %p246 = pneg %p98
        %p247 = pneg %p122
        %p248 = pneg %p119
        %p249 = pneg %p143
        %p250 = pneg %p140
        %p251 = pneg %p171
        %p252 = pneg %p168
        %s253 = sand.u32 %s158, 1
        %s254 = scalar_lea.sflag [#allocation4], %s253
        %s255 = sand.u32 %s158, 1
        %s256 = smul.addr %s255, 64
        %s257 = scalar_lea.vmem [#allocation3], %s256
        %p258 = scmp.lt.s32.totalorder %s23, 1
        %s259 = scalar_select %p258, %s23, 1
        %s260 = smul.addr %s259, 16
        %s261 = smul.addr %s260, 4
        %s262 = scalar_lea.vmem %s0, %s261
        %s263 = smul.u32 8, %s24
        %p264 = scmp.lt.s32.totalorder %s23, 1
        %s265 = scalar_select %p264, %s23, 1
        %p266 = scmp.lt.s32.totalorder %s263, 7
        %s267 = scalar_select %p266, %s263, 7
        %s268 = smul.addr %s265, 8
        %s269 = sadd.s32 %s267, %s268
        %s270 = smul.addr %s269, 4
        %s271 = scalar_lea.vmem %s1, %s270
        %s272 = smul.u32 8, %s24
        %s273 = smul.u32 8, %s24
        %s275 = smul.u32 %s24, 8
        %s276 = smul.u32 %s24, 64
        %s277 = sshra.s32 %s276, 3
        %s278 = sand.u32 %s276, 7
        %s279 = smul.addr %s277, 4
        %s280 = scalar_lea.vmem %s262, %s279
        %v281 = vld [vmem:[%s280] sm:$0xf]
        %v282 = vld [vmem:[%s280 + $0x4] sm:$0xf]
        %v283 = vld [vmem:[%s280 + $0x8] sm:$0xf]
        %v284 = vld [vmem:[%s280 + $0xc] sm:$0xf]
        %v285 = vld [vmem:[%s280 + $0x10] sm:$0xf]
        %v286 = vld [vmem:[%s280 + $0x14] sm:$0xf]
        %v287 = vld [vmem:[%s280 + $0x18] sm:$0xf]
        %v288 = vld [vmem:[%s280 + $0x1c] sm:$0xf]
        %v297 = vunpack.c.l.b16 %v281
        %v298 = vunpack.c.l.b16 %v282
        %v299 = vunpack.c.l.b16 %v283
        %v300 = vunpack.c.l.b16 %v284
        %v301 = vunpack.c.l.b16 %v285
        %v302 = vunpack.c.l.b16 %v286
        %v303 = vunpack.c.l.b16 %v287
        %v304 = vunpack.c.l.b16 %v288
        %v305 = vpack.c.b16 %v298, %v297
        %v306 = vpack.c.b16 %v300, %v299
        %v307 = vpack.c.b16 %v302, %v301
        %v308 = vpack.c.b16 %v304, %v303
        %313 = vst [vmem:[#allocation2] sm:$0xff] %v305
        %314 = vst [vmem:[#allocation2 + $0x48] sm:$0xff] %v306
        %315 = vst [vmem:[#allocation2 + $0x90] sm:$0xff] %v307
        %316 = vst [vmem:[#allocation2 + $0xd8] sm:$0xff] %v308
        %s317 = sadd.s32 %s275, 1
        %s318 = smul.u32 %s317, 8
        %s319 = sshra.s32 %s318, 3
        %s320 = sand.u32 %s318, 7
        %s321 = smul.addr %s319, 4
        %s322 = scalar_lea.vmem %s262, %s321
        %v323 = vld [vmem:[%s322] sm:$0xf]
        %v324 = vld [vmem:[%s322 + $0x4] sm:$0xf]
        %v325 = vld [vmem:[%s322 + $0x8] sm:$0xf]
        %v326 = vld [vmem:[%s322 + $0xc] sm:$0xf]
        %v327 = vld [vmem:[%s322 + $0x10] sm:$0xf]
        %v328 = vld [vmem:[%s322 + $0x14] sm:$0xf]
        %v329 = vld [vmem:[%s322 + $0x18] sm:$0xf]
        %v330 = vld [vmem:[%s322 + $0x1c] sm:$0xf]
        %v339 = vunpack.c.l.b16 %v323
        %v340 = vunpack.c.l.b16 %v324
        %v341 = vunpack.c.l.b16 %v325
        %v342 = vunpack.c.l.b16 %v326
        %v343 = vunpack.c.l.b16 %v327
        %v344 = vunpack.c.l.b16 %v328
        %v345 = vunpack.c.l.b16 %v329
        %v346 = vunpack.c.l.b16 %v330
        %v347 = vpack.c.b16 %v340, %v339
        %v348 = vpack.c.b16 %v342, %v341
        %v349 = vpack.c.b16 %v344, %v343
        %v350 = vpack.c.b16 %v346, %v345
        %355 = vst [vmem:[#allocation2 + $0x8] sm:$0xff] %v347
        %356 = vst [vmem:[#allocation2 + $0x50] sm:$0xff] %v348
        %357 = vst [vmem:[#allocation2 + $0x98] sm:$0xff] %v349
        %358 = vst [vmem:[#allocation2 + $0xe0] sm:$0xff] %v350
        %s359 = sadd.s32 %s275, 2
        %s360 = smul.u32 %s359, 8
        %s361 = sshra.s32 %s360, 3
        %s362 = sand.u32 %s360, 7
        %s363 = smul.addr %s361, 4
        %s364 = scalar_lea.vmem %s262, %s363
        %v365 = vld [vmem:[%s364] sm:$0xf]
        %v366 = vld [vmem:[%s364 + $0x4] sm:$0xf]
        %v367 = vld [vmem:[%s364 + $0x8] sm:$0xf]
        %v368 = vld [vmem:[%s364 + $0xc] sm:$0xf]
        %v369 = vld [vmem:[%s364 + $0x10] sm:$0xf]
        %v370 = vld [vmem:[%s364 + $0x14] sm:$0xf]
        %v371 = vld [vmem:[%s364 + $0x18] sm:$0xf]
        %v372 = vld [vmem:[%s364 + $0x1c] sm:$0xf]
        %v381 = vunpack.c.l.b16 %v365
        %v382 = vunpack.c.l.b16 %v366
        %v383 = vunpack.c.l.b16 %v367
        %v384 = vunpack.c.l.b16 %v368
        %v385 = vunpack.c.l.b16 %v369
        %v386 = vunpack.c.l.b16 %v370
        %v387 = vunpack.c.l.b16 %v371
        %v388 = vunpack.c.l.b16 %v372
        %v389 = vpack.c.b16 %v382, %v381
        %v390 = vpack.c.b16 %v384, %v383
        %v391 = vpack.c.b16 %v386, %v385
        %v392 = vpack.c.b16 %v388, %v387
        %397 = vst [vmem:[#allocation2 + $0x10] sm:$0xff] %v389
        %398 = vst [vmem:[#allocation2 + $0x58] sm:$0xff] %v390
        %399 = vst [vmem:[#allocation2 + $0xa0] sm:$0xff] %v391
        %400 = vst [vmem:[#allocation2 + $0xe8] sm:$0xff] %v392
        %s401 = sadd.s32 %s275, 3
        %s402 = smul.u32 %s401, 8
        %s403 = sshra.s32 %s402, 3
        %s404 = sand.u32 %s402, 7
        %s405 = smul.addr %s403, 4
        %s406 = scalar_lea.vmem %s262, %s405
        %v407 = vld [vmem:[%s406] sm:$0xf]
        %v408 = vld [vmem:[%s406 + $0x4] sm:$0xf]
        %v409 = vld [vmem:[%s406 + $0x8] sm:$0xf]
        %v410 = vld [vmem:[%s406 + $0xc] sm:$0xf]
        %v411 = vld [vmem:[%s406 + $0x10] sm:$0xf]
        %v412 = vld [vmem:[%s406 + $0x14] sm:$0xf]
        %v413 = vld [vmem:[%s406 + $0x18] sm:$0xf]
        %v414 = vld [vmem:[%s406 + $0x1c] sm:$0xf]
        %v423 = vunpack.c.l.b16 %v407
        %v424 = vunpack.c.l.b16 %v408
        %v425 = vunpack.c.l.b16 %v409
        %v426 = vunpack.c.l.b16 %v410
        %v427 = vunpack.c.l.b16 %v411
        %v428 = vunpack.c.l.b16 %v412
        %v429 = vunpack.c.l.b16 %v413
        %v430 = vunpack.c.l.b16 %v414
        %v431 = vpack.c.b16 %v424, %v423
        %v432 = vpack.c.b16 %v426, %v425
        %v433 = vpack.c.b16 %v428, %v427
        %v434 = vpack.c.b16 %v430, %v429
        %439 = vst [vmem:[#allocation2 + $0x18] sm:$0xff] %v431
        %440 = vst [vmem:[#allocation2 + $0x60] sm:$0xff] %v432
        %441 = vst [vmem:[#allocation2 + $0xa8] sm:$0xff] %v433
        %442 = vst [vmem:[#allocation2 + $0xf0] sm:$0xff] %v434
        %s443 = sadd.s32 %s275, 4
        %s444 = smul.u32 %s443, 8
        %s445 = sshra.s32 %s444, 3
        %s446 = sand.u32 %s444, 7
        %s447 = smul.addr %s445, 4
        %s448 = scalar_lea.vmem %s262, %s447
        %v449 = vld [vmem:[%s448] sm:$0xf]
        %v450 = vld [vmem:[%s448 + $0x4] sm:$0xf]
        %v451 = vld [vmem:[%s448 + $0x8] sm:$0xf]
        %v452 = vld [vmem:[%s448 + $0xc] sm:$0xf]
        %v453 = vld [vmem:[%s448 + $0x10] sm:$0xf]
        %v454 = vld [vmem:[%s448 + $0x14] sm:$0xf]
        %v455 = vld [vmem:[%s448 + $0x18] sm:$0xf]
        %v456 = vld [vmem:[%s448 + $0x1c] sm:$0xf]
        %v465 = vunpack.c.l.b16 %v449
        %v466 = vunpack.c.l.b16 %v450
        %v467 = vunpack.c.l.b16 %v451
        %v468 = vunpack.c.l.b16 %v452
        %v469 = vunpack.c.l.b16 %v453
        %v470 = vunpack.c.l.b16 %v454
        %v471 = vunpack.c.l.b16 %v455
        %v472 = vunpack.c.l.b16 %v456
        %v473 = vpack.c.b16 %v466, %v465
        %v474 = vpack.c.b16 %v468, %v467
        %v475 = vpack.c.b16 %v470, %v469
        %v476 = vpack.c.b16 %v472, %v471
        %481 = vst [vmem:[#allocation2 + $0x20] sm:$0xff] %v473
        %482 = vst [vmem:[#allocation2 + $0x68] sm:$0xff] %v474
        %483 = vst [vmem:[#allocation2 + $0xb0] sm:$0xff] %v475
        %484 = vst [vmem:[#allocation2 + $0xf8] sm:$0xff] %v476
        %s485 = sadd.s32 %s275, 5
        %s486 = smul.u32 %s485, 8
        %s487 = sshra.s32 %s486, 3
        %s488 = sand.u32 %s486, 7
        %s489 = smul.addr %s487, 4
        %s490 = scalar_lea.vmem %s262, %s489
        %v491 = vld [vmem:[%s490] sm:$0xf]
        %v492 = vld [vmem:[%s490 + $0x4] sm:$0xf]
        %v493 = vld [vmem:[%s490 + $0x8] sm:$0xf]
        %v494 = vld [vmem:[%s490 + $0xc] sm:$0xf]
        %v495 = vld [vmem:[%s490 + $0x10] sm:$0xf]
        %v496 = vld [vmem:[%s490 + $0x14] sm:$0xf]
        %v497 = vld [vmem:[%s490 + $0x18] sm:$0xf]
        %v498 = vld [vmem:[%s490 + $0x1c] sm:$0xf]
        %v507 = vunpack.c.l.b16 %v491
        %v508 = vunpack.c.l.b16 %v492
        %v509 = vunpack.c.l.b16 %v493
        %v510 = vunpack.c.l.b16 %v494
        %v511 = vunpack.c.l.b16 %v495
        %v512 = vunpack.c.l.b16 %v496
        %v513 = vunpack.c.l.b16 %v497
        %v514 = vunpack.c.l.b16 %v498
        %v515 = vpack.c.b16 %v508, %v507
        %v516 = vpack.c.b16 %v510, %v509
        %v517 = vpack.c.b16 %v512, %v511
        %v518 = vpack.c.b16 %v514, %v513
        %523 = vst [vmem:[#allocation2 + $0x28] sm:$0xff] %v515
        %524 = vst [vmem:[#allocation2 + $0x70] sm:$0xff] %v516
        %525 = vst [vmem:[#allocation2 + $0xb8] sm:$0xff] %v517
        %526 = vst [vmem:[#allocation2 + $0x100] sm:$0xff] %v518
        %s527 = sadd.s32 %s275, 6
        %s528 = smul.u32 %s527, 8
        %s529 = sshra.s32 %s528, 3
        %s530 = sand.u32 %s528, 7
        %s531 = smul.addr %s529, 4
        %s532 = scalar_lea.vmem %s262, %s531
        %v533 = vld [vmem:[%s532] sm:$0xf]
        %v534 = vld [vmem:[%s532 + $0x4] sm:$0xf]
        %v535 = vld [vmem:[%s532 + $0x8] sm:$0xf]
        %v536 = vld [vmem:[%s532 + $0xc] sm:$0xf]
        %v537 = vld [vmem:[%s532 + $0x10] sm:$0xf]
        %v538 = vld [vmem:[%s532 + $0x14] sm:$0xf]
        %v539 = vld [vmem:[%s532 + $0x18] sm:$0xf]
        %v540 = vld [vmem:[%s532 + $0x1c] sm:$0xf]
        %v549 = vunpack.c.l.b16 %v533
        %v550 = vunpack.c.l.b16 %v534
        %v551 = vunpack.c.l.b16 %v535
        %v552 = vunpack.c.l.b16 %v536
        %v553 = vunpack.c.l.b16 %v537
        %v554 = vunpack.c.l.b16 %v538
        %v555 = vunpack.c.l.b16 %v539
        %v556 = vunpack.c.l.b16 %v540
        %v557 = vpack.c.b16 %v550, %v549
        %v558 = vpack.c.b16 %v552, %v551
        %v559 = vpack.c.b16 %v554, %v553
        %v560 = vpack.c.b16 %v556, %v555
        %565 = vst [vmem:[#allocation2 + $0x30] sm:$0xff] %v557
        %566 = vst [vmem:[#allocation2 + $0x78] sm:$0xff] %v558
        %567 = vst [vmem:[#allocation2 + $0xc0] sm:$0xff] %v559
        %568 = vst [vmem:[#allocation2 + $0x108] sm:$0xff] %v560
        %s569 = sadd.s32 %s275, 7
        %s570 = smul.u32 %s569, 8
        %s571 = sshra.s32 %s570, 3
        %s572 = sand.u32 %s570, 7
        %s573 = smul.addr %s571, 4
        %s574 = scalar_lea.vmem %s262, %s573
        %v575 = vld [vmem:[%s574] sm:$0xf]
        %v576 = vld [vmem:[%s574 + $0x4] sm:$0xf]
        %v577 = vld [vmem:[%s574 + $0x8] sm:$0xf]
        %v578 = vld [vmem:[%s574 + $0xc] sm:$0xf]
        %v579 = vld [vmem:[%s574 + $0x10] sm:$0xf]
        %v580 = vld [vmem:[%s574 + $0x14] sm:$0xf]
        %v581 = vld [vmem:[%s574 + $0x18] sm:$0xf]
        %v582 = vld [vmem:[%s574 + $0x1c] sm:$0xf]
        %v591 = vunpack.c.l.b16 %v575
        %v592 = vunpack.c.l.b16 %v576
        %v593 = vunpack.c.l.b16 %v577
        %v594 = vunpack.c.l.b16 %v578
        %v595 = vunpack.c.l.b16 %v579
        %v596 = vunpack.c.l.b16 %v580
        %v597 = vunpack.c.l.b16 %v581
        %v598 = vunpack.c.l.b16 %v582
        %v599 = vpack.c.b16 %v592, %v591
        %v600 = vpack.c.b16 %v594, %v593
        %v601 = vpack.c.b16 %v596, %v595
        %v602 = vpack.c.b16 %v598, %v597
        %607 = vst [vmem:[#allocation2 + $0x38] sm:$0xff] %v599
        %608 = vst [vmem:[#allocation2 + $0x80] sm:$0xff] %v600
        %609 = vst [vmem:[#allocation2 + $0xc8] sm:$0xff] %v601
        %610 = vst [vmem:[#allocation2 + $0x110] sm:$0xff] %v602
        %s611 = sadd.s32 %s275, 8
        %s612 = smul.u32 %s611, 8
        %s613 = sshra.s32 %s612, 3
        %s614 = sand.u32 %s612, 7
        %s615 = smul.addr %s613, 4
        %s616 = scalar_lea.vmem %s262, %s615
        %v617 = vld [vmem:[%s616] sm:$0xf]
        %v618 = vld [vmem:[%s616 + $0x4] sm:$0xf]
        %v619 = vld [vmem:[%s616 + $0x8] sm:$0xf]
        %v620 = vld [vmem:[%s616 + $0xc] sm:$0xf]
        %v621 = vld [vmem:[%s616 + $0x10] sm:$0xf]
        %v622 = vld [vmem:[%s616 + $0x14] sm:$0xf]
        %v623 = vld [vmem:[%s616 + $0x18] sm:$0xf]
        %v624 = vld [vmem:[%s616 + $0x1c] sm:$0xf]
        %v633 = vunpack.c.l.b16 %v617
        %v634 = vunpack.c.l.b16 %v618
        %v635 = vunpack.c.l.b16 %v619
        %v636 = vunpack.c.l.b16 %v620
        %v637 = vunpack.c.l.b16 %v621
        %v638 = vunpack.c.l.b16 %v622
        %v639 = vunpack.c.l.b16 %v623
        %v640 = vunpack.c.l.b16 %v624
        %v641 = vpack.c.b16 %v634, %v633
        %v642 = vpack.c.b16 %v636, %v635
        %v643 = vpack.c.b16 %v638, %v637
        %v644 = vpack.c.b16 %v640, %v639
        %649 = vst [vmem:[#allocation2 + $0x40] sm:$0xff] %v641
        %650 = vst [vmem:[#allocation2 + $0x88] sm:$0xff] %v642
        %651 = vst [vmem:[#allocation2 + $0xd0] sm:$0xff] %v643
        %652 = vst [vmem:[#allocation2 + $0x118] sm:$0xff] %v644
        %v653 = vld [vmem:[#allocation2] sm:$0xff]
        %v654 = vld [vmem:[#allocation2 + $0x8] sm:$0xff]
        %v655 = vld [vmem:[#allocation2 + $0x10] sm:$0xff]
        %v656 = vld [vmem:[#allocation2 + $0x18] sm:$0xff]
        %v657 = vld [vmem:[#allocation2 + $0x20] sm:$0xff]
        %v658 = vld [vmem:[#allocation2 + $0x28] sm:$0xff]
        %v659 = vld [vmem:[#allocation2 + $0x30] sm:$0xff]
        %v660 = vld [vmem:[#allocation2 + $0x38] sm:$0xff]
        %v661 = vld [vmem:[#allocation2 + $0x40] sm:$0xff]
        %v662 = vld [vmem:[#allocation2 + $0x48] sm:$0xff]
        %v663 = vld [vmem:[#allocation2 + $0x50] sm:$0xff]
        %v664 = vld [vmem:[#allocation2 + $0x58] sm:$0xff]
        %v665 = vld [vmem:[#allocation2 + $0x60] sm:$0xff]
        %v666 = vld [vmem:[#allocation2 + $0x68] sm:$0xff]
        %v667 = vld [vmem:[#allocation2 + $0x70] sm:$0xff]
        %v668 = vld [vmem:[#allocation2 + $0x78] sm:$0xff]
        %v669 = vld [vmem:[#allocation2 + $0x80] sm:$0xff]
        %v670 = vld [vmem:[#allocation2 + $0x88] sm:$0xff]
        %v671 = vld [vmem:[#allocation2 + $0x90] sm:$0xff]
        %v672 = vld [vmem:[#allocation2 + $0x98] sm:$0xff]
        %v673 = vld [vmem:[#allocation2 + $0xa0] sm:$0xff]
        %v674 = vld [vmem:[#allocation2 + $0xa8] sm:$0xff]
        %v675 = vld [vmem:[#allocation2 + $0xb0] sm:$0xff]
        %v676 = vld [vmem:[#allocation2 + $0xb8] sm:$0xff]
        %v677 = vld [vmem:[#allocation2 + $0xc0] sm:$0xff]
        %v678 = vld [vmem:[#allocation2 + $0xc8] sm:$0xff]
        %v679 = vld [vmem:[#allocation2 + $0xd0] sm:$0xff]
        %v680 = vld [vmem:[#allocation2 + $0xd8] sm:$0xff]
        %v681 = vld [vmem:[#allocation2 + $0xe0] sm:$0xff]
        %v682 = vld [vmem:[#allocation2 + $0xe8] sm:$0xff]
        %v683 = vld [vmem:[#allocation2 + $0xf0] sm:$0xff]
        %v684 = vld [vmem:[#allocation2 + $0xf8] sm:$0xff]
        %v685 = vld [vmem:[#allocation2 + $0x100] sm:$0xff]
        %v686 = vld [vmem:[#allocation2 + $0x108] sm:$0xff]
        %v687 = vld [vmem:[#allocation2 + $0x110] sm:$0xff]
        %v688 = vld [vmem:[#allocation2 + $0x118] sm:$0xff]
        %v689 = vld [vmem:[%s2] sm:$0xf]
        %v690 = vld [vmem:[%s2 + $0x4] sm:$0xf]
        %v691 = vld [vmem:[%s2 + $0x8] sm:$0xf]
        %v692 = vld [vmem:[%s2 + $0xc] sm:$0xf]
        %v693 = vld [vmem:[%s2 + $0x10] sm:$0xf]
        %v694 = vld [vmem:[%s2 + $0x14] sm:$0xf]
        %v695 = vld [vmem:[%s2 + $0x18] sm:$0xf]
        %v696 = vld [vmem:[%s2 + $0x1c] sm:$0xf]
        %v697 = vld [vmem:[%s2 + $0x20] sm:$0xf]
        %v698 = vld [vmem:[%s2 + $0x24] sm:$0xf]
        %v699 = vld [vmem:[%s2 + $0x28] sm:$0xf]
        %v700 = vld [vmem:[%s2 + $0x2c] sm:$0xf]
        %v701 = vld [vmem:[%s2 + $0x30] sm:$0xf]
        %v702 = vld [vmem:[%s2 + $0x34] sm:$0xf]
        %v703 = vld [vmem:[%s2 + $0x38] sm:$0xf]
        %v704 = vld [vmem:[%s2 + $0x3c] sm:$0xf]
        %v705 = vld [vmem:[%s2 + $0x40] sm:$0xf]
        %v706 = vld [vmem:[%s2 + $0x44] sm:$0xf]
        %v707 = vld [vmem:[%s2 + $0x48] sm:$0xf]
        %v708 = vld [vmem:[%s2 + $0x4c] sm:$0xf]
        %v709 = vld [vmem:[%s2 + $0x50] sm:$0xf]
        %v710 = vld [vmem:[%s2 + $0x54] sm:$0xf]
        %v711 = vld [vmem:[%s2 + $0x58] sm:$0xf]
        %v712 = vld [vmem:[%s2 + $0x5c] sm:$0xf]
        %v713 = vld [vmem:[%s2 + $0x60] sm:$0xf]
        %v714 = vld [vmem:[%s2 + $0x64] sm:$0xf]
        %v715 = vld [vmem:[%s2 + $0x68] sm:$0xf]
        %v716 = vld [vmem:[%s2 + $0x6c] sm:$0xf]
        %v717 = vld [vmem:[%s2 + $0x70] sm:$0xf]
        %v718 = vld [vmem:[%s2 + $0x74] sm:$0xf]
        %v719 = vld [vmem:[%s2 + $0x78] sm:$0xf]
        %v720 = vld [vmem:[%s2 + $0x7c] sm:$0xf]
        %v721 = vld [vmem:[%s2 + $0x80] sm:$0xf]
        %v722 = vld [vmem:[%s2 + $0x84] sm:$0xf]
        %v723 = vld [vmem:[%s2 + $0x88] sm:$0xf]
        %v724 = vld [vmem:[%s2 + $0x8c] sm:$0xf]
        %v725 = vld [vmem:[%s2 + $0x90] sm:$0xf]
        %v726 = vld [vmem:[%s2 + $0x94] sm:$0xf]
        %v727 = vld [vmem:[%s2 + $0x98] sm:$0xf]
        %v728 = vld [vmem:[%s2 + $0x9c] sm:$0xf]
        %v729 = vld [vmem:[%s2 + $0xa0] sm:$0xf]
        %v730 = vld [vmem:[%s2 + $0xa4] sm:$0xf]
        %v731 = vld [vmem:[%s2 + $0xa8] sm:$0xf]
        %v732 = vld [vmem:[%s2 + $0xac] sm:$0xf]
        %v733 = vld [vmem:[%s2 + $0xb0] sm:$0xf]
        %v734 = vld [vmem:[%s2 + $0xb4] sm:$0xf]
        %v735 = vld [vmem:[%s2 + $0xb8] sm:$0xf]
        %v736 = vld [vmem:[%s2 + $0xbc] sm:$0xf]
        %v737 = vld [vmem:[%s2 + $0xc0] sm:$0xf]
        %v738 = vld [vmem:[%s2 + $0xc4] sm:$0xf]
        %v739 = vld [vmem:[%s2 + $0xc8] sm:$0xf]
        %v740 = vld [vmem:[%s2 + $0xcc] sm:$0xf]
        %v741 = vld [vmem:[%s2 + $0xd0] sm:$0xf]
        %v742 = vld [vmem:[%s2 + $0xd4] sm:$0xf]
        %v743 = vld [vmem:[%s2 + $0xd8] sm:$0xf]
        %v744 = vld [vmem:[%s2 + $0xdc] sm:$0xf]
        %v745 = vld [vmem:[%s2 + $0xe0] sm:$0xf]
        %v746 = vld [vmem:[%s2 + $0xe4] sm:$0xf]
        %v747 = vld [vmem:[%s2 + $0xe8] sm:$0xf]
        %v748 = vld [vmem:[%s2 + $0xec] sm:$0xf]
        %v749 = vld [vmem:[%s2 + $0xf0] sm:$0xf]
        %v750 = vld [vmem:[%s2 + $0xf4] sm:$0xf]
        %v751 = vld [vmem:[%s2 + $0xf8] sm:$0xf]
        %v752 = vld [vmem:[%s2 + $0xfc] sm:$0xf]
        %v753 = vld [vmem:[%s2 + $0x100] sm:$0xf]
        %v754 = vld [vmem:[%s2 + $0x104] sm:$0xf]
        %v755 = vld [vmem:[%s2 + $0x108] sm:$0xf]
        %v756 = vld [vmem:[%s2 + $0x10c] sm:$0xf]
        %v757 = vld [vmem:[%s2 + $0x110] sm:$0xf]
        %v758 = vld [vmem:[%s2 + $0x114] sm:$0xf]
        %v759 = vld [vmem:[%s2 + $0x118] sm:$0xf]
        %v760 = vld [vmem:[%s2 + $0x11c] sm:$0xf]
        %v761 = vld [vmem:[%s2 + $0x120] sm:$0xf]
        %v762 = vld [vmem:[%s2 + $0x124] sm:$0xf]
        %v763 = vld [vmem:[%s2 + $0x128] sm:$0xf]
        %v764 = vld [vmem:[%s2 + $0x12c] sm:$0xf]
        %v765 = vld [vmem:[%s2 + $0x130] sm:$0xf]
        %v766 = vld [vmem:[%s2 + $0x134] sm:$0xf]
        %v767 = vld [vmem:[%s2 + $0x138] sm:$0xf]
        %v768 = vld [vmem:[%s2 + $0x13c] sm:$0xf]
        %v769 = vld [vmem:[%s2 + $0x140] sm:$0xf]
        %v770 = vld [vmem:[%s2 + $0x144] sm:$0xf]
        %v771 = vld [vmem:[%s2 + $0x148] sm:$0xf]
        %v772 = vld [vmem:[%s2 + $0x14c] sm:$0xf]
        %v773 = vld [vmem:[%s2 + $0x150] sm:$0xf]
        %v774 = vld [vmem:[%s2 + $0x154] sm:$0xf]
        %v775 = vld [vmem:[%s2 + $0x158] sm:$0xf]
        %v776 = vld [vmem:[%s2 + $0x15c] sm:$0xf]
        %v777 = vld [vmem:[%s2 + $0x160] sm:$0xf]
        %v778 = vld [vmem:[%s2 + $0x164] sm:$0xf]
        %v779 = vld [vmem:[%s2 + $0x168] sm:$0xf]
        %v780 = vld [vmem:[%s2 + $0x16c] sm:$0xf]
        %v781 = vld [vmem:[%s2 + $0x170] sm:$0xf]
        %v782 = vld [vmem:[%s2 + $0x174] sm:$0xf]
        %v783 = vld [vmem:[%s2 + $0x178] sm:$0xf]
        %v784 = vld [vmem:[%s2 + $0x17c] sm:$0xf]
        %v785 = vld [vmem:[%s2 + $0x180] sm:$0xf]
        %v786 = vld [vmem:[%s2 + $0x184] sm:$0xf]
        %v787 = vld [vmem:[%s2 + $0x188] sm:$0xf]
        %v788 = vld [vmem:[%s2 + $0x18c] sm:$0xf]
        %v789 = vld [vmem:[%s2 + $0x190] sm:$0xf]
        %v790 = vld [vmem:[%s2 + $0x194] sm:$0xf]
        %v791 = vld [vmem:[%s2 + $0x198] sm:$0xf]
        %v792 = vld [vmem:[%s2 + $0x19c] sm:$0xf]
        %v793 = vld [vmem:[%s2 + $0x1a0] sm:$0xf]
        %v794 = vld [vmem:[%s2 + $0x1a4] sm:$0xf]
        %v795 = vld [vmem:[%s2 + $0x1a8] sm:$0xf]
        %v796 = vld [vmem:[%s2 + $0x1ac] sm:$0xf]
        %v797 = vld [vmem:[%s2 + $0x1b0] sm:$0xf]
        %v798 = vld [vmem:[%s2 + $0x1b4] sm:$0xf]
        %v799 = vld [vmem:[%s2 + $0x1b8] sm:$0xf]
        %v800 = vld [vmem:[%s2 + $0x1bc] sm:$0xf]
        %v801 = vld [vmem:[%s2 + $0x1c0] sm:$0xf]
        %v802 = vld [vmem:[%s2 + $0x1c4] sm:$0xf]
        %v803 = vld [vmem:[%s2 + $0x1c8] sm:$0xf]
        %v804 = vld [vmem:[%s2 + $0x1cc] sm:$0xf]
        %v805 = vld [vmem:[%s2 + $0x1d0] sm:$0xf]
        %v806 = vld [vmem:[%s2 + $0x1d4] sm:$0xf]
        %v807 = vld [vmem:[%s2 + $0x1d8] sm:$0xf]
        %v808 = vld [vmem:[%s2 + $0x1dc] sm:$0xf]
        %v809 = vld [vmem:[%s2 + $0x1e0] sm:$0xf]
        %v810 = vld [vmem:[%s2 + $0x1e4] sm:$0xf]
        %v811 = vld [vmem:[%s2 + $0x1e8] sm:$0xf]
        %v812 = vld [vmem:[%s2 + $0x1ec] sm:$0xf]
        %v813 = vld [vmem:[%s2 + $0x1f0] sm:$0xf]
        %v814 = vld [vmem:[%s2 + $0x1f4] sm:$0xf]
        %v815 = vld [vmem:[%s2 + $0x1f8] sm:$0xf]
        %v816 = vld [vmem:[%s2 + $0x1fc] sm:$0xf]
        %v817 = vld [vmem:[%s2 + $0x200] sm:$0xf]
        %v818 = vld [vmem:[%s2 + $0x204] sm:$0xf]
        %v819 = vld [vmem:[%s2 + $0x208] sm:$0xf]
        %v820 = vld [vmem:[%s2 + $0x20c] sm:$0xf]
        %v821 = vld [vmem:[%s2 + $0x210] sm:$0xf]
        %v822 = vld [vmem:[%s2 + $0x214] sm:$0xf]
        %v823 = vld [vmem:[%s2 + $0x218] sm:$0xf]
        %v824 = vld [vmem:[%s2 + $0x21c] sm:$0xf]
        %v825 = vld [vmem:[%s2 + $0x220] sm:$0xf]
        %v826 = vld [vmem:[%s2 + $0x224] sm:$0xf]
        %v827 = vld [vmem:[%s2 + $0x228] sm:$0xf]
        %v828 = vld [vmem:[%s2 + $0x22c] sm:$0xf]
        %v829 = vld [vmem:[%s2 + $0x230] sm:$0xf]
        %v830 = vld [vmem:[%s2 + $0x234] sm:$0xf]
        %v831 = vld [vmem:[%s2 + $0x238] sm:$0xf]
        %v832 = vld [vmem:[%s2 + $0x23c] sm:$0xf]
        %v977 = vunpack.c.l.b16 %v689
        %v978 = vunpack.c.l.b16 %v690
        %v979 = vunpack.c.l.b16 %v691
        %v980 = vunpack.c.l.b16 %v692
        %v981 = vunpack.c.l.b16 %v693
        %v982 = vunpack.c.l.b16 %v694
        %v983 = vunpack.c.l.b16 %v695
        %v984 = vunpack.c.l.b16 %v696
        %v985 = vunpack.c.l.b16 %v697
        %v986 = vunpack.c.l.b16 %v698
        %v987 = vunpack.c.l.b16 %v699
        %v988 = vunpack.c.l.b16 %v700
        %v989 = vunpack.c.l.b16 %v701
        %v990 = vunpack.c.l.b16 %v702
        %v991 = vunpack.c.l.b16 %v703
        %v992 = vunpack.c.l.b16 %v704
        %v993 = vunpack.c.l.b16 %v705
        %v994 = vunpack.c.l.b16 %v706
        %v995 = vunpack.c.l.b16 %v707
        %v996 = vunpack.c.l.b16 %v708
        %v997 = vunpack.c.l.b16 %v709
        %v998 = vunpack.c.l.b16 %v710
        %v999 = vunpack.c.l.b16 %v711
        %v1000 = vunpack.c.l.b16 %v712
        %v1001 = vunpack.c.l.b16 %v713
        %v1002 = vunpack.c.l.b16 %v714
        %v1003 = vunpack.c.l.b16 %v715
        %v1004 = vunpack.c.l.b16 %v716
        %v1005 = vunpack.c.l.b16 %v717
        %v1006 = vunpack.c.l.b16 %v718
        %v1007 = vunpack.c.l.b16 %v719
        %v1008 = vunpack.c.l.b16 %v720
        %v1009 = vunpack.c.l.b16 %v721
        %v1010 = vunpack.c.l.b16 %v722
        %v1011 = vunpack.c.l.b16 %v723
        %v1012 = vunpack.c.l.b16 %v724
        %v1013 = vunpack.c.l.b16 %v725
        %v1014 = vunpack.c.l.b16 %v726
        %v1015 = vunpack.c.l.b16 %v727
        %v1016 = vunpack.c.l.b16 %v728
        %v1017 = vunpack.c.l.b16 %v729
        %v1018 = vunpack.c.l.b16 %v730
        %v1019 = vunpack.c.l.b16 %v731
        %v1020 = vunpack.c.l.b16 %v732
        %v1021 = vunpack.c.l.b16 %v733
        %v1022 = vunpack.c.l.b16 %v734
        %v1023 = vunpack.c.l.b16 %v735
        %v1024 = vunpack.c.l.b16 %v736
        %v1025 = vunpack.c.l.b16 %v737
        %v1026 = vunpack.c.l.b16 %v738
        %v1027 = vunpack.c.l.b16 %v739
        %v1028 = vunpack.c.l.b16 %v740
        %v1029 = vunpack.c.l.b16 %v741
        %v1030 = vunpack.c.l.b16 %v742
        %v1031 = vunpack.c.l.b16 %v743
        %v1032 = vunpack.c.l.b16 %v744
        %v1033 = vunpack.c.l.b16 %v745
        %v1034 = vunpack.c.l.b16 %v746
        %v1035 = vunpack.c.l.b16 %v747
        %v1036 = vunpack.c.l.b16 %v748
        %v1037 = vunpack.c.l.b16 %v749
        %v1038 = vunpack.c.l.b16 %v750
        %v1039 = vunpack.c.l.b16 %v751
        %v1040 = vunpack.c.l.b16 %v752
        %v1041 = vunpack.c.l.b16 %v753
        %v1042 = vunpack.c.l.b16 %v754
        %v1043 = vunpack.c.l.b16 %v755
        %v1044 = vunpack.c.l.b16 %v756
        %v1045 = vunpack.c.l.b16 %v757
        %v1046 = vunpack.c.l.b16 %v758
        %v1047 = vunpack.c.l.b16 %v759
        %v1048 = vunpack.c.l.b16 %v760
        %v1049 = vunpack.c.l.b16 %v761
        %v1050 = vunpack.c.l.b16 %v762
        %v1051 = vunpack.c.l.b16 %v763
        %v1052 = vunpack.c.l.b16 %v764
        %v1053 = vunpack.c.l.b16 %v765
        %v1054 = vunpack.c.l.b16 %v766
        %v1055 = vunpack.c.l.b16 %v767
        %v1056 = vunpack.c.l.b16 %v768
        %v1057 = vunpack.c.l.b16 %v769
        %v1058 = vunpack.c.l.b16 %v770
        %v1059 = vunpack.c.l.b16 %v771
        %v1060 = vunpack.c.l.b16 %v772
        %v1061 = vunpack.c.l.b16 %v773
        %v1062 = vunpack.c.l.b16 %v774
        %v1063 = vunpack.c.l.b16 %v775
        %v1064 = vunpack.c.l.b16 %v776
        %v1065 = vunpack.c.l.b16 %v777
        %v1066 = vunpack.c.l.b16 %v778
        %v1067 = vunpack.c.l.b16 %v779
        %v1068 = vunpack.c.l.b16 %v780
        %v1069 = vunpack.c.l.b16 %v781
        %v1070 = vunpack.c.l.b16 %v782
        %v1071 = vunpack.c.l.b16 %v783
        %v1072 = vunpack.c.l.b16 %v784
        %v1073 = vunpack.c.l.b16 %v785
        %v1074 = vunpack.c.l.b16 %v786
        %v1075 = vunpack.c.l.b16 %v787
        %v1076 = vunpack.c.l.b16 %v788
        %v1077 = vunpack.c.l.b16 %v789
        %v1078 = vunpack.c.l.b16 %v790
        %v1079 = vunpack.c.l.b16 %v791
        %v1080 = vunpack.c.l.b16 %v792
        %v1081 = vunpack.c.l.b16 %v793
        %v1082 = vunpack.c.l.b16 %v794
        %v1083 = vunpack.c.l.b16 %v795
        %v1084 = vunpack.c.l.b16 %v796
        %v1085 = vunpack.c.l.b16 %v797
        %v1086 = vunpack.c.l.b16 %v798
        %v1087 = vunpack.c.l.b16 %v799
        %v1088 = vunpack.c.l.b16 %v800
        %v1089 = vunpack.c.l.b16 %v801
        %v1090 = vunpack.c.l.b16 %v802
        %v1091 = vunpack.c.l.b16 %v803
        %v1092 = vunpack.c.l.b16 %v804
        %v1093 = vunpack.c.l.b16 %v805
        %v1094 = vunpack.c.l.b16 %v806
        %v1095 = vunpack.c.l.b16 %v807
        %v1096 = vunpack.c.l.b16 %v808
        %v1097 = vunpack.c.l.b16 %v809
        %v1098 = vunpack.c.l.b16 %v810
        %v1099 = vunpack.c.l.b16 %v811
        %v1100 = vunpack.c.l.b16 %v812
        %v1101 = vunpack.c.l.b16 %v813
        %v1102 = vunpack.c.l.b16 %v814
        %v1103 = vunpack.c.l.b16 %v815
        %v1104 = vunpack.c.l.b16 %v816
        %v1105 = vunpack.c.l.b16 %v817
        %v1106 = vunpack.c.l.b16 %v818
        %v1107 = vunpack.c.l.b16 %v819
        %v1108 = vunpack.c.l.b16 %v820
        %v1109 = vunpack.c.l.b16 %v821
        %v1110 = vunpack.c.l.b16 %v822
        %v1111 = vunpack.c.l.b16 %v823
        %v1112 = vunpack.c.l.b16 %v824
        %v1113 = vunpack.c.l.b16 %v825
        %v1114 = vunpack.c.l.b16 %v826
        %v1115 = vunpack.c.l.b16 %v827
        %v1116 = vunpack.c.l.b16 %v828
        %v1117 = vunpack.c.l.b16 %v829
        %v1118 = vunpack.c.l.b16 %v830
        %v1119 = vunpack.c.l.b16 %v831
        %v1120 = vunpack.c.l.b16 %v832
        %v1121 = vpack.c.b16 %v978, %v977
        %v1122 = vpack.c.b16 %v980, %v979
        %v1123 = vpack.c.b16 %v982, %v981
        %v1124 = vpack.c.b16 %v984, %v983
        %v1125 = vpack.c.b16 %v986, %v985
        %v1126 = vpack.c.b16 %v988, %v987
        %v1127 = vpack.c.b16 %v990, %v989
        %v1128 = vpack.c.b16 %v992, %v991
        %v1129 = vpack.c.b16 %v994, %v993
        %v1130 = vpack.c.b16 %v996, %v995
        %v1131 = vpack.c.b16 %v998, %v997
        %v1132 = vpack.c.b16 %v1000, %v999
        %v1133 = vpack.c.b16 %v1002, %v1001
        %v1134 = vpack.c.b16 %v1004, %v1003
        %v1135 = vpack.c.b16 %v1006, %v1005
        %v1136 = vpack.c.b16 %v1008, %v1007
        %v1137 = vpack.c.b16 %v1010, %v1009
        %v1138 = vpack.c.b16 %v1012, %v1011
        %v1139 = vpack.c.b16 %v1014, %v1013
        %v1140 = vpack.c.b16 %v1016, %v1015
        %v1141 = vpack.c.b16 %v1018, %v1017
        %v1142 = vpack.c.b16 %v1020, %v1019
        %v1143 = vpack.c.b16 %v1022, %v1021
        %v1144 = vpack.c.b16 %v1024, %v1023
        %v1145 = vpack.c.b16 %v1026, %v1025
        %v1146 = vpack.c.b16 %v1028, %v1027
        %v1147 = vpack.c.b16 %v1030, %v1029
        %v1148 = vpack.c.b16 %v1032, %v1031
        %v1149 = vpack.c.b16 %v1034, %v1033
        %v1150 = vpack.c.b16 %v1036, %v1035
        %v1151 = vpack.c.b16 %v1038, %v1037
        %v1152 = vpack.c.b16 %v1040, %v1039
        %v1153 = vpack.c.b16 %v1042, %v1041
        %v1154 = vpack.c.b16 %v1044, %v1043
        %v1155 = vpack.c.b16 %v1046, %v1045
        %v1156 = vpack.c.b16 %v1048, %v1047
        %v1157 = vpack.c.b16 %v1050, %v1049
        %v1158 = vpack.c.b16 %v1052, %v1051
        %v1159 = vpack.c.b16 %v1054, %v1053
        %v1160 = vpack.c.b16 %v1056, %v1055
        %v1161 = vpack.c.b16 %v1058, %v1057
        %v1162 = vpack.c.b16 %v1060, %v1059
        %v1163 = vpack.c.b16 %v1062, %v1061
        %v1164 = vpack.c.b16 %v1064, %v1063
        %v1165 = vpack.c.b16 %v1066, %v1065
        %v1166 = vpack.c.b16 %v1068, %v1067
        %v1167 = vpack.c.b16 %v1070, %v1069
        %v1168 = vpack.c.b16 %v1072, %v1071
        %v1169 = vpack.c.b16 %v1074, %v1073
        %v1170 = vpack.c.b16 %v1076, %v1075
        %v1171 = vpack.c.b16 %v1078, %v1077
        %v1172 = vpack.c.b16 %v1080, %v1079
        %v1173 = vpack.c.b16 %v1082, %v1081
        %v1174 = vpack.c.b16 %v1084, %v1083
        %v1175 = vpack.c.b16 %v1086, %v1085
        %v1176 = vpack.c.b16 %v1088, %v1087
        %v1177 = vpack.c.b16 %v1090, %v1089
        %v1178 = vpack.c.b16 %v1092, %v1091
        %v1179 = vpack.c.b16 %v1094, %v1093
        %v1180 = vpack.c.b16 %v1096, %v1095
        %v1181 = vpack.c.b16 %v1098, %v1097
        %v1182 = vpack.c.b16 %v1100, %v1099
        %v1183 = vpack.c.b16 %v1102, %v1101
        %v1184 = vpack.c.b16 %v1104, %v1103
        %v1185 = vpack.c.b16 %v1106, %v1105
        %v1186 = vpack.c.b16 %v1108, %v1107
        %v1187 = vpack.c.b16 %v1110, %v1109
        %v1188 = vpack.c.b16 %v1112, %v1111
        %v1189 = vpack.c.b16 %v1114, %v1113
        %v1190 = vpack.c.b16 %v1116, %v1115
        %v1191 = vpack.c.b16 %v1118, %v1117
        %v1192 = vpack.c.b16 %v1120, %v1119
        %1265 = vmatprep.subr.bf16.mxu0 0
        %1266 = vmatpush1.bf16.msra.mxu0 %v1121
        %1267 = vmatprep.subr.bf16.mxu0 0
        %1268 = vmatpush1.bf16.msra.mxu0 %v1122
        %1269 = vmatprep.subr.bf16.mxu0 0
        %1270 = vmatpush1.bf16.msra.mxu0 %v1123
        %1271 = vmatprep.subr.bf16.mxu0 0
        %1272 = vmatpush1.bf16.msra.mxu0 %v1124
        %1273 = vmatprep.subr.bf16.mxu0 0
        %1274 = vmatpush1.bf16.msra.mxu0 %v1125
        %1275 = vmatprep.subr.bf16.mxu0 0
        %1276 = vmatpush1.bf16.msra.mxu0 %v1126
        %1277 = vmatprep.subr.bf16.mxu0 0
        %1278 = vmatpush1.bf16.msra.mxu0 %v1127
        %1279 = vmatprep.subr.bf16.mxu0 0
        %1280 = vmatpush1.bf16.msra.mxu0 %v1128
        %1281 = vmatprep.subr.bf16.mxu0 0
        %1282 = vmatpush1.bf16.msra.mxu0 %v1129
        %1283 = vmatprep.subr.bf16.mxu0 0
        %1284 = vmatpush1.bf16.msra.mxu0 %v1130
        %1285 = vmatprep.subr.bf16.mxu0 0
        %1286 = vmatpush1.bf16.msra.mxu0 %v1131
        %1287 = vmatprep.subr.bf16.mxu0 0
        %1288 = vmatpush1.bf16.msra.mxu0 %v1132
        %1289 = vmatprep.subr.bf16.mxu0 0
        %1290 = vmatpush1.bf16.msra.mxu0 %v1133
        %1291 = vmatprep.subr.bf16.mxu0 0
        %1292 = vmatpush1.bf16.msra.mxu0 %v1134
        %1293 = vmatprep.subr.bf16.mxu0 0
        %1294 = vmatpush1.bf16.msra.mxu0 %v1135
        %1295 = vmatprep.subr.bf16.mxu0 0
        %1296 = vmatpush1.bf16.msra.mxu0 %v1136
        %1297 = vmatprep.mubr.bf16.mxu0 %v654
        %1298 = vmatmul.mubr.bf16.gmra.mrb[0].mxu0 %v653
        %v1299 = vpop.f32.mrb[0].mxu0
        %v1300 = vadd.f32 0.0, %v1299
        %v1301 = vpop.f32.mrb[0].mxu0
        %v1302 = vpop.f32.mrb[0].mxu0
        %v1303 = vadd.f32 0.0, %v1302
        %v1304 = vpop.f32.mrb[0].mxu0
        %1305 = vmatprep.mubr.bf16.mxu0 %v663
        %1306 = vmatmul.mubr.bf16.gmra.mrb[0].mxu0 %v662
        %v1307 = vpop.f32.mrb[0].mxu0
        %v1308 = vadd.f32 0.0, %v1307
        %v1309 = vpop.f32.mrb[0].mxu0
        %v1310 = vpop.f32.mrb[0].mxu0
        %v1311 = vadd.f32 0.0, %v1310
        %v1312 = vpop.f32.mrb[0].mxu0
        %1313 = vmatprep.mubr.bf16.mxu0 %v672
        %1314 = vmatmul.mubr.bf16.gmra.mrb[0].mxu0 %v671
        %v1315 = vpop.f32.mrb[0].mxu0
        %v1316 = vadd.f32 0.0, %v1315
        %v1317 = vpop.f32.mrb[0].mxu0
        %v1318 = vpop.f32.mrb[0].mxu0
        %v1319 = vadd.f32 0.0, %v1318
        %v1320 = vpop.f32.mrb[0].mxu0
        %1321 = vmatprep.mubr.bf16.mxu0 %v681
        %1322 = vmatmul.mubr.bf16.gmra.mrb[0].mxu0 %v680
        %v1323 = vpop.f32.mrb[0].mxu0
        %v1324 = vadd.f32 0.0, %v1323
        %v1325 = vpop.f32.mrb[0].mxu0
        %v1326 = vpop.f32.mrb[0].mxu0
        %v1327 = vadd.f32 0.0, %v1326
        %v1328 = vpop.f32.mrb[0].mxu0
        %1329 = vdwg.mxu0
        %1330 = vmatprep.subr.bf16.mxu0 0
        %1331 = vmatpush1.bf16.msra.mxu0 %v1137
        %1332 = vmatprep.subr.bf16.mxu0 0
        %1333 = vmatpush1.bf16.msra.mxu0 %v1138
        %1334 = vmatprep.subr.bf16.mxu0 0
        %1335 = vmatpush1.bf16.msra.mxu0 %v1139
        %1336 = vmatprep.subr.bf16.mxu0 0
        %1337 = vmatpush1.bf16.msra.mxu0 %v1140
        %1338 = vmatprep.subr.bf16.mxu0 0
        %1339 = vmatpush1.bf16.msra.mxu0 %v1141
        %1340 = vmatprep.subr.bf16.mxu0 0
        %1341 = vmatpush1.bf16.msra.mxu0 %v1142
        %1342 = vmatprep.subr.bf16.mxu0 0
        %1343 = vmatpush1.bf16.msra.mxu0 %v1143
        %1344 = vmatprep.subr.bf16.mxu0 0
        %1345 = vmatpush1.bf16.msra.mxu0 %v1144
        %1346 = vmatprep.subr.bf16.mxu0 0
        %1347 = vmatpush1.bf16.msra.mxu0 %v1145
        %1348 = vmatprep.subr.bf16.mxu0 0
        %1349 = vmatpush1.bf16.msra.mxu0 %v1146
        %1350 = vmatprep.subr.bf16.mxu0 0
        %1351 = vmatpush1.bf16.msra.mxu0 %v1147
        %1352 = vmatprep.subr.bf16.mxu0 0
        %1353 = vmatpush1.bf16.msra.mxu0 %v1148
        %1354 = vmatprep.subr.bf16.mxu0 0
        %1355 = vmatpush1.bf16.msra.mxu0 %v1149
        %1356 = vmatprep.subr.bf16.mxu0 0
        %1357 = vmatpush1.bf16.msra.mxu0 %v1150
        %1358 = vmatprep.subr.bf16.mxu0 0
        %1359 = vmatpush1.bf16.msra.mxu0 %v1151
        %1360 = vmatprep.subr.bf16.mxu0 0
        %1361 = vmatpush1.bf16.msra.mxu0 %v1152
        %1362 = vmatprep.mubr.bf16.mxu0 %v656
        %1363 = vmatmul.mubr.bf16.gmra.mrb[0].mxu0 %v655
        %v1364 = vpop.f32.mrb[0].mxu0
        %v1365 = vadd.f32 %v1300, %v1364
        %v1366 = vpop.f32.mrb[0].mxu0
        %v1367 = vpop.f32.mrb[0].mxu0
        %v1368 = vadd.f32 %v1303, %v1367
        %v1369 = vpop.f32.mrb[0].mxu0
        %1370 = vmatprep.mubr.bf16.mxu0 %v665
        %1371 = vmatmul.mubr.bf16.gmra.mrb[0].mxu0 %v664
        %v1372 = vpop.f32.mrb[0].mxu0
        %v1373 = vadd.f32 %v1308, %v1372
        %v1374 = vpop.f32.mrb[0].mxu0
        %v1375 = vpop.f32.mrb[0].mxu0
        %v1376 = vadd.f32 %v1311, %v1375
        %v1377 = vpop.f32.mrb[0].mxu0
        %1378 = vmatprep.mubr.bf16.mxu0 %v674
        %1379 = vmatmul.mubr.bf16.gmra.mrb[0].mxu0 %v673
        %v1380 = vpop.f32.mrb[0].mxu0
        %v1381 = vadd.f32 %v1316, %v1380
        %v1382 = vpop.f32.mrb[0].mxu0
        %v1383 = vpop.f32.mrb[0].mxu0
        %v1384 = vadd.f32 %v1319, %v1383
        %v1385 = vpop.f32.mrb[0].mxu0
        %1386 = vmatprep.mubr.bf16.mxu0 %v683
        %1387 = vmatmul.mubr.bf16.gmra.mrb[0].mxu0 %v682
        %v1388 = vpop.f32.mrb[0].mxu0
        %v1389 = vadd.f32 %v1324, %v1388
        %v1390 = vpop.f32.mrb[0].mxu0
        %v1391 = vpop.f32.mrb[0].mxu0
        %v1392 = vadd.f32 %v1327, %v1391
        %v1393 = vpop.f32.mrb[0].mxu0
        %1394 = vdwg.mxu0
        %1395 = vmatprep.subr.bf16.mxu0 0
        %1396 = vmatpush1.bf16.msra.mxu0 %v1153
        %1397 = vmatprep.subr.bf16.mxu0 0
        %1398 = vmatpush1.bf16.msra.mxu0 %v1154
        %1399 = vmatprep.subr.bf16.mxu0 0
        %1400 = vmatpush1.bf16.msra.mxu0 %v1155
        %1401 = vmatprep.subr.bf16.mxu0 0
        %1402 = vmatpush1.bf16.msra.mxu0 %v1156
        %1403 = vmatprep.subr.bf16.mxu0 0
        %1404 = vmatpush1.bf16.msra.mxu0 %v1157
        %1405 = vmatprep.subr.bf16.mxu0 0
        %1406 = vmatpush1.bf16.msra.mxu0 %v1158
        %1407 = vmatprep.subr.bf16.mxu0 0
        %1408 = vmatpush1.bf16.msra.mxu0 %v1159
        %1409 = vmatprep.subr.bf16.mxu0 0
        %1410 = vmatpush1.bf16.msra.mxu0 %v1160
        %1411 = vmatprep.subr.bf16.mxu0 0
        %1412 = vmatpush1.bf16.msra.mxu0 %v1161
        %1413 = vmatprep.subr.bf16.mxu0 0
        %1414 = vmatpush1.bf16.msra.mxu0 %v1162
        %1415 = vmatprep.subr.bf16.mxu0 0
        %1416 = vmatpush1.bf16.msra.mxu0 %v1163
        %1417 = vmatprep.subr.bf16.mxu0 0
        %1418 = vmatpush1.bf16.msra.mxu0 %v1164
        %1419 = vmatprep.subr.bf16.mxu0 0
        %1420 = vmatpush1.bf16.msra.mxu0 %v1165
        %1421 = vmatprep.subr.bf16.mxu0 0
        %1422 = vmatpush1.bf16.msra.mxu0 %v1166
        %1423 = vmatprep.subr.bf16.mxu0 0
        %1424 = vmatpush1.bf16.msra.mxu0 %v1167
        %1425 = vmatprep.subr.bf16.mxu0 0
        %1426 = vmatpush1.bf16.msra.mxu0 %v1168
        %1427 = vmatprep.mubr.bf16.mxu0 %v658
        %1428 = vmatmul.mubr.bf16.gmra.mrb[0].mxu0 %v657
        %v1429 = vpop.f32.mrb[0].mxu0
        %v1430 = vadd.f32 %v1365, %v1429
        %v1431 = vpop.f32.mrb[0].mxu0
        %v1432 = vpop.f32.mrb[0].mxu0
        %v1433 = vadd.f32 %v1368, %v1432
        %v1434 = vpop.f32.mrb[0].mxu0
        %1435 = vmatprep.mubr.bf16.mxu0 %v667
        %1436 = vmatmul.mubr.bf16.gmra.mrb[0].mxu0 %v666
        %v1437 = vpop.f32.mrb[0].mxu0
        %v1438 = vadd.f32 %v1373, %v1437
        %v1439 = vpop.f32.mrb[0].mxu0
        %v1440 = vpop.f32.mrb[0].mxu0
        %v1441 = vadd.f32 %v1376, %v1440
        %v1442 = vpop.f32.mrb[0].mxu0
        %1443 = vmatprep.mubr.bf16.mxu0 %v676
        %1444 = vmatmul.mubr.bf16.gmra.mrb[0].mxu0 %v675
        %v1445 = vpop.f32.mrb[0].mxu0
        %v1446 = vadd.f32 %v1381, %v1445
        %v1447 = vpop.f32.mrb[0].mxu0
        %v1448 = vpop.f32.mrb[0].mxu0
        %v1449 = vadd.f32 %v1384, %v1448
        %v1450 = vpop.f32.mrb[0].mxu0
        %1451 = vmatprep.mubr.bf16.mxu0 %v685
        %1452 = vmatmul.mubr.bf16.gmra.mrb[0].mxu0 %v684
        %v1453 = vpop.f32.mrb[0].mxu0
        %v1454 = vadd.f32 %v1389, %v1453
        %v1455 = vpop.f32.mrb[0].mxu0
        %v1456 = vpop.f32.mrb[0].mxu0
        %v1457 = vadd.f32 %v1392, %v1456
        %v1458 = vpop.f32.mrb[0].mxu0
        %1459 = vdwg.mxu0
        %1460 = vmatprep.subr.bf16.mxu0 0
        %1461 = vmatpush1.bf16.msra.mxu0 %v1169
        %1462 = vmatprep.subr.bf16.mxu0 0
        %1463 = vmatpush1.bf16.msra.mxu0 %v1170
        %1464 = vmatprep.subr.bf16.mxu0 0
        %1465 = vmatpush1.bf16.msra.mxu0 %v1171
        %1466 = vmatprep.subr.bf16.mxu0 0
        %1467 = vmatpush1.bf16.msra.mxu0 %v1172
        %1468 = vmatprep.subr.bf16.mxu0 0
        %1469 = vmatpush1.bf16.msra.mxu0 %v1173
        %1470 = vmatprep.subr.bf16.mxu0 0
        %1471 = vmatpush1.bf16.msra.mxu0 %v1174
        %1472 = vmatprep.subr.bf16.mxu0 0
        %1473 = vmatpush1.bf16.msra.mxu0 %v1175
        %1474 = vmatprep.subr.bf16.mxu0 0
        %1475 = vmatpush1.bf16.msra.mxu0 %v1176
        %1476 = vmatprep.subr.bf16.mxu0 0
        %1477 = vmatpush1.bf16.msra.mxu0 %v1177
        %1478 = vmatprep.subr.bf16.mxu0 0
        %1479 = vmatpush1.bf16.msra.mxu0 %v1178
        %1480 = vmatprep.subr.bf16.mxu0 0
        %1481 = vmatpush1.bf16.msra.mxu0 %v1179
        %1482 = vmatprep.subr.bf16.mxu0 0
        %1483 = vmatpush1.bf16.msra.mxu0 %v1180
        %1484 = vmatprep.subr.bf16.mxu0 0
        %1485 = vmatpush1.bf16.msra.mxu0 %v1181
        %1486 = vmatprep.subr.bf16.mxu0 0
        %1487 = vmatpush1.bf16.msra.mxu0 %v1182
        %1488 = vmatprep.subr.bf16.mxu0 0
        %1489 = vmatpush1.bf16.msra.mxu0 %v1183
        %1490 = vmatprep.subr.bf16.mxu0 0
        %1491 = vmatpush1.bf16.msra.mxu0 %v1184
        %1492 = vmatprep.mubr.bf16.mxu0 %v660
        %1493 = vmatmul.mubr.bf16.gmra.mrb[0].mxu0 %v659
        %v1494 = vpop.f32.mrb[0].mxu0
        %v1495 = vadd.f32 %v1430, %v1494
        %v1496 = vpop.f32.mrb[0].mxu0
        %v1497 = vpop.f32.mrb[0].mxu0
        %v1498 = vadd.f32 %v1433, %v1497
        %v1499 = vpop.f32.mrb[0].mxu0
        %1500 = vmatprep.mubr.bf16.mxu0 %v669
        %1501 = vmatmul.mubr.bf16.gmra.mrb[0].mxu0 %v668
        %v1502 = vpop.f32.mrb[0].mxu0
        %v1503 = vadd.f32 %v1438, %v1502
        %v1504 = vpop.f32.mrb[0].mxu0
        %v1505 = vpop.f32.mrb[0].mxu0
        %v1506 = vadd.f32 %v1441, %v1505
        %v1507 = vpop.f32.mrb[0].mxu0
        %1508 = vmatprep.mubr.bf16.mxu0 %v678
        %1509 = vmatmul.mubr.bf16.gmra.mrb[0].mxu0 %v677
        %v1510 = vpop.f32.mrb[0].mxu0
        %v1511 = vadd.f32 %v1446, %v1510
        %v1512 = vpop.f32.mrb[0].mxu0
        %v1513 = vpop.f32.mrb[0].mxu0
        %v1514 = vadd.f32 %v1449, %v1513
        %v1515 = vpop.f32.mrb[0].mxu0
        %1516 = vmatprep.mubr.bf16.mxu0 %v687
        %1517 = vmatmul.mubr.bf16.gmra.mrb[0].mxu0 %v686
        %v1518 = vpop.f32.mrb[0].mxu0
        %v1519 = vadd.f32 %v1454, %v1518
        %v1520 = vpop.f32.mrb[0].mxu0
        %v1521 = vpop.f32.mrb[0].mxu0
        %v1522 = vadd.f32 %v1457, %v1521
        %v1523 = vpop.f32.mrb[0].mxu0
        %1524 = vdwg.mxu0
        %1525 = vmatprep.subr.bf16.mxu0 0
        %1526 = vmatpush1.bf16.msra.mxu0 %v1185
        %1527 = vmatprep.subr.bf16.mxu0 0
        %1528 = vmatpush1.bf16.msra.mxu0 %v1186
        %1529 = vmatprep.subr.bf16.mxu0 0
        %1530 = vmatpush1.bf16.msra.mxu0 %v1187
        %1531 = vmatprep.subr.bf16.mxu0 0
        %1532 = vmatpush1.bf16.msra.mxu0 %v1188
        %1533 = vmatprep.subr.bf16.mxu0 0
        %1534 = vmatpush1.bf16.msra.mxu0 %v1189
        %1535 = vmatprep.subr.bf16.mxu0 0
        %1536 = vmatpush1.bf16.msra.mxu0 %v1190
        %1537 = vmatprep.subr.bf16.mxu0 0
        %1538 = vmatpush1.bf16.msra.mxu0 %v1191
        %1539 = vmatprep.subr.bf16.mxu0 0
        %1540 = vmatpush1.bf16.msra.mxu0 %v1192
        %1541 = vmatprep.subr.bf16.mxu0 0
        %1542 = vmatpush1.bf16.msra.mxu0 0
        %1543 = vmatprep.subr.bf16.mxu0 0
        %1544 = vmatpush1.bf16.msra.mxu0 0
        %1545 = vmatprep.subr.bf16.mxu0 0
        %1546 = vmatpush1.bf16.msra.mxu0 0
        %1547 = vmatprep.subr.bf16.mxu0 0
        %1548 = vmatpush1.bf16.msra.mxu0 0
        %1549 = vmatprep.subr.bf16.mxu0 0
        %1550 = vmatpush1.bf16.msra.mxu0 0
        %1551 = vmatprep.subr.bf16.mxu0 0
        %1552 = vmatpush1.bf16.msra.mxu0 0
        %1553 = vmatprep.subr.bf16.mxu0 0
        %1554 = vmatpush1.bf16.msra.mxu0 0
        %1555 = vmatprep.subr.bf16.mxu0 0
        %1556 = vmatpush1.bf16.msra.mxu0 0
        %1557 = vmatprep.mubr.bf16.mxu0 0
        %1558 = vmatmul.mubr.bf16.gmra.mrb[0].mxu0 %v661
        %v1559 = vpop.f32.mrb[0].mxu0
        %v1560 = vadd.f32 %v1495, %v1559
        %v1561 = vpop.f32.mrb[0].mxu0
        %v1562 = vpop.f32.mrb[0].mxu0
        %v1563 = vadd.f32 %v1498, %v1562
        %v1564 = vpop.f32.mrb[0].mxu0
        %1565 = vmatprep.mubr.bf16.mxu0 0
        %1566 = vmatmul.mubr.bf16.gmra.mrb[0].mxu0 %v670
        %v1567 = vpop.f32.mrb[0].mxu0
        %v1568 = vadd.f32 %v1503, %v1567
        %v1569 = vpop.f32.mrb[0].mxu0
        %v1570 = vpop.f32.mrb[0].mxu0
        %v1571 = vadd.f32 %v1506, %v1570
        %v1572 = vpop.f32.mrb[0].mxu0
        %1573 = vmatprep.mubr.bf16.mxu0 0
        %1574 = vmatmul.mubr.bf16.gmra.mrb[0].mxu0 %v679
        %v1575 = vpop.f32.mrb[0].mxu0
        %v1576 = vadd.f32 %v1511, %v1575
        %v1577 = vpop.f32.mrb[0].mxu0
        %v1578 = vpop.f32.mrb[0].mxu0
        %v1579 = vadd.f32 %v1514, %v1578
        %v1580 = vpop.f32.mrb[0].mxu0
        %1581 = vmatprep.mubr.bf16.mxu0 0
        %1582 = vmatmul.mubr.bf16.gmra.mrb[0].mxu0 %v688
        %v1583 = vpop.f32.mrb[0].mxu0
        %v1584 = vadd.f32 %v1519, %v1583
        %v1585 = vpop.f32.mrb[0].mxu0
        %v1586 = vpop.f32.mrb[0].mxu0
        %v1587 = vadd.f32 %v1522, %v1586
        %v1588 = vpop.f32.mrb[0].mxu0
        %1589 = vdwg.mxu0
        %v1590 = vld [vmem:[%s3] sm:$0x1]
        %v1592 = vlaneseq
        %v1593 = vshrl.u32 %v1592, 7
        %v1594 = vsub.s32 0, %v1593
        %v1595 = vrot.slane %v1590, %v1594
        %v1597 = vmul.f32 %v1560, %v1595
        %v1598 = vmul.f32 %v1563, %v1595
        %v1599 = vmul.f32 %v1568, %v1595
        %v1600 = vmul.f32 %v1571, %v1595
        %v1601 = vmul.f32 %v1576, %v1595
        %v1602 = vmul.f32 %v1579, %v1595
        %v1603 = vmul.f32 %v1584, %v1595
        %v1604 = vmul.f32 %v1587, %v1595
        %v1605 = vld [vmem:[%s4] sm:$0x1]
        %v1607 = vlaneseq
        %v1608 = vshrl.u32 %v1607, 7
        %v1609 = vsub.s32 0, %v1608
        %v1610 = vrot.slane %v1605, %v1609
        %v1612 = vadd.f32 %v1597, %v1610
        %v1613 = vadd.f32 %v1598, %v1610
        %v1614 = vadd.f32 %v1599, %v1610
        %v1615 = vadd.f32 %v1600, %v1610
        %v1616 = vadd.f32 %v1601, %v1610
        %v1617 = vadd.f32 %v1602, %v1610
        %v1618 = vadd.f32 %v1603, %v1610
        %v1619 = vadd.f32 %v1604, %v1610
        %v1620 = vld [vmem:[%s271] sm:$0xf]
        %v1621 = vld [vmem:[%s271 + $0x4] sm:$0xf]
        %v1622 = vld [vmem:[%s271 + $0x8] sm:$0xf]
        %v1623 = vld [vmem:[%s271 + $0xc] sm:$0xf]
        %v1624 = vld [vmem:[%s271 + $0x10] sm:$0xf]
        %v1625 = vld [vmem:[%s271 + $0x14] sm:$0xf]
        %v1626 = vld [vmem:[%s271 + $0x18] sm:$0xf]
        %v1627 = vld [vmem:[%s271 + $0x1c] sm:$0xf]
        %v1628 = vunpack.c.l.bf16 %v1620
        %v1629 = vunpack.c.l.bf16 %v1621
        %v1630 = vunpack.c.l.bf16 %v1622
        %v1631 = vunpack.c.l.bf16 %v1623
        %v1632 = vunpack.c.l.bf16 %v1624
        %v1633 = vunpack.c.l.bf16 %v1625
        %v1634 = vunpack.c.l.bf16 %v1626
        %v1635 = vunpack.c.l.bf16 %v1627
        %v1636 = vadd.f32 %v1612, %v1628
        %v1637 = vadd.f32 %v1613, %v1629
        %v1638 = vadd.f32 %v1614, %v1630
        %v1639 = vadd.f32 %v1615, %v1631
        %v1640 = vadd.f32 %v1616, %v1632
        %v1641 = vadd.f32 %v1617, %v1633
        %v1642 = vadd.f32 %v1618, %v1634
        %v1643 = vadd.f32 %v1619, %v1635
        %v1644 = vmax.f32 %v1636, 0.0
        %v1645 = vmax.f32 %v1637, 0.0
        %v1646 = vmax.f32 %v1638, 0.0
        %v1647 = vmax.f32 %v1639, 0.0
        %v1648 = vmax.f32 %v1640, 0.0
        %v1649 = vmax.f32 %v1641, 0.0
        %v1650 = vmax.f32 %v1642, 0.0
        %v1651 = vmax.f32 %v1643, 0.0
        %1652 = vst [vmem:[%s257] sm:$0xff] %v1644
        %1653 = vst [vmem:[%s257 + $0x8] sm:$0xff] %v1645
        %1654 = vst [vmem:[%s257 + $0x10] sm:$0xff] %v1646
        %1655 = vst [vmem:[%s257 + $0x18] sm:$0xff] %v1647
        %1656 = vst [vmem:[%s257 + $0x20] sm:$0xff] %v1648
        %1657 = vst [vmem:[%s257 + $0x28] sm:$0xff] %v1649
        %1658 = vst [vmem:[%s257 + $0x30] sm:$0xff] %v1650
        %1659 = vst [vmem:[%s257 + $0x38] sm:$0xff] %v1651
        %s1660 = sand.u32 %s158, 1
        %s1661 = scalar_lea.sflag [#allocation4], %s1660
        %s1662 = sand.u32 %s158, 1
        %s1663 = smul.addr %s1662, 64
        %s1664 = scalar_lea.vmem [#allocation3], %s1663
        // Predicated region
        $region41: #{gfe_two_apply.11} parent=39 // pred_check
          %p1665 = pneg %p168
        $region42: #{gfe_two_apply.11} parent=39 // pred_check_branch
          %1667 = sbr.rel (%p1665) target = $region44
        $region43: #{gfe_two_apply.11} parent=39 // pred_region
          %s1668 = smul.u32 8, %s24
          %s1670 = ssub.s32 1024, 1024
          %1671 = vsyncadd %s1661, %s1670
          %s1672 = smul.addr %s23, 8
          %s1673 = sadd.s32 %s1668, %s1672
          %s1674 = smul.addr %s1673, 128
          %s1675 = scalar_lea.hbm %s5, %s1674
          %s1676 = sshll.u32 %s1664, 4
          %s1677 = int_to_ptr.vmem [resolvable:$true] %s1676
          %1682 = dma.vmem_to_hbm [thread:$0]  %s1677, 1024, %s1675, %s1661, 128, 128, 8
        $region44: #{gfe_two_apply.11} parent=39 // pred_fallthru
          _
      $region40: #{gfe_two_apply.11} parent=5 // pred_fallthru
        _
      %p1683 = scmp.le.s32.totalorder 2, %s14
      // Predicated region
      $region45: #{gfe_two_apply.11} parent=5 // pred_check
        %p1684 = pneg %p1683
      $region46: #{gfe_two_apply.11} parent=5 // pred_check_branch
        %1686 = sbr.rel (%p1684) target = $region48
      $region47: #{gfe_two_apply.11} parent=5 // pred_region
        %s1687 = ssub.s32 %s14, 2
        // Predicated region
        $region49: #{gfe_two_apply.11} parent=47 // pred_check
          %p1688 = pneg %p174
        $region50: #{gfe_two_apply.11} parent=47 // pred_check_branch
          %1690 = sbr.rel (%p1688) target = $region52
        $region51: #{gfe_two_apply.11} parent=47 // pred_region
          %s1691 = sand.u32 %s159, 1
          %s1692 = scalar_lea.sflag [#allocation4], %s1691
          %s1693 = sand.u32 %s159, 1
          %s1694 = smul.addr %s1693, 64
          %s1695 = scalar_lea.vmem [#allocation3], %s1694
          %1696 = dma.done %s1692, 1024
        $region52: #{gfe_two_apply.11} parent=47 // pred_fallthru
          _
      $region48: #{gfe_two_apply.11} parent=5 // pred_fallthru
        _
    $region6: #{gfe_two_apply.11} parent=1 // loop_footer
      %s18 = sadd.s32 1, %s14
    $region7: #{gfe_two_apply.11} parent=1 // loop_footer_branch
      %13 = sbr.rel target = $region3
    $region8: #{gfe_two_apply.11} parent=1 // loop_exit
      _
    %1697 = vsyncpa [#allocation4], 1
    %s1698 = scalar_lea.sflag [#allocation4], 1
    %1699 = vsyncpa %s1698, 1

</llo_original>
